<compile_context>
chip_gen: v7x
topology: tpu7x:2x2x1
jax: 0.10.0
libtpu: 0.0.40
codegen_flags: <defaults>
</compile_context>

<pallas_src>
import jax
import jax.numpy as jnp
from jax.experimental import pallas as pl
from jax.experimental.pallas import tpu as pltpu

_BN_EPS = 1e-5
_LANE = 128  # TPU lane width; every channel dim is zero-padded to this.


def _round_up(n, m):
    return ((n + m - 1) // m) * m


# ----------------------------------------------------------------------------
# Fully fused network kernel (one grid step = one image).
# ----------------------------------------------------------------------------
def _make_mobilenet_kernel(h_in, cin_pad, c, strides):
    h0 = (h_in - 1) // 2 + 1                    # conv0 output spatial (3x3, stride 2, pad 1)
    unit_hin = []
    h = h0
    for s in strides:
        unit_hin.append(h)
        h = h if s == 1 else (h - 1) // 2 + 1
    h_out = h
    pad_sizes = sorted({hu + 2 for hu in unit_hin if hu > 1}, reverse=True)
    m0 = h0 * h0

    def kernel(p00, p01, p10, p11, w0_ref, b0_ref, dww_ref, dwb_ref, pww_ref,
               pwb_ref, o_ref, im2col_ref, flat_ref, *pad_refs):
        pads = dict(zip(pad_sizes, pad_refs))
        # Zero the padded-activation scratches: their 1-pixel borders must be zero and
        # interiors are fully overwritten before every use.  Done unconditionally (NOT
        # @pl.when(pid == 0)) so it stays correct when the "parallel" batch grid is
        # sharded across megacore TensorCores; it is only ~80 KiB of VMEM stores/step.
        for r in pad_refs:
            r[...] = jnp.zeros(r.shape, r.dtype)

        # ---------------- first layer: full 3x3 conv, stride 2, folded BN + ReLU -------
        # Build the (Ho*Wo, 9*Cin) im2col block in VMEM from the four stride-2 phases of
        # the padded input, then ONE MXU matmul with M = Ho*Wo.
        phases = ((p00, p01), (p10, p11))       # [row parity][col parity]
        for kh in range(3):
            for kw in range(3):
                ph = phases[kh % 2][kw % 2]
                t = kh * 3 + kw
                for i in range(h0):
                    im2col_ref[i * h0:(i + 1) * h0,
                               t * cin_pad:(t + 1) * cin_pad] = (
                        ph[0, i + kh // 2, kw // 2:kw // 2 + h0, :])
        y = jnp.dot(im2col_ref[...].astype(jnp.bfloat16), w0_ref[...],
                    preferred_element_type=jnp.float32)
        y = jnp.maximum(y + b0_ref[...], 0.0)                       # (h0*h0, C) f32

        # ---------------- 13 conv_units: dw 3x3 + BN + ReLU, pw 1x1 + BN + ReLU --------
        hcur = h0
        for li, s in enumerate(strides):
            dwb = dwb_ref[li:li + 1, :]                             # (1, C)
            pwb = pwb_ref[li:li + 1, :]                             # (1, C)

            def dww(t, _li=li):
                return dww_ref[_li * 9 + t:_li * 9 + t + 1, :]      # (1, C)

            if hcur == 1:
                # 3x3 depthwise on a 1x1 zero-padded map (any stride) = centre tap only.
                lhs = jnp.maximum(y * dww(4) + dwb, 0.0)            # (1, C)
                hnext = 1
            else:
                pr = pads[hcur + 2]
                # Scatter the flat previous output back into the padded 2-D scratch.
                for r_ in range(hcur):
                    pr[1 + r_, 1:hcur + 1, :] = y[r_ * hcur:(r_ + 1) * hcur, :]
                if s == 1:
                    # Whole-block depthwise: 9 full (H, W, C) slab multiply-adds (VPU).
                    acc = jnp.zeros((hcur, hcur, c), jnp.float32)
                    for kh in range(3):
                        for kw in range(3):
                            acc = acc + (pr[kh:kh + hcur, kw:kw + hcur, :]
                                         * dww(kh * 3 + kw))
                    dw = jnp.maximum(acc + dwb, 0.0)                # (H, W, C)
                    for r_ in range(hcur):                          # stage flat for MXU
                        flat_ref[r_ * hcur:(r_ + 1) * hcur, :] = dw[r_]
                    m = hcur * hcur
                    hnext = hcur
                else:
                    # Stride 2: compute only the strided output pixels (<= 4x4 here),
                    # written straight into the flat staging buffer.
                    ho = (hcur - 1) // 2 + 1
                    for i in range(ho):
                        for j in range(ho):
                            acc = jnp.zeros((1, c), jnp.float32)
                            for kh in range(3):
                                for kw in range(3):
                                    acc = acc + (
                                        pr[2 * i + kh, 2 * j + kw:2 * j + kw + 1, :]
                                        * dww(kh * 3 + kw))
                            flat_ref[i * ho + j:i * ho + j + 1, :] = (
                                jnp.maximum(acc + dwb, 0.0))
                    m = ho * ho
                    hnext = ho
                lhs = flat_ref[0:m, :]

            # Pointwise 1x1: one MXU matmul with M = H*W of this layer, bf16 inputs.
            y = jnp.dot(lhs.astype(jnp.bfloat16), pww_ref[li],
                        preferred_element_type=jnp.float32)
            y = jnp.maximum(y + pwb, 0.0)                           # (m, C) f32
            hcur = hnext

        o_ref[0] = y.astype(o_ref.dtype)         # single lane-dense block store

    return kernel, h_out, pad_sizes, m0


# ----------------------------------------------------------------------------
# Parameters: kaiming-normal conv weights, inference-mode BN folded into a
# per-output-channel scale (merged into the weights) plus a bias; all channel
# dims zero-padded to one lane tile (128); MXU weights stored in bf16.
# ----------------------------------------------------------------------------
def _bn_scale_bias(ch):
    gamma = jnp.ones((ch,), jnp.float32)
    beta = jnp.zeros((ch,), jnp.float32)
    mean = jnp.zeros((ch,), jnp.float32)
    var = jnp.ones((ch,), jnp.float32)
    scale = gamma / jnp.sqrt(var + _BN_EPS)
    bias = beta - mean * scale
    return scale, bias


def _pad_to(a, shape):
    return jnp.pad(a, [(0, t - s) for s, t in zip(a.shape, shape)])


def init_mobilenet_params(key, in_channels, width=0.125):
    # Base MobileNet channels; `width` mimics config_channels scaling (32..1024 -> 4..128).
    base = [32, 64, 128, 128, 256, 256, 512, 512, 512, 512, 512, 512, 1024, 1024]
    chans = [max(1, int(ch * width)) for ch in base]
    strides = (1, 2, 1, 2, 1, 2, 1, 1, 1, 1, 1, 2, 1)
    C = _LANE
    assert max(chans) <= C, "toy config keeps every channel dim within one lane tile"
    cin_pad = _round_up(in_channels, C)

    key, k0 = jax.random.split(key)
    c0 = chans[0]
    w0 = jax.random.normal(k0, (3, 3, in_channels, c0), jnp.float32) * (
        2.0 / (in_channels * 9)) ** 0.5                 # kaiming_normal_, fan_in
    s0, b0 = _bn_scale_bias(c0)
    w0 = _pad_to(w0 * s0, (3, 3, cin_pad, C))           # fold BN scale into weights
    w0 = w0.reshape(9 * cin_pad, C).astype(jnp.bfloat16)  # im2col layout, bf16 for MXU
    b0 = _pad_to(b0, (C,)).reshape(1, C)

    dww, dwb, pww, pwb = [], [], [], []
    cr = c0
    for li in range(len(strides)):
        co = chans[li + 1]
        key, kdw, kpw = jax.random.split(key, 3)
        dw_w = jax.random.normal(kdw, (3, 3, cr), jnp.float32) * (2.0 / 9.0) ** 0.5
        dw_s, dw_b = _bn_scale_bias(cr)
        dww.append(_pad_to(dw_w * dw_s, (3, 3, C)).reshape(9, C))   # f32 (VPU path)
        dwb.append(_pad_to(dw_b, (C,)).reshape(1, C))
        pw_w = jax.random.normal(kpw, (cr, co), jnp.float32) * (2.0 / cr) ** 0.5
        pw_s, pw_b = _bn_scale_bias(co)
        pww.append(_pad_to(pw_w * pw_s, (C, C)).astype(jnp.bfloat16))
        pwb.append(_pad_to(pw_b, (C,)).reshape(1, C))
        cr = co

    return dict(
        w0=w0, b0=b0,
        dww=jnp.concatenate(dww, axis=0),     # (13*9, C) f32
        dwb=jnp.concatenate(dwb, axis=0),     # (13,   C) f32
        pww=jnp.stack(pww, axis=0),           # (13, C, C) bf16
        pwb=jnp.concatenate(pwb, axis=0),     # (13,   C) f32
        strides=strides, cin_pad=cin_pad, cout=cr,
    )


# ----------------------------------------------------------------------------
# Wrapper: NCHW -> NHWC, lane-pad channels, build conv0 stride-2 phases,
# one pallas_call for the whole network, drop channel padding, NHWC -> NCHW.
# ----------------------------------------------------------------------------
def mobilenet_forward(x_nchw, params):
    C = _LANE
    x = jnp.transpose(x_nchw, (0, 2, 3, 1)).astype(jnp.float32)        # NCHW -> NHWC
    N, H, W, cin = x.shape
    assert H == W and H % 2 == 0, "toy wrapper assumes square, even spatial size"
    cin_pad = params["cin_pad"]
    if cin < cin_pad:
        x = jnp.pad(x, ((0, 0), (0, 0), (0, 0), (0, cin_pad - cin)))   # lane-pad channels
    # Four stride-2 phases of the zero-padded (pad=1) input: every conv0 tap becomes a
    # contiguous slice inside the kernel (no strided in-kernel loads, no 4x over-compute).
    xp = jnp.pad(x, ((0, 0), (1, 1), (1, 1), (0, 0)))
    phases = tuple(xp[:, r::2, s::2, :] for r in (0, 1) for s in (0, 1))
    hp = phases[0].shape[1]

    kernel, h_out, pad_sizes, m0 = _make_mobilenet_kernel(
        H, cin_pad, C, params["strides"])

    phase_spec = pl.BlockSpec((1, hp, hp, cin_pad), lambda n: (n, 0, 0, 0))

    def full(a):
        return pl.BlockSpec(a.shape, lambda n: (0,) * a.ndim)

    out2d = pl.pallas_call(
        kernel,
        out_shape=jax.ShapeDtypeStruct((N, h_out * h_out, C), jnp.float32),
        grid=(N,),
        in_specs=[phase_spec, phase_spec, phase_spec, phase_spec,
                  full(params["w0"]), full(params["b0"]),
                  full(params["dww"]), full(params["dwb"]),
                  full(params["pww"]), full(params["pwb"])],
        out_specs=pl.BlockSpec((1, h_out * h_out, C), lambda n: (n, 0, 0)),
        scratch_shapes=(
            [pltpu.VMEM((m0, 9 * cin_pad), jnp.float32),   # conv0 im2col block
             pltpu.VMEM((m0, C), jnp.float32)]             # flat dw -> pw staging
            + [pltpu.VMEM((ps, ps, C), jnp.float32) for ps in pad_sizes]),
        compiler_params=pltpu.CompilerParams(
            dimension_semantics=("parallel",)),
    )(*phases, params["w0"], params["b0"], params["dww"], params["dwb"],
      params["pww"], params["pwb"])

    out = out2d.reshape(N, h_out, h_out, C)[..., :params["cout"]]      # drop chan padding
    return jnp.transpose(out, (0, 3, 1, 2))                            # NHWC -> NCHW


if __name__ == "__main__":
    key = jax.random.PRNGKey(0)
    key, kx, kp = jax.random.split(key, 3)
    x = jax.random.normal(kx, (2, 3, 16, 16), jnp.float32)   # NCHW, like the PyTorch module
    params = init_mobilenet_params(kp, in_channels=3, width=0.125)
    out = jax.jit(lambda a: mobilenet_forward(a, params))(x)
    jax.block_until_ready(out)
    assert out.shape == (2, 128, 1, 1), out.shape
    assert bool(jnp.all(jnp.isfinite(out)))
    print("KERNEL_OK")
</pallas_src>

<mosaic_0001>
module attributes {stable_mosaic.version = 11 : i64} {
  func.func @kernel(%arg0: i32, %arg1: memref<1x9x9x128xf32, #tpu.memory_space<vmem>>, %arg2: memref<1x9x9x128xf32, #tpu.memory_space<vmem>>, %arg3: memref<1x9x9x128xf32, #tpu.memory_space<vmem>>, %arg4: memref<1x9x9x128xf32, #tpu.memory_space<vmem>>, %arg5: memref<1152x128xbf16, #tpu.memory_space<vmem>>, %arg6: memref<1x128xf32, #tpu.memory_space<vmem>>, %arg7: memref<117x128xf32, #tpu.memory_space<vmem>>, %arg8: memref<13x128xf32, #tpu.memory_space<vmem>>, %arg9: memref<13x128x128xbf16, #tpu.memory_space<vmem>>, %arg10: memref<13x128xf32, #tpu.memory_space<vmem>>, %arg11: memref<1x1x128xf32, #tpu.memory_space<vmem>>, %arg12: memref<64x1152xf32, #tpu.memory_space<vmem>>, %arg13: memref<64x128xf32, #tpu.memory_space<vmem>>, %arg14: memref<10x10x128xf32, #tpu.memory_space<vmem>>, %arg15: memref<6x6x128xf32, #tpu.memory_space<vmem>>, %arg16: memref<4x4x128xf32, #tpu.memory_space<vmem>>) attributes {dimension_semantics = [#tpu.dimension_semantics<parallel>], iteration_bounds = array<i64: 2>, scalar_prefetch = 0 : i64, scratch_operands = 5 : i64, tpu.core_type = #tpu.core_type<tc>, window_params = [{transform_indices = @transform_0, window_bounds = array<i64: 1, 9, 9, 128>}, {transform_indices = @transform_1, window_bounds = array<i64: 1, 9, 9, 128>}, {transform_indices = @transform_2, window_bounds = array<i64: 1, 9, 9, 128>}, {transform_indices = @transform_3, window_bounds = array<i64: 1, 9, 9, 128>}, {pipeline_mode = #tpu.pipeline_mode<synchronous>, transform_indices = @transform_4, window_bounds = array<i64: 1152, 128>}, {pipeline_mode = #tpu.pipeline_mode<synchronous>, transform_indices = @transform_5, window_bounds = array<i64: 1, 128>}, {pipeline_mode = #tpu.pipeline_mode<synchronous>, transform_indices = @transform_6, window_bounds = array<i64: 117, 128>}, {pipeline_mode = #tpu.pipeline_mode<synchronous>, transform_indices = @transform_7, window_bounds = array<i64: 13, 128>}, {pipeline_mode = #tpu.pipeline_mode<synchronous>, transform_indices = @transform_8, window_bounds = array<i64: 13, 128, 128>}, {pipeline_mode = #tpu.pipeline_mode<synchronous>, transform_indices = @transform_9, window_bounds = array<i64: 13, 128>}, {transform_indices = @transform_10, window_bounds = array<i64: 1, 1, 128>}]} {
    %cst = arith.constant 0.000000e+00 : f32
    %0 = vector.broadcast %cst : f32 to vector<10x10x128xf32>
    %c0 = arith.constant 0 : index
    %c0_0 = arith.constant 0 : index
    %c0_1 = arith.constant 0 : index
    %1 = vector.load %arg14[%c0, %c0_0, %c0_1] : memref<10x10x128xf32, #tpu.memory_space<vmem>>, vector<10x10x128xf32>
    tpu.vector_store %arg14[%c0, %c0_0, %c0_1], %0 {strides = array<i32>} : memref<10x10x128xf32, #tpu.memory_space<vmem>>, vector<10x10x128xf32>,
    %cst_2 = arith.constant 0.000000e+00 : f32
    %2 = vector.broadcast %cst_2 : f32 to vector<6x6x128xf32>
    %c0_3 = arith.constant 0 : index
    %c0_4 = arith.constant 0 : index
    %c0_5 = arith.constant 0 : index
    %3 = vector.load %arg15[%c0_3, %c0_4, %c0_5] : memref<6x6x128xf32, #tpu.memory_space<vmem>>, vector<6x6x128xf32>
    tpu.vector_store %arg15[%c0_3, %c0_4, %c0_5], %2 {strides = array<i32>} : memref<6x6x128xf32, #tpu.memory_space<vmem>>, vector<6x6x128xf32>,
    %cst_6 = arith.constant 0.000000e+00 : f32
    %4 = vector.broadcast %cst_6 : f32 to vector<4x4x128xf32>
    %c0_7 = arith.constant 0 : index
    %c0_8 = arith.constant 0 : index
    %c0_9 = arith.constant 0 : index
    %5 = vector.load %arg16[%c0_7, %c0_8, %c0_9] : memref<4x4x128xf32, #tpu.memory_space<vmem>>, vector<4x4x128xf32>
    tpu.vector_store %arg16[%c0_7, %c0_8, %c0_9], %4 {strides = array<i32>} : memref<4x4x128xf32, #tpu.memory_space<vmem>>, vector<4x4x128xf32>,
    %c0_10 = arith.constant 0 : index
    %c0_11 = arith.constant 0 : index
    %c0_12 = arith.constant 0 : index
    %c0_13 = arith.constant 0 : index
    %6 = vector.load %arg1[%c0_10, %c0_11, %c0_12, %c0_13] : memref<1x9x9x128xf32, #tpu.memory_space<vmem>>, vector<1x1x8x128xf32>
    %7 = vector.shape_cast %6 : vector<1x1x8x128xf32> to vector<8x128xf32>
    %c0_14 = arith.constant 0 : index
    %c0_15 = arith.constant 0 : index
    %8 = vector.load %arg12[%c0_14, %c0_15] : memref<64x1152xf32, #tpu.memory_space<vmem>>, vector<8x128xf32>
    tpu.vector_store %arg12[%c0_14, %c0_15], %7 {strides = array<i32>} : memref<64x1152xf32, #tpu.memory_space<vmem>>, vector<8x128xf32>,
    %c0_16 = arith.constant 0 : index
    %c1 = arith.constant 1 : index
    %c0_17 = arith.constant 0 : index
    %c0_18 = arith.constant 0 : index
    %9 = vector.load %arg1[%c0_16, %c1, %c0_17, %c0_18] : memref<1x9x9x128xf32, #tpu.memory_space<vmem>>, vector<1x1x8x128xf32>
    %10 = vector.shape_cast %9 : vector<1x1x8x128xf32> to vector<8x128xf32>
    %c8 = arith.constant 8 : index
    %c0_19 = arith.constant 0 : index
    %11 = vector.load %arg12[%c8, %c0_19] : memref<64x1152xf32, #tpu.memory_space<vmem>>, vector<8x128xf32>
    tpu.vector_store %arg12[%c8, %c0_19], %10 {strides = array<i32>} : memref<64x1152xf32, #tpu.memory_space<vmem>>, vector<8x128xf32>,
    %c0_20 = arith.constant 0 : index
    %c2 = arith.constant 2 : index
    %c0_21 = arith.constant 0 : index
    %c0_22 = arith.constant 0 : index
    %12 = vector.load %arg1[%c0_20, %c2, %c0_21, %c0_22] : memref<1x9x9x128xf32, #tpu.memory_space<vmem>>, vector<1x1x8x128xf32>
    %13 = vector.shape_cast %12 : vector<1x1x8x128xf32> to vector<8x128xf32>
    %c16 = arith.constant 16 : index
    %c0_23 = arith.constant 0 : index
    %14 = vector.load %arg12[%c16, %c0_23] : memref<64x1152xf32, #tpu.memory_space<vmem>>, vector<8x128xf32>
    tpu.vector_store %arg12[%c16, %c0_23], %13 {strides = array<i32>} : memref<64x1152xf32, #tpu.memory_space<vmem>>, vector<8x128xf32>,
    %c0_24 = arith.constant 0 : index
    %c3 = arith.constant 3 : index
    %c0_25 = arith.constant 0 : index
    %c0_26 = arith.constant 0 : index
    %15 = vector.load %arg1[%c0_24, %c3, %c0_25, %c0_26] : memref<1x9x9x128xf32, #tpu.memory_space<vmem>>, vector<1x1x8x128xf32>
    %16 = vector.shape_cast %15 : vector<1x1x8x128xf32> to vector<8x128xf32>
    %c24 = arith.constant 24 : index
    %c0_27 = arith.constant 0 : index
    %17 = vector.load %arg12[%c24, %c0_27] : memref<64x1152xf32, #tpu.memory_space<vmem>>, vector<8x128xf32>
    tpu.vector_store %arg12[%c24, %c0_27], %16 {strides = array<i32>} : memref<64x1152xf32, #tpu.memory_space<vmem>>, vector<8x128xf32>,
    %c0_28 = arith.constant 0 : index
    %c4 = arith.constant 4 : index
    %c0_29 = arith.constant 0 : index
    %c0_30 = arith.constant 0 : index
    %18 = vector.load %arg1[%c0_28, %c4, %c0_29, %c0_30] : memref<1x9x9x128xf32, #tpu.memory_space<vmem>>, vector<1x1x8x128xf32>
    %19 = vector.shape_cast %18 : vector<1x1x8x128xf32> to vector<8x128xf32>
    %c32 = arith.constant 32 : index
    %c0_31 = arith.constant 0 : index
    %20 = vector.load %arg12[%c32, %c0_31] : memref<64x1152xf32, #tpu.memory_space<vmem>>, vector<8x128xf32>
    tpu.vector_store %arg12[%c32, %c0_31], %19 {strides = array<i32>} : memref<64x1152xf32, #tpu.memory_space<vmem>>, vector<8x128xf32>,
    %c0_32 = arith.constant 0 : index
    %c5 = arith.constant 5 : index
    %c0_33 = arith.constant 0 : index
    %c0_34 = arith.constant 0 : index
    %21 = vector.load %arg1[%c0_32, %c5, %c0_33, %c0_34] : memref<1x9x9x128xf32, #tpu.memory_space<vmem>>, vector<1x1x8x128xf32>
    %22 = vector.shape_cast %21 : vector<1x1x8x128xf32> to vector<8x128xf32>
    %c40 = arith.constant 40 : index
    %c0_35 = arith.constant 0 : index
    %23 = vector.load %arg12[%c40, %c0_35] : memref<64x1152xf32, #tpu.memory_space<vmem>>, vector<8x128xf32>
    tpu.vector_store %arg12[%c40, %c0_35], %22 {strides = array<i32>} : memref<64x1152xf32, #tpu.memory_space<vmem>>, vector<8x128xf32>,
    %c0_36 = arith.constant 0 : index
    %c6 = arith.constant 6 : index
    %c0_37 = arith.constant 0 : index
    %c0_38 = arith.constant 0 : index
    %24 = vector.load %arg1[%c0_36, %c6, %c0_37, %c0_38] : memref<1x9x9x128xf32, #tpu.memory_space<vmem>>, vector<1x1x8x128xf32>
    %25 = vector.shape_cast %24 : vector<1x1x8x128xf32> to vector<8x128xf32>
    %c48 = arith.constant 48 : index
    %c0_39 = arith.constant 0 : index
    %26 = vector.load %arg12[%c48, %c0_39] : memref<64x1152xf32, #tpu.memory_space<vmem>>, vector<8x128xf32>
    tpu.vector_store %arg12[%c48, %c0_39], %25 {strides = array<i32>} : memref<64x1152xf32, #tpu.memory_space<vmem>>, vector<8x128xf32>,
    %c0_40 = arith.constant 0 : index
    %c7 = arith.constant 7 : index
    %c0_41 = arith.constant 0 : index
    %c0_42 = arith.constant 0 : index
    %27 = vector.load %arg1[%c0_40, %c7, %c0_41, %c0_42] : memref<1x9x9x128xf32, #tpu.memory_space<vmem>>, vector<1x1x8x128xf32>
    %28 = vector.shape_cast %27 : vector<1x1x8x128xf32> to vector<8x128xf32>
    %c56 = arith.constant 56 : index
    %c0_43 = arith.constant 0 : index
    %29 = vector.load %arg12[%c56, %c0_43] : memref<64x1152xf32, #tpu.memory_space<vmem>>, vector<8x128xf32>
    tpu.vector_store %arg12[%c56, %c0_43], %28 {strides = array<i32>} : memref<64x1152xf32, #tpu.memory_space<vmem>>, vector<8x128xf32>,
    %c0_44 = arith.constant 0 : index
    %c0_45 = arith.constant 0 : index
    %c0_46 = arith.constant 0 : index
    %c0_47 = arith.constant 0 : index
    %30 = vector.load %arg2[%c0_44, %c0_45, %c0_46, %c0_47] : memref<1x9x9x128xf32, #tpu.memory_space<vmem>>, vector<1x1x8x128xf32>
    %31 = vector.shape_cast %30 : vector<1x1x8x128xf32> to vector<8x128xf32>
    %c0_48 = arith.constant 0 : index
    %c128 = arith.constant 128 : index
    %32 = vector.load %arg12[%c0_48, %c128] : memref<64x1152xf32, #tpu.memory_space<vmem>>, vector<8x128xf32>
    tpu.vector_store %arg12[%c0_48, %c128], %31 {strides = array<i32>} : memref<64x1152xf32, #tpu.memory_space<vmem>>, vector<8x128xf32>,
    %c0_49 = arith.constant 0 : index
    %c1_50 = arith.constant 1 : index
    %c0_51 = arith.constant 0 : index
    %c0_52 = arith.constant 0 : index
    %33 = vector.load %arg2[%c0_49, %c1_50, %c0_51, %c0_52] : memref<1x9x9x128xf32, #tpu.memory_space<vmem>>, vector<1x1x8x128xf32>
    %34 = vector.shape_cast %33 : vector<1x1x8x128xf32> to vector<8x128xf32>
    %c8_53 = arith.constant 8 : index
    %c128_54 = arith.constant 128 : index
    %35 = vector.load %arg12[%c8_53, %c128_54] : memref<64x1152xf32, #tpu.memory_space<vmem>>, vector<8x128xf32>
    tpu.vector_store %arg12[%c8_53, %c128_54], %34 {strides = array<i32>} : memref<64x1152xf32, #tpu.memory_space<vmem>>, vector<8x128xf32>,
    %c0_55 = arith.constant 0 : index
    %c2_56 = arith.constant 2 : index
    %c0_57 = arith.constant 0 : index
    %c0_58 = arith.constant 0 : index
    %36 = vector.load %arg2[%c0_55, %c2_56, %c0_57, %c0_58] : memref<1x9x9x128xf32, #tpu.memory_space<vmem>>, vector<1x1x8x128xf32>
    %37 = vector.shape_cast %36 : vector<1x1x8x128xf32> to vector<8x128xf32>
    %c16_59 = arith.constant 16 : index
    %c128_60 = arith.constant 128 : index
    %38 = vector.load %arg12[%c16_59, %c128_60] : memref<64x1152xf32, #tpu.memory_space<vmem>>, vector<8x128xf32>
    tpu.vector_store %arg12[%c16_59, %c128_60], %37 {strides = array<i32>} : memref<64x1152xf32, #tpu.memory_space<vmem>>, vector<8x128xf32>,
    %c0_61 = arith.constant 0 : index
    %c3_62 = arith.constant 3 : index
    %c0_63 = arith.constant 0 : index
    %c0_64 = arith.constant 0 : index
    %39 = vector.load %arg2[%c0_61, %c3_62, %c0_63, %c0_64] : memref<1x9x9x128xf32, #tpu.memory_space<vmem>>, vector<1x1x8x128xf32>
    %40 = vector.shape_cast %39 : vector<1x1x8x128xf32> to vector<8x128xf32>
    %c24_65 = arith.constant 24 : index
    %c128_66 = arith.constant 128 : index
    %41 = vector.load %arg12[%c24_65, %c128_66] : memref<64x1152xf32, #tpu.memory_space<vmem>>, vector<8x128xf32>
    tpu.vector_store %arg12[%c24_65, %c128_66], %40 {strides = array<i32>} : memref<64x1152xf32, #tpu.memory_space<vmem>>, vector<8x128xf32>,
    %c0_67 = arith.constant 0 : index
    %c4_68 = arith.constant 4 : index
    %c0_69 = arith.constant 0 : index
    %c0_70 = arith.constant 0 : index
    %42 = vector.load %arg2[%c0_67, %c4_68, %c0_69, %c0_70] : memref<1x9x9x128xf32, #tpu.memory_space<vmem>>, vector<1x1x8x128xf32>
    %43 = vector.shape_cast %42 : vector<1x1x8x128xf32> to vector<8x128xf32>
    %c32_71 = arith.constant 32 : index
    %c128_72 = arith.constant 128 : index
    %44 = vector.load %arg12[%c32_71, %c128_72] : memref<64x1152xf32, #tpu.memory_space<vmem>>, vector<8x128xf32>
    tpu.vector_store %arg12[%c32_71, %c128_72], %43 {strides = array<i32>} : memref<64x1152xf32, #tpu.memory_space<vmem>>, vector<8x128xf32>,
    %c0_73 = arith.constant 0 : index
    %c5_74 = arith.constant 5 : index
    %c0_75 = arith.constant 0 : index
    %c0_76 = arith.constant 0 : index
    %45 = vector.load %arg2[%c0_73, %c5_74, %c0_75, %c0_76] : memref<1x9x9x128xf32, #tpu.memory_space<vmem>>, vector<1x1x8x128xf32>
    %46 = vector.shape_cast %45 : vector<1x1x8x128xf32> to vector<8x128xf32>
    %c40_77 = arith.constant 40 : index
    %c128_78 = arith.constant 128 : index
    %47 = vector.load %arg12[%c40_77, %c128_78] : memref<64x1152xf32, #tpu.memory_space<vmem>>, vector<8x128xf32>
    tpu.vector_store %arg12[%c40_77, %c128_78], %46 {strides = array<i32>} : memref<64x1152xf32, #tpu.memory_space<vmem>>, vector<8x128xf32>,
    %c0_79 = arith.constant 0 : index
    %c6_80 = arith.constant 6 : index
    %c0_81 = arith.constant 0 : index
    %c0_82 = arith.constant 0 : index
    %48 = vector.load %arg2[%c0_79, %c6_80, %c0_81, %c0_82] : memref<1x9x9x128xf32, #tpu.memory_space<vmem>>, vector<1x1x8x128xf32>
    %49 = vector.shape_cast %48 : vector<1x1x8x128xf32> to vector<8x128xf32>
    %c48_83 = arith.constant 48 : index
    %c128_84 = arith.constant 128 : index
    %50 = vector.load %arg12[%c48_83, %c128_84] : memref<64x1152xf32, #tpu.memory_space<vmem>>, vector<8x128xf32>
    tpu.vector_store %arg12[%c48_83, %c128_84], %49 {strides = array<i32>} : memref<64x1152xf32, #tpu.memory_space<vmem>>, vector<8x128xf32>,
    %c0_85 = arith.constant 0 : index
    %c7_86 = arith.constant 7 : index
    %c0_87 = arith.constant 0 : index
    %c0_88 = arith.constant 0 : index
    %51 = vector.load %arg2[%c0_85, %c7_86, %c0_87, %c0_88] : memref<1x9x9x128xf32, #tpu.memory_space<vmem>>, vector<1x1x8x128xf32>
    %52 = vector.shape_cast %51 : vector<1x1x8x128xf32> to vector<8x128xf32>
    %c56_89 = arith.constant 56 : index
    %c128_90 = arith.constant 128 : index
    %53 = vector.load %arg12[%c56_89, %c128_90] : memref<64x1152xf32, #tpu.memory_space<vmem>>, vector<8x128xf32>
    tpu.vector_store %arg12[%c56_89, %c128_90], %52 {strides = array<i32>} : memref<64x1152xf32, #tpu.memory_space<vmem>>, vector<8x128xf32>,
    %c0_91 = arith.constant 0 : index
    %c0_92 = arith.constant 0 : index
    %c1_93 = arith.constant 1 : index
    %c0_94 = arith.constant 0 : index
    %54 = vector.load %arg1[%c0_91, %c0_92, %c1_93, %c0_94] : memref<1x9x9x128xf32, #tpu.memory_space<vmem>>, vector<1x1x8x128xf32>
    %55 = vector.shape_cast %54 : vector<1x1x8x128xf32> to vector<8x128xf32>
    %c0_95 = arith.constant 0 : index
    %c256 = arith.constant 256 : index
    %56 = vector.load %arg12[%c0_95, %c256] : memref<64x1152xf32, #tpu.memory_space<vmem>>, vector<8x128xf32>
    tpu.vector_store %arg12[%c0_95, %c256], %55 {strides = array<i32>} : memref<64x1152xf32, #tpu.memory_space<vmem>>, vector<8x128xf32>,
    %c0_96 = arith.constant 0 : index
    %c1_97 = arith.constant 1 : index
    %c1_98 = arith.constant 1 : index
    %c0_99 = arith.constant 0 : index
    %57 = vector.load %arg1[%c0_96, %c1_97, %c1_98, %c0_99] : memref<1x9x9x128xf32, #tpu.memory_space<vmem>>, vector<1x1x8x128xf32>
    %58 = vector.shape_cast %57 : vector<1x1x8x128xf32> to vector<8x128xf32>
    %c8_100 = arith.constant 8 : index
    %c256_101 = arith.constant 256 : index
    %59 = vector.load %arg12[%c8_100, %c256_101] : memref<64x1152xf32, #tpu.memory_space<vmem>>, vector<8x128xf32>
    tpu.vector_store %arg12[%c8_100, %c256_101], %58 {strides = array<i32>} : memref<64x1152xf32, #tpu.memory_space<vmem>>, vector<8x128xf32>,
    %c0_102 = arith.constant 0 : index
    %c2_103 = arith.constant 2 : index
    %c1_104 = arith.constant 1 : index
    %c0_105 = arith.constant 0 : index
    %60 = vector.load %arg1[%c0_102, %c2_103, %c1_104, %c0_105] : memref<1x9x9x128xf32, #tpu.memory_space<vmem>>, vector<1x1x8x128xf32>
    %61 = vector.shape_cast %60 : vector<1x1x8x128xf32> to vector<8x128xf32>
    %c16_106 = arith.constant 16 : index
    %c256_107 = arith.constant 256 : index
    %62 = vector.load %arg12[%c16_106, %c256_107] : memref<64x1152xf32, #tpu.memory_space<vmem>>, vector<8x128xf32>
    tpu.vector_store %arg12[%c16_106, %c256_107], %61 {strides = array<i32>} : memref<64x1152xf32, #tpu.memory_space<vmem>>, vector<8x128xf32>,
    %c0_108 = arith.constant 0 : index
    %c3_109 = arith.constant 3 : index
    %c1_110 = arith.constant 1 : index
    %c0_111 = arith.constant 0 : index
    %63 = vector.load %arg1[%c0_108, %c3_109, %c1_110, %c0_111] : memref<1x9x9x128xf32, #tpu.memory_space<vmem>>, vector<1x1x8x128xf32>
    %64 = vector.shape_cast %63 : vector<1x1x8x128xf32> to vector<8x128xf32>
    %c24_112 = arith.constant 24 : index
    %c256_113 = arith.constant 256 : index
    %65 = vector.load %arg12[%c24_112, %c256_113] : memref<64x1152xf32, #tpu.memory_space<vmem>>, vector<8x128xf32>
    tpu.vector_store %arg12[%c24_112, %c256_113], %64 {strides = array<i32>} : memref<64x1152xf32, #tpu.memory_space<vmem>>, vector<8x128xf32>,
    %c0_114 = arith.constant 0 : index
    %c4_115 = arith.constant 4 : index
    %c1_116 = arith.constant 1 : index
    %c0_117 = arith.constant 0 : index
    %66 = vector.load %arg1[%c0_114, %c4_115, %c1_116, %c0_117] : memref<1x9x9x128xf32, #tpu.memory_space<vmem>>, vector<1x1x8x128xf32>
    %67 = vector.shape_cast %66 : vector<1x1x8x128xf32> to vector<8x128xf32>
    %c32_118 = arith.constant 32 : index
    %c256_119 = arith.constant 256 : index
    %68 = vector.load %arg12[%c32_118, %c256_119] : memref<64x1152xf32, #tpu.memory_space<vmem>>, vector<8x128xf32>
    tpu.vector_store %arg12[%c32_118, %c256_119], %67 {strides = array<i32>} : memref<64x1152xf32, #tpu.memory_space<vmem>>, vector<8x128xf32>,
    %c0_120 = arith.constant 0 : index
    %c5_121 = arith.constant 5 : index
    %c1_122 = arith.constant 1 : index
    %c0_123 = arith.constant 0 : index
    %69 = vector.load %arg1[%c0_120, %c5_121, %c1_122, %c0_123] : memref<1x9x9x128xf32, #tpu.memory_space<vmem>>, vector<1x1x8x128xf32>
    %70 = vector.shape_cast %69 : vector<1x1x8x128xf32> to vector<8x128xf32>
    %c40_124 = arith.constant 40 : index
    %c256_125 = arith.constant 256 : index
    %71 = vector.load %arg12[%c40_124, %c256_125] : memref<64x1152xf32, #tpu.memory_space<vmem>>, vector<8x128xf32>
    tpu.vector_store %arg12[%c40_124, %c256_125], %70 {strides = array<i32>} : memref<64x1152xf32, #tpu.memory_space<vmem>>, vector<8x128xf32>,
    %c0_126 = arith.constant 0 : index
    %c6_127 = arith.constant 6 : index
    %c1_128 = arith.constant 1 : index
    %c0_129 = arith.constant 0 : index
    %72 = vector.load %arg1[%c0_126, %c6_127, %c1_128, %c0_129] : memref<1x9x9x128xf32, #tpu.memory_space<vmem>>, vector<1x1x8x128xf32>
    %73 = vector.shape_cast %72 : vector<1x1x8x128xf32> to vector<8x128xf32>
    %c48_130 = arith.constant 48 : index
    %c256_131 = arith.constant 256 : index
    %74 = vector.load %arg12[%c48_130, %c256_131] : memref<64x1152xf32, #tpu.memory_space<vmem>>, vector<8x128xf32>
    tpu.vector_store %arg12[%c48_130, %c256_131], %73 {strides = array<i32>} : memref<64x1152xf32, #tpu.memory_space<vmem>>, vector<8x128xf32>,
    %c0_132 = arith.constant 0 : index
    %c7_133 = arith.constant 7 : index
    %c1_134 = arith.constant 1 : index
    %c0_135 = arith.constant 0 : index
    %75 = vector.load %arg1[%c0_132, %c7_133, %c1_134, %c0_135] : memref<1x9x9x128xf32, #tpu.memory_space<vmem>>, vector<1x1x8x128xf32>
    %76 = vector.shape_cast %75 : vector<1x1x8x128xf32> to vector<8x128xf32>
    %c56_136 = arith.constant 56 : index
    %c256_137 = arith.constant 256 : index
    %77 = vector.load %arg12[%c56_136, %c256_137] : memref<64x1152xf32, #tpu.memory_space<vmem>>, vector<8x128xf32>
    tpu.vector_store %arg12[%c56_136, %c256_137], %76 {strides = array<i32>} : memref<64x1152xf32, #tpu.memory_space<vmem>>, vector<8x128xf32>,
    %c0_138 = arith.constant 0 : index
    %c0_139 = arith.constant 0 : index
    %c0_140 = arith.constant 0 : index
    %c0_141 = arith.constant 0 : index
    %78 = vector.load %arg3[%c0_138, %c0_139, %c0_140, %c0_141] : memref<1x9x9x128xf32, #tpu.memory_space<vmem>>, vector<1x1x8x128xf32>
    %79 = vector.shape_cast %78 : vector<1x1x8x128xf32> to vector<8x128xf32>
    %c0_142 = arith.constant 0 : index
    %c384 = arith.constant 384 : index
    %80 = vector.load %arg12[%c0_142, %c384] : memref<64x1152xf32, #tpu.memory_space<vmem>>, vector<8x128xf32>
    tpu.vector_store %arg12[%c0_142, %c384], %79 {strides = array<i32>} : memref<64x1152xf32, #tpu.memory_space<vmem>>, vector<8x128xf32>,
    %c0_143 = arith.constant 0 : index
    %c1_144 = arith.constant 1 : index
    %c0_145 = arith.constant 0 : index
    %c0_146 = arith.constant 0 : index
    %81 = vector.load %arg3[%c0_143, %c1_144, %c0_145, %c0_146] : memref<1x9x9x128xf32, #tpu.memory_space<vmem>>, vector<1x1x8x128xf32>
    %82 = vector.shape_cast %81 : vector<1x1x8x128xf32> to vector<8x128xf32>
    %c8_147 = arith.constant 8 : index
    %c384_148 = arith.constant 384 : index
    %83 = vector.load %arg12[%c8_147, %c384_148] : memref<64x1152xf32, #tpu.memory_space<vmem>>, vector<8x128xf32>
    tpu.vector_store %arg12[%c8_147, %c384_148], %82 {strides = array<i32>} : memref<64x1152xf32, #tpu.memory_space<vmem>>, vector<8x128xf32>,
    %c0_149 = arith.constant 0 : index
    %c2_150 = arith.constant 2 : index
    %c0_151 = arith.constant 0 : index
    %c0_152 = arith.constant 0 : index
    %84 = vector.load %arg3[%c0_149, %c2_150, %c0_151, %c0_152] : memref<1x9x9x128xf32, #tpu.memory_space<vmem>>, vector<1x1x8x128xf32>
    %85 = vector.shape_cast %84 : vector<1x1x8x128xf32> to vector<8x128xf32>
    %c16_153 = arith.constant 16 : index
    %c384_154 = arith.constant 384 : index
    %86 = vector.load %arg12[%c16_153, %c384_154] : memref<64x1152xf32, #tpu.memory_space<vmem>>, vector<8x128xf32>
    tpu.vector_store %arg12[%c16_153, %c384_154], %85 {strides = array<i32>} : memref<64x1152xf32, #tpu.memory_space<vmem>>, vector<8x128xf32>,
    %c0_155 = arith.constant 0 : index
    %c3_156 = arith.constant 3 : index
    %c0_157 = arith.constant 0 : index
    %c0_158 = arith.constant 0 : index
    %87 = vector.load %arg3[%c0_155, %c3_156, %c0_157, %c0_158] : memref<1x9x9x128xf32, #tpu.memory_space<vmem>>, vector<1x1x8x128xf32>
    %88 = vector.shape_cast %87 : vector<1x1x8x128xf32> to vector<8x128xf32>
    %c24_159 = arith.constant 24 : index
    %c384_160 = arith.constant 384 : index
    %89 = vector.load %arg12[%c24_159, %c384_160] : memref<64x1152xf32, #tpu.memory_space<vmem>>, vector<8x128xf32>
    tpu.vector_store %arg12[%c24_159, %c384_160], %88 {strides = array<i32>} : memref<64x1152xf32, #tpu.memory_space<vmem>>, vector<8x128xf32>,
    %c0_161 = arith.constant 0 : index
    %c4_162 = arith.constant 4 : index
    %c0_163 = arith.constant 0 : index
    %c0_164 = arith.constant 0 : index
    %90 = vector.load %arg3[%c0_161, %c4_162, %c0_163, %c0_164] : memref<1x9x9x128xf32, #tpu.memory_space<vmem>>, vector<1x1x8x128xf32>
    %91 = vector.shape_cast %90 : vector<1x1x8x128xf32> to vector<8x128xf32>
    %c32_165 = arith.constant 32 : index
    %c384_166 = arith.constant 384 : index
    %92 = vector.load %arg12[%c32_165, %c384_166] : memref<64x1152xf32, #tpu.memory_space<vmem>>, vector<8x128xf32>
    tpu.vector_store %arg12[%c32_165, %c384_166], %91 {strides = array<i32>} : memref<64x1152xf32, #tpu.memory_space<vmem>>, vector<8x128xf32>,
    %c0_167 = arith.constant 0 : index
    %c5_168 = arith.constant 5 : index
    %c0_169 = arith.constant 0 : index
    %c0_170 = arith.constant 0 : index
    %93 = vector.load %arg3[%c0_167, %c5_168, %c0_169, %c0_170] : memref<1x9x9x128xf32, #tpu.memory_space<vmem>>, vector<1x1x8x128xf32>
    %94 = vector.shape_cast %93 : vector<1x1x8x128xf32> to vector<8x128xf32>
    %c40_171 = arith.constant 40 : index
    %c384_172 = arith.constant 384 : index
    %95 = vector.load %arg12[%c40_171, %c384_172] : memref<64x1152xf32, #tpu.memory_space<vmem>>, vector<8x128xf32>
    tpu.vector_store %arg12[%c40_171, %c384_172], %94 {strides = array<i32>} : memref<64x1152xf32, #tpu.memory_space<vmem>>, vector<8x128xf32>,
    %c0_173 = arith.constant 0 : index
    %c6_174 = arith.constant 6 : index
    %c0_175 = arith.constant 0 : index
    %c0_176 = arith.constant 0 : index
    %96 = vector.load %arg3[%c0_173, %c6_174, %c0_175, %c0_176] : memref<1x9x9x128xf32, #tpu.memory_space<vmem>>, vector<1x1x8x128xf32>
    %97 = vector.shape_cast %96 : vector<1x1x8x128xf32> to vector<8x128xf32>
    %c48_177 = arith.constant 48 : index
    %c384_178 = arith.constant 384 : index
    %98 = vector.load %arg12[%c48_177, %c384_178] : memref<64x1152xf32, #tpu.memory_space<vmem>>, vector<8x128xf32>
    tpu.vector_store %arg12[%c48_177, %c384_178], %97 {strides = array<i32>} : memref<64x1152xf32, #tpu.memory_space<vmem>>, vector<8x128xf32>,
    %c0_179 = arith.constant 0 : index
    %c7_180 = arith.constant 7 : index
    %c0_181 = arith.constant 0 : index
    %c0_182 = arith.constant 0 : index
    %99 = vector.load %arg3[%c0_179, %c7_180, %c0_181, %c0_182] : memref<1x9x9x128xf32, #tpu.memory_space<vmem>>, vector<1x1x8x128xf32>
    %100 = vector.shape_cast %99 : vector<1x1x8x128xf32> to vector<8x128xf32>
    %c56_183 = arith.constant 56 : index
    %c384_184 = arith.constant 384 : index
    %101 = vector.load %arg12[%c56_183, %c384_184] : memref<64x1152xf32, #tpu.memory_space<vmem>>, vector<8x128xf32>
    tpu.vector_store %arg12[%c56_183, %c384_184], %100 {strides = array<i32>} : memref<64x1152xf32, #tpu.memory_space<vmem>>, vector<8x128xf32>,
    %c0_185 = arith.constant 0 : index
    %c0_186 = arith.constant 0 : index
    %c0_187 = arith.constant 0 : index
    %c0_188 = arith.constant 0 : index
    %102 = vector.load %arg4[%c0_185, %c0_186, %c0_187, %c0_188] : memref<1x9x9x128xf32, #tpu.memory_space<vmem>>, vector<1x1x8x128xf32>
    %103 = vector.shape_cast %102 : vector<1x1x8x128xf32> to vector<8x128xf32>
    %c0_189 = arith.constant 0 : index
    %c512 = arith.constant 512 : index
    %104 = vector.load %arg12[%c0_189, %c512] : memref<64x1152xf32, #tpu.memory_space<vmem>>, vector<8x128xf32>
    tpu.vector_store %arg12[%c0_189, %c512], %103 {strides = array<i32>} : memref<64x1152xf32, #tpu.memory_space<vmem>>, vector<8x128xf32>,
    %c0_190 = arith.constant 0 : index
    %c1_191 = arith.constant 1 : index
    %c0_192 = arith.constant 0 : index
    %c0_193 = arith.constant 0 : index
    %105 = vector.load %arg4[%c0_190, %c1_191, %c0_192, %c0_193] : memref<1x9x9x128xf32, #tpu.memory_space<vmem>>, vector<1x1x8x128xf32>
    %106 = vector.shape_cast %105 : vector<1x1x8x128xf32> to vector<8x128xf32>
    %c8_194 = arith.constant 8 : index
    %c512_195 = arith.constant 512 : index
    %107 = vector.load %arg12[%c8_194, %c512_195] : memref<64x1152xf32, #tpu.memory_space<vmem>>, vector<8x128xf32>
    tpu.vector_store %arg12[%c8_194, %c512_195], %106 {strides = array<i32>} : memref<64x1152xf32, #tpu.memory_space<vmem>>, vector<8x128xf32>,
    %c0_196 = arith.constant 0 : index
    %c2_197 = arith.constant 2 : index
    %c0_198 = arith.constant 0 : index
    %c0_199 = arith.constant 0 : index
    %108 = vector.load %arg4[%c0_196, %c2_197, %c0_198, %c0_199] : memref<1x9x9x128xf32, #tpu.memory_space<vmem>>, vector<1x1x8x128xf32>
    %109 = vector.shape_cast %108 : vector<1x1x8x128xf32> to vector<8x128xf32>
    %c16_200 = arith.constant 16 : index
    %c512_201 = arith.constant 512 : index
    %110 = vector.load %arg12[%c16_200, %c512_201] : memref<64x1152xf32, #tpu.memory_space<vmem>>, vector<8x128xf32>
    tpu.vector_store %arg12[%c16_200, %c512_201], %109 {strides = array<i32>} : memref<64x1152xf32, #tpu.memory_space<vmem>>, vector<8x128xf32>,
    %c0_202 = arith.constant 0 : index
    %c3_203 = arith.constant 3 : index
    %c0_204 = arith.constant 0 : index
    %c0_205 = arith.constant 0 : index
    %111 = vector.load %arg4[%c0_202, %c3_203, %c0_204, %c0_205] : memref<1x9x9x128xf32, #tpu.memory_space<vmem>>, vector<1x1x8x128xf32>
    %112 = vector.shape_cast %111 : vector<1x1x8x128xf32> to vector<8x128xf32>
    %c24_206 = arith.constant 24 : index
    %c512_207 = arith.constant 512 : index
    %113 = vector.load %arg12[%c24_206, %c512_207] : memref<64x1152xf32, #tpu.memory_space<vmem>>, vector<8x128xf32>
    tpu.vector_store %arg12[%c24_206, %c512_207], %112 {strides = array<i32>} : memref<64x1152xf32, #tpu.memory_space<vmem>>, vector<8x128xf32>,
    %c0_208 = arith.constant 0 : index
    %c4_209 = arith.constant 4 : index
    %c0_210 = arith.constant 0 : index
    %c0_211 = arith.constant 0 : index
    %114 = vector.load %arg4[%c0_208, %c4_209, %c0_210, %c0_211] : memref<1x9x9x128xf32, #tpu.memory_space<vmem>>, vector<1x1x8x128xf32>
    %115 = vector.shape_cast %114 : vector<1x1x8x128xf32> to vector<8x128xf32>
    %c32_212 = arith.constant 32 : index
    %c512_213 = arith.constant 512 : index
    %116 = vector.load %arg12[%c32_212, %c512_213] : memref<64x1152xf32, #tpu.memory_space<vmem>>, vector<8x128xf32>
    tpu.vector_store %arg12[%c32_212, %c512_213], %115 {strides = array<i32>} : memref<64x1152xf32, #tpu.memory_space<vmem>>, vector<8x128xf32>,
    %c0_214 = arith.constant 0 : index
    %c5_215 = arith.constant 5 : index
    %c0_216 = arith.constant 0 : index
    %c0_217 = arith.constant 0 : index
    %117 = vector.load %arg4[%c0_214, %c5_215, %c0_216, %c0_217] : memref<1x9x9x128xf32, #tpu.memory_space<vmem>>, vector<1x1x8x128xf32>
    %118 = vector.shape_cast %117 : vector<1x1x8x128xf32> to vector<8x128xf32>
    %c40_218 = arith.constant 40 : index
    %c512_219 = arith.constant 512 : index
    %119 = vector.load %arg12[%c40_218, %c512_219] : memref<64x1152xf32, #tpu.memory_space<vmem>>, vector<8x128xf32>
    tpu.vector_store %arg12[%c40_218, %c512_219], %118 {strides = array<i32>} : memref<64x1152xf32, #tpu.memory_space<vmem>>, vector<8x128xf32>,
    %c0_220 = arith.constant 0 : index
    %c6_221 = arith.constant 6 : index
    %c0_222 = arith.constant 0 : index
    %c0_223 = arith.constant 0 : index
    %120 = vector.load %arg4[%c0_220, %c6_221, %c0_222, %c0_223] : memref<1x9x9x128xf32, #tpu.memory_space<vmem>>, vector<1x1x8x128xf32>
    %121 = vector.shape_cast %120 : vector<1x1x8x128xf32> to vector<8x128xf32>
    %c48_224 = arith.constant 48 : index
    %c512_225 = arith.constant 512 : index
    %122 = vector.load %arg12[%c48_224, %c512_225] : memref<64x1152xf32, #tpu.memory_space<vmem>>, vector<8x128xf32>
    tpu.vector_store %arg12[%c48_224, %c512_225], %121 {strides = array<i32>} : memref<64x1152xf32, #tpu.memory_space<vmem>>, vector<8x128xf32>,
    %c0_226 = arith.constant 0 : index
    %c7_227 = arith.constant 7 : index
    %c0_228 = arith.constant 0 : index
    %c0_229 = arith.constant 0 : index
    %123 = vector.load %arg4[%c0_226, %c7_227, %c0_228, %c0_229] : memref<1x9x9x128xf32, #tpu.memory_space<vmem>>, vector<1x1x8x128xf32>
    %124 = vector.shape_cast %123 : vector<1x1x8x128xf32> to vector<8x128xf32>
    %c56_230 = arith.constant 56 : index
    %c512_231 = arith.constant 512 : index
    %125 = vector.load %arg12[%c56_230, %c512_231] : memref<64x1152xf32, #tpu.memory_space<vmem>>, vector<8x128xf32>
    tpu.vector_store %arg12[%c56_230, %c512_231], %124 {strides = array<i32>} : memref<64x1152xf32, #tpu.memory_space<vmem>>, vector<8x128xf32>,
    %c0_232 = arith.constant 0 : index
    %c0_233 = arith.constant 0 : index
    %c1_234 = arith.constant 1 : index
    %c0_235 = arith.constant 0 : index
    %126 = vector.load %arg3[%c0_232, %c0_233, %c1_234, %c0_235] : memref<1x9x9x128xf32, #tpu.memory_space<vmem>>, vector<1x1x8x128xf32>
    %127 = vector.shape_cast %126 : vector<1x1x8x128xf32> to vector<8x128xf32>
    %c0_236 = arith.constant 0 : index
    %c640 = arith.constant 640 : index
    %128 = vector.load %arg12[%c0_236, %c640] : memref<64x1152xf32, #tpu.memory_space<vmem>>, vector<8x128xf32>
    tpu.vector_store %arg12[%c0_236, %c640], %127 {strides = array<i32>} : memref<64x1152xf32, #tpu.memory_space<vmem>>, vector<8x128xf32>,
    %c0_237 = arith.constant 0 : index
    %c1_238 = arith.constant 1 : index
    %c1_239 = arith.constant 1 : index
    %c0_240 = arith.constant 0 : index
    %129 = vector.load %arg3[%c0_237, %c1_238, %c1_239, %c0_240] : memref<1x9x9x128xf32, #tpu.memory_space<vmem>>, vector<1x1x8x128xf32>
    %130 = vector.shape_cast %129 : vector<1x1x8x128xf32> to vector<8x128xf32>
    %c8_241 = arith.constant 8 : index
    %c640_242 = arith.constant 640 : index
    %131 = vector.load %arg12[%c8_241, %c640_242] : memref<64x1152xf32, #tpu.memory_space<vmem>>, vector<8x128xf32>
    tpu.vector_store %arg12[%c8_241, %c640_242], %130 {strides = array<i32>} : memref<64x1152xf32, #tpu.memory_space<vmem>>, vector<8x128xf32>,
    %c0_243 = arith.constant 0 : index
    %c2_244 = arith.constant 2 : index
    %c1_245 = arith.constant 1 : index
    %c0_246 = arith.constant 0 : index
    %132 = vector.load %arg3[%c0_243, %c2_244, %c1_245, %c0_246] : memref<1x9x9x128xf32, #tpu.memory_space<vmem>>, vector<1x1x8x128xf32>
    %133 = vector.shape_cast %132 : vector<1x1x8x128xf32> to vector<8x128xf32>
    %c16_247 = arith.constant 16 : index
    %c640_248 = arith.constant 640 : index
    %134 = vector.load %arg12[%c16_247, %c640_248] : memref<64x1152xf32, #tpu.memory_space<vmem>>, vector<8x128xf32>
    tpu.vector_store %arg12[%c16_247, %c640_248], %133 {strides = array<i32>} : memref<64x1152xf32, #tpu.memory_space<vmem>>, vector<8x128xf32>,
    %c0_249 = arith.constant 0 : index
    %c3_250 = arith.constant 3 : index
    %c1_251 = arith.constant 1 : index
    %c0_252 = arith.constant 0 : index
    %135 = vector.load %arg3[%c0_249, %c3_250, %c1_251, %c0_252] : memref<1x9x9x128xf32, #tpu.memory_space<vmem>>, vector<1x1x8x128xf32>
    %136 = vector.shape_cast %135 : vector<1x1x8x128xf32> to vector<8x128xf32>
    %c24_253 = arith.constant 24 : index
    %c640_254 = arith.constant 640 : index
    %137 = vector.load %arg12[%c24_253, %c640_254] : memref<64x1152xf32, #tpu.memory_space<vmem>>, vector<8x128xf32>
    tpu.vector_store %arg12[%c24_253, %c640_254], %136 {strides = array<i32>} : memref<64x1152xf32, #tpu.memory_space<vmem>>, vector<8x128xf32>,
    %c0_255 = arith.constant 0 : index
    %c4_256 = arith.constant 4 : index
    %c1_257 = arith.constant 1 : index
    %c0_258 = arith.constant 0 : index
    %138 = vector.load %arg3[%c0_255, %c4_256, %c1_257, %c0_258] : memref<1x9x9x128xf32, #tpu.memory_space<vmem>>, vector<1x1x8x128xf32>
    %139 = vector.shape_cast %138 : vector<1x1x8x128xf32> to vector<8x128xf32>
    %c32_259 = arith.constant 32 : index
    %c640_260 = arith.constant 640 : index
    %140 = vector.load %arg12[%c32_259, %c640_260] : memref<64x1152xf32, #tpu.memory_space<vmem>>, vector<8x128xf32>
    tpu.vector_store %arg12[%c32_259, %c640_260], %139 {strides = array<i32>} : memref<64x1152xf32, #tpu.memory_space<vmem>>, vector<8x128xf32>,
    %c0_261 = arith.constant 0 : index
    %c5_262 = arith.constant 5 : index
    %c1_263 = arith.constant 1 : index
    %c0_264 = arith.constant 0 : index
    %141 = vector.load %arg3[%c0_261, %c5_262, %c1_263, %c0_264] : memref<1x9x9x128xf32, #tpu.memory_space<vmem>>, vector<1x1x8x128xf32>
    %142 = vector.shape_cast %141 : vector<1x1x8x128xf32> to vector<8x128xf32>
    %c40_265 = arith.constant 40 : index
    %c640_266 = arith.constant 640 : index
    %143 = vector.load %arg12[%c40_265, %c640_266] : memref<64x1152xf32, #tpu.memory_space<vmem>>, vector<8x128xf32>
    tpu.vector_store %arg12[%c40_265, %c640_266], %142 {strides = array<i32>} : memref<64x1152xf32, #tpu.memory_space<vmem>>, vector<8x128xf32>,
    %c0_267 = arith.constant 0 : index
    %c6_268 = arith.constant 6 : index
    %c1_269 = arith.constant 1 : index
    %c0_270 = arith.constant 0 : index
    %144 = vector.load %arg3[%c0_267, %c6_268, %c1_269, %c0_270] : memref<1x9x9x128xf32, #tpu.memory_space<vmem>>, vector<1x1x8x128xf32>
    %145 = vector.shape_cast %144 : vector<1x1x8x128xf32> to vector<8x128xf32>
    %c48_271 = arith.constant 48 : index
    %c640_272 = arith.constant 640 : index
    %146 = vector.load %arg12[%c48_271, %c640_272] : memref<64x1152xf32, #tpu.memory_space<vmem>>, vector<8x128xf32>
    tpu.vector_store %arg12[%c48_271, %c640_272], %145 {strides = array<i32>} : memref<64x1152xf32, #tpu.memory_space<vmem>>, vector<8x128xf32>,
    %c0_273 = arith.constant 0 : index
    %c7_274 = arith.constant 7 : index
    %c1_275 = arith.constant 1 : index
    %c0_276 = arith.constant 0 : index
    %147 = vector.load %arg3[%c0_273, %c7_274, %c1_275, %c0_276] : memref<1x9x9x128xf32, #tpu.memory_space<vmem>>, vector<1x1x8x128xf32>
    %148 = vector.shape_cast %147 : vector<1x1x8x128xf32> to vector<8x128xf32>
    %c56_277 = arith.constant 56 : index
    %c640_278 = arith.constant 640 : index
    %149 = vector.load %arg12[%c56_277, %c640_278] : memref<64x1152xf32, #tpu.memory_space<vmem>>, vector<8x128xf32>
    tpu.vector_store %arg12[%c56_277, %c640_278], %148 {strides = array<i32>} : memref<64x1152xf32, #tpu.memory_space<vmem>>, vector<8x128xf32>,
    %c0_279 = arith.constant 0 : index
    %c1_280 = arith.constant 1 : index
    %c0_281 = arith.constant 0 : index
    %c0_282 = arith.constant 0 : index
    %150 = vector.load %arg1[%c0_279, %c1_280, %c0_281, %c0_282] : memref<1x9x9x128xf32, #tpu.memory_space<vmem>>, vector<1x1x8x128xf32>
    %151 = vector.shape_cast %150 : vector<1x1x8x128xf32> to vector<8x128xf32>
    %c0_283 = arith.constant 0 : index
    %c768 = arith.constant 768 : index
    %152 = vector.load %arg12[%c0_283, %c768] : memref<64x1152xf32, #tpu.memory_space<vmem>>, vector<8x128xf32>
    tpu.vector_store %arg12[%c0_283, %c768], %151 {strides = array<i32>} : memref<64x1152xf32, #tpu.memory_space<vmem>>, vector<8x128xf32>,
    %c0_284 = arith.constant 0 : index
    %c2_285 = arith.constant 2 : index
    %c0_286 = arith.constant 0 : index
    %c0_287 = arith.constant 0 : index
    %153 = vector.load %arg1[%c0_284, %c2_285, %c0_286, %c0_287] : memref<1x9x9x128xf32, #tpu.memory_space<vmem>>, vector<1x1x8x128xf32>
    %154 = vector.shape_cast %153 : vector<1x1x8x128xf32> to vector<8x128xf32>
    %c8_288 = arith.constant 8 : index
    %c768_289 = arith.constant 768 : index
    %155 = vector.load %arg12[%c8_288, %c768_289] : memref<64x1152xf32, #tpu.memory_space<vmem>>, vector<8x128xf32>
    tpu.vector_store %arg12[%c8_288, %c768_289], %154 {strides = array<i32>} : memref<64x1152xf32, #tpu.memory_space<vmem>>, vector<8x128xf32>,
    %c0_290 = arith.constant 0 : index
    %c3_291 = arith.constant 3 : index
    %c0_292 = arith.constant 0 : index
    %c0_293 = arith.constant 0 : index
    %156 = vector.load %arg1[%c0_290, %c3_291, %c0_292, %c0_293] : memref<1x9x9x128xf32, #tpu.memory_space<vmem>>, vector<1x1x8x128xf32>
    %157 = vector.shape_cast %156 : vector<1x1x8x128xf32> to vector<8x128xf32>
    %c16_294 = arith.constant 16 : index
    %c768_295 = arith.constant 768 : index
    %158 = vector.load %arg12[%c16_294, %c768_295] : memref<64x1152xf32, #tpu.memory_space<vmem>>, vector<8x128xf32>
    tpu.vector_store %arg12[%c16_294, %c768_295], %157 {strides = array<i32>} : memref<64x1152xf32, #tpu.memory_space<vmem>>, vector<8x128xf32>,
    %c0_296 = arith.constant 0 : index
    %c4_297 = arith.constant 4 : index
    %c0_298 = arith.constant 0 : index
    %c0_299 = arith.constant 0 : index
    %159 = vector.load %arg1[%c0_296, %c4_297, %c0_298, %c0_299] : memref<1x9x9x128xf32, #tpu.memory_space<vmem>>, vector<1x1x8x128xf32>
    %160 = vector.shape_cast %159 : vector<1x1x8x128xf32> to vector<8x128xf32>
    %c24_300 = arith.constant 24 : index
    %c768_301 = arith.constant 768 : index
    %161 = vector.load %arg12[%c24_300, %c768_301] : memref<64x1152xf32, #tpu.memory_space<vmem>>, vector<8x128xf32>
    tpu.vector_store %arg12[%c24_300, %c768_301], %160 {strides = array<i32>} : memref<64x1152xf32, #tpu.memory_space<vmem>>, vector<8x128xf32>,
    %c0_302 = arith.constant 0 : index
    %c5_303 = arith.constant 5 : index
    %c0_304 = arith.constant 0 : index
    %c0_305 = arith.constant 0 : index
    %162 = vector.load %arg1[%c0_302, %c5_303, %c0_304, %c0_305] : memref<1x9x9x128xf32, #tpu.memory_space<vmem>>, vector<1x1x8x128xf32>
    %163 = vector.shape_cast %162 : vector<1x1x8x128xf32> to vector<8x128xf32>
    %c32_306 = arith.constant 32 : index
    %c768_307 = arith.constant 768 : index
    %164 = vector.load %arg12[%c32_306, %c768_307] : memref<64x1152xf32, #tpu.memory_space<vmem>>, vector<8x128xf32>
    tpu.vector_store %arg12[%c32_306, %c768_307], %163 {strides = array<i32>} : memref<64x1152xf32, #tpu.memory_space<vmem>>, vector<8x128xf32>,
    %c0_308 = arith.constant 0 : index
    %c6_309 = arith.constant 6 : index
    %c0_310 = arith.constant 0 : index
    %c0_311 = arith.constant 0 : index
    %165 = vector.load %arg1[%c0_308, %c6_309, %c0_310, %c0_311] : memref<1x9x9x128xf32, #tpu.memory_space<vmem>>, vector<1x1x8x128xf32>
    %166 = vector.shape_cast %165 : vector<1x1x8x128xf32> to vector<8x128xf32>
    %c40_312 = arith.constant 40 : index
    %c768_313 = arith.constant 768 : index
    %167 = vector.load %arg12[%c40_312, %c768_313] : memref<64x1152xf32, #tpu.memory_space<vmem>>, vector<8x128xf32>
    tpu.vector_store %arg12[%c40_312, %c768_313], %166 {strides = array<i32>} : memref<64x1152xf32, #tpu.memory_space<vmem>>, vector<8x128xf32>,
    %c0_314 = arith.constant 0 : index
    %c7_315 = arith.constant 7 : index
    %c0_316 = arith.constant 0 : index
    %c0_317 = arith.constant 0 : index
    %168 = vector.load %arg1[%c0_314, %c7_315, %c0_316, %c0_317] : memref<1x9x9x128xf32, #tpu.memory_space<vmem>>, vector<1x1x8x128xf32>
    %169 = vector.shape_cast %168 : vector<1x1x8x128xf32> to vector<8x128xf32>
    %c48_318 = arith.constant 48 : index
    %c768_319 = arith.constant 768 : index
    %170 = vector.load %arg12[%c48_318, %c768_319] : memref<64x1152xf32, #tpu.memory_space<vmem>>, vector<8x128xf32>
    tpu.vector_store %arg12[%c48_318, %c768_319], %169 {strides = array<i32>} : memref<64x1152xf32, #tpu.memory_space<vmem>>, vector<8x128xf32>,
    %c0_320 = arith.constant 0 : index
    %c8_321 = arith.constant 8 : index
    %c0_322 = arith.constant 0 : index
    %c0_323 = arith.constant 0 : index
    %171 = vector.load %arg1[%c0_320, %c8_321, %c0_322, %c0_323] : memref<1x9x9x128xf32, #tpu.memory_space<vmem>>, vector<1x1x8x128xf32>
    %172 = vector.shape_cast %171 : vector<1x1x8x128xf32> to vector<8x128xf32>
    %c56_324 = arith.constant 56 : index
    %c768_325 = arith.constant 768 : index
    %173 = vector.load %arg12[%c56_324, %c768_325] : memref<64x1152xf32, #tpu.memory_space<vmem>>, vector<8x128xf32>
    tpu.vector_store %arg12[%c56_324, %c768_325], %172 {strides = array<i32>} : memref<64x1152xf32, #tpu.memory_space<vmem>>, vector<8x128xf32>,
    %c0_326 = arith.constant 0 : index
    %c1_327 = arith.constant 1 : index
    %c0_328 = arith.constant 0 : index
    %c0_329 = arith.constant 0 : index
    %174 = vector.load %arg2[%c0_326, %c1_327, %c0_328, %c0_329] : memref<1x9x9x128xf32, #tpu.memory_space<vmem>>, vector<1x1x8x128xf32>
    %175 = vector.shape_cast %174 : vector<1x1x8x128xf32> to vector<8x128xf32>
    %c0_330 = arith.constant 0 : index
    %c896 = arith.constant 896 : index
    %176 = vector.load %arg12[%c0_330, %c896] : memref<64x1152xf32, #tpu.memory_space<vmem>>, vector<8x128xf32>
    tpu.vector_store %arg12[%c0_330, %c896], %175 {strides = array<i32>} : memref<64x1152xf32, #tpu.memory_space<vmem>>, vector<8x128xf32>,
    %c0_331 = arith.constant 0 : index
    %c2_332 = arith.constant 2 : index
    %c0_333 = arith.constant 0 : index
    %c0_334 = arith.constant 0 : index
    %177 = vector.load %arg2[%c0_331, %c2_332, %c0_333, %c0_334] : memref<1x9x9x128xf32, #tpu.memory_space<vmem>>, vector<1x1x8x128xf32>
    %178 = vector.shape_cast %177 : vector<1x1x8x128xf32> to vector<8x128xf32>
    %c8_335 = arith.constant 8 : index
    %c896_336 = arith.constant 896 : index
    %179 = vector.load %arg12[%c8_335, %c896_336] : memref<64x1152xf32, #tpu.memory_space<vmem>>, vector<8x128xf32>
    tpu.vector_store %arg12[%c8_335, %c896_336], %178 {strides = array<i32>} : memref<64x1152xf32, #tpu.memory_space<vmem>>, vector<8x128xf32>,
    %c0_337 = arith.constant 0 : index
    %c3_338 = arith.constant 3 : index
    %c0_339 = arith.constant 0 : index
    %c0_340 = arith.constant 0 : index
    %180 = vector.load %arg2[%c0_337, %c3_338, %c0_339, %c0_340] : memref<1x9x9x128xf32, #tpu.memory_space<vmem>>, vector<1x1x8x128xf32>
    %181 = vector.shape_cast %180 : vector<1x1x8x128xf32> to vector<8x128xf32>
    %c16_341 = arith.constant 16 : index
    %c896_342 = arith.constant 896 : index
    %182 = vector.load %arg12[%c16_341, %c896_342] : memref<64x1152xf32, #tpu.memory_space<vmem>>, vector<8x128xf32>
    tpu.vector_store %arg12[%c16_341, %c896_342], %181 {strides = array<i32>} : memref<64x1152xf32, #tpu.memory_space<vmem>>, vector<8x128xf32>,
    %c0_343 = arith.constant 0 : index
    %c4_344 = arith.constant 4 : index
    %c0_345 = arith.constant 0 : index
    %c0_346 = arith.constant 0 : index
    %183 = vector.load %arg2[%c0_343, %c4_344, %c0_345, %c0_346] : memref<1x9x9x128xf32, #tpu.memory_space<vmem>>, vector<1x1x8x128xf32>
    %184 = vector.shape_cast %183 : vector<1x1x8x128xf32> to vector<8x128xf32>
    %c24_347 = arith.constant 24 : index
    %c896_348 = arith.constant 896 : index
    %185 = vector.load %arg12[%c24_347, %c896_348] : memref<64x1152xf32, #tpu.memory_space<vmem>>, vector<8x128xf32>
    tpu.vector_store %arg12[%c24_347, %c896_348], %184 {strides = array<i32>} : memref<64x1152xf32, #tpu.memory_space<vmem>>, vector<8x128xf32>,
    %c0_349 = arith.constant 0 : index
    %c5_350 = arith.constant 5 : index
    %c0_351 = arith.constant 0 : index
    %c0_352 = arith.constant 0 : index
    %186 = vector.load %arg2[%c0_349, %c5_350, %c0_351, %c0_352] : memref<1x9x9x128xf32, #tpu.memory_space<vmem>>, vector<1x1x8x128xf32>
    %187 = vector.shape_cast %186 : vector<1x1x8x128xf32> to vector<8x128xf32>
    %c32_353 = arith.constant 32 : index
    %c896_354 = arith.constant 896 : index
    %188 = vector.load %arg12[%c32_353, %c896_354] : memref<64x1152xf32, #tpu.memory_space<vmem>>, vector<8x128xf32>
    tpu.vector_store %arg12[%c32_353, %c896_354], %187 {strides = array<i32>} : memref<64x1152xf32, #tpu.memory_space<vmem>>, vector<8x128xf32>,
    %c0_355 = arith.constant 0 : index
    %c6_356 = arith.constant 6 : index
    %c0_357 = arith.constant 0 : index
    %c0_358 = arith.constant 0 : index
    %189 = vector.load %arg2[%c0_355, %c6_356, %c0_357, %c0_358] : memref<1x9x9x128xf32, #tpu.memory_space<vmem>>, vector<1x1x8x128xf32>
    %190 = vector.shape_cast %189 : vector<1x1x8x128xf32> to vector<8x128xf32>
    %c40_359 = arith.constant 40 : index
    %c896_360 = arith.constant 896 : index
    %191 = vector.load %arg12[%c40_359, %c896_360] : memref<64x1152xf32, #tpu.memory_space<vmem>>, vector<8x128xf32>
    tpu.vector_store %arg12[%c40_359, %c896_360], %190 {strides = array<i32>} : memref<64x1152xf32, #tpu.memory_space<vmem>>, vector<8x128xf32>,
    %c0_361 = arith.constant 0 : index
    %c7_362 = arith.constant 7 : index
    %c0_363 = arith.constant 0 : index
    %c0_364 = arith.constant 0 : index
    %192 = vector.load %arg2[%c0_361, %c7_362, %c0_363, %c0_364] : memref<1x9x9x128xf32, #tpu.memory_space<vmem>>, vector<1x1x8x128xf32>
    %193 = vector.shape_cast %192 : vector<1x1x8x128xf32> to vector<8x128xf32>
    %c48_365 = arith.constant 48 : index
    %c896_366 = arith.constant 896 : index
    %194 = vector.load %arg12[%c48_365, %c896_366] : memref<64x1152xf32, #tpu.memory_space<vmem>>, vector<8x128xf32>
    tpu.vector_store %arg12[%c48_365, %c896_366], %193 {strides = array<i32>} : memref<64x1152xf32, #tpu.memory_space<vmem>>, vector<8x128xf32>,
    %c0_367 = arith.constant 0 : index
    %c8_368 = arith.constant 8 : index
    %c0_369 = arith.constant 0 : index
    %c0_370 = arith.constant 0 : index
    %195 = vector.load %arg2[%c0_367, %c8_368, %c0_369, %c0_370] : memref<1x9x9x128xf32, #tpu.memory_space<vmem>>, vector<1x1x8x128xf32>
    %196 = vector.shape_cast %195 : vector<1x1x8x128xf32> to vector<8x128xf32>
    %c56_371 = arith.constant 56 : index
    %c896_372 = arith.constant 896 : index
    %197 = vector.load %arg12[%c56_371, %c896_372] : memref<64x1152xf32, #tpu.memory_space<vmem>>, vector<8x128xf32>
    tpu.vector_store %arg12[%c56_371, %c896_372], %196 {strides = array<i32>} : memref<64x1152xf32, #tpu.memory_space<vmem>>, vector<8x128xf32>,
    %c0_373 = arith.constant 0 : index
    %c1_374 = arith.constant 1 : index
    %c1_375 = arith.constant 1 : index
    %c0_376 = arith.constant 0 : index
    %198 = vector.load %arg1[%c0_373, %c1_374, %c1_375, %c0_376] : memref<1x9x9x128xf32, #tpu.memory_space<vmem>>, vector<1x1x8x128xf32>
    %199 = vector.shape_cast %198 : vector<1x1x8x128xf32> to vector<8x128xf32>
    %c0_377 = arith.constant 0 : index
    %c1024 = arith.constant 1024 : index
    %200 = vector.load %arg12[%c0_377, %c1024] : memref<64x1152xf32, #tpu.memory_space<vmem>>, vector<8x128xf32>
    tpu.vector_store %arg12[%c0_377, %c1024], %199 {strides = array<i32>} : memref<64x1152xf32, #tpu.memory_space<vmem>>, vector<8x128xf32>,
    %c0_378 = arith.constant 0 : index
    %c2_379 = arith.constant 2 : index
    %c1_380 = arith.constant 1 : index
    %c0_381 = arith.constant 0 : index
    %201 = vector.load %arg1[%c0_378, %c2_379, %c1_380, %c0_381] : memref<1x9x9x128xf32, #tpu.memory_space<vmem>>, vector<1x1x8x128xf32>
    %202 = vector.shape_cast %201 : vector<1x1x8x128xf32> to vector<8x128xf32>
    %c8_382 = arith.constant 8 : index
    %c1024_383 = arith.constant 1024 : index
    %203 = vector.load %arg12[%c8_382, %c1024_383] : memref<64x1152xf32, #tpu.memory_space<vmem>>, vector<8x128xf32>
    tpu.vector_store %arg12[%c8_382, %c1024_383], %202 {strides = array<i32>} : memref<64x1152xf32, #tpu.memory_space<vmem>>, vector<8x128xf32>,
    %c0_384 = arith.constant 0 : index
    %c3_385 = arith.constant 3 : index
    %c1_386 = arith.constant 1 : index
    %c0_387 = arith.constant 0 : index
    %204 = vector.load %arg1[%c0_384, %c3_385, %c1_386, %c0_387] : memref<1x9x9x128xf32, #tpu.memory_space<vmem>>, vector<1x1x8x128xf32>
    %205 = vector.shape_cast %204 : vector<1x1x8x128xf32> to vector<8x128xf32>
    %c16_388 = arith.constant 16 : index
    %c1024_389 = arith.constant 1024 : index
    %206 = vector.load %arg12[%c16_388, %c1024_389] : memref<64x1152xf32, #tpu.memory_space<vmem>>, vector<8x128xf32>
    tpu.vector_store %arg12[%c16_388, %c1024_389], %205 {strides = array<i32>} : memref<64x1152xf32, #tpu.memory_space<vmem>>, vector<8x128xf32>,
    %c0_390 = arith.constant 0 : index
    %c4_391 = arith.constant 4 : index
    %c1_392 = arith.constant 1 : index
    %c0_393 = arith.constant 0 : index
    %207 = vector.load %arg1[%c0_390, %c4_391, %c1_392, %c0_393] : memref<1x9x9x128xf32, #tpu.memory_space<vmem>>, vector<1x1x8x128xf32>
    %208 = vector.shape_cast %207 : vector<1x1x8x128xf32> to vector<8x128xf32>
    %c24_394 = arith.constant 24 : index
    %c1024_395 = arith.constant 1024 : index
    %209 = vector.load %arg12[%c24_394, %c1024_395] : memref<64x1152xf32, #tpu.memory_space<vmem>>, vector<8x128xf32>
    tpu.vector_store %arg12[%c24_394, %c1024_395], %208 {strides = array<i32>} : memref<64x1152xf32, #tpu.memory_space<vmem>>, vector<8x128xf32>,
    %c0_396 = arith.constant 0 : index
    %c5_397 = arith.constant 5 : index
    %c1_398 = arith.constant 1 : index
    %c0_399 = arith.constant 0 : index
    %210 = vector.load %arg1[%c0_396, %c5_397, %c1_398, %c0_399] : memref<1x9x9x128xf32, #tpu.memory_space<vmem>>, vector<1x1x8x128xf32>
    %211 = vector.shape_cast %210 : vector<1x1x8x128xf32> to vector<8x128xf32>
    %c32_400 = arith.constant 32 : index
    %c1024_401 = arith.constant 1024 : index
    %212 = vector.load %arg12[%c32_400, %c1024_401] : memref<64x1152xf32, #tpu.memory_space<vmem>>, vector<8x128xf32>
    tpu.vector_store %arg12[%c32_400, %c1024_401], %211 {strides = array<i32>} : memref<64x1152xf32, #tpu.memory_space<vmem>>, vector<8x128xf32>,
    %c0_402 = arith.constant 0 : index
    %c6_403 = arith.constant 6 : index
    %c1_404 = arith.constant 1 : index
    %c0_405 = arith.constant 0 : index
    %213 = vector.load %arg1[%c0_402, %c6_403, %c1_404, %c0_405] : memref<1x9x9x128xf32, #tpu.memory_space<vmem>>, vector<1x1x8x128xf32>
    %214 = vector.shape_cast %213 : vector<1x1x8x128xf32> to vector<8x128xf32>
    %c40_406 = arith.constant 40 : index
    %c1024_407 = arith.constant 1024 : index
    %215 = vector.load %arg12[%c40_406, %c1024_407] : memref<64x1152xf32, #tpu.memory_space<vmem>>, vector<8x128xf32>
    tpu.vector_store %arg12[%c40_406, %c1024_407], %214 {strides = array<i32>} : memref<64x1152xf32, #tpu.memory_space<vmem>>, vector<8x128xf32>,
    %c0_408 = arith.constant 0 : index
    %c7_409 = arith.constant 7 : index
    %c1_410 = arith.constant 1 : index
    %c0_411 = arith.constant 0 : index
    %216 = vector.load %arg1[%c0_408, %c7_409, %c1_410, %c0_411] : memref<1x9x9x128xf32, #tpu.memory_space<vmem>>, vector<1x1x8x128xf32>
    %217 = vector.shape_cast %216 : vector<1x1x8x128xf32> to vector<8x128xf32>
    %c48_412 = arith.constant 48 : index
    %c1024_413 = arith.constant 1024 : index
    %218 = vector.load %arg12[%c48_412, %c1024_413] : memref<64x1152xf32, #tpu.memory_space<vmem>>, vector<8x128xf32>
    tpu.vector_store %arg12[%c48_412, %c1024_413], %217 {strides = array<i32>} : memref<64x1152xf32, #tpu.memory_space<vmem>>, vector<8x128xf32>,
    %c0_414 = arith.constant 0 : index
    %c8_415 = arith.constant 8 : index
    %c1_416 = arith.constant 1 : index
    %c0_417 = arith.constant 0 : index
    %219 = vector.load %arg1[%c0_414, %c8_415, %c1_416, %c0_417] : memref<1x9x9x128xf32, #tpu.memory_space<vmem>>, vector<1x1x8x128xf32>
    %220 = vector.shape_cast %219 : vector<1x1x8x128xf32> to vector<8x128xf32>
    %c56_418 = arith.constant 56 : index
    %c1024_419 = arith.constant 1024 : index
    %221 = vector.load %arg12[%c56_418, %c1024_419] : memref<64x1152xf32, #tpu.memory_space<vmem>>, vector<8x128xf32>
    tpu.vector_store %arg12[%c56_418, %c1024_419], %220 {strides = array<i32>} : memref<64x1152xf32, #tpu.memory_space<vmem>>, vector<8x128xf32>,
    %c0_420 = arith.constant 0 : index
    %c0_421 = arith.constant 0 : index
    %222 = vector.load %arg12[%c0_420, %c0_421] : memref<64x1152xf32, #tpu.memory_space<vmem>>, vector<64x1152xf32>
    %223 = arith.truncf %222 : vector<64x1152xf32> to vector<64x1152xbf16>
    %c0_422 = arith.constant 0 : index
    %c0_423 = arith.constant 0 : index
    %224 = vector.load %arg5[%c0_422, %c0_423] : memref<1152x128xbf16, #tpu.memory_space<vmem>>, vector<1152x128xbf16>
    %cst_424 = arith.constant dense<0.000000e+00> : vector<64x128xf32>
    %225 = tpu.matmul %223, %224, %cst_424 {dimension_numbers = #tpu.dot_dimension_numbers<[1], [0], [0], [1], [0, 0, 1, 1], [], []>} : vector<64x1152xbf16>, vector<1152x128xbf16>, vector<64x128xf32> -> vector<64x128xf32>
    %c0_425 = arith.constant 0 : index
    %c0_426 = arith.constant 0 : index
    %226 = vector.load %arg6[%c0_425, %c0_426] : memref<1x128xf32, #tpu.memory_space<vmem>>, vector<1x128xf32>
    %227 = vector.broadcast %226 : vector<1x128xf32> to vector<64x128xf32>
    %228 = arith.addf %225, %227 : vector<64x128xf32>
    %cst_427 = arith.constant 0.000000e+00 : f32
    %229 = vector.broadcast %cst_427 : f32 to vector<64x128xf32>
    %230 = arith.maximumf %228, %229 : vector<64x128xf32>
    %c0_428 = arith.constant 0 : index
    %c0_429 = arith.constant 0 : index
    %231 = vector.load %arg8[%c0_428, %c0_429] : memref<13x128xf32, #tpu.memory_space<vmem>>, vector<1x128xf32>
    %c0_430 = arith.constant 0 : index
    %c0_431 = arith.constant 0 : index
    %232 = vector.load %arg10[%c0_430, %c0_431] : memref<13x128xf32, #tpu.memory_space<vmem>>, vector<1x128xf32>
    %233 = vector.extract_strided_slice %230 {offsets = [0, 0], sizes = [8, 128], strides = [1, 1]} : vector<64x128xf32> to vector<8x128xf32>
    %c1_432 = arith.constant 1 : index
    %c1_433 = arith.constant 1 : index
    %c0_434 = arith.constant 0 : index
    %234 = vector.load %arg14[%c1_432, %c1_433, %c0_434] : memref<10x10x128xf32, #tpu.memory_space<vmem>>, vector<1x8x128xf32>
    %235 = vector.shape_cast %234 : vector<1x8x128xf32> to vector<8x128xf32>
    %236 = vector.shape_cast %233 : vector<8x128xf32> to vector<1x8x128xf32>
    tpu.vector_store %arg14[%c1_432, %c1_433, %c0_434], %236 {strides = array<i32>} : memref<10x10x128xf32, #tpu.memory_space<vmem>>, vector<1x8x128xf32>,
    %237 = vector.extract_strided_slice %230 {offsets = [8, 0], sizes = [8, 128], strides = [1, 1]} : vector<64x128xf32> to vector<8x128xf32>
    %c2_435 = arith.constant 2 : index
    %c1_436 = arith.constant 1 : index
    %c0_437 = arith.constant 0 : index
    %238 = vector.load %arg14[%c2_435, %c1_436, %c0_437] : memref<10x10x128xf32, #tpu.memory_space<vmem>>, vector<1x8x128xf32>
    %239 = vector.shape_cast %238 : vector<1x8x128xf32> to vector<8x128xf32>
    %240 = vector.shape_cast %237 : vector<8x128xf32> to vector<1x8x128xf32>
    tpu.vector_store %arg14[%c2_435, %c1_436, %c0_437], %240 {strides = array<i32>} : memref<10x10x128xf32, #tpu.memory_space<vmem>>, vector<1x8x128xf32>,
    %241 = vector.extract_strided_slice %230 {offsets = [16, 0], sizes = [8, 128], strides = [1, 1]} : vector<64x128xf32> to vector<8x128xf32>
    %c3_438 = arith.constant 3 : index
    %c1_439 = arith.constant 1 : index
    %c0_440 = arith.constant 0 : index
    %242 = vector.load %arg14[%c3_438, %c1_439, %c0_440] : memref<10x10x128xf32, #tpu.memory_space<vmem>>, vector<1x8x128xf32>
    %243 = vector.shape_cast %242 : vector<1x8x128xf32> to vector<8x128xf32>
    %244 = vector.shape_cast %241 : vector<8x128xf32> to vector<1x8x128xf32>
    tpu.vector_store %arg14[%c3_438, %c1_439, %c0_440], %244 {strides = array<i32>} : memref<10x10x128xf32, #tpu.memory_space<vmem>>, vector<1x8x128xf32>,
    %245 = vector.extract_strided_slice %230 {offsets = [24, 0], sizes = [8, 128], strides = [1, 1]} : vector<64x128xf32> to vector<8x128xf32>
    %c4_441 = arith.constant 4 : index
    %c1_442 = arith.constant 1 : index
    %c0_443 = arith.constant 0 : index
    %246 = vector.load %arg14[%c4_441, %c1_442, %c0_443] : memref<10x10x128xf32, #tpu.memory_space<vmem>>, vector<1x8x128xf32>
    %247 = vector.shape_cast %246 : vector<1x8x128xf32> to vector<8x128xf32>
    %248 = vector.shape_cast %245 : vector<8x128xf32> to vector<1x8x128xf32>
    tpu.vector_store %arg14[%c4_441, %c1_442, %c0_443], %248 {strides = array<i32>} : memref<10x10x128xf32, #tpu.memory_space<vmem>>, vector<1x8x128xf32>,
    %249 = vector.extract_strided_slice %230 {offsets = [32, 0], sizes = [8, 128], strides = [1, 1]} : vector<64x128xf32> to vector<8x128xf32>
    %c5_444 = arith.constant 5 : index
    %c1_445 = arith.constant 1 : index
    %c0_446 = arith.constant 0 : index
    %250 = vector.load %arg14[%c5_444, %c1_445, %c0_446] : memref<10x10x128xf32, #tpu.memory_space<vmem>>, vector<1x8x128xf32>
    %251 = vector.shape_cast %250 : vector<1x8x128xf32> to vector<8x128xf32>
    %252 = vector.shape_cast %249 : vector<8x128xf32> to vector<1x8x128xf32>
    tpu.vector_store %arg14[%c5_444, %c1_445, %c0_446], %252 {strides = array<i32>} : memref<10x10x128xf32, #tpu.memory_space<vmem>>, vector<1x8x128xf32>,
    %253 = vector.extract_strided_slice %230 {offsets = [40, 0], sizes = [8, 128], strides = [1, 1]} : vector<64x128xf32> to vector<8x128xf32>
    %c6_447 = arith.constant 6 : index
    %c1_448 = arith.constant 1 : index
    %c0_449 = arith.constant 0 : index
    %254 = vector.load %arg14[%c6_447, %c1_448, %c0_449] : memref<10x10x128xf32, #tpu.memory_space<vmem>>, vector<1x8x128xf32>
    %255 = vector.shape_cast %254 : vector<1x8x128xf32> to vector<8x128xf32>
    %256 = vector.shape_cast %253 : vector<8x128xf32> to vector<1x8x128xf32>
    tpu.vector_store %arg14[%c6_447, %c1_448, %c0_449], %256 {strides = array<i32>} : memref<10x10x128xf32, #tpu.memory_space<vmem>>, vector<1x8x128xf32>,
    %257 = vector.extract_strided_slice %230 {offsets = [48, 0], sizes = [8, 128], strides = [1, 1]} : vector<64x128xf32> to vector<8x128xf32>
    %c7_450 = arith.constant 7 : index
    %c1_451 = arith.constant 1 : index
    %c0_452 = arith.constant 0 : index
    %258 = vector.load %arg14[%c7_450, %c1_451, %c0_452] : memref<10x10x128xf32, #tpu.memory_space<vmem>>, vector<1x8x128xf32>
    %259 = vector.shape_cast %258 : vector<1x8x128xf32> to vector<8x128xf32>
    %260 = vector.shape_cast %257 : vector<8x128xf32> to vector<1x8x128xf32>
    tpu.vector_store %arg14[%c7_450, %c1_451, %c0_452], %260 {strides = array<i32>} : memref<10x10x128xf32, #tpu.memory_space<vmem>>, vector<1x8x128xf32>,
    %261 = vector.extract_strided_slice %230 {offsets = [56, 0], sizes = [8, 128], strides = [1, 1]} : vector<64x128xf32> to vector<8x128xf32>
    %c8_453 = arith.constant 8 : index
    %c1_454 = arith.constant 1 : index
    %c0_455 = arith.constant 0 : index
    %262 = vector.load %arg14[%c8_453, %c1_454, %c0_455] : memref<10x10x128xf32, #tpu.memory_space<vmem>>, vector<1x8x128xf32>
    %263 = vector.shape_cast %262 : vector<1x8x128xf32> to vector<8x128xf32>
    %264 = vector.shape_cast %261 : vector<8x128xf32> to vector<1x8x128xf32>
    tpu.vector_store %arg14[%c8_453, %c1_454, %c0_455], %264 {strides = array<i32>} : memref<10x10x128xf32, #tpu.memory_space<vmem>>, vector<1x8x128xf32>,
    %cst_456 = arith.constant 0.000000e+00 : f32
    %265 = vector.broadcast %cst_456 : f32 to vector<8x8x128xf32>
    %c0_457 = arith.constant 0 : index
    %c0_458 = arith.constant 0 : index
    %c0_459 = arith.constant 0 : index
    %266 = vector.load %arg14[%c0_457, %c0_458, %c0_459] : memref<10x10x128xf32, #tpu.memory_space<vmem>>, vector<8x8x128xf32>
    %c0_460 = arith.constant 0 : index
    %c0_461 = arith.constant 0 : index
    %267 = vector.load %arg7[%c0_460, %c0_461] : memref<117x128xf32, #tpu.memory_space<vmem>>, vector<1x128xf32>
    %268 = vector.shape_cast %267 : vector<1x128xf32> to vector<1x1x128xf32>
    %269 = vector.broadcast %268 : vector<1x1x128xf32> to vector<8x8x128xf32>
    %270 = arith.mulf %266, %269 : vector<8x8x128xf32>
    %271 = arith.addf %265, %270 : vector<8x8x128xf32>
    %c0_462 = arith.constant 0 : index
    %c1_463 = arith.constant 1 : index
    %c0_464 = arith.constant 0 : index
    %272 = vector.load %arg14[%c0_462, %c1_463, %c0_464] : memref<10x10x128xf32, #tpu.memory_space<vmem>>, vector<8x8x128xf32>
    %c1_465 = arith.constant 1 : index
    %c0_466 = arith.constant 0 : index
    %273 = vector.load %arg7[%c1_465, %c0_466] : memref<117x128xf32, #tpu.memory_space<vmem>>, vector<1x128xf32>
    %274 = vector.shape_cast %273 : vector<1x128xf32> to vector<1x1x128xf32>
    %275 = vector.broadcast %274 : vector<1x1x128xf32> to vector<8x8x128xf32>
    %276 = arith.mulf %272, %275 : vector<8x8x128xf32>
    %277 = arith.addf %271, %276 : vector<8x8x128xf32>
    %c0_467 = arith.constant 0 : index
    %c2_468 = arith.constant 2 : index
    %c0_469 = arith.constant 0 : index
    %278 = vector.load %arg14[%c0_467, %c2_468, %c0_469] : memref<10x10x128xf32, #tpu.memory_space<vmem>>, vector<8x8x128xf32>
    %c2_470 = arith.constant 2 : index
    %c0_471 = arith.constant 0 : index
    %279 = vector.load %arg7[%c2_470, %c0_471] : memref<117x128xf32, #tpu.memory_space<vmem>>, vector<1x128xf32>
    %280 = vector.shape_cast %279 : vector<1x128xf32> to vector<1x1x128xf32>
    %281 = vector.broadcast %280 : vector<1x1x128xf32> to vector<8x8x128xf32>
    %282 = arith.mulf %278, %281 : vector<8x8x128xf32>
    %283 = arith.addf %277, %282 : vector<8x8x128xf32>
    %c1_472 = arith.constant 1 : index
    %c0_473 = arith.constant 0 : index
    %c0_474 = arith.constant 0 : index
    %284 = vector.load %arg14[%c1_472, %c0_473, %c0_474] : memref<10x10x128xf32, #tpu.memory_space<vmem>>, vector<8x8x128xf32>
    %c3_475 = arith.constant 3 : index
    %c0_476 = arith.constant 0 : index
    %285 = vector.load %arg7[%c3_475, %c0_476] : memref<117x128xf32, #tpu.memory_space<vmem>>, vector<1x128xf32>
    %286 = vector.shape_cast %285 : vector<1x128xf32> to vector<1x1x128xf32>
    %287 = vector.broadcast %286 : vector<1x1x128xf32> to vector<8x8x128xf32>
    %288 = arith.mulf %284, %287 : vector<8x8x128xf32>
    %289 = arith.addf %283, %288 : vector<8x8x128xf32>
    %c1_477 = arith.constant 1 : index
    %c1_478 = arith.constant 1 : index
    %c0_479 = arith.constant 0 : index
    %290 = vector.load %arg14[%c1_477, %c1_478, %c0_479] : memref<10x10x128xf32, #tpu.memory_space<vmem>>, vector<8x8x128xf32>
    %c4_480 = arith.constant 4 : index
    %c0_481 = arith.constant 0 : index
    %291 = vector.load %arg7[%c4_480, %c0_481] : memref<117x128xf32, #tpu.memory_space<vmem>>, vector<1x128xf32>
    %292 = vector.shape_cast %291 : vector<1x128xf32> to vector<1x1x128xf32>
    %293 = vector.broadcast %292 : vector<1x1x128xf32> to vector<8x8x128xf32>
    %294 = arith.mulf %290, %293 : vector<8x8x128xf32>
    %295 = arith.addf %289, %294 : vector<8x8x128xf32>
    %c1_482 = arith.constant 1 : index
    %c2_483 = arith.constant 2 : index
    %c0_484 = arith.constant 0 : index
    %296 = vector.load %arg14[%c1_482, %c2_483, %c0_484] : memref<10x10x128xf32, #tpu.memory_space<vmem>>, vector<8x8x128xf32>
    %c5_485 = arith.constant 5 : index
    %c0_486 = arith.constant 0 : index
    %297 = vector.load %arg7[%c5_485, %c0_486] : memref<117x128xf32, #tpu.memory_space<vmem>>, vector<1x128xf32>
    %298 = vector.shape_cast %297 : vector<1x128xf32> to vector<1x1x128xf32>
    %299 = vector.broadcast %298 : vector<1x1x128xf32> to vector<8x8x128xf32>
    %300 = arith.mulf %296, %299 : vector<8x8x128xf32>
    %301 = arith.addf %295, %300 : vector<8x8x128xf32>
    %c2_487 = arith.constant 2 : index
    %c0_488 = arith.constant 0 : index
    %c0_489 = arith.constant 0 : index
    %302 = vector.load %arg14[%c2_487, %c0_488, %c0_489] : memref<10x10x128xf32, #tpu.memory_space<vmem>>, vector<8x8x128xf32>
    %c6_490 = arith.constant 6 : index
    %c0_491 = arith.constant 0 : index
    %303 = vector.load %arg7[%c6_490, %c0_491] : memref<117x128xf32, #tpu.memory_space<vmem>>, vector<1x128xf32>
    %304 = vector.shape_cast %303 : vector<1x128xf32> to vector<1x1x128xf32>
    %305 = vector.broadcast %304 : vector<1x1x128xf32> to vector<8x8x128xf32>
    %306 = arith.mulf %302, %305 : vector<8x8x128xf32>
    %307 = arith.addf %301, %306 : vector<8x8x128xf32>
    %c2_492 = arith.constant 2 : index
    %c1_493 = arith.constant 1 : index
    %c0_494 = arith.constant 0 : index
    %308 = vector.load %arg14[%c2_492, %c1_493, %c0_494] : memref<10x10x128xf32, #tpu.memory_space<vmem>>, vector<8x8x128xf32>
    %c7_495 = arith.constant 7 : index
    %c0_496 = arith.constant 0 : index
    %309 = vector.load %arg7[%c7_495, %c0_496] : memref<117x128xf32, #tpu.memory_space<vmem>>, vector<1x128xf32>
    %310 = vector.shape_cast %309 : vector<1x128xf32> to vector<1x1x128xf32>
    %311 = vector.broadcast %310 : vector<1x1x128xf32> to vector<8x8x128xf32>
    %312 = arith.mulf %308, %311 : vector<8x8x128xf32>
    %313 = arith.addf %307, %312 : vector<8x8x128xf32>
    %c2_497 = arith.constant 2 : index
    %c2_498 = arith.constant 2 : index
    %c0_499 = arith.constant 0 : index
    %314 = vector.load %arg14[%c2_497, %c2_498, %c0_499] : memref<10x10x128xf32, #tpu.memory_space<vmem>>, vector<8x8x128xf32>
    %c8_500 = arith.constant 8 : index
    %c0_501 = arith.constant 0 : index
    %315 = vector.load %arg7[%c8_500, %c0_501] : memref<117x128xf32, #tpu.memory_space<vmem>>, vector<1x128xf32>
    %316 = vector.shape_cast %315 : vector<1x128xf32> to vector<1x1x128xf32>
    %317 = vector.broadcast %316 : vector<1x1x128xf32> to vector<8x8x128xf32>
    %318 = arith.mulf %314, %317 : vector<8x8x128xf32>
    %319 = arith.addf %313, %318 : vector<8x8x128xf32>
    %320 = vector.shape_cast %231 : vector<1x128xf32> to vector<1x1x128xf32>
    %321 = vector.broadcast %320 : vector<1x1x128xf32> to vector<8x8x128xf32>
    %322 = arith.addf %319, %321 : vector<8x8x128xf32>
    %cst_502 = arith.constant 0.000000e+00 : f32
    %323 = vector.broadcast %cst_502 : f32 to vector<8x8x128xf32>
    %324 = arith.maximumf %322, %323 : vector<8x8x128xf32>
    %325 = vector.extract_strided_slice %324 {offsets = [0, 0, 0], sizes = [1, 8, 128], strides = [1, 1, 1]} : vector<8x8x128xf32> to vector<1x8x128xf32>
    %326 = vector.shape_cast %325 : vector<1x8x128xf32> to vector<8x128xf32>
    %c0_503 = arith.constant 0 : index
    %c0_504 = arith.constant 0 : index
    %327 = vector.load %arg13[%c0_503, %c0_504] : memref<64x128xf32, #tpu.memory_space<vmem>>, vector<8x128xf32>
    tpu.vector_store %arg13[%c0_503, %c0_504], %326 {strides = array<i32>} : memref<64x128xf32, #tpu.memory_space<vmem>>, vector<8x128xf32>,
    %328 = vector.extract_strided_slice %324 {offsets = [1, 0, 0], sizes = [1, 8, 128], strides = [1, 1, 1]} : vector<8x8x128xf32> to vector<1x8x128xf32>
    %329 = vector.shape_cast %328 : vector<1x8x128xf32> to vector<8x128xf32>
    %c8_505 = arith.constant 8 : index
    %c0_506 = arith.constant 0 : index
    %330 = vector.load %arg13[%c8_505, %c0_506] : memref<64x128xf32, #tpu.memory_space<vmem>>, vector<8x128xf32>
    tpu.vector_store %arg13[%c8_505, %c0_506], %329 {strides = array<i32>} : memref<64x128xf32, #tpu.memory_space<vmem>>, vector<8x128xf32>,
    %331 = vector.extract_strided_slice %324 {offsets = [2, 0, 0], sizes = [1, 8, 128], strides = [1, 1, 1]} : vector<8x8x128xf32> to vector<1x8x128xf32>
    %332 = vector.shape_cast %331 : vector<1x8x128xf32> to vector<8x128xf32>
    %c16_507 = arith.constant 16 : index
    %c0_508 = arith.constant 0 : index
    %333 = vector.load %arg13[%c16_507, %c0_508] : memref<64x128xf32, #tpu.memory_space<vmem>>, vector<8x128xf32>
    tpu.vector_store %arg13[%c16_507, %c0_508], %332 {strides = array<i32>} : memref<64x128xf32, #tpu.memory_space<vmem>>, vector<8x128xf32>,
    %334 = vector.extract_strided_slice %324 {offsets = [3, 0, 0], sizes = [1, 8, 128], strides = [1, 1, 1]} : vector<8x8x128xf32> to vector<1x8x128xf32>
    %335 = vector.shape_cast %334 : vector<1x8x128xf32> to vector<8x128xf32>
    %c24_509 = arith.constant 24 : index
    %c0_510 = arith.constant 0 : index
    %336 = vector.load %arg13[%c24_509, %c0_510] : memref<64x128xf32, #tpu.memory_space<vmem>>, vector<8x128xf32>
    tpu.vector_store %arg13[%c24_509, %c0_510], %335 {strides = array<i32>} : memref<64x128xf32, #tpu.memory_space<vmem>>, vector<8x128xf32>,
    %337 = vector.extract_strided_slice %324 {offsets = [4, 0, 0], sizes = [1, 8, 128], strides = [1, 1, 1]} : vector<8x8x128xf32> to vector<1x8x128xf32>
    %338 = vector.shape_cast %337 : vector<1x8x128xf32> to vector<8x128xf32>
    %c32_511 = arith.constant 32 : index
    %c0_512 = arith.constant 0 : index
    %339 = vector.load %arg13[%c32_511, %c0_512] : memref<64x128xf32, #tpu.memory_space<vmem>>, vector<8x128xf32>
    tpu.vector_store %arg13[%c32_511, %c0_512], %338 {strides = array<i32>} : memref<64x128xf32, #tpu.memory_space<vmem>>, vector<8x128xf32>,
    %340 = vector.extract_strided_slice %324 {offsets = [5, 0, 0], sizes = [1, 8, 128], strides = [1, 1, 1]} : vector<8x8x128xf32> to vector<1x8x128xf32>
    %341 = vector.shape_cast %340 : vector<1x8x128xf32> to vector<8x128xf32>
    %c40_513 = arith.constant 40 : index
    %c0_514 = arith.constant 0 : index
    %342 = vector.load %arg13[%c40_513, %c0_514] : memref<64x128xf32, #tpu.memory_space<vmem>>, vector<8x128xf32>
    tpu.vector_store %arg13[%c40_513, %c0_514], %341 {strides = array<i32>} : memref<64x128xf32, #tpu.memory_space<vmem>>, vector<8x128xf32>,
    %343 = vector.extract_strided_slice %324 {offsets = [6, 0, 0], sizes = [1, 8, 128], strides = [1, 1, 1]} : vector<8x8x128xf32> to vector<1x8x128xf32>
    %344 = vector.shape_cast %343 : vector<1x8x128xf32> to vector<8x128xf32>
    %c48_515 = arith.constant 48 : index
    %c0_516 = arith.constant 0 : index
    %345 = vector.load %arg13[%c48_515, %c0_516] : memref<64x128xf32, #tpu.memory_space<vmem>>, vector<8x128xf32>
    tpu.vector_store %arg13[%c48_515, %c0_516], %344 {strides = array<i32>} : memref<64x128xf32, #tpu.memory_space<vmem>>, vector<8x128xf32>,
    %346 = vector.extract_strided_slice %324 {offsets = [7, 0, 0], sizes = [1, 8, 128], strides = [1, 1, 1]} : vector<8x8x128xf32> to vector<1x8x128xf32>
    %347 = vector.shape_cast %346 : vector<1x8x128xf32> to vector<8x128xf32>
    %c56_517 = arith.constant 56 : index
    %c0_518 = arith.constant 0 : index
    %348 = vector.load %arg13[%c56_517, %c0_518] : memref<64x128xf32, #tpu.memory_space<vmem>>, vector<8x128xf32>
    tpu.vector_store %arg13[%c56_517, %c0_518], %347 {strides = array<i32>} : memref<64x128xf32, #tpu.memory_space<vmem>>, vector<8x128xf32>,
    %c0_519 = arith.constant 0 : index
    %c0_520 = arith.constant 0 : index
    %349 = vector.load %arg13[%c0_519, %c0_520] : memref<64x128xf32, #tpu.memory_space<vmem>>, vector<64x128xf32>
    %350 = arith.truncf %349 : vector<64x128xf32> to vector<64x128xbf16>
    %c0_521 = arith.constant 0 : index
    %c0_522 = arith.constant 0 : index
    %c0_523 = arith.constant 0 : index
    %351 = vector.load %arg9[%c0_521, %c0_522, %c0_523] : memref<13x128x128xbf16, #tpu.memory_space<vmem>>, vector<1x128x128xbf16>
    %352 = vector.shape_cast %351 : vector<1x128x128xbf16> to vector<128x128xbf16>
    %cst_524 = arith.constant dense<0.000000e+00> : vector<64x128xf32>
    %353 = tpu.matmul %350, %352, %cst_524 {dimension_numbers = #tpu.dot_dimension_numbers<[1], [0], [0], [1], [0, 0, 1, 1], [], []>} : vector<64x128xbf16>, vector<128x128xbf16>, vector<64x128xf32> -> vector<64x128xf32>
    %354 = vector.broadcast %232 : vector<1x128xf32> to vector<64x128xf32>
    %355 = arith.addf %353, %354 : vector<64x128xf32>
    %cst_525 = arith.constant 0.000000e+00 : f32
    %356 = vector.broadcast %cst_525 : f32 to vector<64x128xf32>
    %357 = arith.maximumf %355, %356 : vector<64x128xf32>
    %c1_526 = arith.constant 1 : index
    %c0_527 = arith.constant 0 : index
    %358 = vector.load %arg8[%c1_526, %c0_527] : memref<13x128xf32, #tpu.memory_space<vmem>>, vector<1x128xf32>
    %c1_528 = arith.constant 1 : index
    %c0_529 = arith.constant 0 : index
    %359 = vector.load %arg10[%c1_528, %c0_529] : memref<13x128xf32, #tpu.memory_space<vmem>>, vector<1x128xf32>
    %360 = vector.extract_strided_slice %357 {offsets = [0, 0], sizes = [8, 128], strides = [1, 1]} : vector<64x128xf32> to vector<8x128xf32>
    %c1_530 = arith.constant 1 : index
    %c1_531 = arith.constant 1 : index
    %c0_532 = arith.constant 0 : index
    %361 = vector.load %arg14[%c1_530, %c1_531, %c0_532] : memref<10x10x128xf32, #tpu.memory_space<vmem>>, vector<1x8x128xf32>
    %362 = vector.shape_cast %361 : vector<1x8x128xf32> to vector<8x128xf32>
    %363 = vector.shape_cast %360 : vector<8x128xf32> to vector<1x8x128xf32>
    tpu.vector_store %arg14[%c1_530, %c1_531, %c0_532], %363 {strides = array<i32>} : memref<10x10x128xf32, #tpu.memory_space<vmem>>, vector<1x8x128xf32>,
    %364 = vector.extract_strided_slice %357 {offsets = [8, 0], sizes = [8, 128], strides = [1, 1]} : vector<64x128xf32> to vector<8x128xf32>
    %c2_533 = arith.constant 2 : index
    %c1_534 = arith.constant 1 : index
    %c0_535 = arith.constant 0 : index
    %365 = vector.load %arg14[%c2_533, %c1_534, %c0_535] : memref<10x10x128xf32, #tpu.memory_space<vmem>>, vector<1x8x128xf32>
    %366 = vector.shape_cast %365 : vector<1x8x128xf32> to vector<8x128xf32>
    %367 = vector.shape_cast %364 : vector<8x128xf32> to vector<1x8x128xf32>
    tpu.vector_store %arg14[%c2_533, %c1_534, %c0_535], %367 {strides = array<i32>} : memref<10x10x128xf32, #tpu.memory_space<vmem>>, vector<1x8x128xf32>,
    %368 = vector.extract_strided_slice %357 {offsets = [16, 0], sizes = [8, 128], strides = [1, 1]} : vector<64x128xf32> to vector<8x128xf32>
    %c3_536 = arith.constant 3 : index
    %c1_537 = arith.constant 1 : index
    %c0_538 = arith.constant 0 : index
    %369 = vector.load %arg14[%c3_536, %c1_537, %c0_538] : memref<10x10x128xf32, #tpu.memory_space<vmem>>, vector<1x8x128xf32>
    %370 = vector.shape_cast %369 : vector<1x8x128xf32> to vector<8x128xf32>
    %371 = vector.shape_cast %368 : vector<8x128xf32> to vector<1x8x128xf32>
    tpu.vector_store %arg14[%c3_536, %c1_537, %c0_538], %371 {strides = array<i32>} : memref<10x10x128xf32, #tpu.memory_space<vmem>>, vector<1x8x128xf32>,
    %372 = vector.extract_strided_slice %357 {offsets = [24, 0], sizes = [8, 128], strides = [1, 1]} : vector<64x128xf32> to vector<8x128xf32>
    %c4_539 = arith.constant 4 : index
    %c1_540 = arith.constant 1 : index
    %c0_541 = arith.constant 0 : index
    %373 = vector.load %arg14[%c4_539, %c1_540, %c0_541] : memref<10x10x128xf32, #tpu.memory_space<vmem>>, vector<1x8x128xf32>
    %374 = vector.shape_cast %373 : vector<1x8x128xf32> to vector<8x128xf32>
    %375 = vector.shape_cast %372 : vector<8x128xf32> to vector<1x8x128xf32>
    tpu.vector_store %arg14[%c4_539, %c1_540, %c0_541], %375 {strides = array<i32>} : memref<10x10x128xf32, #tpu.memory_space<vmem>>, vector<1x8x128xf32>,
    %376 = vector.extract_strided_slice %357 {offsets = [32, 0], sizes = [8, 128], strides = [1, 1]} : vector<64x128xf32> to vector<8x128xf32>
    %c5_542 = arith.constant 5 : index
    %c1_543 = arith.constant 1 : index
    %c0_544 = arith.constant 0 : index
    %377 = vector.load %arg14[%c5_542, %c1_543, %c0_544] : memref<10x10x128xf32, #tpu.memory_space<vmem>>, vector<1x8x128xf32>
    %378 = vector.shape_cast %377 : vector<1x8x128xf32> to vector<8x128xf32>
    %379 = vector.shape_cast %376 : vector<8x128xf32> to vector<1x8x128xf32>
    tpu.vector_store %arg14[%c5_542, %c1_543, %c0_544], %379 {strides = array<i32>} : memref<10x10x128xf32, #tpu.memory_space<vmem>>, vector<1x8x128xf32>,
    %380 = vector.extract_strided_slice %357 {offsets = [40, 0], sizes = [8, 128], strides = [1, 1]} : vector<64x128xf32> to vector<8x128xf32>
    %c6_545 = arith.constant 6 : index
    %c1_546 = arith.constant 1 : index
    %c0_547 = arith.constant 0 : index
    %381 = vector.load %arg14[%c6_545, %c1_546, %c0_547] : memref<10x10x128xf32, #tpu.memory_space<vmem>>, vector<1x8x128xf32>
    %382 = vector.shape_cast %381 : vector<1x8x128xf32> to vector<8x128xf32>
    %383 = vector.shape_cast %380 : vector<8x128xf32> to vector<1x8x128xf32>
    tpu.vector_store %arg14[%c6_545, %c1_546, %c0_547], %383 {strides = array<i32>} : memref<10x10x128xf32, #tpu.memory_space<vmem>>, vector<1x8x128xf32>,
    %384 = vector.extract_strided_slice %357 {offsets = [48, 0], sizes = [8, 128], strides = [1, 1]} : vector<64x128xf32> to vector<8x128xf32>
    %c7_548 = arith.constant 7 : index
    %c1_549 = arith.constant 1 : index
    %c0_550 = arith.constant 0 : index
    %385 = vector.load %arg14[%c7_548, %c1_549, %c0_550] : memref<10x10x128xf32, #tpu.memory_space<vmem>>, vector<1x8x128xf32>
    %386 = vector.shape_cast %385 : vector<1x8x128xf32> to vector<8x128xf32>
    %387 = vector.shape_cast %384 : vector<8x128xf32> to vector<1x8x128xf32>
    tpu.vector_store %arg14[%c7_548, %c1_549, %c0_550], %387 {strides = array<i32>} : memref<10x10x128xf32, #tpu.memory_space<vmem>>, vector<1x8x128xf32>,
    %388 = vector.extract_strided_slice %357 {offsets = [56, 0], sizes = [8, 128], strides = [1, 1]} : vector<64x128xf32> to vector<8x128xf32>
    %c8_551 = arith.constant 8 : index
    %c1_552 = arith.constant 1 : index
    %c0_553 = arith.constant 0 : index
    %389 = vector.load %arg14[%c8_551, %c1_552, %c0_553] : memref<10x10x128xf32, #tpu.memory_space<vmem>>, vector<1x8x128xf32>
    %390 = vector.shape_cast %389 : vector<1x8x128xf32> to vector<8x128xf32>
    %391 = vector.shape_cast %388 : vector<8x128xf32> to vector<1x8x128xf32>
    tpu.vector_store %arg14[%c8_551, %c1_552, %c0_553], %391 {strides = array<i32>} : memref<10x10x128xf32, #tpu.memory_space<vmem>>, vector<1x8x128xf32>,
    %cst_554 = arith.constant 0.000000e+00 : f32
    %392 = vector.broadcast %cst_554 : f32 to vector<1x128xf32>
    %c0_555 = arith.constant 0 : index
    %c0_556 = arith.constant 0 : index
    %c0_557 = arith.constant 0 : index
    %393 = vector.load %arg14[%c0_555, %c0_556, %c0_557] : memref<10x10x128xf32, #tpu.memory_space<vmem>>, vector<1x1x128xf32>
    %394 = vector.shape_cast %393 : vector<1x1x128xf32> to vector<1x128xf32>
    %c9 = arith.constant 9 : index
    %c0_558 = arith.constant 0 : index
    %395 = vector.load %arg7[%c9, %c0_558] : memref<117x128xf32, #tpu.memory_space<vmem>>, vector<1x128xf32>
    %396 = arith.mulf %394, %395 : vector<1x128xf32>
    %397 = arith.addf %392, %396 : vector<1x128xf32>
    %c0_559 = arith.constant 0 : index
    %c1_560 = arith.constant 1 : index
    %c0_561 = arith.constant 0 : index
    %398 = vector.load %arg14[%c0_559, %c1_560, %c0_561] : memref<10x10x128xf32, #tpu.memory_space<vmem>>, vector<1x1x128xf32>
    %399 = vector.shape_cast %398 : vector<1x1x128xf32> to vector<1x128xf32>
    %c10 = arith.constant 10 : index
    %c0_562 = arith.constant 0 : index
    %400 = vector.load %arg7[%c10, %c0_562] : memref<117x128xf32, #tpu.memory_space<vmem>>, vector<1x128xf32>
    %401 = arith.mulf %399, %400 : vector<1x128xf32>
    %402 = arith.addf %397, %401 : vector<1x128xf32>
    %c0_563 = arith.constant 0 : index
    %c2_564 = arith.constant 2 : index
    %c0_565 = arith.constant 0 : index
    %403 = vector.load %arg14[%c0_563, %c2_564, %c0_565] : memref<10x10x128xf32, #tpu.memory_space<vmem>>, vector<1x1x128xf32>
    %404 = vector.shape_cast %403 : vector<1x1x128xf32> to vector<1x128xf32>
    %c11 = arith.constant 11 : index
    %c0_566 = arith.constant 0 : index
    %405 = vector.load %arg7[%c11, %c0_566] : memref<117x128xf32, #tpu.memory_space<vmem>>, vector<1x128xf32>
    %406 = arith.mulf %404, %405 : vector<1x128xf32>
    %407 = arith.addf %402, %406 : vector<1x128xf32>
    %c1_567 = arith.constant 1 : index
    %c0_568 = arith.constant 0 : index
    %c0_569 = arith.constant 0 : index
    %408 = vector.load %arg14[%c1_567, %c0_568, %c0_569] : memref<10x10x128xf32, #tpu.memory_space<vmem>>, vector<1x1x128xf32>
    %409 = vector.shape_cast %408 : vector<1x1x128xf32> to vector<1x128xf32>
    %c12 = arith.constant 12 : index
    %c0_570 = arith.constant 0 : index
    %410 = vector.load %arg7[%c12, %c0_570] : memref<117x128xf32, #tpu.memory_space<vmem>>, vector<1x128xf32>
    %411 = arith.mulf %409, %410 : vector<1x128xf32>
    %412 = arith.addf %407, %411 : vector<1x128xf32>
    %c1_571 = arith.constant 1 : index
    %c1_572 = arith.constant 1 : index
    %c0_573 = arith.constant 0 : index
    %413 = vector.load %arg14[%c1_571, %c1_572, %c0_573] : memref<10x10x128xf32, #tpu.memory_space<vmem>>, vector<1x1x128xf32>
    %414 = vector.shape_cast %413 : vector<1x1x128xf32> to vector<1x128xf32>
    %c13 = arith.constant 13 : index
    %c0_574 = arith.constant 0 : index
    %415 = vector.load %arg7[%c13, %c0_574] : memref<117x128xf32, #tpu.memory_space<vmem>>, vector<1x128xf32>
    %416 = arith.mulf %414, %415 : vector<1x128xf32>
    %417 = arith.addf %412, %416 : vector<1x128xf32>
    %c1_575 = arith.constant 1 : index
    %c2_576 = arith.constant 2 : index
    %c0_577 = arith.constant 0 : index
    %418 = vector.load %arg14[%c1_575, %c2_576, %c0_577] : memref<10x10x128xf32, #tpu.memory_space<vmem>>, vector<1x1x128xf32>
    %419 = vector.shape_cast %418 : vector<1x1x128xf32> to vector<1x128xf32>
    %c14 = arith.constant 14 : index
    %c0_578 = arith.constant 0 : index
    %420 = vector.load %arg7[%c14, %c0_578] : memref<117x128xf32, #tpu.memory_space<vmem>>, vector<1x128xf32>
    %421 = arith.mulf %419, %420 : vector<1x128xf32>
    %422 = arith.addf %417, %421 : vector<1x128xf32>
    %c2_579 = arith.constant 2 : index
    %c0_580 = arith.constant 0 : index
    %c0_581 = arith.constant 0 : index
    %423 = vector.load %arg14[%c2_579, %c0_580, %c0_581] : memref<10x10x128xf32, #tpu.memory_space<vmem>>, vector<1x1x128xf32>
    %424 = vector.shape_cast %423 : vector<1x1x128xf32> to vector<1x128xf32>
    %c15 = arith.constant 15 : index
    %c0_582 = arith.constant 0 : index
    %425 = vector.load %arg7[%c15, %c0_582] : memref<117x128xf32, #tpu.memory_space<vmem>>, vector<1x128xf32>
    %426 = arith.mulf %424, %425 : vector<1x128xf32>
    %427 = arith.addf %422, %426 : vector<1x128xf32>
    %c2_583 = arith.constant 2 : index
    %c1_584 = arith.constant 1 : index
    %c0_585 = arith.constant 0 : index
    %428 = vector.load %arg14[%c2_583, %c1_584, %c0_585] : memref<10x10x128xf32, #tpu.memory_space<vmem>>, vector<1x1x128xf32>
    %429 = vector.shape_cast %428 : vector<1x1x128xf32> to vector<1x128xf32>
    %c16_586 = arith.constant 16 : index
    %c0_587 = arith.constant 0 : index
    %430 = vector.load %arg7[%c16_586, %c0_587] : memref<117x128xf32, #tpu.memory_space<vmem>>, vector<1x128xf32>
    %431 = arith.mulf %429, %430 : vector<1x128xf32>
    %432 = arith.addf %427, %431 : vector<1x128xf32>
    %c2_588 = arith.constant 2 : index
    %c2_589 = arith.constant 2 : index
    %c0_590 = arith.constant 0 : index
    %433 = vector.load %arg14[%c2_588, %c2_589, %c0_590] : memref<10x10x128xf32, #tpu.memory_space<vmem>>, vector<1x1x128xf32>
    %434 = vector.shape_cast %433 : vector<1x1x128xf32> to vector<1x128xf32>
    %c17 = arith.constant 17 : index
    %c0_591 = arith.constant 0 : index
    %435 = vector.load %arg7[%c17, %c0_591] : memref<117x128xf32, #tpu.memory_space<vmem>>, vector<1x128xf32>
    %436 = arith.mulf %434, %435 : vector<1x128xf32>
    %437 = arith.addf %432, %436 : vector<1x128xf32>
    %438 = arith.addf %437, %358 : vector<1x128xf32>
    %cst_592 = arith.constant 0.000000e+00 : f32
    %439 = vector.broadcast %cst_592 : f32 to vector<1x128xf32>
    %440 = arith.maximumf %438, %439 : vector<1x128xf32>
    %c0_593 = arith.constant 0 : index
    %c0_594 = arith.constant 0 : index
    %441 = vector.load %arg13[%c0_593, %c0_594] : memref<64x128xf32, #tpu.memory_space<vmem>>, vector<1x128xf32>
    tpu.vector_store %arg13[%c0_593, %c0_594], %440 {strides = array<i32>} : memref<64x128xf32, #tpu.memory_space<vmem>>, vector<1x128xf32>,
    %cst_595 = arith.constant 0.000000e+00 : f32
    %442 = vector.broadcast %cst_595 : f32 to vector<1x128xf32>
    %c0_596 = arith.constant 0 : index
    %c2_597 = arith.constant 2 : index
    %c0_598 = arith.constant 0 : index
    %443 = vector.load %arg14[%c0_596, %c2_597, %c0_598] : memref<10x10x128xf32, #tpu.memory_space<vmem>>, vector<1x1x128xf32>
    %444 = vector.shape_cast %443 : vector<1x1x128xf32> to vector<1x128xf32>
    %c9_599 = arith.constant 9 : index
    %c0_600 = arith.constant 0 : index
    %445 = vector.load %arg7[%c9_599, %c0_600] : memref<117x128xf32, #tpu.memory_space<vmem>>, vector<1x128xf32>
    %446 = arith.mulf %444, %445 : vector<1x128xf32>
    %447 = arith.addf %442, %446 : vector<1x128xf32>
    %c0_601 = arith.constant 0 : index
    %c3_602 = arith.constant 3 : index
    %c0_603 = arith.constant 0 : index
    %448 = vector.load %arg14[%c0_601, %c3_602, %c0_603] : memref<10x10x128xf32, #tpu.memory_space<vmem>>, vector<1x1x128xf32>
    %449 = vector.shape_cast %448 : vector<1x1x128xf32> to vector<1x128xf32>
    %c10_604 = arith.constant 10 : index
    %c0_605 = arith.constant 0 : index
    %450 = vector.load %arg7[%c10_604, %c0_605] : memref<117x128xf32, #tpu.memory_space<vmem>>, vector<1x128xf32>
    %451 = arith.mulf %449, %450 : vector<1x128xf32>
    %452 = arith.addf %447, %451 : vector<1x128xf32>
    %c0_606 = arith.constant 0 : index
    %c4_607 = arith.constant 4 : index
    %c0_608 = arith.constant 0 : index
    %453 = vector.load %arg14[%c0_606, %c4_607, %c0_608] : memref<10x10x128xf32, #tpu.memory_space<vmem>>, vector<1x1x128xf32>
    %454 = vector.shape_cast %453 : vector<1x1x128xf32> to vector<1x128xf32>
    %c11_609 = arith.constant 11 : index
    %c0_610 = arith.constant 0 : index
    %455 = vector.load %arg7[%c11_609, %c0_610] : memref<117x128xf32, #tpu.memory_space<vmem>>, vector<1x128xf32>
    %456 = arith.mulf %454, %455 : vector<1x128xf32>
    %457 = arith.addf %452, %456 : vector<1x128xf32>
    %c1_611 = arith.constant 1 : index
    %c2_612 = arith.constant 2 : index
    %c0_613 = arith.constant 0 : index
    %458 = vector.load %arg14[%c1_611, %c2_612, %c0_613] : memref<10x10x128xf32, #tpu.memory_space<vmem>>, vector<1x1x128xf32>
    %459 = vector.shape_cast %458 : vector<1x1x128xf32> to vector<1x128xf32>
    %c12_614 = arith.constant 12 : index
    %c0_615 = arith.constant 0 : index
    %460 = vector.load %arg7[%c12_614, %c0_615] : memref<117x128xf32, #tpu.memory_space<vmem>>, vector<1x128xf32>
    %461 = arith.mulf %459, %460 : vector<1x128xf32>
    %462 = arith.addf %457, %461 : vector<1x128xf32>
    %c1_616 = arith.constant 1 : index
    %c3_617 = arith.constant 3 : index
    %c0_618 = arith.constant 0 : index
    %463 = vector.load %arg14[%c1_616, %c3_617, %c0_618] : memref<10x10x128xf32, #tpu.memory_space<vmem>>, vector<1x1x128xf32>
    %464 = vector.shape_cast %463 : vector<1x1x128xf32> to vector<1x128xf32>
    %c13_619 = arith.constant 13 : index
    %c0_620 = arith.constant 0 : index
    %465 = vector.load %arg7[%c13_619, %c0_620] : memref<117x128xf32, #tpu.memory_space<vmem>>, vector<1x128xf32>
    %466 = arith.mulf %464, %465 : vector<1x128xf32>
    %467 = arith.addf %462, %466 : vector<1x128xf32>
    %c1_621 = arith.constant 1 : index
    %c4_622 = arith.constant 4 : index
    %c0_623 = arith.constant 0 : index
    %468 = vector.load %arg14[%c1_621, %c4_622, %c0_623] : memref<10x10x128xf32, #tpu.memory_space<vmem>>, vector<1x1x128xf32>
    %469 = vector.shape_cast %468 : vector<1x1x128xf32> to vector<1x128xf32>
    %c14_624 = arith.constant 14 : index
    %c0_625 = arith.constant 0 : index
    %470 = vector.load %arg7[%c14_624, %c0_625] : memref<117x128xf32, #tpu.memory_space<vmem>>, vector<1x128xf32>
    %471 = arith.mulf %469, %470 : vector<1x128xf32>
    %472 = arith.addf %467, %471 : vector<1x128xf32>
    %c2_626 = arith.constant 2 : index
    %c2_627 = arith.constant 2 : index
    %c0_628 = arith.constant 0 : index
    %473 = vector.load %arg14[%c2_626, %c2_627, %c0_628] : memref<10x10x128xf32, #tpu.memory_space<vmem>>, vector<1x1x128xf32>
    %474 = vector.shape_cast %473 : vector<1x1x128xf32> to vector<1x128xf32>
    %c15_629 = arith.constant 15 : index
    %c0_630 = arith.constant 0 : index
    %475 = vector.load %arg7[%c15_629, %c0_630] : memref<117x128xf32, #tpu.memory_space<vmem>>, vector<1x128xf32>
    %476 = arith.mulf %474, %475 : vector<1x128xf32>
    %477 = arith.addf %472, %476 : vector<1x128xf32>
    %c2_631 = arith.constant 2 : index
    %c3_632 = arith.constant 3 : index
    %c0_633 = arith.constant 0 : index
    %478 = vector.load %arg14[%c2_631, %c3_632, %c0_633] : memref<10x10x128xf32, #tpu.memory_space<vmem>>, vector<1x1x128xf32>
    %479 = vector.shape_cast %478 : vector<1x1x128xf32> to vector<1x128xf32>
    %c16_634 = arith.constant 16 : index
    %c0_635 = arith.constant 0 : index
    %480 = vector.load %arg7[%c16_634, %c0_635] : memref<117x128xf32, #tpu.memory_space<vmem>>, vector<1x128xf32>
    %481 = arith.mulf %479, %480 : vector<1x128xf32>
    %482 = arith.addf %477, %481 : vector<1x128xf32>
    %c2_636 = arith.constant 2 : index
    %c4_637 = arith.constant 4 : index
    %c0_638 = arith.constant 0 : index
    %483 = vector.load %arg14[%c2_636, %c4_637, %c0_638] : memref<10x10x128xf32, #tpu.memory_space<vmem>>, vector<1x1x128xf32>
    %484 = vector.shape_cast %483 : vector<1x1x128xf32> to vector<1x128xf32>
    %c17_639 = arith.constant 17 : index
    %c0_640 = arith.constant 0 : index
    %485 = vector.load %arg7[%c17_639, %c0_640] : memref<117x128xf32, #tpu.memory_space<vmem>>, vector<1x128xf32>
    %486 = arith.mulf %484, %485 : vector<1x128xf32>
    %487 = arith.addf %482, %486 : vector<1x128xf32>
    %488 = arith.addf %487, %358 : vector<1x128xf32>
    %cst_641 = arith.constant 0.000000e+00 : f32
    %489 = vector.broadcast %cst_641 : f32 to vector<1x128xf32>
    %490 = arith.maximumf %488, %489 : vector<1x128xf32>
    %c1_642 = arith.constant 1 : index
    %c0_643 = arith.constant 0 : index
    %491 = vector.load %arg13[%c1_642, %c0_643] : memref<64x128xf32, #tpu.memory_space<vmem>>, vector<1x128xf32>
    tpu.vector_store %arg13[%c1_642, %c0_643], %490 {strides = array<i32>} : memref<64x128xf32, #tpu.memory_space<vmem>>, vector<1x128xf32>,
    %cst_644 = arith.constant 0.000000e+00 : f32
    %492 = vector.broadcast %cst_644 : f32 to vector<1x128xf32>
    %c0_645 = arith.constant 0 : index
    %c4_646 = arith.constant 4 : index
    %c0_647 = arith.constant 0 : index
    %493 = vector.load %arg14[%c0_645, %c4_646, %c0_647] : memref<10x10x128xf32, #tpu.memory_space<vmem>>, vector<1x1x128xf32>
    %494 = vector.shape_cast %493 : vector<1x1x128xf32> to vector<1x128xf32>
    %c9_648 = arith.constant 9 : index
    %c0_649 = arith.constant 0 : index
    %495 = vector.load %arg7[%c9_648, %c0_649] : memref<117x128xf32, #tpu.memory_space<vmem>>, vector<1x128xf32>
    %496 = arith.mulf %494, %495 : vector<1x128xf32>
    %497 = arith.addf %492, %496 : vector<1x128xf32>
    %c0_650 = arith.constant 0 : index
    %c5_651 = arith.constant 5 : index
    %c0_652 = arith.constant 0 : index
    %498 = vector.load %arg14[%c0_650, %c5_651, %c0_652] : memref<10x10x128xf32, #tpu.memory_space<vmem>>, vector<1x1x128xf32>
    %499 = vector.shape_cast %498 : vector<1x1x128xf32> to vector<1x128xf32>
    %c10_653 = arith.constant 10 : index
    %c0_654 = arith.constant 0 : index
    %500 = vector.load %arg7[%c10_653, %c0_654] : memref<117x128xf32, #tpu.memory_space<vmem>>, vector<1x128xf32>
    %501 = arith.mulf %499, %500 : vector<1x128xf32>
    %502 = arith.addf %497, %501 : vector<1x128xf32>
    %c0_655 = arith.constant 0 : index
    %c6_656 = arith.constant 6 : index
    %c0_657 = arith.constant 0 : index
    %503 = vector.load %arg14[%c0_655, %c6_656, %c0_657] : memref<10x10x128xf32, #tpu.memory_space<vmem>>, vector<1x1x128xf32>
    %504 = vector.shape_cast %503 : vector<1x1x128xf32> to vector<1x128xf32>
    %c11_658 = arith.constant 11 : index
    %c0_659 = arith.constant 0 : index
    %505 = vector.load %arg7[%c11_658, %c0_659] : memref<117x128xf32, #tpu.memory_space<vmem>>, vector<1x128xf32>
    %506 = arith.mulf %504, %505 : vector<1x128xf32>
    %507 = arith.addf %502, %506 : vector<1x128xf32>
    %c1_660 = arith.constant 1 : index
    %c4_661 = arith.constant 4 : index
    %c0_662 = arith.constant 0 : index
    %508 = vector.load %arg14[%c1_660, %c4_661, %c0_662] : memref<10x10x128xf32, #tpu.memory_space<vmem>>, vector<1x1x128xf32>
    %509 = vector.shape_cast %508 : vector<1x1x128xf32> to vector<1x128xf32>
    %c12_663 = arith.constant 12 : index
    %c0_664 = arith.constant 0 : index
    %510 = vector.load %arg7[%c12_663, %c0_664] : memref<117x128xf32, #tpu.memory_space<vmem>>, vector<1x128xf32>
    %511 = arith.mulf %509, %510 : vector<1x128xf32>
    %512 = arith.addf %507, %511 : vector<1x128xf32>
    %c1_665 = arith.constant 1 : index
    %c5_666 = arith.constant 5 : index
    %c0_667 = arith.constant 0 : index
    %513 = vector.load %arg14[%c1_665, %c5_666, %c0_667] : memref<10x10x128xf32, #tpu.memory_space<vmem>>, vector<1x1x128xf32>
    %514 = vector.shape_cast %513 : vector<1x1x128xf32> to vector<1x128xf32>
    %c13_668 = arith.constant 13 : index
    %c0_669 = arith.constant 0 : index
    %515 = vector.load %arg7[%c13_668, %c0_669] : memref<117x128xf32, #tpu.memory_space<vmem>>, vector<1x128xf32>
    %516 = arith.mulf %514, %515 : vector<1x128xf32>
    %517 = arith.addf %512, %516 : vector<1x128xf32>
    %c1_670 = arith.constant 1 : index
    %c6_671 = arith.constant 6 : index
    %c0_672 = arith.constant 0 : index
    %518 = vector.load %arg14[%c1_670, %c6_671, %c0_672] : memref<10x10x128xf32, #tpu.memory_space<vmem>>, vector<1x1x128xf32>
    %519 = vector.shape_cast %518 : vector<1x1x128xf32> to vector<1x128xf32>
    %c14_673 = arith.constant 14 : index
    %c0_674 = arith.constant 0 : index
    %520 = vector.load %arg7[%c14_673, %c0_674] : memref<117x128xf32, #tpu.memory_space<vmem>>, vector<1x128xf32>
    %521 = arith.mulf %519, %520 : vector<1x128xf32>
    %522 = arith.addf %517, %521 : vector<1x128xf32>
    %c2_675 = arith.constant 2 : index
    %c4_676 = arith.constant 4 : index
    %c0_677 = arith.constant 0 : index
    %523 = vector.load %arg14[%c2_675, %c4_676, %c0_677] : memref<10x10x128xf32, #tpu.memory_space<vmem>>, vector<1x1x128xf32>
    %524 = vector.shape_cast %523 : vector<1x1x128xf32> to vector<1x128xf32>
    %c15_678 = arith.constant 15 : index
    %c0_679 = arith.constant 0 : index
    %525 = vector.load %arg7[%c15_678, %c0_679] : memref<117x128xf32, #tpu.memory_space<vmem>>, vector<1x128xf32>
    %526 = arith.mulf %524, %525 : vector<1x128xf32>
    %527 = arith.addf %522, %526 : vector<1x128xf32>
    %c2_680 = arith.constant 2 : index
    %c5_681 = arith.constant 5 : index
    %c0_682 = arith.constant 0 : index
    %528 = vector.load %arg14[%c2_680, %c5_681, %c0_682] : memref<10x10x128xf32, #tpu.memory_space<vmem>>, vector<1x1x128xf32>
    %529 = vector.shape_cast %528 : vector<1x1x128xf32> to vector<1x128xf32>
    %c16_683 = arith.constant 16 : index
    %c0_684 = arith.constant 0 : index
    %530 = vector.load %arg7[%c16_683, %c0_684] : memref<117x128xf32, #tpu.memory_space<vmem>>, vector<1x128xf32>
    %531 = arith.mulf %529, %530 : vector<1x128xf32>
    %532 = arith.addf %527, %531 : vector<1x128xf32>
    %c2_685 = arith.constant 2 : index
    %c6_686 = arith.constant 6 : index
    %c0_687 = arith.constant 0 : index
    %533 = vector.load %arg14[%c2_685, %c6_686, %c0_687] : memref<10x10x128xf32, #tpu.memory_space<vmem>>, vector<1x1x128xf32>
    %534 = vector.shape_cast %533 : vector<1x1x128xf32> to vector<1x128xf32>
    %c17_688 = arith.constant 17 : index
    %c0_689 = arith.constant 0 : index
    %535 = vector.load %arg7[%c17_688, %c0_689] : memref<117x128xf32, #tpu.memory_space<vmem>>, vector<1x128xf32>
    %536 = arith.mulf %534, %535 : vector<1x128xf32>
    %537 = arith.addf %532, %536 : vector<1x128xf32>
    %538 = arith.addf %537, %358 : vector<1x128xf32>
    %cst_690 = arith.constant 0.000000e+00 : f32
    %539 = vector.broadcast %cst_690 : f32 to vector<1x128xf32>
    %540 = arith.maximumf %538, %539 : vector<1x128xf32>
    %c2_691 = arith.constant 2 : index
    %c0_692 = arith.constant 0 : index
    %541 = vector.load %arg13[%c2_691, %c0_692] : memref<64x128xf32, #tpu.memory_space<vmem>>, vector<1x128xf32>
    tpu.vector_store %arg13[%c2_691, %c0_692], %540 {strides = array<i32>} : memref<64x128xf32, #tpu.memory_space<vmem>>, vector<1x128xf32>,
    %cst_693 = arith.constant 0.000000e+00 : f32
    %542 = vector.broadcast %cst_693 : f32 to vector<1x128xf32>
    %c0_694 = arith.constant 0 : index
    %c6_695 = arith.constant 6 : index
    %c0_696 = arith.constant 0 : index
    %543 = vector.load %arg14[%c0_694, %c6_695, %c0_696] : memref<10x10x128xf32, #tpu.memory_space<vmem>>, vector<1x1x128xf32>
    %544 = vector.shape_cast %543 : vector<1x1x128xf32> to vector<1x128xf32>
    %c9_697 = arith.constant 9 : index
    %c0_698 = arith.constant 0 : index
    %545 = vector.load %arg7[%c9_697, %c0_698] : memref<117x128xf32, #tpu.memory_space<vmem>>, vector<1x128xf32>
    %546 = arith.mulf %544, %545 : vector<1x128xf32>
    %547 = arith.addf %542, %546 : vector<1x128xf32>
    %c0_699 = arith.constant 0 : index
    %c7_700 = arith.constant 7 : index
    %c0_701 = arith.constant 0 : index
    %548 = vector.load %arg14[%c0_699, %c7_700, %c0_701] : memref<10x10x128xf32, #tpu.memory_space<vmem>>, vector<1x1x128xf32>
    %549 = vector.shape_cast %548 : vector<1x1x128xf32> to vector<1x128xf32>
    %c10_702 = arith.constant 10 : index
    %c0_703 = arith.constant 0 : index
    %550 = vector.load %arg7[%c10_702, %c0_703] : memref<117x128xf32, #tpu.memory_space<vmem>>, vector<1x128xf32>
    %551 = arith.mulf %549, %550 : vector<1x128xf32>
    %552 = arith.addf %547, %551 : vector<1x128xf32>
    %c0_704 = arith.constant 0 : index
    %c8_705 = arith.constant 8 : index
    %c0_706 = arith.constant 0 : index
    %553 = vector.load %arg14[%c0_704, %c8_705, %c0_706] : memref<10x10x128xf32, #tpu.memory_space<vmem>>, vector<1x1x128xf32>
    %554 = vector.shape_cast %553 : vector<1x1x128xf32> to vector<1x128xf32>
    %c11_707 = arith.constant 11 : index
    %c0_708 = arith.constant 0 : index
    %555 = vector.load %arg7[%c11_707, %c0_708] : memref<117x128xf32, #tpu.memory_space<vmem>>, vector<1x128xf32>
    %556 = arith.mulf %554, %555 : vector<1x128xf32>
    %557 = arith.addf %552, %556 : vector<1x128xf32>
    %c1_709 = arith.constant 1 : index
    %c6_710 = arith.constant 6 : index
    %c0_711 = arith.constant 0 : index
    %558 = vector.load %arg14[%c1_709, %c6_710, %c0_711] : memref<10x10x128xf32, #tpu.memory_space<vmem>>, vector<1x1x128xf32>
    %559 = vector.shape_cast %558 : vector<1x1x128xf32> to vector<1x128xf32>
    %c12_712 = arith.constant 12 : index
    %c0_713 = arith.constant 0 : index
    %560 = vector.load %arg7[%c12_712, %c0_713] : memref<117x128xf32, #tpu.memory_space<vmem>>, vector<1x128xf32>
    %561 = arith.mulf %559, %560 : vector<1x128xf32>
    %562 = arith.addf %557, %561 : vector<1x128xf32>
    %c1_714 = arith.constant 1 : index
    %c7_715 = arith.constant 7 : index
    %c0_716 = arith.constant 0 : index
    %563 = vector.load %arg14[%c1_714, %c7_715, %c0_716] : memref<10x10x128xf32, #tpu.memory_space<vmem>>, vector<1x1x128xf32>
    %564 = vector.shape_cast %563 : vector<1x1x128xf32> to vector<1x128xf32>
    %c13_717 = arith.constant 13 : index
    %c0_718 = arith.constant 0 : index
    %565 = vector.load %arg7[%c13_717, %c0_718] : memref<117x128xf32, #tpu.memory_space<vmem>>, vector<1x128xf32>
    %566 = arith.mulf %564, %565 : vector<1x128xf32>
    %567 = arith.addf %562, %566 : vector<1x128xf32>
    %c1_719 = arith.constant 1 : index
    %c8_720 = arith.constant 8 : index
    %c0_721 = arith.constant 0 : index
    %568 = vector.load %arg14[%c1_719, %c8_720, %c0_721] : memref<10x10x128xf32, #tpu.memory_space<vmem>>, vector<1x1x128xf32>
    %569 = vector.shape_cast %568 : vector<1x1x128xf32> to vector<1x128xf32>
    %c14_722 = arith.constant 14 : index
    %c0_723 = arith.constant 0 : index
    %570 = vector.load %arg7[%c14_722, %c0_723] : memref<117x128xf32, #tpu.memory_space<vmem>>, vector<1x128xf32>
    %571 = arith.mulf %569, %570 : vector<1x128xf32>
    %572 = arith.addf %567, %571 : vector<1x128xf32>
    %c2_724 = arith.constant 2 : index
    %c6_725 = arith.constant 6 : index
    %c0_726 = arith.constant 0 : index
    %573 = vector.load %arg14[%c2_724, %c6_725, %c0_726] : memref<10x10x128xf32, #tpu.memory_space<vmem>>, vector<1x1x128xf32>
    %574 = vector.shape_cast %573 : vector<1x1x128xf32> to vector<1x128xf32>
    %c15_727 = arith.constant 15 : index
    %c0_728 = arith.constant 0 : index
    %575 = vector.load %arg7[%c15_727, %c0_728] : memref<117x128xf32, #tpu.memory_space<vmem>>, vector<1x128xf32>
    %576 = arith.mulf %574, %575 : vector<1x128xf32>
    %577 = arith.addf %572, %576 : vector<1x128xf32>
    %c2_729 = arith.constant 2 : index
    %c7_730 = arith.constant 7 : index
    %c0_731 = arith.constant 0 : index
    %578 = vector.load %arg14[%c2_729, %c7_730, %c0_731] : memref<10x10x128xf32, #tpu.memory_space<vmem>>, vector<1x1x128xf32>
    %579 = vector.shape_cast %578 : vector<1x1x128xf32> to vector<1x128xf32>
    %c16_732 = arith.constant 16 : index
    %c0_733 = arith.constant 0 : index
    %580 = vector.load %arg7[%c16_732, %c0_733] : memref<117x128xf32, #tpu.memory_space<vmem>>, vector<1x128xf32>
    %581 = arith.mulf %579, %580 : vector<1x128xf32>
    %582 = arith.addf %577, %581 : vector<1x128xf32>
    %c2_734 = arith.constant 2 : index
    %c8_735 = arith.constant 8 : index
    %c0_736 = arith.constant 0 : index
    %583 = vector.load %arg14[%c2_734, %c8_735, %c0_736] : memref<10x10x128xf32, #tpu.memory_space<vmem>>, vector<1x1x128xf32>
    %584 = vector.shape_cast %583 : vector<1x1x128xf32> to vector<1x128xf32>
    %c17_737 = arith.constant 17 : index
    %c0_738 = arith.constant 0 : index
    %585 = vector.load %arg7[%c17_737, %c0_738] : memref<117x128xf32, #tpu.memory_space<vmem>>, vector<1x128xf32>
    %586 = arith.mulf %584, %585 : vector<1x128xf32>
    %587 = arith.addf %582, %586 : vector<1x128xf32>
    %588 = arith.addf %587, %358 : vector<1x128xf32>
    %cst_739 = arith.constant 0.000000e+00 : f32
    %589 = vector.broadcast %cst_739 : f32 to vector<1x128xf32>
    %590 = arith.maximumf %588, %589 : vector<1x128xf32>
    %c3_740 = arith.constant 3 : index
    %c0_741 = arith.constant 0 : index
    %591 = vector.load %arg13[%c3_740, %c0_741] : memref<64x128xf32, #tpu.memory_space<vmem>>, vector<1x128xf32>
    tpu.vector_store %arg13[%c3_740, %c0_741], %590 {strides = array<i32>} : memref<64x128xf32, #tpu.memory_space<vmem>>, vector<1x128xf32>,
    %cst_742 = arith.constant 0.000000e+00 : f32
    %592 = vector.broadcast %cst_742 : f32 to vector<1x128xf32>
    %c2_743 = arith.constant 2 : index
    %c0_744 = arith.constant 0 : index
    %c0_745 = arith.constant 0 : index
    %593 = vector.load %arg14[%c2_743, %c0_744, %c0_745] : memref<10x10x128xf32, #tpu.memory_space<vmem>>, vector<1x1x128xf32>
    %594 = vector.shape_cast %593 : vector<1x1x128xf32> to vector<1x128xf32>
    %c9_746 = arith.constant 9 : index
    %c0_747 = arith.constant 0 : index
    %595 = vector.load %arg7[%c9_746, %c0_747] : memref<117x128xf32, #tpu.memory_space<vmem>>, vector<1x128xf32>
    %596 = arith.mulf %594, %595 : vector<1x128xf32>
    %597 = arith.addf %592, %596 : vector<1x128xf32>
    %c2_748 = arith.constant 2 : index
    %c1_749 = arith.constant 1 : index
    %c0_750 = arith.constant 0 : index
    %598 = vector.load %arg14[%c2_748, %c1_749, %c0_750] : memref<10x10x128xf32, #tpu.memory_space<vmem>>, vector<1x1x128xf32>
    %599 = vector.shape_cast %598 : vector<1x1x128xf32> to vector<1x128xf32>
    %c10_751 = arith.constant 10 : index
    %c0_752 = arith.constant 0 : index
    %600 = vector.load %arg7[%c10_751, %c0_752] : memref<117x128xf32, #tpu.memory_space<vmem>>, vector<1x128xf32>
    %601 = arith.mulf %599, %600 : vector<1x128xf32>
    %602 = arith.addf %597, %601 : vector<1x128xf32>
    %c2_753 = arith.constant 2 : index
    %c2_754 = arith.constant 2 : index
    %c0_755 = arith.constant 0 : index
    %603 = vector.load %arg14[%c2_753, %c2_754, %c0_755] : memref<10x10x128xf32, #tpu.memory_space<vmem>>, vector<1x1x128xf32>
    %604 = vector.shape_cast %603 : vector<1x1x128xf32> to vector<1x128xf32>
    %c11_756 = arith.constant 11 : index
    %c0_757 = arith.constant 0 : index
    %605 = vector.load %arg7[%c11_756, %c0_757] : memref<117x128xf32, #tpu.memory_space<vmem>>, vector<1x128xf32>
    %606 = arith.mulf %604, %605 : vector<1x128xf32>
    %607 = arith.addf %602, %606 : vector<1x128xf32>
    %c3_758 = arith.constant 3 : index
    %c0_759 = arith.constant 0 : index
    %c0_760 = arith.constant 0 : index
    %608 = vector.load %arg14[%c3_758, %c0_759, %c0_760] : memref<10x10x128xf32, #tpu.memory_space<vmem>>, vector<1x1x128xf32>
    %609 = vector.shape_cast %608 : vector<1x1x128xf32> to vector<1x128xf32>
    %c12_761 = arith.constant 12 : index
    %c0_762 = arith.constant 0 : index
    %610 = vector.load %arg7[%c12_761, %c0_762] : memref<117x128xf32, #tpu.memory_space<vmem>>, vector<1x128xf32>
    %611 = arith.mulf %609, %610 : vector<1x128xf32>
    %612 = arith.addf %607, %611 : vector<1x128xf32>
    %c3_763 = arith.constant 3 : index
    %c1_764 = arith.constant 1 : index
    %c0_765 = arith.constant 0 : index
    %613 = vector.load %arg14[%c3_763, %c1_764, %c0_765] : memref<10x10x128xf32, #tpu.memory_space<vmem>>, vector<1x1x128xf32>
    %614 = vector.shape_cast %613 : vector<1x1x128xf32> to vector<1x128xf32>
    %c13_766 = arith.constant 13 : index
    %c0_767 = arith.constant 0 : index
    %615 = vector.load %arg7[%c13_766, %c0_767] : memref<117x128xf32, #tpu.memory_space<vmem>>, vector<1x128xf32>
    %616 = arith.mulf %614, %615 : vector<1x128xf32>
    %617 = arith.addf %612, %616 : vector<1x128xf32>
    %c3_768 = arith.constant 3 : index
    %c2_769 = arith.constant 2 : index
    %c0_770 = arith.constant 0 : index
    %618 = vector.load %arg14[%c3_768, %c2_769, %c0_770] : memref<10x10x128xf32, #tpu.memory_space<vmem>>, vector<1x1x128xf32>
    %619 = vector.shape_cast %618 : vector<1x1x128xf32> to vector<1x128xf32>
    %c14_771 = arith.constant 14 : index
    %c0_772 = arith.constant 0 : index
    %620 = vector.load %arg7[%c14_771, %c0_772] : memref<117x128xf32, #tpu.memory_space<vmem>>, vector<1x128xf32>
    %621 = arith.mulf %619, %620 : vector<1x128xf32>
    %622 = arith.addf %617, %621 : vector<1x128xf32>
    %c4_773 = arith.constant 4 : index
    %c0_774 = arith.constant 0 : index
    %c0_775 = arith.constant 0 : index
    %623 = vector.load %arg14[%c4_773, %c0_774, %c0_775] : memref<10x10x128xf32, #tpu.memory_space<vmem>>, vector<1x1x128xf32>
    %624 = vector.shape_cast %623 : vector<1x1x128xf32> to vector<1x128xf32>
    %c15_776 = arith.constant 15 : index
    %c0_777 = arith.constant 0 : index
    %625 = vector.load %arg7[%c15_776, %c0_777] : memref<117x128xf32, #tpu.memory_space<vmem>>, vector<1x128xf32>
    %626 = arith.mulf %624, %625 : vector<1x128xf32>
    %627 = arith.addf %622, %626 : vector<1x128xf32>
    %c4_778 = arith.constant 4 : index
    %c1_779 = arith.constant 1 : index
    %c0_780 = arith.constant 0 : index
    %628 = vector.load %arg14[%c4_778, %c1_779, %c0_780] : memref<10x10x128xf32, #tpu.memory_space<vmem>>, vector<1x1x128xf32>
    %629 = vector.shape_cast %628 : vector<1x1x128xf32> to vector<1x128xf32>
    %c16_781 = arith.constant 16 : index
    %c0_782 = arith.constant 0 : index
    %630 = vector.load %arg7[%c16_781, %c0_782] : memref<117x128xf32, #tpu.memory_space<vmem>>, vector<1x128xf32>
    %631 = arith.mulf %629, %630 : vector<1x128xf32>
    %632 = arith.addf %627, %631 : vector<1x128xf32>
    %c4_783 = arith.constant 4 : index
    %c2_784 = arith.constant 2 : index
    %c0_785 = arith.constant 0 : index
    %633 = vector.load %arg14[%c4_783, %c2_784, %c0_785] : memref<10x10x128xf32, #tpu.memory_space<vmem>>, vector<1x1x128xf32>
    %634 = vector.shape_cast %633 : vector<1x1x128xf32> to vector<1x128xf32>
    %c17_786 = arith.constant 17 : index
    %c0_787 = arith.constant 0 : index
    %635 = vector.load %arg7[%c17_786, %c0_787] : memref<117x128xf32, #tpu.memory_space<vmem>>, vector<1x128xf32>
    %636 = arith.mulf %634, %635 : vector<1x128xf32>
    %637 = arith.addf %632, %636 : vector<1x128xf32>
    %638 = arith.addf %637, %358 : vector<1x128xf32>
    %cst_788 = arith.constant 0.000000e+00 : f32
    %639 = vector.broadcast %cst_788 : f32 to vector<1x128xf32>
    %640 = arith.maximumf %638, %639 : vector<1x128xf32>
    %c4_789 = arith.constant 4 : index
    %c0_790 = arith.constant 0 : index
    %641 = vector.load %arg13[%c4_789, %c0_790] : memref<64x128xf32, #tpu.memory_space<vmem>>, vector<1x128xf32>
    tpu.vector_store %arg13[%c4_789, %c0_790], %640 {strides = array<i32>} : memref<64x128xf32, #tpu.memory_space<vmem>>, vector<1x128xf32>,
    %cst_791 = arith.constant 0.000000e+00 : f32
    %642 = vector.broadcast %cst_791 : f32 to vector<1x128xf32>
    %c2_792 = arith.constant 2 : index
    %c2_793 = arith.constant 2 : index
    %c0_794 = arith.constant 0 : index
    %643 = vector.load %arg14[%c2_792, %c2_793, %c0_794] : memref<10x10x128xf32, #tpu.memory_space<vmem>>, vector<1x1x128xf32>
    %644 = vector.shape_cast %643 : vector<1x1x128xf32> to vector<1x128xf32>
    %c9_795 = arith.constant 9 : index
    %c0_796 = arith.constant 0 : index
    %645 = vector.load %arg7[%c9_795, %c0_796] : memref<117x128xf32, #tpu.memory_space<vmem>>, vector<1x128xf32>
    %646 = arith.mulf %644, %645 : vector<1x128xf32>
    %647 = arith.addf %642, %646 : vector<1x128xf32>
    %c2_797 = arith.constant 2 : index
    %c3_798 = arith.constant 3 : index
    %c0_799 = arith.constant 0 : index
    %648 = vector.load %arg14[%c2_797, %c3_798, %c0_799] : memref<10x10x128xf32, #tpu.memory_space<vmem>>, vector<1x1x128xf32>
    %649 = vector.shape_cast %648 : vector<1x1x128xf32> to vector<1x128xf32>
    %c10_800 = arith.constant 10 : index
    %c0_801 = arith.constant 0 : index
    %650 = vector.load %arg7[%c10_800, %c0_801] : memref<117x128xf32, #tpu.memory_space<vmem>>, vector<1x128xf32>
    %651 = arith.mulf %649, %650 : vector<1x128xf32>
    %652 = arith.addf %647, %651 : vector<1x128xf32>
    %c2_802 = arith.constant 2 : index
    %c4_803 = arith.constant 4 : index
    %c0_804 = arith.constant 0 : index
    %653 = vector.load %arg14[%c2_802, %c4_803, %c0_804] : memref<10x10x128xf32, #tpu.memory_space<vmem>>, vector<1x1x128xf32>
    %654 = vector.shape_cast %653 : vector<1x1x128xf32> to vector<1x128xf32>
    %c11_805 = arith.constant 11 : index
    %c0_806 = arith.constant 0 : index
    %655 = vector.load %arg7[%c11_805, %c0_806] : memref<117x128xf32, #tpu.memory_space<vmem>>, vector<1x128xf32>
    %656 = arith.mulf %654, %655 : vector<1x128xf32>
    %657 = arith.addf %652, %656 : vector<1x128xf32>
    %c3_807 = arith.constant 3 : index
    %c2_808 = arith.constant 2 : index
    %c0_809 = arith.constant 0 : index
    %658 = vector.load %arg14[%c3_807, %c2_808, %c0_809] : memref<10x10x128xf32, #tpu.memory_space<vmem>>, vector<1x1x128xf32>
    %659 = vector.shape_cast %658 : vector<1x1x128xf32> to vector<1x128xf32>
    %c12_810 = arith.constant 12 : index
    %c0_811 = arith.constant 0 : index
    %660 = vector.load %arg7[%c12_810, %c0_811] : memref<117x128xf32, #tpu.memory_space<vmem>>, vector<1x128xf32>
    %661 = arith.mulf %659, %660 : vector<1x128xf32>
    %662 = arith.addf %657, %661 : vector<1x128xf32>
    %c3_812 = arith.constant 3 : index
    %c3_813 = arith.constant 3 : index
    %c0_814 = arith.constant 0 : index
    %663 = vector.load %arg14[%c3_812, %c3_813, %c0_814] : memref<10x10x128xf32, #tpu.memory_space<vmem>>, vector<1x1x128xf32>
    %664 = vector.shape_cast %663 : vector<1x1x128xf32> to vector<1x128xf32>
    %c13_815 = arith.constant 13 : index
    %c0_816 = arith.constant 0 : index
    %665 = vector.load %arg7[%c13_815, %c0_816] : memref<117x128xf32, #tpu.memory_space<vmem>>, vector<1x128xf32>
    %666 = arith.mulf %664, %665 : vector<1x128xf32>
    %667 = arith.addf %662, %666 : vector<1x128xf32>
    %c3_817 = arith.constant 3 : index
    %c4_818 = arith.constant 4 : index
    %c0_819 = arith.constant 0 : index
    %668 = vector.load %arg14[%c3_817, %c4_818, %c0_819] : memref<10x10x128xf32, #tpu.memory_space<vmem>>, vector<1x1x128xf32>
    %669 = vector.shape_cast %668 : vector<1x1x128xf32> to vector<1x128xf32>
    %c14_820 = arith.constant 14 : index
    %c0_821 = arith.constant 0 : index
    %670 = vector.load %arg7[%c14_820, %c0_821] : memref<117x128xf32, #tpu.memory_space<vmem>>, vector<1x128xf32>
    %671 = arith.mulf %669, %670 : vector<1x128xf32>
    %672 = arith.addf %667, %671 : vector<1x128xf32>
    %c4_822 = arith.constant 4 : index
    %c2_823 = arith.constant 2 : index
    %c0_824 = arith.constant 0 : index
    %673 = vector.load %arg14[%c4_822, %c2_823, %c0_824] : memref<10x10x128xf32, #tpu.memory_space<vmem>>, vector<1x1x128xf32>
    %674 = vector.shape_cast %673 : vector<1x1x128xf32> to vector<1x128xf32>
    %c15_825 = arith.constant 15 : index
    %c0_826 = arith.constant 0 : index
    %675 = vector.load %arg7[%c15_825, %c0_826] : memref<117x128xf32, #tpu.memory_space<vmem>>, vector<1x128xf32>
    %676 = arith.mulf %674, %675 : vector<1x128xf32>
    %677 = arith.addf %672, %676 : vector<1x128xf32>
    %c4_827 = arith.constant 4 : index
    %c3_828 = arith.constant 3 : index
    %c0_829 = arith.constant 0 : index
    %678 = vector.load %arg14[%c4_827, %c3_828, %c0_829] : memref<10x10x128xf32, #tpu.memory_space<vmem>>, vector<1x1x128xf32>
    %679 = vector.shape_cast %678 : vector<1x1x128xf32> to vector<1x128xf32>
    %c16_830 = arith.constant 16 : index
    %c0_831 = arith.constant 0 : index
    %680 = vector.load %arg7[%c16_830, %c0_831] : memref<117x128xf32, #tpu.memory_space<vmem>>, vector<1x128xf32>
    %681 = arith.mulf %679, %680 : vector<1x128xf32>
    %682 = arith.addf %677, %681 : vector<1x128xf32>
    %c4_832 = arith.constant 4 : index
    %c4_833 = arith.constant 4 : index
    %c0_834 = arith.constant 0 : index
    %683 = vector.load %arg14[%c4_832, %c4_833, %c0_834] : memref<10x10x128xf32, #tpu.memory_space<vmem>>, vector<1x1x128xf32>
    %684 = vector.shape_cast %683 : vector<1x1x128xf32> to vector<1x128xf32>
    %c17_835 = arith.constant 17 : index
    %c0_836 = arith.constant 0 : index
    %685 = vector.load %arg7[%c17_835, %c0_836] : memref<117x128xf32, #tpu.memory_space<vmem>>, vector<1x128xf32>
    %686 = arith.mulf %684, %685 : vector<1x128xf32>
    %687 = arith.addf %682, %686 : vector<1x128xf32>
    %688 = arith.addf %687, %358 : vector<1x128xf32>
    %cst_837 = arith.constant 0.000000e+00 : f32
    %689 = vector.broadcast %cst_837 : f32 to vector<1x128xf32>
    %690 = arith.maximumf %688, %689 : vector<1x128xf32>
    %c5_838 = arith.constant 5 : index
    %c0_839 = arith.constant 0 : index
    %691 = vector.load %arg13[%c5_838, %c0_839] : memref<64x128xf32, #tpu.memory_space<vmem>>, vector<1x128xf32>
    tpu.vector_store %arg13[%c5_838, %c0_839], %690 {strides = array<i32>} : memref<64x128xf32, #tpu.memory_space<vmem>>, vector<1x128xf32>,
    %cst_840 = arith.constant 0.000000e+00 : f32
    %692 = vector.broadcast %cst_840 : f32 to vector<1x128xf32>
    %c2_841 = arith.constant 2 : index
    %c4_842 = arith.constant 4 : index
    %c0_843 = arith.constant 0 : index
    %693 = vector.load %arg14[%c2_841, %c4_842, %c0_843] : memref<10x10x128xf32, #tpu.memory_space<vmem>>, vector<1x1x128xf32>
    %694 = vector.shape_cast %693 : vector<1x1x128xf32> to vector<1x128xf32>
    %c9_844 = arith.constant 9 : index
    %c0_845 = arith.constant 0 : index
    %695 = vector.load %arg7[%c9_844, %c0_845] : memref<117x128xf32, #tpu.memory_space<vmem>>, vector<1x128xf32>
    %696 = arith.mulf %694, %695 : vector<1x128xf32>
    %697 = arith.addf %692, %696 : vector<1x128xf32>
    %c2_846 = arith.constant 2 : index
    %c5_847 = arith.constant 5 : index
    %c0_848 = arith.constant 0 : index
    %698 = vector.load %arg14[%c2_846, %c5_847, %c0_848] : memref<10x10x128xf32, #tpu.memory_space<vmem>>, vector<1x1x128xf32>
    %699 = vector.shape_cast %698 : vector<1x1x128xf32> to vector<1x128xf32>
    %c10_849 = arith.constant 10 : index
    %c0_850 = arith.constant 0 : index
    %700 = vector.load %arg7[%c10_849, %c0_850] : memref<117x128xf32, #tpu.memory_space<vmem>>, vector<1x128xf32>
    %701 = arith.mulf %699, %700 : vector<1x128xf32>
    %702 = arith.addf %697, %701 : vector<1x128xf32>
    %c2_851 = arith.constant 2 : index
    %c6_852 = arith.constant 6 : index
    %c0_853 = arith.constant 0 : index
    %703 = vector.load %arg14[%c2_851, %c6_852, %c0_853] : memref<10x10x128xf32, #tpu.memory_space<vmem>>, vector<1x1x128xf32>
    %704 = vector.shape_cast %703 : vector<1x1x128xf32> to vector<1x128xf32>
    %c11_854 = arith.constant 11 : index
    %c0_855 = arith.constant 0 : index
    %705 = vector.load %arg7[%c11_854, %c0_855] : memref<117x128xf32, #tpu.memory_space<vmem>>, vector<1x128xf32>
    %706 = arith.mulf %704, %705 : vector<1x128xf32>
    %707 = arith.addf %702, %706 : vector<1x128xf32>
    %c3_856 = arith.constant 3 : index
    %c4_857 = arith.constant 4 : index
    %c0_858 = arith.constant 0 : index
    %708 = vector.load %arg14[%c3_856, %c4_857, %c0_858] : memref<10x10x128xf32, #tpu.memory_space<vmem>>, vector<1x1x128xf32>
    %709 = vector.shape_cast %708 : vector<1x1x128xf32> to vector<1x128xf32>
    %c12_859 = arith.constant 12 : index
    %c0_860 = arith.constant 0 : index
    %710 = vector.load %arg7[%c12_859, %c0_860] : memref<117x128xf32, #tpu.memory_space<vmem>>, vector<1x128xf32>
    %711 = arith.mulf %709, %710 : vector<1x128xf32>
    %712 = arith.addf %707, %711 : vector<1x128xf32>
    %c3_861 = arith.constant 3 : index
    %c5_862 = arith.constant 5 : index
    %c0_863 = arith.constant 0 : index
    %713 = vector.load %arg14[%c3_861, %c5_862, %c0_863] : memref<10x10x128xf32, #tpu.memory_space<vmem>>, vector<1x1x128xf32>
    %714 = vector.shape_cast %713 : vector<1x1x128xf32> to vector<1x128xf32>
    %c13_864 = arith.constant 13 : index
    %c0_865 = arith.constant 0 : index
    %715 = vector.load %arg7[%c13_864, %c0_865] : memref<117x128xf32, #tpu.memory_space<vmem>>, vector<1x128xf32>
    %716 = arith.mulf %714, %715 : vector<1x128xf32>
    %717 = arith.addf %712, %716 : vector<1x128xf32>
    %c3_866 = arith.constant 3 : index
    %c6_867 = arith.constant 6 : index
    %c0_868 = arith.constant 0 : index
    %718 = vector.load %arg14[%c3_866, %c6_867, %c0_868] : memref<10x10x128xf32, #tpu.memory_space<vmem>>, vector<1x1x128xf32>
    %719 = vector.shape_cast %718 : vector<1x1x128xf32> to vector<1x128xf32>
    %c14_869 = arith.constant 14 : index
    %c0_870 = arith.constant 0 : index
    %720 = vector.load %arg7[%c14_869, %c0_870] : memref<117x128xf32, #tpu.memory_space<vmem>>, vector<1x128xf32>
    %721 = arith.mulf %719, %720 : vector<1x128xf32>
    %722 = arith.addf %717, %721 : vector<1x128xf32>
    %c4_871 = arith.constant 4 : index
    %c4_872 = arith.constant 4 : index
    %c0_873 = arith.constant 0 : index
    %723 = vector.load %arg14[%c4_871, %c4_872, %c0_873] : memref<10x10x128xf32, #tpu.memory_space<vmem>>, vector<1x1x128xf32>
    %724 = vector.shape_cast %723 : vector<1x1x128xf32> to vector<1x128xf32>
    %c15_874 = arith.constant 15 : index
    %c0_875 = arith.constant 0 : index
    %725 = vector.load %arg7[%c15_874, %c0_875] : memref<117x128xf32, #tpu.memory_space<vmem>>, vector<1x128xf32>
    %726 = arith.mulf %724, %725 : vector<1x128xf32>
    %727 = arith.addf %722, %726 : vector<1x128xf32>
    %c4_876 = arith.constant 4 : index
    %c5_877 = arith.constant 5 : index
    %c0_878 = arith.constant 0 : index
    %728 = vector.load %arg14[%c4_876, %c5_877, %c0_878] : memref<10x10x128xf32, #tpu.memory_space<vmem>>, vector<1x1x128xf32>
    %729 = vector.shape_cast %728 : vector<1x1x128xf32> to vector<1x128xf32>
    %c16_879 = arith.constant 16 : index
    %c0_880 = arith.constant 0 : index
    %730 = vector.load %arg7[%c16_879, %c0_880] : memref<117x128xf32, #tpu.memory_space<vmem>>, vector<1x128xf32>
    %731 = arith.mulf %729, %730 : vector<1x128xf32>
    %732 = arith.addf %727, %731 : vector<1x128xf32>
    %c4_881 = arith.constant 4 : index
    %c6_882 = arith.constant 6 : index
    %c0_883 = arith.constant 0 : index
    %733 = vector.load %arg14[%c4_881, %c6_882, %c0_883] : memref<10x10x128xf32, #tpu.memory_space<vmem>>, vector<1x1x128xf32>
    %734 = vector.shape_cast %733 : vector<1x1x128xf32> to vector<1x128xf32>
    %c17_884 = arith.constant 17 : index
    %c0_885 = arith.constant 0 : index
    %735 = vector.load %arg7[%c17_884, %c0_885] : memref<117x128xf32, #tpu.memory_space<vmem>>, vector<1x128xf32>
    %736 = arith.mulf %734, %735 : vector<1x128xf32>
    %737 = arith.addf %732, %736 : vector<1x128xf32>
    %738 = arith.addf %737, %358 : vector<1x128xf32>
    %cst_886 = arith.constant 0.000000e+00 : f32
    %739 = vector.broadcast %cst_886 : f32 to vector<1x128xf32>
    %740 = arith.maximumf %738, %739 : vector<1x128xf32>
    %c6_887 = arith.constant 6 : index
    %c0_888 = arith.constant 0 : index
    %741 = vector.load %arg13[%c6_887, %c0_888] : memref<64x128xf32, #tpu.memory_space<vmem>>, vector<1x128xf32>
    tpu.vector_store %arg13[%c6_887, %c0_888], %740 {strides = array<i32>} : memref<64x128xf32, #tpu.memory_space<vmem>>, vector<1x128xf32>,
    %cst_889 = arith.constant 0.000000e+00 : f32
    %742 = vector.broadcast %cst_889 : f32 to vector<1x128xf32>
    %c2_890 = arith.constant 2 : index
    %c6_891 = arith.constant 6 : index
    %c0_892 = arith.constant 0 : index
    %743 = vector.load %arg14[%c2_890, %c6_891, %c0_892] : memref<10x10x128xf32, #tpu.memory_space<vmem>>, vector<1x1x128xf32>
    %744 = vector.shape_cast %743 : vector<1x1x128xf32> to vector<1x128xf32>
    %c9_893 = arith.constant 9 : index
    %c0_894 = arith.constant 0 : index
    %745 = vector.load %arg7[%c9_893, %c0_894] : memref<117x128xf32, #tpu.memory_space<vmem>>, vector<1x128xf32>
    %746 = arith.mulf %744, %745 : vector<1x128xf32>
    %747 = arith.addf %742, %746 : vector<1x128xf32>
    %c2_895 = arith.constant 2 : index
    %c7_896 = arith.constant 7 : index
    %c0_897 = arith.constant 0 : index
    %748 = vector.load %arg14[%c2_895, %c7_896, %c0_897] : memref<10x10x128xf32, #tpu.memory_space<vmem>>, vector<1x1x128xf32>
    %749 = vector.shape_cast %748 : vector<1x1x128xf32> to vector<1x128xf32>
    %c10_898 = arith.constant 10 : index
    %c0_899 = arith.constant 0 : index
    %750 = vector.load %arg7[%c10_898, %c0_899] : memref<117x128xf32, #tpu.memory_space<vmem>>, vector<1x128xf32>
    %751 = arith.mulf %749, %750 : vector<1x128xf32>
    %752 = arith.addf %747, %751 : vector<1x128xf32>
    %c2_900 = arith.constant 2 : index
    %c8_901 = arith.constant 8 : index
    %c0_902 = arith.constant 0 : index
    %753 = vector.load %arg14[%c2_900, %c8_901, %c0_902] : memref<10x10x128xf32, #tpu.memory_space<vmem>>, vector<1x1x128xf32>
    %754 = vector.shape_cast %753 : vector<1x1x128xf32> to vector<1x128xf32>
    %c11_903 = arith.constant 11 : index
    %c0_904 = arith.constant 0 : index
    %755 = vector.load %arg7[%c11_903, %c0_904] : memref<117x128xf32, #tpu.memory_space<vmem>>, vector<1x128xf32>
    %756 = arith.mulf %754, %755 : vector<1x128xf32>
    %757 = arith.addf %752, %756 : vector<1x128xf32>
    %c3_905 = arith.constant 3 : index
    %c6_906 = arith.constant 6 : index
    %c0_907 = arith.constant 0 : index
    %758 = vector.load %arg14[%c3_905, %c6_906, %c0_907] : memref<10x10x128xf32, #tpu.memory_space<vmem>>, vector<1x1x128xf32>
    %759 = vector.shape_cast %758 : vector<1x1x128xf32> to vector<1x128xf32>
    %c12_908 = arith.constant 12 : index
    %c0_909 = arith.constant 0 : index
    %760 = vector.load %arg7[%c12_908, %c0_909] : memref<117x128xf32, #tpu.memory_space<vmem>>, vector<1x128xf32>
    %761 = arith.mulf %759, %760 : vector<1x128xf32>
    %762 = arith.addf %757, %761 : vector<1x128xf32>
    %c3_910 = arith.constant 3 : index
    %c7_911 = arith.constant 7 : index
    %c0_912 = arith.constant 0 : index
    %763 = vector.load %arg14[%c3_910, %c7_911, %c0_912] : memref<10x10x128xf32, #tpu.memory_space<vmem>>, vector<1x1x128xf32>
    %764 = vector.shape_cast %763 : vector<1x1x128xf32> to vector<1x128xf32>
    %c13_913 = arith.constant 13 : index
    %c0_914 = arith.constant 0 : index
    %765 = vector.load %arg7[%c13_913, %c0_914] : memref<117x128xf32, #tpu.memory_space<vmem>>, vector<1x128xf32>
    %766 = arith.mulf %764, %765 : vector<1x128xf32>
    %767 = arith.addf %762, %766 : vector<1x128xf32>
    %c3_915 = arith.constant 3 : index
    %c8_916 = arith.constant 8 : index
    %c0_917 = arith.constant 0 : index
    %768 = vector.load %arg14[%c3_915, %c8_916, %c0_917] : memref<10x10x128xf32, #tpu.memory_space<vmem>>, vector<1x1x128xf32>
    %769 = vector.shape_cast %768 : vector<1x1x128xf32> to vector<1x128xf32>
    %c14_918 = arith.constant 14 : index
    %c0_919 = arith.constant 0 : index
    %770 = vector.load %arg7[%c14_918, %c0_919] : memref<117x128xf32, #tpu.memory_space<vmem>>, vector<1x128xf32>
    %771 = arith.mulf %769, %770 : vector<1x128xf32>
    %772 = arith.addf %767, %771 : vector<1x128xf32>
    %c4_920 = arith.constant 4 : index
    %c6_921 = arith.constant 6 : index
    %c0_922 = arith.constant 0 : index
    %773 = vector.load %arg14[%c4_920, %c6_921, %c0_922] : memref<10x10x128xf32, #tpu.memory_space<vmem>>, vector<1x1x128xf32>
    %774 = vector.shape_cast %773 : vector<1x1x128xf32> to vector<1x128xf32>
    %c15_923 = arith.constant 15 : index
    %c0_924 = arith.constant 0 : index
    %775 = vector.load %arg7[%c15_923, %c0_924] : memref<117x128xf32, #tpu.memory_space<vmem>>, vector<1x128xf32>
    %776 = arith.mulf %774, %775 : vector<1x128xf32>
    %777 = arith.addf %772, %776 : vector<1x128xf32>
    %c4_925 = arith.constant 4 : index
    %c7_926 = arith.constant 7 : index
    %c0_927 = arith.constant 0 : index
    %778 = vector.load %arg14[%c4_925, %c7_926, %c0_927] : memref<10x10x128xf32, #tpu.memory_space<vmem>>, vector<1x1x128xf32>
    %779 = vector.shape_cast %778 : vector<1x1x128xf32> to vector<1x128xf32>
    %c16_928 = arith.constant 16 : index
    %c0_929 = arith.constant 0 : index
    %780 = vector.load %arg7[%c16_928, %c0_929] : memref<117x128xf32, #tpu.memory_space<vmem>>, vector<1x128xf32>
    %781 = arith.mulf %779, %780 : vector<1x128xf32>
    %782 = arith.addf %777, %781 : vector<1x128xf32>
    %c4_930 = arith.constant 4 : index
    %c8_931 = arith.constant 8 : index
    %c0_932 = arith.constant 0 : index
    %783 = vector.load %arg14[%c4_930, %c8_931, %c0_932] : memref<10x10x128xf32, #tpu.memory_space<vmem>>, vector<1x1x128xf32>
    %784 = vector.shape_cast %783 : vector<1x1x128xf32> to vector<1x128xf32>
    %c17_933 = arith.constant 17 : index
    %c0_934 = arith.constant 0 : index
    %785 = vector.load %arg7[%c17_933, %c0_934] : memref<117x128xf32, #tpu.memory_space<vmem>>, vector<1x128xf32>
    %786 = arith.mulf %784, %785 : vector<1x128xf32>
    %787 = arith.addf %782, %786 : vector<1x128xf32>
    %788 = arith.addf %787, %358 : vector<1x128xf32>
    %cst_935 = arith.constant 0.000000e+00 : f32
    %789 = vector.broadcast %cst_935 : f32 to vector<1x128xf32>
    %790 = arith.maximumf %788, %789 : vector<1x128xf32>
    %c7_936 = arith.constant 7 : index
    %c0_937 = arith.constant 0 : index
    %791 = vector.load %arg13[%c7_936, %c0_937] : memref<64x128xf32, #tpu.memory_space<vmem>>, vector<1x128xf32>
    tpu.vector_store %arg13[%c7_936, %c0_937], %790 {strides = array<i32>} : memref<64x128xf32, #tpu.memory_space<vmem>>, vector<1x128xf32>,
    %cst_938 = arith.constant 0.000000e+00 : f32
    %792 = vector.broadcast %cst_938 : f32 to vector<1x128xf32>
    %c4_939 = arith.constant 4 : index
    %c0_940 = arith.constant 0 : index
    %c0_941 = arith.constant 0 : index
    %793 = vector.load %arg14[%c4_939, %c0_940, %c0_941] : memref<10x10x128xf32, #tpu.memory_space<vmem>>, vector<1x1x128xf32>
    %794 = vector.shape_cast %793 : vector<1x1x128xf32> to vector<1x128xf32>
    %c9_942 = arith.constant 9 : index
    %c0_943 = arith.constant 0 : index
    %795 = vector.load %arg7[%c9_942, %c0_943] : memref<117x128xf32, #tpu.memory_space<vmem>>, vector<1x128xf32>
    %796 = arith.mulf %794, %795 : vector<1x128xf32>
    %797 = arith.addf %792, %796 : vector<1x128xf32>
    %c4_944 = arith.constant 4 : index
    %c1_945 = arith.constant 1 : index
    %c0_946 = arith.constant 0 : index
    %798 = vector.load %arg14[%c4_944, %c1_945, %c0_946] : memref<10x10x128xf32, #tpu.memory_space<vmem>>, vector<1x1x128xf32>
    %799 = vector.shape_cast %798 : vector<1x1x128xf32> to vector<1x128xf32>
    %c10_947 = arith.constant 10 : index
    %c0_948 = arith.constant 0 : index
    %800 = vector.load %arg7[%c10_947, %c0_948] : memref<117x128xf32, #tpu.memory_space<vmem>>, vector<1x128xf32>
    %801 = arith.mulf %799, %800 : vector<1x128xf32>
    %802 = arith.addf %797, %801 : vector<1x128xf32>
    %c4_949 = arith.constant 4 : index
    %c2_950 = arith.constant 2 : index
    %c0_951 = arith.constant 0 : index
    %803 = vector.load %arg14[%c4_949, %c2_950, %c0_951] : memref<10x10x128xf32, #tpu.memory_space<vmem>>, vector<1x1x128xf32>
    %804 = vector.shape_cast %803 : vector<1x1x128xf32> to vector<1x128xf32>
    %c11_952 = arith.constant 11 : index
    %c0_953 = arith.constant 0 : index
    %805 = vector.load %arg7[%c11_952, %c0_953] : memref<117x128xf32, #tpu.memory_space<vmem>>, vector<1x128xf32>
    %806 = arith.mulf %804, %805 : vector<1x128xf32>
    %807 = arith.addf %802, %806 : vector<1x128xf32>
    %c5_954 = arith.constant 5 : index
    %c0_955 = arith.constant 0 : index
    %c0_956 = arith.constant 0 : index
    %808 = vector.load %arg14[%c5_954, %c0_955, %c0_956] : memref<10x10x128xf32, #tpu.memory_space<vmem>>, vector<1x1x128xf32>
    %809 = vector.shape_cast %808 : vector<1x1x128xf32> to vector<1x128xf32>
    %c12_957 = arith.constant 12 : index
    %c0_958 = arith.constant 0 : index
    %810 = vector.load %arg7[%c12_957, %c0_958] : memref<117x128xf32, #tpu.memory_space<vmem>>, vector<1x128xf32>
    %811 = arith.mulf %809, %810 : vector<1x128xf32>
    %812 = arith.addf %807, %811 : vector<1x128xf32>
    %c5_959 = arith.constant 5 : index
    %c1_960 = arith.constant 1 : index
    %c0_961 = arith.constant 0 : index
    %813 = vector.load %arg14[%c5_959, %c1_960, %c0_961] : memref<10x10x128xf32, #tpu.memory_space<vmem>>, vector<1x1x128xf32>
    %814 = vector.shape_cast %813 : vector<1x1x128xf32> to vector<1x128xf32>
    %c13_962 = arith.constant 13 : index
    %c0_963 = arith.constant 0 : index
    %815 = vector.load %arg7[%c13_962, %c0_963] : memref<117x128xf32, #tpu.memory_space<vmem>>, vector<1x128xf32>
    %816 = arith.mulf %814, %815 : vector<1x128xf32>
    %817 = arith.addf %812, %816 : vector<1x128xf32>
    %c5_964 = arith.constant 5 : index
    %c2_965 = arith.constant 2 : index
    %c0_966 = arith.constant 0 : index
    %818 = vector.load %arg14[%c5_964, %c2_965, %c0_966] : memref<10x10x128xf32, #tpu.memory_space<vmem>>, vector<1x1x128xf32>
    %819 = vector.shape_cast %818 : vector<1x1x128xf32> to vector<1x128xf32>
    %c14_967 = arith.constant 14 : index
    %c0_968 = arith.constant 0 : index
    %820 = vector.load %arg7[%c14_967, %c0_968] : memref<117x128xf32, #tpu.memory_space<vmem>>, vector<1x128xf32>
    %821 = arith.mulf %819, %820 : vector<1x128xf32>
    %822 = arith.addf %817, %821 : vector<1x128xf32>
    %c6_969 = arith.constant 6 : index
    %c0_970 = arith.constant 0 : index
    %c0_971 = arith.constant 0 : index
    %823 = vector.load %arg14[%c6_969, %c0_970, %c0_971] : memref<10x10x128xf32, #tpu.memory_space<vmem>>, vector<1x1x128xf32>
    %824 = vector.shape_cast %823 : vector<1x1x128xf32> to vector<1x128xf32>
    %c15_972 = arith.constant 15 : index
    %c0_973 = arith.constant 0 : index
    %825 = vector.load %arg7[%c15_972, %c0_973] : memref<117x128xf32, #tpu.memory_space<vmem>>, vector<1x128xf32>
    %826 = arith.mulf %824, %825 : vector<1x128xf32>
    %827 = arith.addf %822, %826 : vector<1x128xf32>
    %c6_974 = arith.constant 6 : index
    %c1_975 = arith.constant 1 : index
    %c0_976 = arith.constant 0 : index
    %828 = vector.load %arg14[%c6_974, %c1_975, %c0_976] : memref<10x10x128xf32, #tpu.memory_space<vmem>>, vector<1x1x128xf32>
    %829 = vector.shape_cast %828 : vector<1x1x128xf32> to vector<1x128xf32>
    %c16_977 = arith.constant 16 : index
    %c0_978 = arith.constant 0 : index
    %830 = vector.load %arg7[%c16_977, %c0_978] : memref<117x128xf32, #tpu.memory_space<vmem>>, vector<1x128xf32>
    %831 = arith.mulf %829, %830 : vector<1x128xf32>
    %832 = arith.addf %827, %831 : vector<1x128xf32>
    %c6_979 = arith.constant 6 : index
    %c2_980 = arith.constant 2 : index
    %c0_981 = arith.constant 0 : index
    %833 = vector.load %arg14[%c6_979, %c2_980, %c0_981] : memref<10x10x128xf32, #tpu.memory_space<vmem>>, vector<1x1x128xf32>
    %834 = vector.shape_cast %833 : vector<1x1x128xf32> to vector<1x128xf32>
    %c17_982 = arith.constant 17 : index
    %c0_983 = arith.constant 0 : index
    %835 = vector.load %arg7[%c17_982, %c0_983] : memref<117x128xf32, #tpu.memory_space<vmem>>, vector<1x128xf32>
    %836 = arith.mulf %834, %835 : vector<1x128xf32>
    %837 = arith.addf %832, %836 : vector<1x128xf32>
    %838 = arith.addf %837, %358 : vector<1x128xf32>
    %cst_984 = arith.constant 0.000000e+00 : f32
    %839 = vector.broadcast %cst_984 : f32 to vector<1x128xf32>
    %840 = arith.maximumf %838, %839 : vector<1x128xf32>
    %c8_985 = arith.constant 8 : index
    %c0_986 = arith.constant 0 : index
    %841 = vector.load %arg13[%c8_985, %c0_986] : memref<64x128xf32, #tpu.memory_space<vmem>>, vector<1x128xf32>
    tpu.vector_store %arg13[%c8_985, %c0_986], %840 {strides = array<i32>} : memref<64x128xf32, #tpu.memory_space<vmem>>, vector<1x128xf32>,
    %cst_987 = arith.constant 0.000000e+00 : f32
    %842 = vector.broadcast %cst_987 : f32 to vector<1x128xf32>
    %c4_988 = arith.constant 4 : index
    %c2_989 = arith.constant 2 : index
    %c0_990 = arith.constant 0 : index
    %843 = vector.load %arg14[%c4_988, %c2_989, %c0_990] : memref<10x10x128xf32, #tpu.memory_space<vmem>>, vector<1x1x128xf32>
    %844 = vector.shape_cast %843 : vector<1x1x128xf32> to vector<1x128xf32>
    %c9_991 = arith.constant 9 : index
    %c0_992 = arith.constant 0 : index
    %845 = vector.load %arg7[%c9_991, %c0_992] : memref<117x128xf32, #tpu.memory_space<vmem>>, vector<1x128xf32>
    %846 = arith.mulf %844, %845 : vector<1x128xf32>
    %847 = arith.addf %842, %846 : vector<1x128xf32>
    %c4_993 = arith.constant 4 : index
    %c3_994 = arith.constant 3 : index
    %c0_995 = arith.constant 0 : index
    %848 = vector.load %arg14[%c4_993, %c3_994, %c0_995] : memref<10x10x128xf32, #tpu.memory_space<vmem>>, vector<1x1x128xf32>
    %849 = vector.shape_cast %848 : vector<1x1x128xf32> to vector<1x128xf32>
    %c10_996 = arith.constant 10 : index
    %c0_997 = arith.constant 0 : index
    %850 = vector.load %arg7[%c10_996, %c0_997] : memref<117x128xf32, #tpu.memory_space<vmem>>, vector<1x128xf32>
    %851 = arith.mulf %849, %850 : vector<1x128xf32>
    %852 = arith.addf %847, %851 : vector<1x128xf32>
    %c4_998 = arith.constant 4 : index
    %c4_999 = arith.constant 4 : index
    %c0_1000 = arith.constant 0 : index
    %853 = vector.load %arg14[%c4_998, %c4_999, %c0_1000] : memref<10x10x128xf32, #tpu.memory_space<vmem>>, vector<1x1x128xf32>
    %854 = vector.shape_cast %853 : vector<1x1x128xf32> to vector<1x128xf32>
    %c11_1001 = arith.constant 11 : index
    %c0_1002 = arith.constant 0 : index
    %855 = vector.load %arg7[%c11_1001, %c0_1002] : memref<117x128xf32, #tpu.memory_space<vmem>>, vector<1x128xf32>
    %856 = arith.mulf %854, %855 : vector<1x128xf32>
    %857 = arith.addf %852, %856 : vector<1x128xf32>
    %c5_1003 = arith.constant 5 : index
    %c2_1004 = arith.constant 2 : index
    %c0_1005 = arith.constant 0 : index
    %858 = vector.load %arg14[%c5_1003, %c2_1004, %c0_1005] : memref<10x10x128xf32, #tpu.memory_space<vmem>>, vector<1x1x128xf32>
    %859 = vector.shape_cast %858 : vector<1x1x128xf32> to vector<1x128xf32>
    %c12_1006 = arith.constant 12 : index
    %c0_1007 = arith.constant 0 : index
    %860 = vector.load %arg7[%c12_1006, %c0_1007] : memref<117x128xf32, #tpu.memory_space<vmem>>, vector<1x128xf32>
    %861 = arith.mulf %859, %860 : vector<1x128xf32>
    %862 = arith.addf %857, %861 : vector<1x128xf32>
    %c5_1008 = arith.constant 5 : index
    %c3_1009 = arith.constant 3 : index
    %c0_1010 = arith.constant 0 : index
    %863 = vector.load %arg14[%c5_1008, %c3_1009, %c0_1010] : memref<10x10x128xf32, #tpu.memory_space<vmem>>, vector<1x1x128xf32>
    %864 = vector.shape_cast %863 : vector<1x1x128xf32> to vector<1x128xf32>
    %c13_1011 = arith.constant 13 : index
    %c0_1012 = arith.constant 0 : index
    %865 = vector.load %arg7[%c13_1011, %c0_1012] : memref<117x128xf32, #tpu.memory_space<vmem>>, vector<1x128xf32>
    %866 = arith.mulf %864, %865 : vector<1x128xf32>
    %867 = arith.addf %862, %866 : vector<1x128xf32>
    %c5_1013 = arith.constant 5 : index
    %c4_1014 = arith.constant 4 : index
    %c0_1015 = arith.constant 0 : index
    %868 = vector.load %arg14[%c5_1013, %c4_1014, %c0_1015] : memref<10x10x128xf32, #tpu.memory_space<vmem>>, vector<1x1x128xf32>
    %869 = vector.shape_cast %868 : vector<1x1x128xf32> to vector<1x128xf32>
    %c14_1016 = arith.constant 14 : index
    %c0_1017 = arith.constant 0 : index
    %870 = vector.load %arg7[%c14_1016, %c0_1017] : memref<117x128xf32, #tpu.memory_space<vmem>>, vector<1x128xf32>
    %871 = arith.mulf %869, %870 : vector<1x128xf32>
    %872 = arith.addf %867, %871 : vector<1x128xf32>
    %c6_1018 = arith.constant 6 : index
    %c2_1019 = arith.constant 2 : index
    %c0_1020 = arith.constant 0 : index
    %873 = vector.load %arg14[%c6_1018, %c2_1019, %c0_1020] : memref<10x10x128xf32, #tpu.memory_space<vmem>>, vector<1x1x128xf32>
    %874 = vector.shape_cast %873 : vector<1x1x128xf32> to vector<1x128xf32>
    %c15_1021 = arith.constant 15 : index
    %c0_1022 = arith.constant 0 : index
    %875 = vector.load %arg7[%c15_1021, %c0_1022] : memref<117x128xf32, #tpu.memory_space<vmem>>, vector<1x128xf32>
    %876 = arith.mulf %874, %875 : vector<1x128xf32>
    %877 = arith.addf %872, %876 : vector<1x128xf32>
    %c6_1023 = arith.constant 6 : index
    %c3_1024 = arith.constant 3 : index
    %c0_1025 = arith.constant 0 : index
    %878 = vector.load %arg14[%c6_1023, %c3_1024, %c0_1025] : memref<10x10x128xf32, #tpu.memory_space<vmem>>, vector<1x1x128xf32>
    %879 = vector.shape_cast %878 : vector<1x1x128xf32> to vector<1x128xf32>
    %c16_1026 = arith.constant 16 : index
    %c0_1027 = arith.constant 0 : index
    %880 = vector.load %arg7[%c16_1026, %c0_1027] : memref<117x128xf32, #tpu.memory_space<vmem>>, vector<1x128xf32>
    %881 = arith.mulf %879, %880 : vector<1x128xf32>
    %882 = arith.addf %877, %881 : vector<1x128xf32>
    %c6_1028 = arith.constant 6 : index
    %c4_1029 = arith.constant 4 : index
    %c0_1030 = arith.constant 0 : index
    %883 = vector.load %arg14[%c6_1028, %c4_1029, %c0_1030] : memref<10x10x128xf32, #tpu.memory_space<vmem>>, vector<1x1x128xf32>
    %884 = vector.shape_cast %883 : vector<1x1x128xf32> to vector<1x128xf32>
    %c17_1031 = arith.constant 17 : index
    %c0_1032 = arith.constant 0 : index
    %885 = vector.load %arg7[%c17_1031, %c0_1032] : memref<117x128xf32, #tpu.memory_space<vmem>>, vector<1x128xf32>
    %886 = arith.mulf %884, %885 : vector<1x128xf32>
    %887 = arith.addf %882, %886 : vector<1x128xf32>
    %888 = arith.addf %887, %358 : vector<1x128xf32>
    %cst_1033 = arith.constant 0.000000e+00 : f32
    %889 = vector.broadcast %cst_1033 : f32 to vector<1x128xf32>
    %890 = arith.maximumf %888, %889 : vector<1x128xf32>
    %c9_1034 = arith.constant 9 : index
    %c0_1035 = arith.constant 0 : index
    %891 = vector.load %arg13[%c9_1034, %c0_1035] : memref<64x128xf32, #tpu.memory_space<vmem>>, vector<1x128xf32>
    tpu.vector_store %arg13[%c9_1034, %c0_1035], %890 {strides = array<i32>} : memref<64x128xf32, #tpu.memory_space<vmem>>, vector<1x128xf32>,
    %cst_1036 = arith.constant 0.000000e+00 : f32
    %892 = vector.broadcast %cst_1036 : f32 to vector<1x128xf32>
    %c4_1037 = arith.constant 4 : index
    %c4_1038 = arith.constant 4 : index
    %c0_1039 = arith.constant 0 : index
    %893 = vector.load %arg14[%c4_1037, %c4_1038, %c0_1039] : memref<10x10x128xf32, #tpu.memory_space<vmem>>, vector<1x1x128xf32>
    %894 = vector.shape_cast %893 : vector<1x1x128xf32> to vector<1x128xf32>
    %c9_1040 = arith.constant 9 : index
    %c0_1041 = arith.constant 0 : index
    %895 = vector.load %arg7[%c9_1040, %c0_1041] : memref<117x128xf32, #tpu.memory_space<vmem>>, vector<1x128xf32>
    %896 = arith.mulf %894, %895 : vector<1x128xf32>
    %897 = arith.addf %892, %896 : vector<1x128xf32>
    %c4_1042 = arith.constant 4 : index
    %c5_1043 = arith.constant 5 : index
    %c0_1044 = arith.constant 0 : index
    %898 = vector.load %arg14[%c4_1042, %c5_1043, %c0_1044] : memref<10x10x128xf32, #tpu.memory_space<vmem>>, vector<1x1x128xf32>
    %899 = vector.shape_cast %898 : vector<1x1x128xf32> to vector<1x128xf32>
    %c10_1045 = arith.constant 10 : index
    %c0_1046 = arith.constant 0 : index
    %900 = vector.load %arg7[%c10_1045, %c0_1046] : memref<117x128xf32, #tpu.memory_space<vmem>>, vector<1x128xf32>
    %901 = arith.mulf %899, %900 : vector<1x128xf32>
    %902 = arith.addf %897, %901 : vector<1x128xf32>
    %c4_1047 = arith.constant 4 : index
    %c6_1048 = arith.constant 6 : index
    %c0_1049 = arith.constant 0 : index
    %903 = vector.load %arg14[%c4_1047, %c6_1048, %c0_1049] : memref<10x10x128xf32, #tpu.memory_space<vmem>>, vector<1x1x128xf32>
    %904 = vector.shape_cast %903 : vector<1x1x128xf32> to vector<1x128xf32>
    %c11_1050 = arith.constant 11 : index
    %c0_1051 = arith.constant 0 : index
    %905 = vector.load %arg7[%c11_1050, %c0_1051] : memref<117x128xf32, #tpu.memory_space<vmem>>, vector<1x128xf32>
    %906 = arith.mulf %904, %905 : vector<1x128xf32>
    %907 = arith.addf %902, %906 : vector<1x128xf32>
    %c5_1052 = arith.constant 5 : index
    %c4_1053 = arith.constant 4 : index
    %c0_1054 = arith.constant 0 : index
    %908 = vector.load %arg14[%c5_1052, %c4_1053, %c0_1054] : memref<10x10x128xf32, #tpu.memory_space<vmem>>, vector<1x1x128xf32>
    %909 = vector.shape_cast %908 : vector<1x1x128xf32> to vector<1x128xf32>
    %c12_1055 = arith.constant 12 : index
    %c0_1056 = arith.constant 0 : index
    %910 = vector.load %arg7[%c12_1055, %c0_1056] : memref<117x128xf32, #tpu.memory_space<vmem>>, vector<1x128xf32>
    %911 = arith.mulf %909, %910 : vector<1x128xf32>
    %912 = arith.addf %907, %911 : vector<1x128xf32>
    %c5_1057 = arith.constant 5 : index
    %c5_1058 = arith.constant 5 : index
    %c0_1059 = arith.constant 0 : index
    %913 = vector.load %arg14[%c5_1057, %c5_1058, %c0_1059] : memref<10x10x128xf32, #tpu.memory_space<vmem>>, vector<1x1x128xf32>
    %914 = vector.shape_cast %913 : vector<1x1x128xf32> to vector<1x128xf32>
    %c13_1060 = arith.constant 13 : index
    %c0_1061 = arith.constant 0 : index
    %915 = vector.load %arg7[%c13_1060, %c0_1061] : memref<117x128xf32, #tpu.memory_space<vmem>>, vector<1x128xf32>
    %916 = arith.mulf %914, %915 : vector<1x128xf32>
    %917 = arith.addf %912, %916 : vector<1x128xf32>
    %c5_1062 = arith.constant 5 : index
    %c6_1063 = arith.constant 6 : index
    %c0_1064 = arith.constant 0 : index
    %918 = vector.load %arg14[%c5_1062, %c6_1063, %c0_1064] : memref<10x10x128xf32, #tpu.memory_space<vmem>>, vector<1x1x128xf32>
    %919 = vector.shape_cast %918 : vector<1x1x128xf32> to vector<1x128xf32>
    %c14_1065 = arith.constant 14 : index
    %c0_1066 = arith.constant 0 : index
    %920 = vector.load %arg7[%c14_1065, %c0_1066] : memref<117x128xf32, #tpu.memory_space<vmem>>, vector<1x128xf32>
    %921 = arith.mulf %919, %920 : vector<1x128xf32>
    %922 = arith.addf %917, %921 : vector<1x128xf32>
    %c6_1067 = arith.constant 6 : index
    %c4_1068 = arith.constant 4 : index
    %c0_1069 = arith.constant 0 : index
    %923 = vector.load %arg14[%c6_1067, %c4_1068, %c0_1069] : memref<10x10x128xf32, #tpu.memory_space<vmem>>, vector<1x1x128xf32>
    %924 = vector.shape_cast %923 : vector<1x1x128xf32> to vector<1x128xf32>
    %c15_1070 = arith.constant 15 : index
    %c0_1071 = arith.constant 0 : index
    %925 = vector.load %arg7[%c15_1070, %c0_1071] : memref<117x128xf32, #tpu.memory_space<vmem>>, vector<1x128xf32>
    %926 = arith.mulf %924, %925 : vector<1x128xf32>
    %927 = arith.addf %922, %926 : vector<1x128xf32>
    %c6_1072 = arith.constant 6 : index
    %c5_1073 = arith.constant 5 : index
    %c0_1074 = arith.constant 0 : index
    %928 = vector.load %arg14[%c6_1072, %c5_1073, %c0_1074] : memref<10x10x128xf32, #tpu.memory_space<vmem>>, vector<1x1x128xf32>
    %929 = vector.shape_cast %928 : vector<1x1x128xf32> to vector<1x128xf32>
    %c16_1075 = arith.constant 16 : index
    %c0_1076 = arith.constant 0 : index
    %930 = vector.load %arg7[%c16_1075, %c0_1076] : memref<117x128xf32, #tpu.memory_space<vmem>>, vector<1x128xf32>
    %931 = arith.mulf %929, %930 : vector<1x128xf32>
    %932 = arith.addf %927, %931 : vector<1x128xf32>
    %c6_1077 = arith.constant 6 : index
    %c6_1078 = arith.constant 6 : index
    %c0_1079 = arith.constant 0 : index
    %933 = vector.load %arg14[%c6_1077, %c6_1078, %c0_1079] : memref<10x10x128xf32, #tpu.memory_space<vmem>>, vector<1x1x128xf32>
    %934 = vector.shape_cast %933 : vector<1x1x128xf32> to vector<1x128xf32>
    %c17_1080 = arith.constant 17 : index
    %c0_1081 = arith.constant 0 : index
    %935 = vector.load %arg7[%c17_1080, %c0_1081] : memref<117x128xf32, #tpu.memory_space<vmem>>, vector<1x128xf32>
    %936 = arith.mulf %934, %935 : vector<1x128xf32>
    %937 = arith.addf %932, %936 : vector<1x128xf32>
    %938 = arith.addf %937, %358 : vector<1x128xf32>
    %cst_1082 = arith.constant 0.000000e+00 : f32
    %939 = vector.broadcast %cst_1082 : f32 to vector<1x128xf32>
    %940 = arith.maximumf %938, %939 : vector<1x128xf32>
    %c10_1083 = arith.constant 10 : index
    %c0_1084 = arith.constant 0 : index
    %941 = vector.load %arg13[%c10_1083, %c0_1084] : memref<64x128xf32, #tpu.memory_space<vmem>>, vector<1x128xf32>
    tpu.vector_store %arg13[%c10_1083, %c0_1084], %940 {strides = array<i32>} : memref<64x128xf32, #tpu.memory_space<vmem>>, vector<1x128xf32>,
    %cst_1085 = arith.constant 0.000000e+00 : f32
    %942 = vector.broadcast %cst_1085 : f32 to vector<1x128xf32>
    %c4_1086 = arith.constant 4 : index
    %c6_1087 = arith.constant 6 : index
    %c0_1088 = arith.constant 0 : index
    %943 = vector.load %arg14[%c4_1086, %c6_1087, %c0_1088] : memref<10x10x128xf32, #tpu.memory_space<vmem>>, vector<1x1x128xf32>
    %944 = vector.shape_cast %943 : vector<1x1x128xf32> to vector<1x128xf32>
    %c9_1089 = arith.constant 9 : index
    %c0_1090 = arith.constant 0 : index
    %945 = vector.load %arg7[%c9_1089, %c0_1090] : memref<117x128xf32, #tpu.memory_space<vmem>>, vector<1x128xf32>
    %946 = arith.mulf %944, %945 : vector<1x128xf32>
    %947 = arith.addf %942, %946 : vector<1x128xf32>
    %c4_1091 = arith.constant 4 : index
    %c7_1092 = arith.constant 7 : index
    %c0_1093 = arith.constant 0 : index
    %948 = vector.load %arg14[%c4_1091, %c7_1092, %c0_1093] : memref<10x10x128xf32, #tpu.memory_space<vmem>>, vector<1x1x128xf32>
    %949 = vector.shape_cast %948 : vector<1x1x128xf32> to vector<1x128xf32>
    %c10_1094 = arith.constant 10 : index
    %c0_1095 = arith.constant 0 : index
    %950 = vector.load %arg7[%c10_1094, %c0_1095] : memref<117x128xf32, #tpu.memory_space<vmem>>, vector<1x128xf32>
    %951 = arith.mulf %949, %950 : vector<1x128xf32>
    %952 = arith.addf %947, %951 : vector<1x128xf32>
    %c4_1096 = arith.constant 4 : index
    %c8_1097 = arith.constant 8 : index
    %c0_1098 = arith.constant 0 : index
    %953 = vector.load %arg14[%c4_1096, %c8_1097, %c0_1098] : memref<10x10x128xf32, #tpu.memory_space<vmem>>, vector<1x1x128xf32>
    %954 = vector.shape_cast %953 : vector<1x1x128xf32> to vector<1x128xf32>
    %c11_1099 = arith.constant 11 : index
    %c0_1100 = arith.constant 0 : index
    %955 = vector.load %arg7[%c11_1099, %c0_1100] : memref<117x128xf32, #tpu.memory_space<vmem>>, vector<1x128xf32>
    %956 = arith.mulf %954, %955 : vector<1x128xf32>
    %957 = arith.addf %952, %956 : vector<1x128xf32>
    %c5_1101 = arith.constant 5 : index
    %c6_1102 = arith.constant 6 : index
    %c0_1103 = arith.constant 0 : index
    %958 = vector.load %arg14[%c5_1101, %c6_1102, %c0_1103] : memref<10x10x128xf32, #tpu.memory_space<vmem>>, vector<1x1x128xf32>
    %959 = vector.shape_cast %958 : vector<1x1x128xf32> to vector<1x128xf32>
    %c12_1104 = arith.constant 12 : index
    %c0_1105 = arith.constant 0 : index
    %960 = vector.load %arg7[%c12_1104, %c0_1105] : memref<117x128xf32, #tpu.memory_space<vmem>>, vector<1x128xf32>
    %961 = arith.mulf %959, %960 : vector<1x128xf32>
    %962 = arith.addf %957, %961 : vector<1x128xf32>
    %c5_1106 = arith.constant 5 : index
    %c7_1107 = arith.constant 7 : index
    %c0_1108 = arith.constant 0 : index
    %963 = vector.load %arg14[%c5_1106, %c7_1107, %c0_1108] : memref<10x10x128xf32, #tpu.memory_space<vmem>>, vector<1x1x128xf32>
    %964 = vector.shape_cast %963 : vector<1x1x128xf32> to vector<1x128xf32>
    %c13_1109 = arith.constant 13 : index
    %c0_1110 = arith.constant 0 : index
    %965 = vector.load %arg7[%c13_1109, %c0_1110] : memref<117x128xf32, #tpu.memory_space<vmem>>, vector<1x128xf32>
    %966 = arith.mulf %964, %965 : vector<1x128xf32>
    %967 = arith.addf %962, %966 : vector<1x128xf32>
    %c5_1111 = arith.constant 5 : index
    %c8_1112 = arith.constant 8 : index
    %c0_1113 = arith.constant 0 : index
    %968 = vector.load %arg14[%c5_1111, %c8_1112, %c0_1113] : memref<10x10x128xf32, #tpu.memory_space<vmem>>, vector<1x1x128xf32>
    %969 = vector.shape_cast %968 : vector<1x1x128xf32> to vector<1x128xf32>
    %c14_1114 = arith.constant 14 : index
    %c0_1115 = arith.constant 0 : index
    %970 = vector.load %arg7[%c14_1114, %c0_1115] : memref<117x128xf32, #tpu.memory_space<vmem>>, vector<1x128xf32>
    %971 = arith.mulf %969, %970 : vector<1x128xf32>
    %972 = arith.addf %967, %971 : vector<1x128xf32>
    %c6_1116 = arith.constant 6 : index
    %c6_1117 = arith.constant 6 : index
    %c0_1118 = arith.constant 0 : index
    %973 = vector.load %arg14[%c6_1116, %c6_1117, %c0_1118] : memref<10x10x128xf32, #tpu.memory_space<vmem>>, vector<1x1x128xf32>
    %974 = vector.shape_cast %973 : vector<1x1x128xf32> to vector<1x128xf32>
    %c15_1119 = arith.constant 15 : index
    %c0_1120 = arith.constant 0 : index
    %975 = vector.load %arg7[%c15_1119, %c0_1120] : memref<117x128xf32, #tpu.memory_space<vmem>>, vector<1x128xf32>
    %976 = arith.mulf %974, %975 : vector<1x128xf32>
    %977 = arith.addf %972, %976 : vector<1x128xf32>
    %c6_1121 = arith.constant 6 : index
    %c7_1122 = arith.constant 7 : index
    %c0_1123 = arith.constant 0 : index
    %978 = vector.load %arg14[%c6_1121, %c7_1122, %c0_1123] : memref<10x10x128xf32, #tpu.memory_space<vmem>>, vector<1x1x128xf32>
    %979 = vector.shape_cast %978 : vector<1x1x128xf32> to vector<1x128xf32>
    %c16_1124 = arith.constant 16 : index
    %c0_1125 = arith.constant 0 : index
    %980 = vector.load %arg7[%c16_1124, %c0_1125] : memref<117x128xf32, #tpu.memory_space<vmem>>, vector<1x128xf32>
    %981 = arith.mulf %979, %980 : vector<1x128xf32>
    %982 = arith.addf %977, %981 : vector<1x128xf32>
    %c6_1126 = arith.constant 6 : index
    %c8_1127 = arith.constant 8 : index
    %c0_1128 = arith.constant 0 : index
    %983 = vector.load %arg14[%c6_1126, %c8_1127, %c0_1128] : memref<10x10x128xf32, #tpu.memory_space<vmem>>, vector<1x1x128xf32>
    %984 = vector.shape_cast %983 : vector<1x1x128xf32> to vector<1x128xf32>
    %c17_1129 = arith.constant 17 : index
    %c0_1130 = arith.constant 0 : index
    %985 = vector.load %arg7[%c17_1129, %c0_1130] : memref<117x128xf32, #tpu.memory_space<vmem>>, vector<1x128xf32>
    %986 = arith.mulf %984, %985 : vector<1x128xf32>
    %987 = arith.addf %982, %986 : vector<1x128xf32>
    %988 = arith.addf %987, %358 : vector<1x128xf32>
    %cst_1131 = arith.constant 0.000000e+00 : f32
    %989 = vector.broadcast %cst_1131 : f32 to vector<1x128xf32>
    %990 = arith.maximumf %988, %989 : vector<1x128xf32>
    %c11_1132 = arith.constant 11 : index
    %c0_1133 = arith.constant 0 : index
    %991 = vector.load %arg13[%c11_1132, %c0_1133] : memref<64x128xf32, #tpu.memory_space<vmem>>, vector<1x128xf32>
    tpu.vector_store %arg13[%c11_1132, %c0_1133], %990 {strides = array<i32>} : memref<64x128xf32, #tpu.memory_space<vmem>>, vector<1x128xf32>,
    %cst_1134 = arith.constant 0.000000e+00 : f32
    %992 = vector.broadcast %cst_1134 : f32 to vector<1x128xf32>
    %c6_1135 = arith.constant 6 : index
    %c0_1136 = arith.constant 0 : index
    %c0_1137 = arith.constant 0 : index
    %993 = vector.load %arg14[%c6_1135, %c0_1136, %c0_1137] : memref<10x10x128xf32, #tpu.memory_space<vmem>>, vector<1x1x128xf32>
    %994 = vector.shape_cast %993 : vector<1x1x128xf32> to vector<1x128xf32>
    %c9_1138 = arith.constant 9 : index
    %c0_1139 = arith.constant 0 : index
    %995 = vector.load %arg7[%c9_1138, %c0_1139] : memref<117x128xf32, #tpu.memory_space<vmem>>, vector<1x128xf32>
    %996 = arith.mulf %994, %995 : vector<1x128xf32>
    %997 = arith.addf %992, %996 : vector<1x128xf32>
    %c6_1140 = arith.constant 6 : index
    %c1_1141 = arith.constant 1 : index
    %c0_1142 = arith.constant 0 : index
    %998 = vector.load %arg14[%c6_1140, %c1_1141, %c0_1142] : memref<10x10x128xf32, #tpu.memory_space<vmem>>, vector<1x1x128xf32>
    %999 = vector.shape_cast %998 : vector<1x1x128xf32> to vector<1x128xf32>
    %c10_1143 = arith.constant 10 : index
    %c0_1144 = arith.constant 0 : index
    %1000 = vector.load %arg7[%c10_1143, %c0_1144] : memref<117x128xf32, #tpu.memory_space<vmem>>, vector<1x128xf32>
    %1001 = arith.mulf %999, %1000 : vector<1x128xf32>
    %1002 = arith.addf %997, %1001 : vector<1x128xf32>
    %c6_1145 = arith.constant 6 : index
    %c2_1146 = arith.constant 2 : index
    %c0_1147 = arith.constant 0 : index
    %1003 = vector.load %arg14[%c6_1145, %c2_1146, %c0_1147] : memref<10x10x128xf32, #tpu.memory_space<vmem>>, vector<1x1x128xf32>
    %1004 = vector.shape_cast %1003 : vector<1x1x128xf32> to vector<1x128xf32>
    %c11_1148 = arith.constant 11 : index
    %c0_1149 = arith.constant 0 : index
    %1005 = vector.load %arg7[%c11_1148, %c0_1149] : memref<117x128xf32, #tpu.memory_space<vmem>>, vector<1x128xf32>
    %1006 = arith.mulf %1004, %1005 : vector<1x128xf32>
    %1007 = arith.addf %1002, %1006 : vector<1x128xf32>
    %c7_1150 = arith.constant 7 : index
    %c0_1151 = arith.constant 0 : index
    %c0_1152 = arith.constant 0 : index
    %1008 = vector.load %arg14[%c7_1150, %c0_1151, %c0_1152] : memref<10x10x128xf32, #tpu.memory_space<vmem>>, vector<1x1x128xf32>
    %1009 = vector.shape_cast %1008 : vector<1x1x128xf32> to vector<1x128xf32>
    %c12_1153 = arith.constant 12 : index
    %c0_1154 = arith.constant 0 : index
    %1010 = vector.load %arg7[%c12_1153, %c0_1154] : memref<117x128xf32, #tpu.memory_space<vmem>>, vector<1x128xf32>
    %1011 = arith.mulf %1009, %1010 : vector<1x128xf32>
    %1012 = arith.addf %1007, %1011 : vector<1x128xf32>
    %c7_1155 = arith.constant 7 : index
    %c1_1156 = arith.constant 1 : index
    %c0_1157 = arith.constant 0 : index
    %1013 = vector.load %arg14[%c7_1155, %c1_1156, %c0_1157] : memref<10x10x128xf32, #tpu.memory_space<vmem>>, vector<1x1x128xf32>
    %1014 = vector.shape_cast %1013 : vector<1x1x128xf32> to vector<1x128xf32>
    %c13_1158 = arith.constant 13 : index
    %c0_1159 = arith.constant 0 : index
    %1015 = vector.load %arg7[%c13_1158, %c0_1159] : memref<117x128xf32, #tpu.memory_space<vmem>>, vector<1x128xf32>
    %1016 = arith.mulf %1014, %1015 : vector<1x128xf32>
    %1017 = arith.addf %1012, %1016 : vector<1x128xf32>
    %c7_1160 = arith.constant 7 : index
    %c2_1161 = arith.constant 2 : index
    %c0_1162 = arith.constant 0 : index
    %1018 = vector.load %arg14[%c7_1160, %c2_1161, %c0_1162] : memref<10x10x128xf32, #tpu.memory_space<vmem>>, vector<1x1x128xf32>
    %1019 = vector.shape_cast %1018 : vector<1x1x128xf32> to vector<1x128xf32>
    %c14_1163 = arith.constant 14 : index
    %c0_1164 = arith.constant 0 : index
    %1020 = vector.load %arg7[%c14_1163, %c0_1164] : memref<117x128xf32, #tpu.memory_space<vmem>>, vector<1x128xf32>
    %1021 = arith.mulf %1019, %1020 : vector<1x128xf32>
    %1022 = arith.addf %1017, %1021 : vector<1x128xf32>
    %c8_1165 = arith.constant 8 : index
    %c0_1166 = arith.constant 0 : index
    %c0_1167 = arith.constant 0 : index
    %1023 = vector.load %arg14[%c8_1165, %c0_1166, %c0_1167] : memref<10x10x128xf32, #tpu.memory_space<vmem>>, vector<1x1x128xf32>
    %1024 = vector.shape_cast %1023 : vector<1x1x128xf32> to vector<1x128xf32>
    %c15_1168 = arith.constant 15 : index
    %c0_1169 = arith.constant 0 : index
    %1025 = vector.load %arg7[%c15_1168, %c0_1169] : memref<117x128xf32, #tpu.memory_space<vmem>>, vector<1x128xf32>
    %1026 = arith.mulf %1024, %1025 : vector<1x128xf32>
    %1027 = arith.addf %1022, %1026 : vector<1x128xf32>
    %c8_1170 = arith.constant 8 : index
    %c1_1171 = arith.constant 1 : index
    %c0_1172 = arith.constant 0 : index
    %1028 = vector.load %arg14[%c8_1170, %c1_1171, %c0_1172] : memref<10x10x128xf32, #tpu.memory_space<vmem>>, vector<1x1x128xf32>
    %1029 = vector.shape_cast %1028 : vector<1x1x128xf32> to vector<1x128xf32>
    %c16_1173 = arith.constant 16 : index
    %c0_1174 = arith.constant 0 : index
    %1030 = vector.load %arg7[%c16_1173, %c0_1174] : memref<117x128xf32, #tpu.memory_space<vmem>>, vector<1x128xf32>
    %1031 = arith.mulf %1029, %1030 : vector<1x128xf32>
    %1032 = arith.addf %1027, %1031 : vector<1x128xf32>
    %c8_1175 = arith.constant 8 : index
    %c2_1176 = arith.constant 2 : index
    %c0_1177 = arith.constant 0 : index
    %1033 = vector.load %arg14[%c8_1175, %c2_1176, %c0_1177] : memref<10x10x128xf32, #tpu.memory_space<vmem>>, vector<1x1x128xf32>
    %1034 = vector.shape_cast %1033 : vector<1x1x128xf32> to vector<1x128xf32>
    %c17_1178 = arith.constant 17 : index
    %c0_1179 = arith.constant 0 : index
    %1035 = vector.load %arg7[%c17_1178, %c0_1179] : memref<117x128xf32, #tpu.memory_space<vmem>>, vector<1x128xf32>
    %1036 = arith.mulf %1034, %1035 : vector<1x128xf32>
    %1037 = arith.addf %1032, %1036 : vector<1x128xf32>
    %1038 = arith.addf %1037, %358 : vector<1x128xf32>
    %cst_1180 = arith.constant 0.000000e+00 : f32
    %1039 = vector.broadcast %cst_1180 : f32 to vector<1x128xf32>
    %1040 = arith.maximumf %1038, %1039 : vector<1x128xf32>
    %c12_1181 = arith.constant 12 : index
    %c0_1182 = arith.constant 0 : index
    %1041 = vector.load %arg13[%c12_1181, %c0_1182] : memref<64x128xf32, #tpu.memory_space<vmem>>, vector<1x128xf32>
    tpu.vector_store %arg13[%c12_1181, %c0_1182], %1040 {strides = array<i32>} : memref<64x128xf32, #tpu.memory_space<vmem>>, vector<1x128xf32>,
    %cst_1183 = arith.constant 0.000000e+00 : f32
    %1042 = vector.broadcast %cst_1183 : f32 to vector<1x128xf32>
    %c6_1184 = arith.constant 6 : index
    %c2_1185 = arith.constant 2 : index
    %c0_1186 = arith.constant 0 : index
    %1043 = vector.load %arg14[%c6_1184, %c2_1185, %c0_1186] : memref<10x10x128xf32, #tpu.memory_space<vmem>>, vector<1x1x128xf32>
    %1044 = vector.shape_cast %1043 : vector<1x1x128xf32> to vector<1x128xf32>
    %c9_1187 = arith.constant 9 : index
    %c0_1188 = arith.constant 0 : index
    %1045 = vector.load %arg7[%c9_1187, %c0_1188] : memref<117x128xf32, #tpu.memory_space<vmem>>, vector<1x128xf32>
    %1046 = arith.mulf %1044, %1045 : vector<1x128xf32>
    %1047 = arith.addf %1042, %1046 : vector<1x128xf32>
    %c6_1189 = arith.constant 6 : index
    %c3_1190 = arith.constant 3 : index
    %c0_1191 = arith.constant 0 : index
    %1048 = vector.load %arg14[%c6_1189, %c3_1190, %c0_1191] : memref<10x10x128xf32, #tpu.memory_space<vmem>>, vector<1x1x128xf32>
    %1049 = vector.shape_cast %1048 : vector<1x1x128xf32> to vector<1x128xf32>
    %c10_1192 = arith.constant 10 : index
    %c0_1193 = arith.constant 0 : index
    %1050 = vector.load %arg7[%c10_1192, %c0_1193] : memref<117x128xf32, #tpu.memory_space<vmem>>, vector<1x128xf32>
    %1051 = arith.mulf %1049, %1050 : vector<1x128xf32>
    %1052 = arith.addf %1047, %1051 : vector<1x128xf32>
    %c6_1194 = arith.constant 6 : index
    %c4_1195 = arith.constant 4 : index
    %c0_1196 = arith.constant 0 : index
    %1053 = vector.load %arg14[%c6_1194, %c4_1195, %c0_1196] : memref<10x10x128xf32, #tpu.memory_space<vmem>>, vector<1x1x128xf32>
    %1054 = vector.shape_cast %1053 : vector<1x1x128xf32> to vector<1x128xf32>
    %c11_1197 = arith.constant 11 : index
    %c0_1198 = arith.constant 0 : index
    %1055 = vector.load %arg7[%c11_1197, %c0_1198] : memref<117x128xf32, #tpu.memory_space<vmem>>, vector<1x128xf32>
    %1056 = arith.mulf %1054, %1055 : vector<1x128xf32>
    %1057 = arith.addf %1052, %1056 : vector<1x128xf32>
    %c7_1199 = arith.constant 7 : index
    %c2_1200 = arith.constant 2 : index
    %c0_1201 = arith.constant 0 : index
    %1058 = vector.load %arg14[%c7_1199, %c2_1200, %c0_1201] : memref<10x10x128xf32, #tpu.memory_space<vmem>>, vector<1x1x128xf32>
    %1059 = vector.shape_cast %1058 : vector<1x1x128xf32> to vector<1x128xf32>
    %c12_1202 = arith.constant 12 : index
    %c0_1203 = arith.constant 0 : index
    %1060 = vector.load %arg7[%c12_1202, %c0_1203] : memref<117x128xf32, #tpu.memory_space<vmem>>, vector<1x128xf32>
    %1061 = arith.mulf %1059, %1060 : vector<1x128xf32>
    %1062 = arith.addf %1057, %1061 : vector<1x128xf32>
    %c7_1204 = arith.constant 7 : index
    %c3_1205 = arith.constant 3 : index
    %c0_1206 = arith.constant 0 : index
    %1063 = vector.load %arg14[%c7_1204, %c3_1205, %c0_1206] : memref<10x10x128xf32, #tpu.memory_space<vmem>>, vector<1x1x128xf32>
    %1064 = vector.shape_cast %1063 : vector<1x1x128xf32> to vector<1x128xf32>
    %c13_1207 = arith.constant 13 : index
    %c0_1208 = arith.constant 0 : index
    %1065 = vector.load %arg7[%c13_1207, %c0_1208] : memref<117x128xf32, #tpu.memory_space<vmem>>, vector<1x128xf32>
    %1066 = arith.mulf %1064, %1065 : vector<1x128xf32>
    %1067 = arith.addf %1062, %1066 : vector<1x128xf32>
    %c7_1209 = arith.constant 7 : index
    %c4_1210 = arith.constant 4 : index
    %c0_1211 = arith.constant 0 : index
    %1068 = vector.load %arg14[%c7_1209, %c4_1210, %c0_1211] : memref<10x10x128xf32, #tpu.memory_space<vmem>>, vector<1x1x128xf32>
    %1069 = vector.shape_cast %1068 : vector<1x1x128xf32> to vector<1x128xf32>
    %c14_1212 = arith.constant 14 : index
    %c0_1213 = arith.constant 0 : index
    %1070 = vector.load %arg7[%c14_1212, %c0_1213] : memref<117x128xf32, #tpu.memory_space<vmem>>, vector<1x128xf32>
    %1071 = arith.mulf %1069, %1070 : vector<1x128xf32>
    %1072 = arith.addf %1067, %1071 : vector<1x128xf32>
    %c8_1214 = arith.constant 8 : index
    %c2_1215 = arith.constant 2 : index
    %c0_1216 = arith.constant 0 : index
    %1073 = vector.load %arg14[%c8_1214, %c2_1215, %c0_1216] : memref<10x10x128xf32, #tpu.memory_space<vmem>>, vector<1x1x128xf32>
    %1074 = vector.shape_cast %1073 : vector<1x1x128xf32> to vector<1x128xf32>
    %c15_1217 = arith.constant 15 : index
    %c0_1218 = arith.constant 0 : index
    %1075 = vector.load %arg7[%c15_1217, %c0_1218] : memref<117x128xf32, #tpu.memory_space<vmem>>, vector<1x128xf32>
    %1076 = arith.mulf %1074, %1075 : vector<1x128xf32>
    %1077 = arith.addf %1072, %1076 : vector<1x128xf32>
    %c8_1219 = arith.constant 8 : index
    %c3_1220 = arith.constant 3 : index
    %c0_1221 = arith.constant 0 : index
    %1078 = vector.load %arg14[%c8_1219, %c3_1220, %c0_1221] : memref<10x10x128xf32, #tpu.memory_space<vmem>>, vector<1x1x128xf32>
    %1079 = vector.shape_cast %1078 : vector<1x1x128xf32> to vector<1x128xf32>
    %c16_1222 = arith.constant 16 : index
    %c0_1223 = arith.constant 0 : index
    %1080 = vector.load %arg7[%c16_1222, %c0_1223] : memref<117x128xf32, #tpu.memory_space<vmem>>, vector<1x128xf32>
    %1081 = arith.mulf %1079, %1080 : vector<1x128xf32>
    %1082 = arith.addf %1077, %1081 : vector<1x128xf32>
    %c8_1224 = arith.constant 8 : index
    %c4_1225 = arith.constant 4 : index
    %c0_1226 = arith.constant 0 : index
    %1083 = vector.load %arg14[%c8_1224, %c4_1225, %c0_1226] : memref<10x10x128xf32, #tpu.memory_space<vmem>>, vector<1x1x128xf32>
    %1084 = vector.shape_cast %1083 : vector<1x1x128xf32> to vector<1x128xf32>
    %c17_1227 = arith.constant 17 : index
    %c0_1228 = arith.constant 0 : index
    %1085 = vector.load %arg7[%c17_1227, %c0_1228] : memref<117x128xf32, #tpu.memory_space<vmem>>, vector<1x128xf32>
    %1086 = arith.mulf %1084, %1085 : vector<1x128xf32>
    %1087 = arith.addf %1082, %1086 : vector<1x128xf32>
    %1088 = arith.addf %1087, %358 : vector<1x128xf32>
    %cst_1229 = arith.constant 0.000000e+00 : f32
    %1089 = vector.broadcast %cst_1229 : f32 to vector<1x128xf32>
    %1090 = arith.maximumf %1088, %1089 : vector<1x128xf32>
    %c13_1230 = arith.constant 13 : index
    %c0_1231 = arith.constant 0 : index
    %1091 = vector.load %arg13[%c13_1230, %c0_1231] : memref<64x128xf32, #tpu.memory_space<vmem>>, vector<1x128xf32>
    tpu.vector_store %arg13[%c13_1230, %c0_1231], %1090 {strides = array<i32>} : memref<64x128xf32, #tpu.memory_space<vmem>>, vector<1x128xf32>,
    %cst_1232 = arith.constant 0.000000e+00 : f32
    %1092 = vector.broadcast %cst_1232 : f32 to vector<1x128xf32>
    %c6_1233 = arith.constant 6 : index
    %c4_1234 = arith.constant 4 : index
    %c0_1235 = arith.constant 0 : index
    %1093 = vector.load %arg14[%c6_1233, %c4_1234, %c0_1235] : memref<10x10x128xf32, #tpu.memory_space<vmem>>, vector<1x1x128xf32>
    %1094 = vector.shape_cast %1093 : vector<1x1x128xf32> to vector<1x128xf32>
    %c9_1236 = arith.constant 9 : index
    %c0_1237 = arith.constant 0 : index
    %1095 = vector.load %arg7[%c9_1236, %c0_1237] : memref<117x128xf32, #tpu.memory_space<vmem>>, vector<1x128xf32>
    %1096 = arith.mulf %1094, %1095 : vector<1x128xf32>
    %1097 = arith.addf %1092, %1096 : vector<1x128xf32>
    %c6_1238 = arith.constant 6 : index
    %c5_1239 = arith.constant 5 : index
    %c0_1240 = arith.constant 0 : index
    %1098 = vector.load %arg14[%c6_1238, %c5_1239, %c0_1240] : memref<10x10x128xf32, #tpu.memory_space<vmem>>, vector<1x1x128xf32>
    %1099 = vector.shape_cast %1098 : vector<1x1x128xf32> to vector<1x128xf32>
    %c10_1241 = arith.constant 10 : index
    %c0_1242 = arith.constant 0 : index
    %1100 = vector.load %arg7[%c10_1241, %c0_1242] : memref<117x128xf32, #tpu.memory_space<vmem>>, vector<1x128xf32>
    %1101 = arith.mulf %1099, %1100 : vector<1x128xf32>
    %1102 = arith.addf %1097, %1101 : vector<1x128xf32>
    %c6_1243 = arith.constant 6 : index
    %c6_1244 = arith.constant 6 : index
    %c0_1245 = arith.constant 0 : index
    %1103 = vector.load %arg14[%c6_1243, %c6_1244, %c0_1245] : memref<10x10x128xf32, #tpu.memory_space<vmem>>, vector<1x1x128xf32>
    %1104 = vector.shape_cast %1103 : vector<1x1x128xf32> to vector<1x128xf32>
    %c11_1246 = arith.constant 11 : index
    %c0_1247 = arith.constant 0 : index
    %1105 = vector.load %arg7[%c11_1246, %c0_1247] : memref<117x128xf32, #tpu.memory_space<vmem>>, vector<1x128xf32>
    %1106 = arith.mulf %1104, %1105 : vector<1x128xf32>
    %1107 = arith.addf %1102, %1106 : vector<1x128xf32>
    %c7_1248 = arith.constant 7 : index
    %c4_1249 = arith.constant 4 : index
    %c0_1250 = arith.constant 0 : index
    %1108 = vector.load %arg14[%c7_1248, %c4_1249, %c0_1250] : memref<10x10x128xf32, #tpu.memory_space<vmem>>, vector<1x1x128xf32>
    %1109 = vector.shape_cast %1108 : vector<1x1x128xf32> to vector<1x128xf32>
    %c12_1251 = arith.constant 12 : index
    %c0_1252 = arith.constant 0 : index
    %1110 = vector.load %arg7[%c12_1251, %c0_1252] : memref<117x128xf32, #tpu.memory_space<vmem>>, vector<1x128xf32>
    %1111 = arith.mulf %1109, %1110 : vector<1x128xf32>
    %1112 = arith.addf %1107, %1111 : vector<1x128xf32>
    %c7_1253 = arith.constant 7 : index
    %c5_1254 = arith.constant 5 : index
    %c0_1255 = arith.constant 0 : index
    %1113 = vector.load %arg14[%c7_1253, %c5_1254, %c0_1255] : memref<10x10x128xf32, #tpu.memory_space<vmem>>, vector<1x1x128xf32>
    %1114 = vector.shape_cast %1113 : vector<1x1x128xf32> to vector<1x128xf32>
    %c13_1256 = arith.constant 13 : index
    %c0_1257 = arith.constant 0 : index
    %1115 = vector.load %arg7[%c13_1256, %c0_1257] : memref<117x128xf32, #tpu.memory_space<vmem>>, vector<1x128xf32>
    %1116 = arith.mulf %1114, %1115 : vector<1x128xf32>
    %1117 = arith.addf %1112, %1116 : vector<1x128xf32>
    %c7_1258 = arith.constant 7 : index
    %c6_1259 = arith.constant 6 : index
    %c0_1260 = arith.constant 0 : index
    %1118 = vector.load %arg14[%c7_1258, %c6_1259, %c0_1260] : memref<10x10x128xf32, #tpu.memory_space<vmem>>, vector<1x1x128xf32>
    %1119 = vector.shape_cast %1118 : vector<1x1x128xf32> to vector<1x128xf32>
    %c14_1261 = arith.constant 14 : index
    %c0_1262 = arith.constant 0 : index
    %1120 = vector.load %arg7[%c14_1261, %c0_1262] : memref<117x128xf32, #tpu.memory_space<vmem>>, vector<1x128xf32>
    %1121 = arith.mulf %1119, %1120 : vector<1x128xf32>
    %1122 = arith.addf %1117, %1121 : vector<1x128xf32>
    %c8_1263 = arith.constant 8 : index
    %c4_1264 = arith.constant 4 : index
    %c0_1265 = arith.constant 0 : index
    %1123 = vector.load %arg14[%c8_1263, %c4_1264, %c0_1265] : memref<10x10x128xf32, #tpu.memory_space<vmem>>, vector<1x1x128xf32>
    %1124 = vector.shape_cast %1123 : vector<1x1x128xf32> to vector<1x128xf32>
    %c15_1266 = arith.constant 15 : index
    %c0_1267 = arith.constant 0 : index
    %1125 = vector.load %arg7[%c15_1266, %c0_1267] : memref<117x128xf32, #tpu.memory_space<vmem>>, vector<1x128xf32>
    %1126 = arith.mulf %1124, %1125 : vector<1x128xf32>
    %1127 = arith.addf %1122, %1126 : vector<1x128xf32>
    %c8_1268 = arith.constant 8 : index
    %c5_1269 = arith.constant 5 : index
    %c0_1270 = arith.constant 0 : index
    %1128 = vector.load %arg14[%c8_1268, %c5_1269, %c0_1270] : memref<10x10x128xf32, #tpu.memory_space<vmem>>, vector<1x1x128xf32>
    %1129 = vector.shape_cast %1128 : vector<1x1x128xf32> to vector<1x128xf32>
    %c16_1271 = arith.constant 16 : index
    %c0_1272 = arith.constant 0 : index
    %1130 = vector.load %arg7[%c16_1271, %c0_1272] : memref<117x128xf32, #tpu.memory_space<vmem>>, vector<1x128xf32>
    %1131 = arith.mulf %1129, %1130 : vector<1x128xf32>
    %1132 = arith.addf %1127, %1131 : vector<1x128xf32>
    %c8_1273 = arith.constant 8 : index
    %c6_1274 = arith.constant 6 : index
    %c0_1275 = arith.constant 0 : index
    %1133 = vector.load %arg14[%c8_1273, %c6_1274, %c0_1275] : memref<10x10x128xf32, #tpu.memory_space<vmem>>, vector<1x1x128xf32>
    %1134 = vector.shape_cast %1133 : vector<1x1x128xf32> to vector<1x128xf32>
    %c17_1276 = arith.constant 17 : index
    %c0_1277 = arith.constant 0 : index
    %1135 = vector.load %arg7[%c17_1276, %c0_1277] : memref<117x128xf32, #tpu.memory_space<vmem>>, vector<1x128xf32>
    %1136 = arith.mulf %1134, %1135 : vector<1x128xf32>
    %1137 = arith.addf %1132, %1136 : vector<1x128xf32>
    %1138 = arith.addf %1137, %358 : vector<1x128xf32>
    %cst_1278 = arith.constant 0.000000e+00 : f32
    %1139 = vector.broadcast %cst_1278 : f32 to vector<1x128xf32>
    %1140 = arith.maximumf %1138, %1139 : vector<1x128xf32>
    %c14_1279 = arith.constant 14 : index
    %c0_1280 = arith.constant 0 : index
    %1141 = vector.load %arg13[%c14_1279, %c0_1280] : memref<64x128xf32, #tpu.memory_space<vmem>>, vector<1x128xf32>
    tpu.vector_store %arg13[%c14_1279, %c0_1280], %1140 {strides = array<i32>} : memref<64x128xf32, #tpu.memory_space<vmem>>, vector<1x128xf32>,
    %cst_1281 = arith.constant 0.000000e+00 : f32
    %1142 = vector.broadcast %cst_1281 : f32 to vector<1x128xf32>
    %c6_1282 = arith.constant 6 : index
    %c6_1283 = arith.constant 6 : index
    %c0_1284 = arith.constant 0 : index
    %1143 = vector.load %arg14[%c6_1282, %c6_1283, %c0_1284] : memref<10x10x128xf32, #tpu.memory_space<vmem>>, vector<1x1x128xf32>
    %1144 = vector.shape_cast %1143 : vector<1x1x128xf32> to vector<1x128xf32>
    %c9_1285 = arith.constant 9 : index
    %c0_1286 = arith.constant 0 : index
    %1145 = vector.load %arg7[%c9_1285, %c0_1286] : memref<117x128xf32, #tpu.memory_space<vmem>>, vector<1x128xf32>
    %1146 = arith.mulf %1144, %1145 : vector<1x128xf32>
    %1147 = arith.addf %1142, %1146 : vector<1x128xf32>
    %c6_1287 = arith.constant 6 : index
    %c7_1288 = arith.constant 7 : index
    %c0_1289 = arith.constant 0 : index
    %1148 = vector.load %arg14[%c6_1287, %c7_1288, %c0_1289] : memref<10x10x128xf32, #tpu.memory_space<vmem>>, vector<1x1x128xf32>
    %1149 = vector.shape_cast %1148 : vector<1x1x128xf32> to vector<1x128xf32>
    %c10_1290 = arith.constant 10 : index
    %c0_1291 = arith.constant 0 : index
    %1150 = vector.load %arg7[%c10_1290, %c0_1291] : memref<117x128xf32, #tpu.memory_space<vmem>>, vector<1x128xf32>
    %1151 = arith.mulf %1149, %1150 : vector<1x128xf32>
    %1152 = arith.addf %1147, %1151 : vector<1x128xf32>
    %c6_1292 = arith.constant 6 : index
    %c8_1293 = arith.constant 8 : index
    %c0_1294 = arith.constant 0 : index
    %1153 = vector.load %arg14[%c6_1292, %c8_1293, %c0_1294] : memref<10x10x128xf32, #tpu.memory_space<vmem>>, vector<1x1x128xf32>
    %1154 = vector.shape_cast %1153 : vector<1x1x128xf32> to vector<1x128xf32>
    %c11_1295 = arith.constant 11 : index
    %c0_1296 = arith.constant 0 : index
    %1155 = vector.load %arg7[%c11_1295, %c0_1296] : memref<117x128xf32, #tpu.memory_space<vmem>>, vector<1x128xf32>
    %1156 = arith.mulf %1154, %1155 : vector<1x128xf32>
    %1157 = arith.addf %1152, %1156 : vector<1x128xf32>
    %c7_1297 = arith.constant 7 : index
    %c6_1298 = arith.constant 6 : index
    %c0_1299 = arith.constant 0 : index
    %1158 = vector.load %arg14[%c7_1297, %c6_1298, %c0_1299] : memref<10x10x128xf32, #tpu.memory_space<vmem>>, vector<1x1x128xf32>
    %1159 = vector.shape_cast %1158 : vector<1x1x128xf32> to vector<1x128xf32>
    %c12_1300 = arith.constant 12 : index
    %c0_1301 = arith.constant 0 : index
    %1160 = vector.load %arg7[%c12_1300, %c0_1301] : memref<117x128xf32, #tpu.memory_space<vmem>>, vector<1x128xf32>
    %1161 = arith.mulf %1159, %1160 : vector<1x128xf32>
    %1162 = arith.addf %1157, %1161 : vector<1x128xf32>
    %c7_1302 = arith.constant 7 : index
    %c7_1303 = arith.constant 7 : index
    %c0_1304 = arith.constant 0 : index
    %1163 = vector.load %arg14[%c7_1302, %c7_1303, %c0_1304] : memref<10x10x128xf32, #tpu.memory_space<vmem>>, vector<1x1x128xf32>
    %1164 = vector.shape_cast %1163 : vector<1x1x128xf32> to vector<1x128xf32>
    %c13_1305 = arith.constant 13 : index
    %c0_1306 = arith.constant 0 : index
    %1165 = vector.load %arg7[%c13_1305, %c0_1306] : memref<117x128xf32, #tpu.memory_space<vmem>>, vector<1x128xf32>
    %1166 = arith.mulf %1164, %1165 : vector<1x128xf32>
    %1167 = arith.addf %1162, %1166 : vector<1x128xf32>
    %c7_1307 = arith.constant 7 : index
    %c8_1308 = arith.constant 8 : index
    %c0_1309 = arith.constant 0 : index
    %1168 = vector.load %arg14[%c7_1307, %c8_1308, %c0_1309] : memref<10x10x128xf32, #tpu.memory_space<vmem>>, vector<1x1x128xf32>
    %1169 = vector.shape_cast %1168 : vector<1x1x128xf32> to vector<1x128xf32>
    %c14_1310 = arith.constant 14 : index
    %c0_1311 = arith.constant 0 : index
    %1170 = vector.load %arg7[%c14_1310, %c0_1311] : memref<117x128xf32, #tpu.memory_space<vmem>>, vector<1x128xf32>
    %1171 = arith.mulf %1169, %1170 : vector<1x128xf32>
    %1172 = arith.addf %1167, %1171 : vector<1x128xf32>
    %c8_1312 = arith.constant 8 : index
    %c6_1313 = arith.constant 6 : index
    %c0_1314 = arith.constant 0 : index
    %1173 = vector.load %arg14[%c8_1312, %c6_1313, %c0_1314] : memref<10x10x128xf32, #tpu.memory_space<vmem>>, vector<1x1x128xf32>
    %1174 = vector.shape_cast %1173 : vector<1x1x128xf32> to vector<1x128xf32>
    %c15_1315 = arith.constant 15 : index
    %c0_1316 = arith.constant 0 : index
    %1175 = vector.load %arg7[%c15_1315, %c0_1316] : memref<117x128xf32, #tpu.memory_space<vmem>>, vector<1x128xf32>
    %1176 = arith.mulf %1174, %1175 : vector<1x128xf32>
    %1177 = arith.addf %1172, %1176 : vector<1x128xf32>
    %c8_1317 = arith.constant 8 : index
    %c7_1318 = arith.constant 7 : index
    %c0_1319 = arith.constant 0 : index
    %1178 = vector.load %arg14[%c8_1317, %c7_1318, %c0_1319] : memref<10x10x128xf32, #tpu.memory_space<vmem>>, vector<1x1x128xf32>
    %1179 = vector.shape_cast %1178 : vector<1x1x128xf32> to vector<1x128xf32>
    %c16_1320 = arith.constant 16 : index
    %c0_1321 = arith.constant 0 : index
    %1180 = vector.load %arg7[%c16_1320, %c0_1321] : memref<117x128xf32, #tpu.memory_space<vmem>>, vector<1x128xf32>
    %1181 = arith.mulf %1179, %1180 : vector<1x128xf32>
    %1182 = arith.addf %1177, %1181 : vector<1x128xf32>
    %c8_1322 = arith.constant 8 : index
    %c8_1323 = arith.constant 8 : index
    %c0_1324 = arith.constant 0 : index
    %1183 = vector.load %arg14[%c8_1322, %c8_1323, %c0_1324] : memref<10x10x128xf32, #tpu.memory_space<vmem>>, vector<1x1x128xf32>
    %1184 = vector.shape_cast %1183 : vector<1x1x128xf32> to vector<1x128xf32>
    %c17_1325 = arith.constant 17 : index
    %c0_1326 = arith.constant 0 : index
    %1185 = vector.load %arg7[%c17_1325, %c0_1326] : memref<117x128xf32, #tpu.memory_space<vmem>>, vector<1x128xf32>
    %1186 = arith.mulf %1184, %1185 : vector<1x128xf32>
    %1187 = arith.addf %1182, %1186 : vector<1x128xf32>
    %1188 = arith.addf %1187, %358 : vector<1x128xf32>
    %cst_1327 = arith.constant 0.000000e+00 : f32
    %1189 = vector.broadcast %cst_1327 : f32 to vector<1x128xf32>
    %1190 = arith.maximumf %1188, %1189 : vector<1x128xf32>
    %c15_1328 = arith.constant 15 : index
    %c0_1329 = arith.constant 0 : index
    %1191 = vector.load %arg13[%c15_1328, %c0_1329] : memref<64x128xf32, #tpu.memory_space<vmem>>, vector<1x128xf32>
    tpu.vector_store %arg13[%c15_1328, %c0_1329], %1190 {strides = array<i32>} : memref<64x128xf32, #tpu.memory_space<vmem>>, vector<1x128xf32>,
    %c0_1330 = arith.constant 0 : index
    %c0_1331 = arith.constant 0 : index
    %1192 = vector.load %arg13[%c0_1330, %c0_1331] : memref<64x128xf32, #tpu.memory_space<vmem>>, vector<16x128xf32>
    %1193 = arith.truncf %1192 : vector<16x128xf32> to vector<16x128xbf16>
    %c1_1332 = arith.constant 1 : index
    %c0_1333 = arith.constant 0 : index
    %c0_1334 = arith.constant 0 : index
    %1194 = vector.load %arg9[%c1_1332, %c0_1333, %c0_1334] : memref<13x128x128xbf16, #tpu.memory_space<vmem>>, vector<1x128x128xbf16>
    %1195 = vector.shape_cast %1194 : vector<1x128x128xbf16> to vector<128x128xbf16>
    %cst_1335 = arith.constant dense<0.000000e+00> : vector<16x128xf32>
    %1196 = tpu.matmul %1193, %1195, %cst_1335 {dimension_numbers = #tpu.dot_dimension_numbers<[1], [0], [0], [1], [0, 0, 1, 1], [], []>} : vector<16x128xbf16>, vector<128x128xbf16>, vector<16x128xf32> -> vector<16x128xf32>
    %1197 = vector.broadcast %359 : vector<1x128xf32> to vector<16x128xf32>
    %1198 = arith.addf %1196, %1197 : vector<16x128xf32>
    %cst_1336 = arith.constant 0.000000e+00 : f32
    %1199 = vector.broadcast %cst_1336 : f32 to vector<16x128xf32>
    %1200 = arith.maximumf %1198, %1199 : vector<16x128xf32>
    %c2_1337 = arith.constant 2 : index
    %c0_1338 = arith.constant 0 : index
    %1201 = vector.load %arg8[%c2_1337, %c0_1338] : memref<13x128xf32, #tpu.memory_space<vmem>>, vector<1x128xf32>
    %c2_1339 = arith.constant 2 : index
    %c0_1340 = arith.constant 0 : index
    %1202 = vector.load %arg10[%c2_1339, %c0_1340] : memref<13x128xf32, #tpu.memory_space<vmem>>, vector<1x128xf32>
    %1203 = vector.extract_strided_slice %1200 {offsets = [0, 0], sizes = [4, 128], strides = [1, 1]} : vector<16x128xf32> to vector<4x128xf32>
    %c1_1341 = arith.constant 1 : index
    %c1_1342 = arith.constant 1 : index
    %c0_1343 = arith.constant 0 : index
    %1204 = vector.load %arg15[%c1_1341, %c1_1342, %c0_1343] : memref<6x6x128xf32, #tpu.memory_space<vmem>>, vector<1x4x128xf32>
    %1205 = vector.shape_cast %1204 : vector<1x4x128xf32> to vector<4x128xf32>
    %1206 = vector.shape_cast %1203 : vector<4x128xf32> to vector<1x4x128xf32>
    tpu.vector_store %arg15[%c1_1341, %c1_1342, %c0_1343], %1206 {strides = array<i32>} : memref<6x6x128xf32, #tpu.memory_space<vmem>>, vector<1x4x128xf32>,
    %1207 = vector.extract_strided_slice %1200 {offsets = [4, 0], sizes = [4, 128], strides = [1, 1]} : vector<16x128xf32> to vector<4x128xf32>
    %c2_1344 = arith.constant 2 : index
    %c1_1345 = arith.constant 1 : index
    %c0_1346 = arith.constant 0 : index
    %1208 = vector.load %arg15[%c2_1344, %c1_1345, %c0_1346] : memref<6x6x128xf32, #tpu.memory_space<vmem>>, vector<1x4x128xf32>
    %1209 = vector.shape_cast %1208 : vector<1x4x128xf32> to vector<4x128xf32>
    %1210 = vector.shape_cast %1207 : vector<4x128xf32> to vector<1x4x128xf32>
    tpu.vector_store %arg15[%c2_1344, %c1_1345, %c0_1346], %1210 {strides = array<i32>} : memref<6x6x128xf32, #tpu.memory_space<vmem>>, vector<1x4x128xf32>,
    %1211 = vector.extract_strided_slice %1200 {offsets = [8, 0], sizes = [4, 128], strides = [1, 1]} : vector<16x128xf32> to vector<4x128xf32>
    %c3_1347 = arith.constant 3 : index
    %c1_1348 = arith.constant 1 : index
    %c0_1349 = arith.constant 0 : index
    %1212 = vector.load %arg15[%c3_1347, %c1_1348, %c0_1349] : memref<6x6x128xf32, #tpu.memory_space<vmem>>, vector<1x4x128xf32>
    %1213 = vector.shape_cast %1212 : vector<1x4x128xf32> to vector<4x128xf32>
    %1214 = vector.shape_cast %1211 : vector<4x128xf32> to vector<1x4x128xf32>
    tpu.vector_store %arg15[%c3_1347, %c1_1348, %c0_1349], %1214 {strides = array<i32>} : memref<6x6x128xf32, #tpu.memory_space<vmem>>, vector<1x4x128xf32>,
    %1215 = vector.extract_strided_slice %1200 {offsets = [12, 0], sizes = [4, 128], strides = [1, 1]} : vector<16x128xf32> to vector<4x128xf32>
    %c4_1350 = arith.constant 4 : index
    %c1_1351 = arith.constant 1 : index
    %c0_1352 = arith.constant 0 : index
    %1216 = vector.load %arg15[%c4_1350, %c1_1351, %c0_1352] : memref<6x6x128xf32, #tpu.memory_space<vmem>>, vector<1x4x128xf32>
    %1217 = vector.shape_cast %1216 : vector<1x4x128xf32> to vector<4x128xf32>
    %1218 = vector.shape_cast %1215 : vector<4x128xf32> to vector<1x4x128xf32>
    tpu.vector_store %arg15[%c4_1350, %c1_1351, %c0_1352], %1218 {strides = array<i32>} : memref<6x6x128xf32, #tpu.memory_space<vmem>>, vector<1x4x128xf32>,
    %cst_1353 = arith.constant 0.000000e+00 : f32
    %1219 = vector.broadcast %cst_1353 : f32 to vector<4x4x128xf32>
    %c0_1354 = arith.constant 0 : index
    %c0_1355 = arith.constant 0 : index
    %c0_1356 = arith.constant 0 : index
    %1220 = vector.load %arg15[%c0_1354, %c0_1355, %c0_1356] : memref<6x6x128xf32, #tpu.memory_space<vmem>>, vector<4x4x128xf32>
    %c18 = arith.constant 18 : index
    %c0_1357 = arith.constant 0 : index
    %1221 = vector.load %arg7[%c18, %c0_1357] : memref<117x128xf32, #tpu.memory_space<vmem>>, vector<1x128xf32>
    %1222 = vector.shape_cast %1221 : vector<1x128xf32> to vector<1x1x128xf32>
    %1223 = vector.broadcast %1222 : vector<1x1x128xf32> to vector<4x4x128xf32>
    %1224 = arith.mulf %1220, %1223 : vector<4x4x128xf32>
    %1225 = arith.addf %1219, %1224 : vector<4x4x128xf32>
    %c0_1358 = arith.constant 0 : index
    %c1_1359 = arith.constant 1 : index
    %c0_1360 = arith.constant 0 : index
    %1226 = vector.load %arg15[%c0_1358, %c1_1359, %c0_1360] : memref<6x6x128xf32, #tpu.memory_space<vmem>>, vector<4x4x128xf32>
    %c19 = arith.constant 19 : index
    %c0_1361 = arith.constant 0 : index
    %1227 = vector.load %arg7[%c19, %c0_1361] : memref<117x128xf32, #tpu.memory_space<vmem>>, vector<1x128xf32>
    %1228 = vector.shape_cast %1227 : vector<1x128xf32> to vector<1x1x128xf32>
    %1229 = vector.broadcast %1228 : vector<1x1x128xf32> to vector<4x4x128xf32>
    %1230 = arith.mulf %1226, %1229 : vector<4x4x128xf32>
    %1231 = arith.addf %1225, %1230 : vector<4x4x128xf32>
    %c0_1362 = arith.constant 0 : index
    %c2_1363 = arith.constant 2 : index
    %c0_1364 = arith.constant 0 : index
    %1232 = vector.load %arg15[%c0_1362, %c2_1363, %c0_1364] : memref<6x6x128xf32, #tpu.memory_space<vmem>>, vector<4x4x128xf32>
    %c20 = arith.constant 20 : index
    %c0_1365 = arith.constant 0 : index
    %1233 = vector.load %arg7[%c20, %c0_1365] : memref<117x128xf32, #tpu.memory_space<vmem>>, vector<1x128xf32>
    %1234 = vector.shape_cast %1233 : vector<1x128xf32> to vector<1x1x128xf32>
    %1235 = vector.broadcast %1234 : vector<1x1x128xf32> to vector<4x4x128xf32>
    %1236 = arith.mulf %1232, %1235 : vector<4x4x128xf32>
    %1237 = arith.addf %1231, %1236 : vector<4x4x128xf32>
    %c1_1366 = arith.constant 1 : index
    %c0_1367 = arith.constant 0 : index
    %c0_1368 = arith.constant 0 : index
    %1238 = vector.load %arg15[%c1_1366, %c0_1367, %c0_1368] : memref<6x6x128xf32, #tpu.memory_space<vmem>>, vector<4x4x128xf32>
    %c21 = arith.constant 21 : index
    %c0_1369 = arith.constant 0 : index
    %1239 = vector.load %arg7[%c21, %c0_1369] : memref<117x128xf32, #tpu.memory_space<vmem>>, vector<1x128xf32>
    %1240 = vector.shape_cast %1239 : vector<1x128xf32> to vector<1x1x128xf32>
    %1241 = vector.broadcast %1240 : vector<1x1x128xf32> to vector<4x4x128xf32>
    %1242 = arith.mulf %1238, %1241 : vector<4x4x128xf32>
    %1243 = arith.addf %1237, %1242 : vector<4x4x128xf32>
    %c1_1370 = arith.constant 1 : index
    %c1_1371 = arith.constant 1 : index
    %c0_1372 = arith.constant 0 : index
    %1244 = vector.load %arg15[%c1_1370, %c1_1371, %c0_1372] : memref<6x6x128xf32, #tpu.memory_space<vmem>>, vector<4x4x128xf32>
    %c22 = arith.constant 22 : index
    %c0_1373 = arith.constant 0 : index
    %1245 = vector.load %arg7[%c22, %c0_1373] : memref<117x128xf32, #tpu.memory_space<vmem>>, vector<1x128xf32>
    %1246 = vector.shape_cast %1245 : vector<1x128xf32> to vector<1x1x128xf32>
    %1247 = vector.broadcast %1246 : vector<1x1x128xf32> to vector<4x4x128xf32>
    %1248 = arith.mulf %1244, %1247 : vector<4x4x128xf32>
    %1249 = arith.addf %1243, %1248 : vector<4x4x128xf32>
    %c1_1374 = arith.constant 1 : index
    %c2_1375 = arith.constant 2 : index
    %c0_1376 = arith.constant 0 : index
    %1250 = vector.load %arg15[%c1_1374, %c2_1375, %c0_1376] : memref<6x6x128xf32, #tpu.memory_space<vmem>>, vector<4x4x128xf32>
    %c23 = arith.constant 23 : index
    %c0_1377 = arith.constant 0 : index
    %1251 = vector.load %arg7[%c23, %c0_1377] : memref<117x128xf32, #tpu.memory_space<vmem>>, vector<1x128xf32>
    %1252 = vector.shape_cast %1251 : vector<1x128xf32> to vector<1x1x128xf32>
    %1253 = vector.broadcast %1252 : vector<1x1x128xf32> to vector<4x4x128xf32>
    %1254 = arith.mulf %1250, %1253 : vector<4x4x128xf32>
    %1255 = arith.addf %1249, %1254 : vector<4x4x128xf32>
    %c2_1378 = arith.constant 2 : index
    %c0_1379 = arith.constant 0 : index
    %c0_1380 = arith.constant 0 : index
    %1256 = vector.load %arg15[%c2_1378, %c0_1379, %c0_1380] : memref<6x6x128xf32, #tpu.memory_space<vmem>>, vector<4x4x128xf32>
    %c24_1381 = arith.constant 24 : index
    %c0_1382 = arith.constant 0 : index
    %1257 = vector.load %arg7[%c24_1381, %c0_1382] : memref<117x128xf32, #tpu.memory_space<vmem>>, vector<1x128xf32>
    %1258 = vector.shape_cast %1257 : vector<1x128xf32> to vector<1x1x128xf32>
    %1259 = vector.broadcast %1258 : vector<1x1x128xf32> to vector<4x4x128xf32>
    %1260 = arith.mulf %1256, %1259 : vector<4x4x128xf32>
    %1261 = arith.addf %1255, %1260 : vector<4x4x128xf32>
    %c2_1383 = arith.constant 2 : index
    %c1_1384 = arith.constant 1 : index
    %c0_1385 = arith.constant 0 : index
    %1262 = vector.load %arg15[%c2_1383, %c1_1384, %c0_1385] : memref<6x6x128xf32, #tpu.memory_space<vmem>>, vector<4x4x128xf32>
    %c25 = arith.constant 25 : index
    %c0_1386 = arith.constant 0 : index
    %1263 = vector.load %arg7[%c25, %c0_1386] : memref<117x128xf32, #tpu.memory_space<vmem>>, vector<1x128xf32>
    %1264 = vector.shape_cast %1263 : vector<1x128xf32> to vector<1x1x128xf32>
    %1265 = vector.broadcast %1264 : vector<1x1x128xf32> to vector<4x4x128xf32>
    %1266 = arith.mulf %1262, %1265 : vector<4x4x128xf32>
    %1267 = arith.addf %1261, %1266 : vector<4x4x128xf32>
    %c2_1387 = arith.constant 2 : index
    %c2_1388 = arith.constant 2 : index
    %c0_1389 = arith.constant 0 : index
    %1268 = vector.load %arg15[%c2_1387, %c2_1388, %c0_1389] : memref<6x6x128xf32, #tpu.memory_space<vmem>>, vector<4x4x128xf32>
    %c26 = arith.constant 26 : index
    %c0_1390 = arith.constant 0 : index
    %1269 = vector.load %arg7[%c26, %c0_1390] : memref<117x128xf32, #tpu.memory_space<vmem>>, vector<1x128xf32>
    %1270 = vector.shape_cast %1269 : vector<1x128xf32> to vector<1x1x128xf32>
    %1271 = vector.broadcast %1270 : vector<1x1x128xf32> to vector<4x4x128xf32>
    %1272 = arith.mulf %1268, %1271 : vector<4x4x128xf32>
    %1273 = arith.addf %1267, %1272 : vector<4x4x128xf32>
    %1274 = vector.shape_cast %1201 : vector<1x128xf32> to vector<1x1x128xf32>
    %1275 = vector.broadcast %1274 : vector<1x1x128xf32> to vector<4x4x128xf32>
    %1276 = arith.addf %1273, %1275 : vector<4x4x128xf32>
    %cst_1391 = arith.constant 0.000000e+00 : f32
    %1277 = vector.broadcast %cst_1391 : f32 to vector<4x4x128xf32>
    %1278 = arith.maximumf %1276, %1277 : vector<4x4x128xf32>
    %1279 = vector.extract_strided_slice %1278 {offsets = [0, 0, 0], sizes = [1, 4, 128], strides = [1, 1, 1]} : vector<4x4x128xf32> to vector<1x4x128xf32>
    %1280 = vector.shape_cast %1279 : vector<1x4x128xf32> to vector<4x128xf32>
    %c0_1392 = arith.constant 0 : index
    %c0_1393 = arith.constant 0 : index
    %1281 = vector.load %arg13[%c0_1392, %c0_1393] : memref<64x128xf32, #tpu.memory_space<vmem>>, vector<4x128xf32>
    tpu.vector_store %arg13[%c0_1392, %c0_1393], %1280 {strides = array<i32>} : memref<64x128xf32, #tpu.memory_space<vmem>>, vector<4x128xf32>,
    %1282 = vector.extract_strided_slice %1278 {offsets = [1, 0, 0], sizes = [1, 4, 128], strides = [1, 1, 1]} : vector<4x4x128xf32> to vector<1x4x128xf32>
    %1283 = vector.shape_cast %1282 : vector<1x4x128xf32> to vector<4x128xf32>
    %c4_1394 = arith.constant 4 : index
    %c0_1395 = arith.constant 0 : index
    %1284 = vector.load %arg13[%c4_1394, %c0_1395] : memref<64x128xf32, #tpu.memory_space<vmem>>, vector<4x128xf32>
    tpu.vector_store %arg13[%c4_1394, %c0_1395], %1283 {strides = array<i32>} : memref<64x128xf32, #tpu.memory_space<vmem>>, vector<4x128xf32>,
    %1285 = vector.extract_strided_slice %1278 {offsets = [2, 0, 0], sizes = [1, 4, 128], strides = [1, 1, 1]} : vector<4x4x128xf32> to vector<1x4x128xf32>
    %1286 = vector.shape_cast %1285 : vector<1x4x128xf32> to vector<4x128xf32>
    %c8_1396 = arith.constant 8 : index
    %c0_1397 = arith.constant 0 : index
    %1287 = vector.load %arg13[%c8_1396, %c0_1397] : memref<64x128xf32, #tpu.memory_space<vmem>>, vector<4x128xf32>
    tpu.vector_store %arg13[%c8_1396, %c0_1397], %1286 {strides = array<i32>} : memref<64x128xf32, #tpu.memory_space<vmem>>, vector<4x128xf32>,
    %1288 = vector.extract_strided_slice %1278 {offsets = [3, 0, 0], sizes = [1, 4, 128], strides = [1, 1, 1]} : vector<4x4x128xf32> to vector<1x4x128xf32>
    %1289 = vector.shape_cast %1288 : vector<1x4x128xf32> to vector<4x128xf32>
    %c12_1398 = arith.constant 12 : index
    %c0_1399 = arith.constant 0 : index
    %1290 = vector.load %arg13[%c12_1398, %c0_1399] : memref<64x128xf32, #tpu.memory_space<vmem>>, vector<4x128xf32>
    tpu.vector_store %arg13[%c12_1398, %c0_1399], %1289 {strides = array<i32>} : memref<64x128xf32, #tpu.memory_space<vmem>>, vector<4x128xf32>,
    %c0_1400 = arith.constant 0 : index
    %c0_1401 = arith.constant 0 : index
    %1291 = vector.load %arg13[%c0_1400, %c0_1401] : memref<64x128xf32, #tpu.memory_space<vmem>>, vector<16x128xf32>
    %1292 = arith.truncf %1291 : vector<16x128xf32> to vector<16x128xbf16>
    %c2_1402 = arith.constant 2 : index
    %c0_1403 = arith.constant 0 : index
    %c0_1404 = arith.constant 0 : index
    %1293 = vector.load %arg9[%c2_1402, %c0_1403, %c0_1404] : memref<13x128x128xbf16, #tpu.memory_space<vmem>>, vector<1x128x128xbf16>
    %1294 = vector.shape_cast %1293 : vector<1x128x128xbf16> to vector<128x128xbf16>
    %cst_1405 = arith.constant dense<0.000000e+00> : vector<16x128xf32>
    %1295 = tpu.matmul %1292, %1294, %cst_1405 {dimension_numbers = #tpu.dot_dimension_numbers<[1], [0], [0], [1], [0, 0, 1, 1], [], []>} : vector<16x128xbf16>, vector<128x128xbf16>, vector<16x128xf32> -> vector<16x128xf32>
    %1296 = vector.broadcast %1202 : vector<1x128xf32> to vector<16x128xf32>
    %1297 = arith.addf %1295, %1296 : vector<16x128xf32>
    %cst_1406 = arith.constant 0.000000e+00 : f32
    %1298 = vector.broadcast %cst_1406 : f32 to vector<16x128xf32>
    %1299 = arith.maximumf %1297, %1298 : vector<16x128xf32>
    %c3_1407 = arith.constant 3 : index
    %c0_1408 = arith.constant 0 : index
    %1300 = vector.load %arg8[%c3_1407, %c0_1408] : memref<13x128xf32, #tpu.memory_space<vmem>>, vector<1x128xf32>
    %c3_1409 = arith.constant 3 : index
    %c0_1410 = arith.constant 0 : index
    %1301 = vector.load %arg10[%c3_1409, %c0_1410] : memref<13x128xf32, #tpu.memory_space<vmem>>, vector<1x128xf32>
    %1302 = vector.extract_strided_slice %1299 {offsets = [0, 0], sizes = [4, 128], strides = [1, 1]} : vector<16x128xf32> to vector<4x128xf32>
    %c1_1411 = arith.constant 1 : index
    %c1_1412 = arith.constant 1 : index
    %c0_1413 = arith.constant 0 : index
    %1303 = vector.load %arg15[%c1_1411, %c1_1412, %c0_1413] : memref<6x6x128xf32, #tpu.memory_space<vmem>>, vector<1x4x128xf32>
    %1304 = vector.shape_cast %1303 : vector<1x4x128xf32> to vector<4x128xf32>
    %1305 = vector.shape_cast %1302 : vector<4x128xf32> to vector<1x4x128xf32>
    tpu.vector_store %arg15[%c1_1411, %c1_1412, %c0_1413], %1305 {strides = array<i32>} : memref<6x6x128xf32, #tpu.memory_space<vmem>>, vector<1x4x128xf32>,
    %1306 = vector.extract_strided_slice %1299 {offsets = [4, 0], sizes = [4, 128], strides = [1, 1]} : vector<16x128xf32> to vector<4x128xf32>
    %c2_1414 = arith.constant 2 : index
    %c1_1415 = arith.constant 1 : index
    %c0_1416 = arith.constant 0 : index
    %1307 = vector.load %arg15[%c2_1414, %c1_1415, %c0_1416] : memref<6x6x128xf32, #tpu.memory_space<vmem>>, vector<1x4x128xf32>
    %1308 = vector.shape_cast %1307 : vector<1x4x128xf32> to vector<4x128xf32>
    %1309 = vector.shape_cast %1306 : vector<4x128xf32> to vector<1x4x128xf32>
    tpu.vector_store %arg15[%c2_1414, %c1_1415, %c0_1416], %1309 {strides = array<i32>} : memref<6x6x128xf32, #tpu.memory_space<vmem>>, vector<1x4x128xf32>,
    %1310 = vector.extract_strided_slice %1299 {offsets = [8, 0], sizes = [4, 128], strides = [1, 1]} : vector<16x128xf32> to vector<4x128xf32>
    %c3_1417 = arith.constant 3 : index
    %c1_1418 = arith.constant 1 : index
    %c0_1419 = arith.constant 0 : index
    %1311 = vector.load %arg15[%c3_1417, %c1_1418, %c0_1419] : memref<6x6x128xf32, #tpu.memory_space<vmem>>, vector<1x4x128xf32>
    %1312 = vector.shape_cast %1311 : vector<1x4x128xf32> to vector<4x128xf32>
    %1313 = vector.shape_cast %1310 : vector<4x128xf32> to vector<1x4x128xf32>
    tpu.vector_store %arg15[%c3_1417, %c1_1418, %c0_1419], %1313 {strides = array<i32>} : memref<6x6x128xf32, #tpu.memory_space<vmem>>, vector<1x4x128xf32>,
    %1314 = vector.extract_strided_slice %1299 {offsets = [12, 0], sizes = [4, 128], strides = [1, 1]} : vector<16x128xf32> to vector<4x128xf32>
    %c4_1420 = arith.constant 4 : index
    %c1_1421 = arith.constant 1 : index
    %c0_1422 = arith.constant 0 : index
    %1315 = vector.load %arg15[%c4_1420, %c1_1421, %c0_1422] : memref<6x6x128xf32, #tpu.memory_space<vmem>>, vector<1x4x128xf32>
    %1316 = vector.shape_cast %1315 : vector<1x4x128xf32> to vector<4x128xf32>
    %1317 = vector.shape_cast %1314 : vector<4x128xf32> to vector<1x4x128xf32>
    tpu.vector_store %arg15[%c4_1420, %c1_1421, %c0_1422], %1317 {strides = array<i32>} : memref<6x6x128xf32, #tpu.memory_space<vmem>>, vector<1x4x128xf32>,
    %cst_1423 = arith.constant 0.000000e+00 : f32
    %1318 = vector.broadcast %cst_1423 : f32 to vector<1x128xf32>
    %c0_1424 = arith.constant 0 : index
    %c0_1425 = arith.constant 0 : index
    %c0_1426 = arith.constant 0 : index
    %1319 = vector.load %arg15[%c0_1424, %c0_1425, %c0_1426] : memref<6x6x128xf32, #tpu.memory_space<vmem>>, vector<1x1x128xf32>
    %1320 = vector.shape_cast %1319 : vector<1x1x128xf32> to vector<1x128xf32>
    %c27 = arith.constant 27 : index
    %c0_1427 = arith.constant 0 : index
    %1321 = vector.load %arg7[%c27, %c0_1427] : memref<117x128xf32, #tpu.memory_space<vmem>>, vector<1x128xf32>
    %1322 = arith.mulf %1320, %1321 : vector<1x128xf32>
    %1323 = arith.addf %1318, %1322 : vector<1x128xf32>
    %c0_1428 = arith.constant 0 : index
    %c1_1429 = arith.constant 1 : index
    %c0_1430 = arith.constant 0 : index
    %1324 = vector.load %arg15[%c0_1428, %c1_1429, %c0_1430] : memref<6x6x128xf32, #tpu.memory_space<vmem>>, vector<1x1x128xf32>
    %1325 = vector.shape_cast %1324 : vector<1x1x128xf32> to vector<1x128xf32>
    %c28 = arith.constant 28 : index
    %c0_1431 = arith.constant 0 : index
    %1326 = vector.load %arg7[%c28, %c0_1431] : memref<117x128xf32, #tpu.memory_space<vmem>>, vector<1x128xf32>
    %1327 = arith.mulf %1325, %1326 : vector<1x128xf32>
    %1328 = arith.addf %1323, %1327 : vector<1x128xf32>
    %c0_1432 = arith.constant 0 : index
    %c2_1433 = arith.constant 2 : index
    %c0_1434 = arith.constant 0 : index
    %1329 = vector.load %arg15[%c0_1432, %c2_1433, %c0_1434] : memref<6x6x128xf32, #tpu.memory_space<vmem>>, vector<1x1x128xf32>
    %1330 = vector.shape_cast %1329 : vector<1x1x128xf32> to vector<1x128xf32>
    %c29 = arith.constant 29 : index
    %c0_1435 = arith.constant 0 : index
    %1331 = vector.load %arg7[%c29, %c0_1435] : memref<117x128xf32, #tpu.memory_space<vmem>>, vector<1x128xf32>
    %1332 = arith.mulf %1330, %1331 : vector<1x128xf32>
    %1333 = arith.addf %1328, %1332 : vector<1x128xf32>
    %c1_1436 = arith.constant 1 : index
    %c0_1437 = arith.constant 0 : index
    %c0_1438 = arith.constant 0 : index
    %1334 = vector.load %arg15[%c1_1436, %c0_1437, %c0_1438] : memref<6x6x128xf32, #tpu.memory_space<vmem>>, vector<1x1x128xf32>
    %1335 = vector.shape_cast %1334 : vector<1x1x128xf32> to vector<1x128xf32>
    %c30 = arith.constant 30 : index
    %c0_1439 = arith.constant 0 : index
    %1336 = vector.load %arg7[%c30, %c0_1439] : memref<117x128xf32, #tpu.memory_space<vmem>>, vector<1x128xf32>
    %1337 = arith.mulf %1335, %1336 : vector<1x128xf32>
    %1338 = arith.addf %1333, %1337 : vector<1x128xf32>
    %c1_1440 = arith.constant 1 : index
    %c1_1441 = arith.constant 1 : index
    %c0_1442 = arith.constant 0 : index
    %1339 = vector.load %arg15[%c1_1440, %c1_1441, %c0_1442] : memref<6x6x128xf32, #tpu.memory_space<vmem>>, vector<1x1x128xf32>
    %1340 = vector.shape_cast %1339 : vector<1x1x128xf32> to vector<1x128xf32>
    %c31 = arith.constant 31 : index
    %c0_1443 = arith.constant 0 : index
    %1341 = vector.load %arg7[%c31, %c0_1443] : memref<117x128xf32, #tpu.memory_space<vmem>>, vector<1x128xf32>
    %1342 = arith.mulf %1340, %1341 : vector<1x128xf32>
    %1343 = arith.addf %1338, %1342 : vector<1x128xf32>
    %c1_1444 = arith.constant 1 : index
    %c2_1445 = arith.constant 2 : index
    %c0_1446 = arith.constant 0 : index
    %1344 = vector.load %arg15[%c1_1444, %c2_1445, %c0_1446] : memref<6x6x128xf32, #tpu.memory_space<vmem>>, vector<1x1x128xf32>
    %1345 = vector.shape_cast %1344 : vector<1x1x128xf32> to vector<1x128xf32>
    %c32_1447 = arith.constant 32 : index
    %c0_1448 = arith.constant 0 : index
    %1346 = vector.load %arg7[%c32_1447, %c0_1448] : memref<117x128xf32, #tpu.memory_space<vmem>>, vector<1x128xf32>
    %1347 = arith.mulf %1345, %1346 : vector<1x128xf32>
    %1348 = arith.addf %1343, %1347 : vector<1x128xf32>
    %c2_1449 = arith.constant 2 : index
    %c0_1450 = arith.constant 0 : index
    %c0_1451 = arith.constant 0 : index
    %1349 = vector.load %arg15[%c2_1449, %c0_1450, %c0_1451] : memref<6x6x128xf32, #tpu.memory_space<vmem>>, vector<1x1x128xf32>
    %1350 = vector.shape_cast %1349 : vector<1x1x128xf32> to vector<1x128xf32>
    %c33 = arith.constant 33 : index
    %c0_1452 = arith.constant 0 : index
    %1351 = vector.load %arg7[%c33, %c0_1452] : memref<117x128xf32, #tpu.memory_space<vmem>>, vector<1x128xf32>
    %1352 = arith.mulf %1350, %1351 : vector<1x128xf32>
    %1353 = arith.addf %1348, %1352 : vector<1x128xf32>
    %c2_1453 = arith.constant 2 : index
    %c1_1454 = arith.constant 1 : index
    %c0_1455 = arith.constant 0 : index
    %1354 = vector.load %arg15[%c2_1453, %c1_1454, %c0_1455] : memref<6x6x128xf32, #tpu.memory_space<vmem>>, vector<1x1x128xf32>
    %1355 = vector.shape_cast %1354 : vector<1x1x128xf32> to vector<1x128xf32>
    %c34 = arith.constant 34 : index
    %c0_1456 = arith.constant 0 : index
    %1356 = vector.load %arg7[%c34, %c0_1456] : memref<117x128xf32, #tpu.memory_space<vmem>>, vector<1x128xf32>
    %1357 = arith.mulf %1355, %1356 : vector<1x128xf32>
    %1358 = arith.addf %1353, %1357 : vector<1x128xf32>
    %c2_1457 = arith.constant 2 : index
    %c2_1458 = arith.constant 2 : index
    %c0_1459 = arith.constant 0 : index
    %1359 = vector.load %arg15[%c2_1457, %c2_1458, %c0_1459] : memref<6x6x128xf32, #tpu.memory_space<vmem>>, vector<1x1x128xf32>
    %1360 = vector.shape_cast %1359 : vector<1x1x128xf32> to vector<1x128xf32>
    %c35 = arith.constant 35 : index
    %c0_1460 = arith.constant 0 : index
    %1361 = vector.load %arg7[%c35, %c0_1460] : memref<117x128xf32, #tpu.memory_space<vmem>>, vector<1x128xf32>
    %1362 = arith.mulf %1360, %1361 : vector<1x128xf32>
    %1363 = arith.addf %1358, %1362 : vector<1x128xf32>
    %1364 = arith.addf %1363, %1300 : vector<1x128xf32>
    %cst_1461 = arith.constant 0.000000e+00 : f32
    %1365 = vector.broadcast %cst_1461 : f32 to vector<1x128xf32>
    %1366 = arith.maximumf %1364, %1365 : vector<1x128xf32>
    %c0_1462 = arith.constant 0 : index
    %c0_1463 = arith.constant 0 : index
    %1367 = vector.load %arg13[%c0_1462, %c0_1463] : memref<64x128xf32, #tpu.memory_space<vmem>>, vector<1x128xf32>
    tpu.vector_store %arg13[%c0_1462, %c0_1463], %1366 {strides = array<i32>} : memref<64x128xf32, #tpu.memory_space<vmem>>, vector<1x128xf32>,
    %cst_1464 = arith.constant 0.000000e+00 : f32
    %1368 = vector.broadcast %cst_1464 : f32 to vector<1x128xf32>
    %c0_1465 = arith.constant 0 : index
    %c2_1466 = arith.constant 2 : index
    %c0_1467 = arith.constant 0 : index
    %1369 = vector.load %arg15[%c0_1465, %c2_1466, %c0_1467] : memref<6x6x128xf32, #tpu.memory_space<vmem>>, vector<1x1x128xf32>
    %1370 = vector.shape_cast %1369 : vector<1x1x128xf32> to vector<1x128xf32>
    %c27_1468 = arith.constant 27 : index
    %c0_1469 = arith.constant 0 : index
    %1371 = vector.load %arg7[%c27_1468, %c0_1469] : memref<117x128xf32, #tpu.memory_space<vmem>>, vector<1x128xf32>
    %1372 = arith.mulf %1370, %1371 : vector<1x128xf32>
    %1373 = arith.addf %1368, %1372 : vector<1x128xf32>
    %c0_1470 = arith.constant 0 : index
    %c3_1471 = arith.constant 3 : index
    %c0_1472 = arith.constant 0 : index
    %1374 = vector.load %arg15[%c0_1470, %c3_1471, %c0_1472] : memref<6x6x128xf32, #tpu.memory_space<vmem>>, vector<1x1x128xf32>
    %1375 = vector.shape_cast %1374 : vector<1x1x128xf32> to vector<1x128xf32>
    %c28_1473 = arith.constant 28 : index
    %c0_1474 = arith.constant 0 : index
    %1376 = vector.load %arg7[%c28_1473, %c0_1474] : memref<117x128xf32, #tpu.memory_space<vmem>>, vector<1x128xf32>
    %1377 = arith.mulf %1375, %1376 : vector<1x128xf32>
    %1378 = arith.addf %1373, %1377 : vector<1x128xf32>
    %c0_1475 = arith.constant 0 : index
    %c4_1476 = arith.constant 4 : index
    %c0_1477 = arith.constant 0 : index
    %1379 = vector.load %arg15[%c0_1475, %c4_1476, %c0_1477] : memref<6x6x128xf32, #tpu.memory_space<vmem>>, vector<1x1x128xf32>
    %1380 = vector.shape_cast %1379 : vector<1x1x128xf32> to vector<1x128xf32>
    %c29_1478 = arith.constant 29 : index
    %c0_1479 = arith.constant 0 : index
    %1381 = vector.load %arg7[%c29_1478, %c0_1479] : memref<117x128xf32, #tpu.memory_space<vmem>>, vector<1x128xf32>
    %1382 = arith.mulf %1380, %1381 : vector<1x128xf32>
    %1383 = arith.addf %1378, %1382 : vector<1x128xf32>
    %c1_1480 = arith.constant 1 : index
    %c2_1481 = arith.constant 2 : index
    %c0_1482 = arith.constant 0 : index
    %1384 = vector.load %arg15[%c1_1480, %c2_1481, %c0_1482] : memref<6x6x128xf32, #tpu.memory_space<vmem>>, vector<1x1x128xf32>
    %1385 = vector.shape_cast %1384 : vector<1x1x128xf32> to vector<1x128xf32>
    %c30_1483 = arith.constant 30 : index
    %c0_1484 = arith.constant 0 : index
    %1386 = vector.load %arg7[%c30_1483, %c0_1484] : memref<117x128xf32, #tpu.memory_space<vmem>>, vector<1x128xf32>
    %1387 = arith.mulf %1385, %1386 : vector<1x128xf32>
    %1388 = arith.addf %1383, %1387 : vector<1x128xf32>
    %c1_1485 = arith.constant 1 : index
    %c3_1486 = arith.constant 3 : index
    %c0_1487 = arith.constant 0 : index
    %1389 = vector.load %arg15[%c1_1485, %c3_1486, %c0_1487] : memref<6x6x128xf32, #tpu.memory_space<vmem>>, vector<1x1x128xf32>
    %1390 = vector.shape_cast %1389 : vector<1x1x128xf32> to vector<1x128xf32>
    %c31_1488 = arith.constant 31 : index
    %c0_1489 = arith.constant 0 : index
    %1391 = vector.load %arg7[%c31_1488, %c0_1489] : memref<117x128xf32, #tpu.memory_space<vmem>>, vector<1x128xf32>
    %1392 = arith.mulf %1390, %1391 : vector<1x128xf32>
    %1393 = arith.addf %1388, %1392 : vector<1x128xf32>
    %c1_1490 = arith.constant 1 : index
    %c4_1491 = arith.constant 4 : index
    %c0_1492 = arith.constant 0 : index
    %1394 = vector.load %arg15[%c1_1490, %c4_1491, %c0_1492] : memref<6x6x128xf32, #tpu.memory_space<vmem>>, vector<1x1x128xf32>
    %1395 = vector.shape_cast %1394 : vector<1x1x128xf32> to vector<1x128xf32>
    %c32_1493 = arith.constant 32 : index
    %c0_1494 = arith.constant 0 : index
    %1396 = vector.load %arg7[%c32_1493, %c0_1494] : memref<117x128xf32, #tpu.memory_space<vmem>>, vector<1x128xf32>
    %1397 = arith.mulf %1395, %1396 : vector<1x128xf32>
    %1398 = arith.addf %1393, %1397 : vector<1x128xf32>
    %c2_1495 = arith.constant 2 : index
    %c2_1496 = arith.constant 2 : index
    %c0_1497 = arith.constant 0 : index
    %1399 = vector.load %arg15[%c2_1495, %c2_1496, %c0_1497] : memref<6x6x128xf32, #tpu.memory_space<vmem>>, vector<1x1x128xf32>
    %1400 = vector.shape_cast %1399 : vector<1x1x128xf32> to vector<1x128xf32>
    %c33_1498 = arith.constant 33 : index
    %c0_1499 = arith.constant 0 : index
    %1401 = vector.load %arg7[%c33_1498, %c0_1499] : memref<117x128xf32, #tpu.memory_space<vmem>>, vector<1x128xf32>
    %1402 = arith.mulf %1400, %1401 : vector<1x128xf32>
    %1403 = arith.addf %1398, %1402 : vector<1x128xf32>
    %c2_1500 = arith.constant 2 : index
    %c3_1501 = arith.constant 3 : index
    %c0_1502 = arith.constant 0 : index
    %1404 = vector.load %arg15[%c2_1500, %c3_1501, %c0_1502] : memref<6x6x128xf32, #tpu.memory_space<vmem>>, vector<1x1x128xf32>
    %1405 = vector.shape_cast %1404 : vector<1x1x128xf32> to vector<1x128xf32>
    %c34_1503 = arith.constant 34 : index
    %c0_1504 = arith.constant 0 : index
    %1406 = vector.load %arg7[%c34_1503, %c0_1504] : memref<117x128xf32, #tpu.memory_space<vmem>>, vector<1x128xf32>
    %1407 = arith.mulf %1405, %1406 : vector<1x128xf32>
    %1408 = arith.addf %1403, %1407 : vector<1x128xf32>
    %c2_1505 = arith.constant 2 : index
    %c4_1506 = arith.constant 4 : index
    %c0_1507 = arith.constant 0 : index
    %1409 = vector.load %arg15[%c2_1505, %c4_1506, %c0_1507] : memref<6x6x128xf32, #tpu.memory_space<vmem>>, vector<1x1x128xf32>
    %1410 = vector.shape_cast %1409 : vector<1x1x128xf32> to vector<1x128xf32>
    %c35_1508 = arith.constant 35 : index
    %c0_1509 = arith.constant 0 : index
    %1411 = vector.load %arg7[%c35_1508, %c0_1509] : memref<117x128xf32, #tpu.memory_space<vmem>>, vector<1x128xf32>
    %1412 = arith.mulf %1410, %1411 : vector<1x128xf32>
    %1413 = arith.addf %1408, %1412 : vector<1x128xf32>
    %1414 = arith.addf %1413, %1300 : vector<1x128xf32>
    %cst_1510 = arith.constant 0.000000e+00 : f32
    %1415 = vector.broadcast %cst_1510 : f32 to vector<1x128xf32>
    %1416 = arith.maximumf %1414, %1415 : vector<1x128xf32>
    %c1_1511 = arith.constant 1 : index
    %c0_1512 = arith.constant 0 : index
    %1417 = vector.load %arg13[%c1_1511, %c0_1512] : memref<64x128xf32, #tpu.memory_space<vmem>>, vector<1x128xf32>
    tpu.vector_store %arg13[%c1_1511, %c0_1512], %1416 {strides = array<i32>} : memref<64x128xf32, #tpu.memory_space<vmem>>, vector<1x128xf32>,
    %cst_1513 = arith.constant 0.000000e+00 : f32
    %1418 = vector.broadcast %cst_1513 : f32 to vector<1x128xf32>
    %c2_1514 = arith.constant 2 : index
    %c0_1515 = arith.constant 0 : index
    %c0_1516 = arith.constant 0 : index
    %1419 = vector.load %arg15[%c2_1514, %c0_1515, %c0_1516] : memref<6x6x128xf32, #tpu.memory_space<vmem>>, vector<1x1x128xf32>
    %1420 = vector.shape_cast %1419 : vector<1x1x128xf32> to vector<1x128xf32>
    %c27_1517 = arith.constant 27 : index
    %c0_1518 = arith.constant 0 : index
    %1421 = vector.load %arg7[%c27_1517, %c0_1518] : memref<117x128xf32, #tpu.memory_space<vmem>>, vector<1x128xf32>
    %1422 = arith.mulf %1420, %1421 : vector<1x128xf32>
    %1423 = arith.addf %1418, %1422 : vector<1x128xf32>
    %c2_1519 = arith.constant 2 : index
    %c1_1520 = arith.constant 1 : index
    %c0_1521 = arith.constant 0 : index
    %1424 = vector.load %arg15[%c2_1519, %c1_1520, %c0_1521] : memref<6x6x128xf32, #tpu.memory_space<vmem>>, vector<1x1x128xf32>
    %1425 = vector.shape_cast %1424 : vector<1x1x128xf32> to vector<1x128xf32>
    %c28_1522 = arith.constant 28 : index
    %c0_1523 = arith.constant 0 : index
    %1426 = vector.load %arg7[%c28_1522, %c0_1523] : memref<117x128xf32, #tpu.memory_space<vmem>>, vector<1x128xf32>
    %1427 = arith.mulf %1425, %1426 : vector<1x128xf32>
    %1428 = arith.addf %1423, %1427 : vector<1x128xf32>
    %c2_1524 = arith.constant 2 : index
    %c2_1525 = arith.constant 2 : index
    %c0_1526 = arith.constant 0 : index
    %1429 = vector.load %arg15[%c2_1524, %c2_1525, %c0_1526] : memref<6x6x128xf32, #tpu.memory_space<vmem>>, vector<1x1x128xf32>
    %1430 = vector.shape_cast %1429 : vector<1x1x128xf32> to vector<1x128xf32>
    %c29_1527 = arith.constant 29 : index
    %c0_1528 = arith.constant 0 : index
    %1431 = vector.load %arg7[%c29_1527, %c0_1528] : memref<117x128xf32, #tpu.memory_space<vmem>>, vector<1x128xf32>
    %1432 = arith.mulf %1430, %1431 : vector<1x128xf32>
    %1433 = arith.addf %1428, %1432 : vector<1x128xf32>
    %c3_1529 = arith.constant 3 : index
    %c0_1530 = arith.constant 0 : index
    %c0_1531 = arith.constant 0 : index
    %1434 = vector.load %arg15[%c3_1529, %c0_1530, %c0_1531] : memref<6x6x128xf32, #tpu.memory_space<vmem>>, vector<1x1x128xf32>
    %1435 = vector.shape_cast %1434 : vector<1x1x128xf32> to vector<1x128xf32>
    %c30_1532 = arith.constant 30 : index
    %c0_1533 = arith.constant 0 : index
    %1436 = vector.load %arg7[%c30_1532, %c0_1533] : memref<117x128xf32, #tpu.memory_space<vmem>>, vector<1x128xf32>
    %1437 = arith.mulf %1435, %1436 : vector<1x128xf32>
    %1438 = arith.addf %1433, %1437 : vector<1x128xf32>
    %c3_1534 = arith.constant 3 : index
    %c1_1535 = arith.constant 1 : index
    %c0_1536 = arith.constant 0 : index
    %1439 = vector.load %arg15[%c3_1534, %c1_1535, %c0_1536] : memref<6x6x128xf32, #tpu.memory_space<vmem>>, vector<1x1x128xf32>
    %1440 = vector.shape_cast %1439 : vector<1x1x128xf32> to vector<1x128xf32>
    %c31_1537 = arith.constant 31 : index
    %c0_1538 = arith.constant 0 : index
    %1441 = vector.load %arg7[%c31_1537, %c0_1538] : memref<117x128xf32, #tpu.memory_space<vmem>>, vector<1x128xf32>
    %1442 = arith.mulf %1440, %1441 : vector<1x128xf32>
    %1443 = arith.addf %1438, %1442 : vector<1x128xf32>
    %c3_1539 = arith.constant 3 : index
    %c2_1540 = arith.constant 2 : index
    %c0_1541 = arith.constant 0 : index
    %1444 = vector.load %arg15[%c3_1539, %c2_1540, %c0_1541] : memref<6x6x128xf32, #tpu.memory_space<vmem>>, vector<1x1x128xf32>
    %1445 = vector.shape_cast %1444 : vector<1x1x128xf32> to vector<1x128xf32>
    %c32_1542 = arith.constant 32 : index
    %c0_1543 = arith.constant 0 : index
    %1446 = vector.load %arg7[%c32_1542, %c0_1543] : memref<117x128xf32, #tpu.memory_space<vmem>>, vector<1x128xf32>
    %1447 = arith.mulf %1445, %1446 : vector<1x128xf32>
    %1448 = arith.addf %1443, %1447 : vector<1x128xf32>
    %c4_1544 = arith.constant 4 : index
    %c0_1545 = arith.constant 0 : index
    %c0_1546 = arith.constant 0 : index
    %1449 = vector.load %arg15[%c4_1544, %c0_1545, %c0_1546] : memref<6x6x128xf32, #tpu.memory_space<vmem>>, vector<1x1x128xf32>
    %1450 = vector.shape_cast %1449 : vector<1x1x128xf32> to vector<1x128xf32>
    %c33_1547 = arith.constant 33 : index
    %c0_1548 = arith.constant 0 : index
    %1451 = vector.load %arg7[%c33_1547, %c0_1548] : memref<117x128xf32, #tpu.memory_space<vmem>>, vector<1x128xf32>
    %1452 = arith.mulf %1450, %1451 : vector<1x128xf32>
    %1453 = arith.addf %1448, %1452 : vector<1x128xf32>
    %c4_1549 = arith.constant 4 : index
    %c1_1550 = arith.constant 1 : index
    %c0_1551 = arith.constant 0 : index
    %1454 = vector.load %arg15[%c4_1549, %c1_1550, %c0_1551] : memref<6x6x128xf32, #tpu.memory_space<vmem>>, vector<1x1x128xf32>
    %1455 = vector.shape_cast %1454 : vector<1x1x128xf32> to vector<1x128xf32>
    %c34_1552 = arith.constant 34 : index
    %c0_1553 = arith.constant 0 : index
    %1456 = vector.load %arg7[%c34_1552, %c0_1553] : memref<117x128xf32, #tpu.memory_space<vmem>>, vector<1x128xf32>
    %1457 = arith.mulf %1455, %1456 : vector<1x128xf32>
    %1458 = arith.addf %1453, %1457 : vector<1x128xf32>
    %c4_1554 = arith.constant 4 : index
    %c2_1555 = arith.constant 2 : index
    %c0_1556 = arith.constant 0 : index
    %1459 = vector.load %arg15[%c4_1554, %c2_1555, %c0_1556] : memref<6x6x128xf32, #tpu.memory_space<vmem>>, vector<1x1x128xf32>
    %1460 = vector.shape_cast %1459 : vector<1x1x128xf32> to vector<1x128xf32>
    %c35_1557 = arith.constant 35 : index
    %c0_1558 = arith.constant 0 : index
    %1461 = vector.load %arg7[%c35_1557, %c0_1558] : memref<117x128xf32, #tpu.memory_space<vmem>>, vector<1x128xf32>
    %1462 = arith.mulf %1460, %1461 : vector<1x128xf32>
    %1463 = arith.addf %1458, %1462 : vector<1x128xf32>
    %1464 = arith.addf %1463, %1300 : vector<1x128xf32>
    %cst_1559 = arith.constant 0.000000e+00 : f32
    %1465 = vector.broadcast %cst_1559 : f32 to vector<1x128xf32>
    %1466 = arith.maximumf %1464, %1465 : vector<1x128xf32>
    %c2_1560 = arith.constant 2 : index
    %c0_1561 = arith.constant 0 : index
    %1467 = vector.load %arg13[%c2_1560, %c0_1561] : memref<64x128xf32, #tpu.memory_space<vmem>>, vector<1x128xf32>
    tpu.vector_store %arg13[%c2_1560, %c0_1561], %1466 {strides = array<i32>} : memref<64x128xf32, #tpu.memory_space<vmem>>, vector<1x128xf32>,
    %cst_1562 = arith.constant 0.000000e+00 : f32
    %1468 = vector.broadcast %cst_1562 : f32 to vector<1x128xf32>
    %c2_1563 = arith.constant 2 : index
    %c2_1564 = arith.constant 2 : index
    %c0_1565 = arith.constant 0 : index
    %1469 = vector.load %arg15[%c2_1563, %c2_1564, %c0_1565] : memref<6x6x128xf32, #tpu.memory_space<vmem>>, vector<1x1x128xf32>
    %1470 = vector.shape_cast %1469 : vector<1x1x128xf32> to vector<1x128xf32>
    %c27_1566 = arith.constant 27 : index
    %c0_1567 = arith.constant 0 : index
    %1471 = vector.load %arg7[%c27_1566, %c0_1567] : memref<117x128xf32, #tpu.memory_space<vmem>>, vector<1x128xf32>
    %1472 = arith.mulf %1470, %1471 : vector<1x128xf32>
    %1473 = arith.addf %1468, %1472 : vector<1x128xf32>
    %c2_1568 = arith.constant 2 : index
    %c3_1569 = arith.constant 3 : index
    %c0_1570 = arith.constant 0 : index
    %1474 = vector.load %arg15[%c2_1568, %c3_1569, %c0_1570] : memref<6x6x128xf32, #tpu.memory_space<vmem>>, vector<1x1x128xf32>
    %1475 = vector.shape_cast %1474 : vector<1x1x128xf32> to vector<1x128xf32>
    %c28_1571 = arith.constant 28 : index
    %c0_1572 = arith.constant 0 : index
    %1476 = vector.load %arg7[%c28_1571, %c0_1572] : memref<117x128xf32, #tpu.memory_space<vmem>>, vector<1x128xf32>
    %1477 = arith.mulf %1475, %1476 : vector<1x128xf32>
    %1478 = arith.addf %1473, %1477 : vector<1x128xf32>
    %c2_1573 = arith.constant 2 : index
    %c4_1574 = arith.constant 4 : index
    %c0_1575 = arith.constant 0 : index
    %1479 = vector.load %arg15[%c2_1573, %c4_1574, %c0_1575] : memref<6x6x128xf32, #tpu.memory_space<vmem>>, vector<1x1x128xf32>
    %1480 = vector.shape_cast %1479 : vector<1x1x128xf32> to vector<1x128xf32>
    %c29_1576 = arith.constant 29 : index
    %c0_1577 = arith.constant 0 : index
    %1481 = vector.load %arg7[%c29_1576, %c0_1577] : memref<117x128xf32, #tpu.memory_space<vmem>>, vector<1x128xf32>
    %1482 = arith.mulf %1480, %1481 : vector<1x128xf32>
    %1483 = arith.addf %1478, %1482 : vector<1x128xf32>
    %c3_1578 = arith.constant 3 : index
    %c2_1579 = arith.constant 2 : index
    %c0_1580 = arith.constant 0 : index
    %1484 = vector.load %arg15[%c3_1578, %c2_1579, %c0_1580] : memref<6x6x128xf32, #tpu.memory_space<vmem>>, vector<1x1x128xf32>
    %1485 = vector.shape_cast %1484 : vector<1x1x128xf32> to vector<1x128xf32>
    %c30_1581 = arith.constant 30 : index
    %c0_1582 = arith.constant 0 : index
    %1486 = vector.load %arg7[%c30_1581, %c0_1582] : memref<117x128xf32, #tpu.memory_space<vmem>>, vector<1x128xf32>
    %1487 = arith.mulf %1485, %1486 : vector<1x128xf32>
    %1488 = arith.addf %1483, %1487 : vector<1x128xf32>
    %c3_1583 = arith.constant 3 : index
    %c3_1584 = arith.constant 3 : index
    %c0_1585 = arith.constant 0 : index
    %1489 = vector.load %arg15[%c3_1583, %c3_1584, %c0_1585] : memref<6x6x128xf32, #tpu.memory_space<vmem>>, vector<1x1x128xf32>
    %1490 = vector.shape_cast %1489 : vector<1x1x128xf32> to vector<1x128xf32>
    %c31_1586 = arith.constant 31 : index
    %c0_1587 = arith.constant 0 : index
    %1491 = vector.load %arg7[%c31_1586, %c0_1587] : memref<117x128xf32, #tpu.memory_space<vmem>>, vector<1x128xf32>
    %1492 = arith.mulf %1490, %1491 : vector<1x128xf32>
    %1493 = arith.addf %1488, %1492 : vector<1x128xf32>
    %c3_1588 = arith.constant 3 : index
    %c4_1589 = arith.constant 4 : index
    %c0_1590 = arith.constant 0 : index
    %1494 = vector.load %arg15[%c3_1588, %c4_1589, %c0_1590] : memref<6x6x128xf32, #tpu.memory_space<vmem>>, vector<1x1x128xf32>
    %1495 = vector.shape_cast %1494 : vector<1x1x128xf32> to vector<1x128xf32>
    %c32_1591 = arith.constant 32 : index
    %c0_1592 = arith.constant 0 : index
    %1496 = vector.load %arg7[%c32_1591, %c0_1592] : memref<117x128xf32, #tpu.memory_space<vmem>>, vector<1x128xf32>
    %1497 = arith.mulf %1495, %1496 : vector<1x128xf32>
    %1498 = arith.addf %1493, %1497 : vector<1x128xf32>
    %c4_1593 = arith.constant 4 : index
    %c2_1594 = arith.constant 2 : index
    %c0_1595 = arith.constant 0 : index
    %1499 = vector.load %arg15[%c4_1593, %c2_1594, %c0_1595] : memref<6x6x128xf32, #tpu.memory_space<vmem>>, vector<1x1x128xf32>
    %1500 = vector.shape_cast %1499 : vector<1x1x128xf32> to vector<1x128xf32>
    %c33_1596 = arith.constant 33 : index
    %c0_1597 = arith.constant 0 : index
    %1501 = vector.load %arg7[%c33_1596, %c0_1597] : memref<117x128xf32, #tpu.memory_space<vmem>>, vector<1x128xf32>
    %1502 = arith.mulf %1500, %1501 : vector<1x128xf32>
    %1503 = arith.addf %1498, %1502 : vector<1x128xf32>
    %c4_1598 = arith.constant 4 : index
    %c3_1599 = arith.constant 3 : index
    %c0_1600 = arith.constant 0 : index
    %1504 = vector.load %arg15[%c4_1598, %c3_1599, %c0_1600] : memref<6x6x128xf32, #tpu.memory_space<vmem>>, vector<1x1x128xf32>
    %1505 = vector.shape_cast %1504 : vector<1x1x128xf32> to vector<1x128xf32>
    %c34_1601 = arith.constant 34 : index
    %c0_1602 = arith.constant 0 : index
    %1506 = vector.load %arg7[%c34_1601, %c0_1602] : memref<117x128xf32, #tpu.memory_space<vmem>>, vector<1x128xf32>
    %1507 = arith.mulf %1505, %1506 : vector<1x128xf32>
    %1508 = arith.addf %1503, %1507 : vector<1x128xf32>
    %c4_1603 = arith.constant 4 : index
    %c4_1604 = arith.constant 4 : index
    %c0_1605 = arith.constant 0 : index
    %1509 = vector.load %arg15[%c4_1603, %c4_1604, %c0_1605] : memref<6x6x128xf32, #tpu.memory_space<vmem>>, vector<1x1x128xf32>
    %1510 = vector.shape_cast %1509 : vector<1x1x128xf32> to vector<1x128xf32>
    %c35_1606 = arith.constant 35 : index
    %c0_1607 = arith.constant 0 : index
    %1511 = vector.load %arg7[%c35_1606, %c0_1607] : memref<117x128xf32, #tpu.memory_space<vmem>>, vector<1x128xf32>
    %1512 = arith.mulf %1510, %1511 : vector<1x128xf32>
    %1513 = arith.addf %1508, %1512 : vector<1x128xf32>
    %1514 = arith.addf %1513, %1300 : vector<1x128xf32>
    %cst_1608 = arith.constant 0.000000e+00 : f32
    %1515 = vector.broadcast %cst_1608 : f32 to vector<1x128xf32>
    %1516 = arith.maximumf %1514, %1515 : vector<1x128xf32>
    %c3_1609 = arith.constant 3 : index
    %c0_1610 = arith.constant 0 : index
    %1517 = vector.load %arg13[%c3_1609, %c0_1610] : memref<64x128xf32, #tpu.memory_space<vmem>>, vector<1x128xf32>
    tpu.vector_store %arg13[%c3_1609, %c0_1610], %1516 {strides = array<i32>} : memref<64x128xf32, #tpu.memory_space<vmem>>, vector<1x128xf32>,
    %c0_1611 = arith.constant 0 : index
    %c0_1612 = arith.constant 0 : index
    %1518 = vector.load %arg13[%c0_1611, %c0_1612] : memref<64x128xf32, #tpu.memory_space<vmem>>, vector<4x128xf32>
    %1519 = arith.truncf %1518 : vector<4x128xf32> to vector<4x128xbf16>
    %c3_1613 = arith.constant 3 : index
    %c0_1614 = arith.constant 0 : index
    %c0_1615 = arith.constant 0 : index
    %1520 = vector.load %arg9[%c3_1613, %c0_1614, %c0_1615] : memref<13x128x128xbf16, #tpu.memory_space<vmem>>, vector<1x128x128xbf16>
    %1521 = vector.shape_cast %1520 : vector<1x128x128xbf16> to vector<128x128xbf16>
    %cst_1616 = arith.constant dense<0.000000e+00> : vector<4x128xf32>
    %1522 = tpu.matmul %1519, %1521, %cst_1616 {dimension_numbers = #tpu.dot_dimension_numbers<[1], [0], [0], [1], [0, 0, 1, 1], [], []>} : vector<4x128xbf16>, vector<128x128xbf16>, vector<4x128xf32> -> vector<4x128xf32>
    %1523 = vector.broadcast %1301 : vector<1x128xf32> to vector<4x128xf32>
    %1524 = arith.addf %1522, %1523 : vector<4x128xf32>
    %cst_1617 = arith.constant 0.000000e+00 : f32
    %1525 = vector.broadcast %cst_1617 : f32 to vector<4x128xf32>
    %1526 = arith.maximumf %1524, %1525 : vector<4x128xf32>
    %c4_1618 = arith.constant 4 : index
    %c0_1619 = arith.constant 0 : index
    %1527 = vector.load %arg8[%c4_1618, %c0_1619] : memref<13x128xf32, #tpu.memory_space<vmem>>, vector<1x128xf32>
    %c4_1620 = arith.constant 4 : index
    %c0_1621 = arith.constant 0 : index
    %1528 = vector.load %arg10[%c4_1620, %c0_1621] : memref<13x128xf32, #tpu.memory_space<vmem>>, vector<1x128xf32>
    %1529 = vector.extract_strided_slice %1526 {offsets = [0, 0], sizes = [2, 128], strides = [1, 1]} : vector<4x128xf32> to vector<2x128xf32>
    %c1_1622 = arith.constant 1 : index
    %c1_1623 = arith.constant 1 : index
    %c0_1624 = arith.constant 0 : index
    %1530 = vector.load %arg16[%c1_1622, %c1_1623, %c0_1624] : memref<4x4x128xf32, #tpu.memory_space<vmem>>, vector<1x2x128xf32>
    %1531 = vector.shape_cast %1530 : vector<1x2x128xf32> to vector<2x128xf32>
    %1532 = vector.shape_cast %1529 : vector<2x128xf32> to vector<1x2x128xf32>
    tpu.vector_store %arg16[%c1_1622, %c1_1623, %c0_1624], %1532 {strides = array<i32>} : memref<4x4x128xf32, #tpu.memory_space<vmem>>, vector<1x2x128xf32>,
    %1533 = vector.extract_strided_slice %1526 {offsets = [2, 0], sizes = [2, 128], strides = [1, 1]} : vector<4x128xf32> to vector<2x128xf32>
    %c2_1625 = arith.constant 2 : index
    %c1_1626 = arith.constant 1 : index
    %c0_1627 = arith.constant 0 : index
    %1534 = vector.load %arg16[%c2_1625, %c1_1626, %c0_1627] : memref<4x4x128xf32, #tpu.memory_space<vmem>>, vector<1x2x128xf32>
    %1535 = vector.shape_cast %1534 : vector<1x2x128xf32> to vector<2x128xf32>
    %1536 = vector.shape_cast %1533 : vector<2x128xf32> to vector<1x2x128xf32>
    tpu.vector_store %arg16[%c2_1625, %c1_1626, %c0_1627], %1536 {strides = array<i32>} : memref<4x4x128xf32, #tpu.memory_space<vmem>>, vector<1x2x128xf32>,
    %cst_1628 = arith.constant 0.000000e+00 : f32
    %1537 = vector.broadcast %cst_1628 : f32 to vector<2x2x128xf32>
    %c0_1629 = arith.constant 0 : index
    %c0_1630 = arith.constant 0 : index
    %c0_1631 = arith.constant 0 : index
    %1538 = vector.load %arg16[%c0_1629, %c0_1630, %c0_1631] : memref<4x4x128xf32, #tpu.memory_space<vmem>>, vector<2x2x128xf32>
    %c36 = arith.constant 36 : index
    %c0_1632 = arith.constant 0 : index
    %1539 = vector.load %arg7[%c36, %c0_1632] : memref<117x128xf32, #tpu.memory_space<vmem>>, vector<1x128xf32>
    %1540 = vector.shape_cast %1539 : vector<1x128xf32> to vector<1x1x128xf32>
    %1541 = vector.broadcast %1540 : vector<1x1x128xf32> to vector<2x2x128xf32>
    %1542 = arith.mulf %1538, %1541 : vector<2x2x128xf32>
    %1543 = arith.addf %1537, %1542 : vector<2x2x128xf32>
    %c0_1633 = arith.constant 0 : index
    %c1_1634 = arith.constant 1 : index
    %c0_1635 = arith.constant 0 : index
    %1544 = vector.load %arg16[%c0_1633, %c1_1634, %c0_1635] : memref<4x4x128xf32, #tpu.memory_space<vmem>>, vector<2x2x128xf32>
    %c37 = arith.constant 37 : index
    %c0_1636 = arith.constant 0 : index
    %1545 = vector.load %arg7[%c37, %c0_1636] : memref<117x128xf32, #tpu.memory_space<vmem>>, vector<1x128xf32>
    %1546 = vector.shape_cast %1545 : vector<1x128xf32> to vector<1x1x128xf32>
    %1547 = vector.broadcast %1546 : vector<1x1x128xf32> to vector<2x2x128xf32>
    %1548 = arith.mulf %1544, %1547 : vector<2x2x128xf32>
    %1549 = arith.addf %1543, %1548 : vector<2x2x128xf32>
    %c0_1637 = arith.constant 0 : index
    %c2_1638 = arith.constant 2 : index
    %c0_1639 = arith.constant 0 : index
    %1550 = vector.load %arg16[%c0_1637, %c2_1638, %c0_1639] : memref<4x4x128xf32, #tpu.memory_space<vmem>>, vector<2x2x128xf32>
    %c38 = arith.constant 38 : index
    %c0_1640 = arith.constant 0 : index
    %1551 = vector.load %arg7[%c38, %c0_1640] : memref<117x128xf32, #tpu.memory_space<vmem>>, vector<1x128xf32>
    %1552 = vector.shape_cast %1551 : vector<1x128xf32> to vector<1x1x128xf32>
    %1553 = vector.broadcast %1552 : vector<1x1x128xf32> to vector<2x2x128xf32>
    %1554 = arith.mulf %1550, %1553 : vector<2x2x128xf32>
    %1555 = arith.addf %1549, %1554 : vector<2x2x128xf32>
    %c1_1641 = arith.constant 1 : index
    %c0_1642 = arith.constant 0 : index
    %c0_1643 = arith.constant 0 : index
    %1556 = vector.load %arg16[%c1_1641, %c0_1642, %c0_1643] : memref<4x4x128xf32, #tpu.memory_space<vmem>>, vector<2x2x128xf32>
    %c39 = arith.constant 39 : index
    %c0_1644 = arith.constant 0 : index
    %1557 = vector.load %arg7[%c39, %c0_1644] : memref<117x128xf32, #tpu.memory_space<vmem>>, vector<1x128xf32>
    %1558 = vector.shape_cast %1557 : vector<1x128xf32> to vector<1x1x128xf32>
    %1559 = vector.broadcast %1558 : vector<1x1x128xf32> to vector<2x2x128xf32>
    %1560 = arith.mulf %1556, %1559 : vector<2x2x128xf32>
    %1561 = arith.addf %1555, %1560 : vector<2x2x128xf32>
    %c1_1645 = arith.constant 1 : index
    %c1_1646 = arith.constant 1 : index
    %c0_1647 = arith.constant 0 : index
    %1562 = vector.load %arg16[%c1_1645, %c1_1646, %c0_1647] : memref<4x4x128xf32, #tpu.memory_space<vmem>>, vector<2x2x128xf32>
    %c40_1648 = arith.constant 40 : index
    %c0_1649 = arith.constant 0 : index
    %1563 = vector.load %arg7[%c40_1648, %c0_1649] : memref<117x128xf32, #tpu.memory_space<vmem>>, vector<1x128xf32>
    %1564 = vector.shape_cast %1563 : vector<1x128xf32> to vector<1x1x128xf32>
    %1565 = vector.broadcast %1564 : vector<1x1x128xf32> to vector<2x2x128xf32>
    %1566 = arith.mulf %1562, %1565 : vector<2x2x128xf32>
    %1567 = arith.addf %1561, %1566 : vector<2x2x128xf32>
    %c1_1650 = arith.constant 1 : index
    %c2_1651 = arith.constant 2 : index
    %c0_1652 = arith.constant 0 : index
    %1568 = vector.load %arg16[%c1_1650, %c2_1651, %c0_1652] : memref<4x4x128xf32, #tpu.memory_space<vmem>>, vector<2x2x128xf32>
    %c41 = arith.constant 41 : index
    %c0_1653 = arith.constant 0 : index
    %1569 = vector.load %arg7[%c41, %c0_1653] : memref<117x128xf32, #tpu.memory_space<vmem>>, vector<1x128xf32>
    %1570 = vector.shape_cast %1569 : vector<1x128xf32> to vector<1x1x128xf32>
    %1571 = vector.broadcast %1570 : vector<1x1x128xf32> to vector<2x2x128xf32>
    %1572 = arith.mulf %1568, %1571 : vector<2x2x128xf32>
    %1573 = arith.addf %1567, %1572 : vector<2x2x128xf32>
    %c2_1654 = arith.constant 2 : index
    %c0_1655 = arith.constant 0 : index
    %c0_1656 = arith.constant 0 : index
    %1574 = vector.load %arg16[%c2_1654, %c0_1655, %c0_1656] : memref<4x4x128xf32, #tpu.memory_space<vmem>>, vector<2x2x128xf32>
    %c42 = arith.constant 42 : index
    %c0_1657 = arith.constant 0 : index
    %1575 = vector.load %arg7[%c42, %c0_1657] : memref<117x128xf32, #tpu.memory_space<vmem>>, vector<1x128xf32>
    %1576 = vector.shape_cast %1575 : vector<1x128xf32> to vector<1x1x128xf32>
    %1577 = vector.broadcast %1576 : vector<1x1x128xf32> to vector<2x2x128xf32>
    %1578 = arith.mulf %1574, %1577 : vector<2x2x128xf32>
    %1579 = arith.addf %1573, %1578 : vector<2x2x128xf32>
    %c2_1658 = arith.constant 2 : index
    %c1_1659 = arith.constant 1 : index
    %c0_1660 = arith.constant 0 : index
    %1580 = vector.load %arg16[%c2_1658, %c1_1659, %c0_1660] : memref<4x4x128xf32, #tpu.memory_space<vmem>>, vector<2x2x128xf32>
    %c43 = arith.constant 43 : index
    %c0_1661 = arith.constant 0 : index
    %1581 = vector.load %arg7[%c43, %c0_1661] : memref<117x128xf32, #tpu.memory_space<vmem>>, vector<1x128xf32>
    %1582 = vector.shape_cast %1581 : vector<1x128xf32> to vector<1x1x128xf32>
    %1583 = vector.broadcast %1582 : vector<1x1x128xf32> to vector<2x2x128xf32>
    %1584 = arith.mulf %1580, %1583 : vector<2x2x128xf32>
    %1585 = arith.addf %1579, %1584 : vector<2x2x128xf32>
    %c2_1662 = arith.constant 2 : index
    %c2_1663 = arith.constant 2 : index
    %c0_1664 = arith.constant 0 : index
    %1586 = vector.load %arg16[%c2_1662, %c2_1663, %c0_1664] : memref<4x4x128xf32, #tpu.memory_space<vmem>>, vector<2x2x128xf32>
    %c44 = arith.constant 44 : index
    %c0_1665 = arith.constant 0 : index
    %1587 = vector.load %arg7[%c44, %c0_1665] : memref<117x128xf32, #tpu.memory_space<vmem>>, vector<1x128xf32>
    %1588 = vector.shape_cast %1587 : vector<1x128xf32> to vector<1x1x128xf32>
    %1589 = vector.broadcast %1588 : vector<1x1x128xf32> to vector<2x2x128xf32>
    %1590 = arith.mulf %1586, %1589 : vector<2x2x128xf32>
    %1591 = arith.addf %1585, %1590 : vector<2x2x128xf32>
    %1592 = vector.shape_cast %1527 : vector<1x128xf32> to vector<1x1x128xf32>
    %1593 = vector.broadcast %1592 : vector<1x1x128xf32> to vector<2x2x128xf32>
    %1594 = arith.addf %1591, %1593 : vector<2x2x128xf32>
    %cst_1666 = arith.constant 0.000000e+00 : f32
    %1595 = vector.broadcast %cst_1666 : f32 to vector<2x2x128xf32>
    %1596 = arith.maximumf %1594, %1595 : vector<2x2x128xf32>
    %1597 = vector.extract_strided_slice %1596 {offsets = [0, 0, 0], sizes = [1, 2, 128], strides = [1, 1, 1]} : vector<2x2x128xf32> to vector<1x2x128xf32>
    %1598 = vector.shape_cast %1597 : vector<1x2x128xf32> to vector<2x128xf32>
    %c0_1667 = arith.constant 0 : index
    %c0_1668 = arith.constant 0 : index
    %1599 = vector.load %arg13[%c0_1667, %c0_1668] : memref<64x128xf32, #tpu.memory_space<vmem>>, vector<2x128xf32>
    tpu.vector_store %arg13[%c0_1667, %c0_1668], %1598 {strides = array<i32>} : memref<64x128xf32, #tpu.memory_space<vmem>>, vector<2x128xf32>,
    %1600 = vector.extract_strided_slice %1596 {offsets = [1, 0, 0], sizes = [1, 2, 128], strides = [1, 1, 1]} : vector<2x2x128xf32> to vector<1x2x128xf32>
    %1601 = vector.shape_cast %1600 : vector<1x2x128xf32> to vector<2x128xf32>
    %c2_1669 = arith.constant 2 : index
    %c0_1670 = arith.constant 0 : index
    %1602 = vector.load %arg13[%c2_1669, %c0_1670] : memref<64x128xf32, #tpu.memory_space<vmem>>, vector<2x128xf32>
    tpu.vector_store %arg13[%c2_1669, %c0_1670], %1601 {strides = array<i32>} : memref<64x128xf32, #tpu.memory_space<vmem>>, vector<2x128xf32>,
    %c0_1671 = arith.constant 0 : index
    %c0_1672 = arith.constant 0 : index
    %1603 = vector.load %arg13[%c0_1671, %c0_1672] : memref<64x128xf32, #tpu.memory_space<vmem>>, vector<4x128xf32>
    %1604 = arith.truncf %1603 : vector<4x128xf32> to vector<4x128xbf16>
    %c4_1673 = arith.constant 4 : index
    %c0_1674 = arith.constant 0 : index
    %c0_1675 = arith.constant 0 : index
    %1605 = vector.load %arg9[%c4_1673, %c0_1674, %c0_1675] : memref<13x128x128xbf16, #tpu.memory_space<vmem>>, vector<1x128x128xbf16>
    %1606 = vector.shape_cast %1605 : vector<1x128x128xbf16> to vector<128x128xbf16>
    %cst_1676 = arith.constant dense<0.000000e+00> : vector<4x128xf32>
    %1607 = tpu.matmul %1604, %1606, %cst_1676 {dimension_numbers = #tpu.dot_dimension_numbers<[1], [0], [0], [1], [0, 0, 1, 1], [], []>} : vector<4x128xbf16>, vector<128x128xbf16>, vector<4x128xf32> -> vector<4x128xf32>
    %1608 = vector.broadcast %1528 : vector<1x128xf32> to vector<4x128xf32>
    %1609 = arith.addf %1607, %1608 : vector<4x128xf32>
    %cst_1677 = arith.constant 0.000000e+00 : f32
    %1610 = vector.broadcast %cst_1677 : f32 to vector<4x128xf32>
    %1611 = arith.maximumf %1609, %1610 : vector<4x128xf32>
    %c5_1678 = arith.constant 5 : index
    %c0_1679 = arith.constant 0 : index
    %1612 = vector.load %arg8[%c5_1678, %c0_1679] : memref<13x128xf32, #tpu.memory_space<vmem>>, vector<1x128xf32>
    %c5_1680 = arith.constant 5 : index
    %c0_1681 = arith.constant 0 : index
    %1613 = vector.load %arg10[%c5_1680, %c0_1681] : memref<13x128xf32, #tpu.memory_space<vmem>>, vector<1x128xf32>
    %1614 = vector.extract_strided_slice %1611 {offsets = [0, 0], sizes = [2, 128], strides = [1, 1]} : vector<4x128xf32> to vector<2x128xf32>
    %c1_1682 = arith.constant 1 : index
    %c1_1683 = arith.constant 1 : index
    %c0_1684 = arith.constant 0 : index
    %1615 = vector.load %arg16[%c1_1682, %c1_1683, %c0_1684] : memref<4x4x128xf32, #tpu.memory_space<vmem>>, vector<1x2x128xf32>
    %1616 = vector.shape_cast %1615 : vector<1x2x128xf32> to vector<2x128xf32>
    %1617 = vector.shape_cast %1614 : vector<2x128xf32> to vector<1x2x128xf32>
    tpu.vector_store %arg16[%c1_1682, %c1_1683, %c0_1684], %1617 {strides = array<i32>} : memref<4x4x128xf32, #tpu.memory_space<vmem>>, vector<1x2x128xf32>,
    %1618 = vector.extract_strided_slice %1611 {offsets = [2, 0], sizes = [2, 128], strides = [1, 1]} : vector<4x128xf32> to vector<2x128xf32>
    %c2_1685 = arith.constant 2 : index
    %c1_1686 = arith.constant 1 : index
    %c0_1687 = arith.constant 0 : index
    %1619 = vector.load %arg16[%c2_1685, %c1_1686, %c0_1687] : memref<4x4x128xf32, #tpu.memory_space<vmem>>, vector<1x2x128xf32>
    %1620 = vector.shape_cast %1619 : vector<1x2x128xf32> to vector<2x128xf32>
    %1621 = vector.shape_cast %1618 : vector<2x128xf32> to vector<1x2x128xf32>
    tpu.vector_store %arg16[%c2_1685, %c1_1686, %c0_1687], %1621 {strides = array<i32>} : memref<4x4x128xf32, #tpu.memory_space<vmem>>, vector<1x2x128xf32>,
    %cst_1688 = arith.constant 0.000000e+00 : f32
    %1622 = vector.broadcast %cst_1688 : f32 to vector<1x128xf32>
    %c0_1689 = arith.constant 0 : index
    %c0_1690 = arith.constant 0 : index
    %c0_1691 = arith.constant 0 : index
    %1623 = vector.load %arg16[%c0_1689, %c0_1690, %c0_1691] : memref<4x4x128xf32, #tpu.memory_space<vmem>>, vector<1x1x128xf32>
    %1624 = vector.shape_cast %1623 : vector<1x1x128xf32> to vector<1x128xf32>
    %c45 = arith.constant 45 : index
    %c0_1692 = arith.constant 0 : index
    %1625 = vector.load %arg7[%c45, %c0_1692] : memref<117x128xf32, #tpu.memory_space<vmem>>, vector<1x128xf32>
    %1626 = arith.mulf %1624, %1625 : vector<1x128xf32>
    %1627 = arith.addf %1622, %1626 : vector<1x128xf32>
    %c0_1693 = arith.constant 0 : index
    %c1_1694 = arith.constant 1 : index
    %c0_1695 = arith.constant 0 : index
    %1628 = vector.load %arg16[%c0_1693, %c1_1694, %c0_1695] : memref<4x4x128xf32, #tpu.memory_space<vmem>>, vector<1x1x128xf32>
    %1629 = vector.shape_cast %1628 : vector<1x1x128xf32> to vector<1x128xf32>
    %c46 = arith.constant 46 : index
    %c0_1696 = arith.constant 0 : index
    %1630 = vector.load %arg7[%c46, %c0_1696] : memref<117x128xf32, #tpu.memory_space<vmem>>, vector<1x128xf32>
    %1631 = arith.mulf %1629, %1630 : vector<1x128xf32>
    %1632 = arith.addf %1627, %1631 : vector<1x128xf32>
    %c0_1697 = arith.constant 0 : index
    %c2_1698 = arith.constant 2 : index
    %c0_1699 = arith.constant 0 : index
    %1633 = vector.load %arg16[%c0_1697, %c2_1698, %c0_1699] : memref<4x4x128xf32, #tpu.memory_space<vmem>>, vector<1x1x128xf32>
    %1634 = vector.shape_cast %1633 : vector<1x1x128xf32> to vector<1x128xf32>
    %c47 = arith.constant 47 : index
    %c0_1700 = arith.constant 0 : index
    %1635 = vector.load %arg7[%c47, %c0_1700] : memref<117x128xf32, #tpu.memory_space<vmem>>, vector<1x128xf32>
    %1636 = arith.mulf %1634, %1635 : vector<1x128xf32>
    %1637 = arith.addf %1632, %1636 : vector<1x128xf32>
    %c1_1701 = arith.constant 1 : index
    %c0_1702 = arith.constant 0 : index
    %c0_1703 = arith.constant 0 : index
    %1638 = vector.load %arg16[%c1_1701, %c0_1702, %c0_1703] : memref<4x4x128xf32, #tpu.memory_space<vmem>>, vector<1x1x128xf32>
    %1639 = vector.shape_cast %1638 : vector<1x1x128xf32> to vector<1x128xf32>
    %c48_1704 = arith.constant 48 : index
    %c0_1705 = arith.constant 0 : index
    %1640 = vector.load %arg7[%c48_1704, %c0_1705] : memref<117x128xf32, #tpu.memory_space<vmem>>, vector<1x128xf32>
    %1641 = arith.mulf %1639, %1640 : vector<1x128xf32>
    %1642 = arith.addf %1637, %1641 : vector<1x128xf32>
    %c1_1706 = arith.constant 1 : index
    %c1_1707 = arith.constant 1 : index
    %c0_1708 = arith.constant 0 : index
    %1643 = vector.load %arg16[%c1_1706, %c1_1707, %c0_1708] : memref<4x4x128xf32, #tpu.memory_space<vmem>>, vector<1x1x128xf32>
    %1644 = vector.shape_cast %1643 : vector<1x1x128xf32> to vector<1x128xf32>
    %c49 = arith.constant 49 : index
    %c0_1709 = arith.constant 0 : index
    %1645 = vector.load %arg7[%c49, %c0_1709] : memref<117x128xf32, #tpu.memory_space<vmem>>, vector<1x128xf32>
    %1646 = arith.mulf %1644, %1645 : vector<1x128xf32>
    %1647 = arith.addf %1642, %1646 : vector<1x128xf32>
    %c1_1710 = arith.constant 1 : index
    %c2_1711 = arith.constant 2 : index
    %c0_1712 = arith.constant 0 : index
    %1648 = vector.load %arg16[%c1_1710, %c2_1711, %c0_1712] : memref<4x4x128xf32, #tpu.memory_space<vmem>>, vector<1x1x128xf32>
    %1649 = vector.shape_cast %1648 : vector<1x1x128xf32> to vector<1x128xf32>
    %c50 = arith.constant 50 : index
    %c0_1713 = arith.constant 0 : index
    %1650 = vector.load %arg7[%c50, %c0_1713] : memref<117x128xf32, #tpu.memory_space<vmem>>, vector<1x128xf32>
    %1651 = arith.mulf %1649, %1650 : vector<1x128xf32>
    %1652 = arith.addf %1647, %1651 : vector<1x128xf32>
    %c2_1714 = arith.constant 2 : index
    %c0_1715 = arith.constant 0 : index
    %c0_1716 = arith.constant 0 : index
    %1653 = vector.load %arg16[%c2_1714, %c0_1715, %c0_1716] : memref<4x4x128xf32, #tpu.memory_space<vmem>>, vector<1x1x128xf32>
    %1654 = vector.shape_cast %1653 : vector<1x1x128xf32> to vector<1x128xf32>
    %c51 = arith.constant 51 : index
    %c0_1717 = arith.constant 0 : index
    %1655 = vector.load %arg7[%c51, %c0_1717] : memref<117x128xf32, #tpu.memory_space<vmem>>, vector<1x128xf32>
    %1656 = arith.mulf %1654, %1655 : vector<1x128xf32>
    %1657 = arith.addf %1652, %1656 : vector<1x128xf32>
    %c2_1718 = arith.constant 2 : index
    %c1_1719 = arith.constant 1 : index
    %c0_1720 = arith.constant 0 : index
    %1658 = vector.load %arg16[%c2_1718, %c1_1719, %c0_1720] : memref<4x4x128xf32, #tpu.memory_space<vmem>>, vector<1x1x128xf32>
    %1659 = vector.shape_cast %1658 : vector<1x1x128xf32> to vector<1x128xf32>
    %c52 = arith.constant 52 : index
    %c0_1721 = arith.constant 0 : index
    %1660 = vector.load %arg7[%c52, %c0_1721] : memref<117x128xf32, #tpu.memory_space<vmem>>, vector<1x128xf32>
    %1661 = arith.mulf %1659, %1660 : vector<1x128xf32>
    %1662 = arith.addf %1657, %1661 : vector<1x128xf32>
    %c2_1722 = arith.constant 2 : index
    %c2_1723 = arith.constant 2 : index
    %c0_1724 = arith.constant 0 : index
    %1663 = vector.load %arg16[%c2_1722, %c2_1723, %c0_1724] : memref<4x4x128xf32, #tpu.memory_space<vmem>>, vector<1x1x128xf32>
    %1664 = vector.shape_cast %1663 : vector<1x1x128xf32> to vector<1x128xf32>
    %c53 = arith.constant 53 : index
    %c0_1725 = arith.constant 0 : index
    %1665 = vector.load %arg7[%c53, %c0_1725] : memref<117x128xf32, #tpu.memory_space<vmem>>, vector<1x128xf32>
    %1666 = arith.mulf %1664, %1665 : vector<1x128xf32>
    %1667 = arith.addf %1662, %1666 : vector<1x128xf32>
    %1668 = arith.addf %1667, %1612 : vector<1x128xf32>
    %cst_1726 = arith.constant 0.000000e+00 : f32
    %1669 = vector.broadcast %cst_1726 : f32 to vector<1x128xf32>
    %1670 = arith.maximumf %1668, %1669 : vector<1x128xf32>
    %c0_1727 = arith.constant 0 : index
    %c0_1728 = arith.constant 0 : index
    %1671 = vector.load %arg13[%c0_1727, %c0_1728] : memref<64x128xf32, #tpu.memory_space<vmem>>, vector<1x128xf32>
    tpu.vector_store %arg13[%c0_1727, %c0_1728], %1670 {strides = array<i32>} : memref<64x128xf32, #tpu.memory_space<vmem>>, vector<1x128xf32>,
    %c0_1729 = arith.constant 0 : index
    %c0_1730 = arith.constant 0 : index
    %1672 = vector.load %arg13[%c0_1729, %c0_1730] : memref<64x128xf32, #tpu.memory_space<vmem>>, vector<1x128xf32>
    %1673 = arith.truncf %1672 : vector<1x128xf32> to vector<1x128xbf16>
    %c5_1731 = arith.constant 5 : index
    %c0_1732 = arith.constant 0 : index
    %c0_1733 = arith.constant 0 : index
    %1674 = vector.load %arg9[%c5_1731, %c0_1732, %c0_1733] : memref<13x128x128xbf16, #tpu.memory_space<vmem>>, vector<1x128x128xbf16>
    %1675 = vector.shape_cast %1674 : vector<1x128x128xbf16> to vector<128x128xbf16>
    %cst_1734 = arith.constant dense<0.000000e+00> : vector<1x128xf32>
    %1676 = tpu.matmul %1673, %1675, %cst_1734 {dimension_numbers = #tpu.dot_dimension_numbers<[1], [0], [0], [1], [0, 0, 1, 1], [], []>} : vector<1x128xbf16>, vector<128x128xbf16>, vector<1x128xf32> -> vector<1x128xf32>
    %1677 = arith.addf %1676, %1613 : vector<1x128xf32>
    %cst_1735 = arith.constant 0.000000e+00 : f32
    %1678 = vector.broadcast %cst_1735 : f32 to vector<1x128xf32>
    %1679 = arith.maximumf %1677, %1678 : vector<1x128xf32>
    %c6_1736 = arith.constant 6 : index
    %c0_1737 = arith.constant 0 : index
    %1680 = vector.load %arg8[%c6_1736, %c0_1737] : memref<13x128xf32, #tpu.memory_space<vmem>>, vector<1x128xf32>
    %c6_1738 = arith.constant 6 : index
    %c0_1739 = arith.constant 0 : index
    %1681 = vector.load %arg10[%c6_1738, %c0_1739] : memref<13x128xf32, #tpu.memory_space<vmem>>, vector<1x128xf32>
    %c58 = arith.constant 58 : index
    %c0_1740 = arith.constant 0 : index
    %1682 = vector.load %arg7[%c58, %c0_1740] : memref<117x128xf32, #tpu.memory_space<vmem>>, vector<1x128xf32>
    %1683 = arith.mulf %1679, %1682 : vector<1x128xf32>
    %1684 = arith.addf %1683, %1680 : vector<1x128xf32>
    %cst_1741 = arith.constant 0.000000e+00 : f32
    %1685 = vector.broadcast %cst_1741 : f32 to vector<1x128xf32>
    %1686 = arith.maximumf %1684, %1685 : vector<1x128xf32>
    %1687 = arith.truncf %1686 : vector<1x128xf32> to vector<1x128xbf16>
    %c6_1742 = arith.constant 6 : index
    %c0_1743 = arith.constant 0 : index
    %c0_1744 = arith.constant 0 : index
    %1688 = vector.load %arg9[%c6_1742, %c0_1743, %c0_1744] : memref<13x128x128xbf16, #tpu.memory_space<vmem>>, vector<1x128x128xbf16>
    %1689 = vector.shape_cast %1688 : vector<1x128x128xbf16> to vector<128x128xbf16>
    %cst_1745 = arith.constant dense<0.000000e+00> : vector<1x128xf32>
    %1690 = tpu.matmul %1687, %1689, %cst_1745 {dimension_numbers = #tpu.dot_dimension_numbers<[1], [0], [0], [1], [0, 0, 1, 1], [], []>} : vector<1x128xbf16>, vector<128x128xbf16>, vector<1x128xf32> -> vector<1x128xf32>
    %1691 = arith.addf %1690, %1681 : vector<1x128xf32>
    %cst_1746 = arith.constant 0.000000e+00 : f32
    %1692 = vector.broadcast %cst_1746 : f32 to vector<1x128xf32>
    %1693 = arith.maximumf %1691, %1692 : vector<1x128xf32>
    %c7_1747 = arith.constant 7 : index
    %c0_1748 = arith.constant 0 : index
    %1694 = vector.load %arg8[%c7_1747, %c0_1748] : memref<13x128xf32, #tpu.memory_space<vmem>>, vector<1x128xf32>
    %c7_1749 = arith.constant 7 : index
    %c0_1750 = arith.constant 0 : index
    %1695 = vector.load %arg10[%c7_1749, %c0_1750] : memref<13x128xf32, #tpu.memory_space<vmem>>, vector<1x128xf32>
    %c67 = arith.constant 67 : index
    %c0_1751 = arith.constant 0 : index
    %1696 = vector.load %arg7[%c67, %c0_1751] : memref<117x128xf32, #tpu.memory_space<vmem>>, vector<1x128xf32>
    %1697 = arith.mulf %1693, %1696 : vector<1x128xf32>
    %1698 = arith.addf %1697, %1694 : vector<1x128xf32>
    %cst_1752 = arith.constant 0.000000e+00 : f32
    %1699 = vector.broadcast %cst_1752 : f32 to vector<1x128xf32>
    %1700 = arith.maximumf %1698, %1699 : vector<1x128xf32>
    %1701 = arith.truncf %1700 : vector<1x128xf32> to vector<1x128xbf16>
    %c7_1753 = arith.constant 7 : index
    %c0_1754 = arith.constant 0 : index
    %c0_1755 = arith.constant 0 : index
    %1702 = vector.load %arg9[%c7_1753, %c0_1754, %c0_1755] : memref<13x128x128xbf16, #tpu.memory_space<vmem>>, vector<1x128x128xbf16>
    %1703 = vector.shape_cast %1702 : vector<1x128x128xbf16> to vector<128x128xbf16>
    %cst_1756 = arith.constant dense<0.000000e+00> : vector<1x128xf32>
    %1704 = tpu.matmul %1701, %1703, %cst_1756 {dimension_numbers = #tpu.dot_dimension_numbers<[1], [0], [0], [1], [0, 0, 1, 1], [], []>} : vector<1x128xbf16>, vector<128x128xbf16>, vector<1x128xf32> -> vector<1x128xf32>
    %1705 = arith.addf %1704, %1695 : vector<1x128xf32>
    %cst_1757 = arith.constant 0.000000e+00 : f32
    %1706 = vector.broadcast %cst_1757 : f32 to vector<1x128xf32>
    %1707 = arith.maximumf %1705, %1706 : vector<1x128xf32>
    %c8_1758 = arith.constant 8 : index
    %c0_1759 = arith.constant 0 : index
    %1708 = vector.load %arg8[%c8_1758, %c0_1759] : memref<13x128xf32, #tpu.memory_space<vmem>>, vector<1x128xf32>
    %c8_1760 = arith.constant 8 : index
    %c0_1761 = arith.constant 0 : index
    %1709 = vector.load %arg10[%c8_1760, %c0_1761] : memref<13x128xf32, #tpu.memory_space<vmem>>, vector<1x128xf32>
    %c76 = arith.constant 76 : index
    %c0_1762 = arith.constant 0 : index
    %1710 = vector.load %arg7[%c76, %c0_1762] : memref<117x128xf32, #tpu.memory_space<vmem>>, vector<1x128xf32>
    %1711 = arith.mulf %1707, %1710 : vector<1x128xf32>
    %1712 = arith.addf %1711, %1708 : vector<1x128xf32>
    %cst_1763 = arith.constant 0.000000e+00 : f32
    %1713 = vector.broadcast %cst_1763 : f32 to vector<1x128xf32>
    %1714 = arith.maximumf %1712, %1713 : vector<1x128xf32>
    %1715 = arith.truncf %1714 : vector<1x128xf32> to vector<1x128xbf16>
    %c8_1764 = arith.constant 8 : index
    %c0_1765 = arith.constant 0 : index
    %c0_1766 = arith.constant 0 : index
    %1716 = vector.load %arg9[%c8_1764, %c0_1765, %c0_1766] : memref<13x128x128xbf16, #tpu.memory_space<vmem>>, vector<1x128x128xbf16>
    %1717 = vector.shape_cast %1716 : vector<1x128x128xbf16> to vector<128x128xbf16>
    %cst_1767 = arith.constant dense<0.000000e+00> : vector<1x128xf32>
    %1718 = tpu.matmul %1715, %1717, %cst_1767 {dimension_numbers = #tpu.dot_dimension_numbers<[1], [0], [0], [1], [0, 0, 1, 1], [], []>} : vector<1x128xbf16>, vector<128x128xbf16>, vector<1x128xf32> -> vector<1x128xf32>
    %1719 = arith.addf %1718, %1709 : vector<1x128xf32>
    %cst_1768 = arith.constant 0.000000e+00 : f32
    %1720 = vector.broadcast %cst_1768 : f32 to vector<1x128xf32>
    %1721 = arith.maximumf %1719, %1720 : vector<1x128xf32>
    %c9_1769 = arith.constant 9 : index
    %c0_1770 = arith.constant 0 : index
    %1722 = vector.load %arg8[%c9_1769, %c0_1770] : memref<13x128xf32, #tpu.memory_space<vmem>>, vector<1x128xf32>
    %c9_1771 = arith.constant 9 : index
    %c0_1772 = arith.constant 0 : index
    %1723 = vector.load %arg10[%c9_1771, %c0_1772] : memref<13x128xf32, #tpu.memory_space<vmem>>, vector<1x128xf32>
    %c85 = arith.constant 85 : index
    %c0_1773 = arith.constant 0 : index
    %1724 = vector.load %arg7[%c85, %c0_1773] : memref<117x128xf32, #tpu.memory_space<vmem>>, vector<1x128xf32>
    %1725 = arith.mulf %1721, %1724 : vector<1x128xf32>
    %1726 = arith.addf %1725, %1722 : vector<1x128xf32>
    %cst_1774 = arith.constant 0.000000e+00 : f32
    %1727 = vector.broadcast %cst_1774 : f32 to vector<1x128xf32>
    %1728 = arith.maximumf %1726, %1727 : vector<1x128xf32>
    %1729 = arith.truncf %1728 : vector<1x128xf32> to vector<1x128xbf16>
    %c9_1775 = arith.constant 9 : index
    %c0_1776 = arith.constant 0 : index
    %c0_1777 = arith.constant 0 : index
    %1730 = vector.load %arg9[%c9_1775, %c0_1776, %c0_1777] : memref<13x128x128xbf16, #tpu.memory_space<vmem>>, vector<1x128x128xbf16>
    %1731 = vector.shape_cast %1730 : vector<1x128x128xbf16> to vector<128x128xbf16>
    %cst_1778 = arith.constant dense<0.000000e+00> : vector<1x128xf32>
    %1732 = tpu.matmul %1729, %1731, %cst_1778 {dimension_numbers = #tpu.dot_dimension_numbers<[1], [0], [0], [1], [0, 0, 1, 1], [], []>} : vector<1x128xbf16>, vector<128x128xbf16>, vector<1x128xf32> -> vector<1x128xf32>
    %1733 = arith.addf %1732, %1723 : vector<1x128xf32>
    %cst_1779 = arith.constant 0.000000e+00 : f32
    %1734 = vector.broadcast %cst_1779 : f32 to vector<1x128xf32>
    %1735 = arith.maximumf %1733, %1734 : vector<1x128xf32>
    %c10_1780 = arith.constant 10 : index
    %c0_1781 = arith.constant 0 : index
    %1736 = vector.load %arg8[%c10_1780, %c0_1781] : memref<13x128xf32, #tpu.memory_space<vmem>>, vector<1x128xf32>
    %c10_1782 = arith.constant 10 : index
    %c0_1783 = arith.constant 0 : index
    %1737 = vector.load %arg10[%c10_1782, %c0_1783] : memref<13x128xf32, #tpu.memory_space<vmem>>, vector<1x128xf32>
    %c94 = arith.constant 94 : index
    %c0_1784 = arith.constant 0 : index
    %1738 = vector.load %arg7[%c94, %c0_1784] : memref<117x128xf32, #tpu.memory_space<vmem>>, vector<1x128xf32>
    %1739 = arith.mulf %1735, %1738 : vector<1x128xf32>
    %1740 = arith.addf %1739, %1736 : vector<1x128xf32>
    %cst_1785 = arith.constant 0.000000e+00 : f32
    %1741 = vector.broadcast %cst_1785 : f32 to vector<1x128xf32>
    %1742 = arith.maximumf %1740, %1741 : vector<1x128xf32>
    %1743 = arith.truncf %1742 : vector<1x128xf32> to vector<1x128xbf16>
    %c10_1786 = arith.constant 10 : index
    %c0_1787 = arith.constant 0 : index
    %c0_1788 = arith.constant 0 : index
    %1744 = vector.load %arg9[%c10_1786, %c0_1787, %c0_1788] : memref<13x128x128xbf16, #tpu.memory_space<vmem>>, vector<1x128x128xbf16>
    %1745 = vector.shape_cast %1744 : vector<1x128x128xbf16> to vector<128x128xbf16>
    %cst_1789 = arith.constant dense<0.000000e+00> : vector<1x128xf32>
    %1746 = tpu.matmul %1743, %1745, %cst_1789 {dimension_numbers = #tpu.dot_dimension_numbers<[1], [0], [0], [1], [0, 0, 1, 1], [], []>} : vector<1x128xbf16>, vector<128x128xbf16>, vector<1x128xf32> -> vector<1x128xf32>
    %1747 = arith.addf %1746, %1737 : vector<1x128xf32>
    %cst_1790 = arith.constant 0.000000e+00 : f32
    %1748 = vector.broadcast %cst_1790 : f32 to vector<1x128xf32>
    %1749 = arith.maximumf %1747, %1748 : vector<1x128xf32>
    %c11_1791 = arith.constant 11 : index
    %c0_1792 = arith.constant 0 : index
    %1750 = vector.load %arg8[%c11_1791, %c0_1792] : memref<13x128xf32, #tpu.memory_space<vmem>>, vector<1x128xf32>
    %c11_1793 = arith.constant 11 : index
    %c0_1794 = arith.constant 0 : index
    %1751 = vector.load %arg10[%c11_1793, %c0_1794] : memref<13x128xf32, #tpu.memory_space<vmem>>, vector<1x128xf32>
    %c103 = arith.constant 103 : index
    %c0_1795 = arith.constant 0 : index
    %1752 = vector.load %arg7[%c103, %c0_1795] : memref<117x128xf32, #tpu.memory_space<vmem>>, vector<1x128xf32>
    %1753 = arith.mulf %1749, %1752 : vector<1x128xf32>
    %1754 = arith.addf %1753, %1750 : vector<1x128xf32>
    %cst_1796 = arith.constant 0.000000e+00 : f32
    %1755 = vector.broadcast %cst_1796 : f32 to vector<1x128xf32>
    %1756 = arith.maximumf %1754, %1755 : vector<1x128xf32>
    %1757 = arith.truncf %1756 : vector<1x128xf32> to vector<1x128xbf16>
    %c11_1797 = arith.constant 11 : index
    %c0_1798 = arith.constant 0 : index
    %c0_1799 = arith.constant 0 : index
    %1758 = vector.load %arg9[%c11_1797, %c0_1798, %c0_1799] : memref<13x128x128xbf16, #tpu.memory_space<vmem>>, vector<1x128x128xbf16>
    %1759 = vector.shape_cast %1758 : vector<1x128x128xbf16> to vector<128x128xbf16>
    %cst_1800 = arith.constant dense<0.000000e+00> : vector<1x128xf32>
    %1760 = tpu.matmul %1757, %1759, %cst_1800 {dimension_numbers = #tpu.dot_dimension_numbers<[1], [0], [0], [1], [0, 0, 1, 1], [], []>} : vector<1x128xbf16>, vector<128x128xbf16>, vector<1x128xf32> -> vector<1x128xf32>
    %1761 = arith.addf %1760, %1751 : vector<1x128xf32>
    %cst_1801 = arith.constant 0.000000e+00 : f32
    %1762 = vector.broadcast %cst_1801 : f32 to vector<1x128xf32>
    %1763 = arith.maximumf %1761, %1762 : vector<1x128xf32>
    %c12_1802 = arith.constant 12 : index
    %c0_1803 = arith.constant 0 : index
    %1764 = vector.load %arg8[%c12_1802, %c0_1803] : memref<13x128xf32, #tpu.memory_space<vmem>>, vector<1x128xf32>
    %c12_1804 = arith.constant 12 : index
    %c0_1805 = arith.constant 0 : index
    %1765 = vector.load %arg10[%c12_1804, %c0_1805] : memref<13x128xf32, #tpu.memory_space<vmem>>, vector<1x128xf32>
    %c112 = arith.constant 112 : index
    %c0_1806 = arith.constant 0 : index
    %1766 = vector.load %arg7[%c112, %c0_1806] : memref<117x128xf32, #tpu.memory_space<vmem>>, vector<1x128xf32>
    %1767 = arith.mulf %1763, %1766 : vector<1x128xf32>
    %1768 = arith.addf %1767, %1764 : vector<1x128xf32>
    %cst_1807 = arith.constant 0.000000e+00 : f32
    %1769 = vector.broadcast %cst_1807 : f32 to vector<1x128xf32>
    %1770 = arith.maximumf %1768, %1769 : vector<1x128xf32>
    %1771 = arith.truncf %1770 : vector<1x128xf32> to vector<1x128xbf16>
    %c12_1808 = arith.constant 12 : index
    %c0_1809 = arith.constant 0 : index
    %c0_1810 = arith.constant 0 : index
    %1772 = vector.load %arg9[%c12_1808, %c0_1809, %c0_1810] : memref<13x128x128xbf16, #tpu.memory_space<vmem>>, vector<1x128x128xbf16>
    %1773 = vector.shape_cast %1772 : vector<1x128x128xbf16> to vector<128x128xbf16>
    %cst_1811 = arith.constant dense<0.000000e+00> : vector<1x128xf32>
    %1774 = tpu.matmul %1771, %1773, %cst_1811 {dimension_numbers = #tpu.dot_dimension_numbers<[1], [0], [0], [1], [0, 0, 1, 1], [], []>} : vector<1x128xbf16>, vector<128x128xbf16>, vector<1x128xf32> -> vector<1x128xf32>
    %1775 = arith.addf %1774, %1765 : vector<1x128xf32>
    %cst_1812 = arith.constant 0.000000e+00 : f32
    %1776 = vector.broadcast %cst_1812 : f32 to vector<1x128xf32>
    %1777 = arith.maximumf %1775, %1776 : vector<1x128xf32>
    %c0_1813 = arith.constant 0 : index
    %c0_1814 = arith.constant 0 : index
    %c0_1815 = arith.constant 0 : index
    %1778 = vector.load %arg11[%c0_1813, %c0_1814, %c0_1815] : memref<1x1x128xf32, #tpu.memory_space<vmem>>, vector<1x1x128xf32>
    %1779 = vector.shape_cast %1778 : vector<1x1x128xf32> to vector<1x128xf32>
    %1780 = vector.shape_cast %1777 : vector<1x128xf32> to vector<1x1x128xf32>
    tpu.vector_store %arg11[%c0_1813, %c0_1814, %c0_1815], %1780 {strides = array<i32>} : memref<1x1x128xf32, #tpu.memory_space<vmem>>, vector<1x1x128xf32>,
    return
  }
  func.func @transform_0(%arg0: i32) -> (i32, i32, i32, i32) {
    %c0_i32 = arith.constant 0 : i32
    %c0_i32_0 = arith.constant 0 : i32
    %c0_i32_1 = arith.constant 0 : i32
    %c0_i32_2 = arith.constant 0 : i32
    return %arg0, %c0_i32, %c0_i32_0, %c0_i32_1 : i32, i32, i32, i32
  }
  func.func @transform_1(%arg0: i32) -> (i32, i32, i32, i32) {
    %c0_i32 = arith.constant 0 : i32
    %c0_i32_0 = arith.constant 0 : i32
    %c0_i32_1 = arith.constant 0 : i32
    %c0_i32_2 = arith.constant 0 : i32
    return %arg0, %c0_i32, %c0_i32_0, %c0_i32_1 : i32, i32, i32, i32
  }
  func.func @transform_2(%arg0: i32) -> (i32, i32, i32, i32) {
    %c0_i32 = arith.constant 0 : i32
    %c0_i32_0 = arith.constant 0 : i32
    %c0_i32_1 = arith.constant 0 : i32
    %c0_i32_2 = arith.constant 0 : i32
    return %arg0, %c0_i32, %c0_i32_0, %c0_i32_1 : i32, i32, i32, i32
  }
  func.func @transform_3(%arg0: i32) -> (i32, i32, i32, i32) {
    %c0_i32 = arith.constant 0 : i32
    %c0_i32_0 = arith.constant 0 : i32
    %c0_i32_1 = arith.constant 0 : i32
    %c0_i32_2 = arith.constant 0 : i32
    return %arg0, %c0_i32, %c0_i32_0, %c0_i32_1 : i32, i32, i32, i32
  }
  func.func @transform_4(%arg0: i32) -> (i32, i32) {
    %c0_i32 = arith.constant 0 : i32
    %c0_i32_0 = arith.constant 0 : i32
    %c0_i32_1 = arith.constant 0 : i32
    return %c0_i32, %c0_i32_0 : i32, i32
  }
  func.func @transform_5(%arg0: i32) -> (i32, i32) {
    %c0_i32 = arith.constant 0 : i32
    %c0_i32_0 = arith.constant 0 : i32
    %c0_i32_1 = arith.constant 0 : i32
    return %c0_i32, %c0_i32_0 : i32, i32
  }
  func.func @transform_6(%arg0: i32) -> (i32, i32) {
    %c0_i32 = arith.constant 0 : i32
    %c0_i32_0 = arith.constant 0 : i32
    %c0_i32_1 = arith.constant 0 : i32
    return %c0_i32, %c0_i32_0 : i32, i32
  }
  func.func @transform_7(%arg0: i32) -> (i32, i32) {
    %c0_i32 = arith.constant 0 : i32
    %c0_i32_0 = arith.constant 0 : i32
    %c0_i32_1 = arith.constant 0 : i32
    return %c0_i32, %c0_i32_0 : i32, i32
  }
  func.func @transform_8(%arg0: i32) -> (i32, i32, i32) {
    %c0_i32 = arith.constant 0 : i32
    %c0_i32_0 = arith.constant 0 : i32
    %c0_i32_1 = arith.constant 0 : i32
    %c0_i32_2 = arith.constant 0 : i32
    return %c0_i32, %c0_i32_0, %c0_i32_1 : i32, i32, i32
  }
  func.func @transform_9(%arg0: i32) -> (i32, i32) {
    %c0_i32 = arith.constant 0 : i32
    %c0_i32_0 = arith.constant 0 : i32
    %c0_i32_1 = arith.constant 0 : i32
    return %c0_i32, %c0_i32_0 : i32, i32
  }
  func.func @transform_10(%arg0: i32) -> (i32, i32, i32) {
    %c0_i32 = arith.constant 0 : i32
    %c0_i32_0 = arith.constant 0 : i32
    %c0_i32_1 = arith.constant 0 : i32
    return %arg0, %c0_i32, %c0_i32_0 : i32, i32, i32
  }
}

</mosaic_0001>

<llo_original>
// kernel: _lambda_.1
$region0: #{_lambda_.1}
  #allocation0 [shape = 'u32[]', space=smem, size = 0x4, offset = 0x4, fixed_abs, tag = 'smem constant byte address 0x4 - core index']
  #allocation1 [shape = 'u32[144,128]{1,0:T(1,128)}', space=vmem, size = 0x12000, scoped, tag = 'internal scratch']
  #allocation2 [shape = 'f32[64,1152]{1,0:T(8,128)}', space=vmem, size = 0x48000, scoped, tag = 'scratch operand']
  #allocation3 [shape = 'f32[64,128]{1,0:T(8,128)}', space=vmem, size = 0x8000, scoped, tag = 'scratch operand']
  #allocation4 [shape = 'f32[10,10,128]{2,1,0:T(8,128)}', space=vmem, size = 0x14000, scoped, tag = 'scratch operand']
  #allocation5 [shape = 'f32[6,6,128]{2,1,0:T(8,128)}', space=vmem, size = 0x6000, scoped, tag = 'scratch operand']
  #allocation6 [shape = 'f32[4,4,128]{2,1,0:T(4,128)}', space=vmem, size = 0x2000, scoped, tag = 'scratch operand']
  %s0 = inlined_call_operand.vmem [shape: f32[2,9,9,128], index: 0, kind: input, shape index: {}]
  %s1 = inlined_call_operand.vmem [shape: f32[2,9,9,128], index: 1, kind: input, shape index: {}]
  %s2 = inlined_call_operand.vmem [shape: f32[2,9,9,128], index: 2, kind: input, shape index: {}]
  %s3 = inlined_call_operand.vmem [shape: f32[2,9,9,128], index: 3, kind: input, shape index: {}]
  %s4 = inlined_call_operand.vmem [shape: bf16[1152,128], index: 4, kind: input, shape index: {}]
  %s5 = inlined_call_operand.vmem [shape: f32[1,128], index: 5, kind: input, shape index: {}]
  %s6 = inlined_call_operand.vmem [shape: f32[117,128], index: 6, kind: input, shape index: {}]
  %s7 = inlined_call_operand.vmem [shape: f32[13,128], index: 7, kind: input, shape index: {}, may-alias: {7,9}]
  %s8 = inlined_call_operand.vmem [shape: bf16[13,128,128], index: 8, kind: input, shape index: {}]
  %s9 = inlined_call_operand.vmem [shape: f32[13,128], index: 9, kind: input, shape index: {}, may-alias: {7,9}]
  %s10 = inlined_call_operand.hbm [shape: f32[2,1,128], index: 10, kind: output, shape index: {}]
  %s11 = sld [smem:[#allocation0]]
  $region73: #{_lambda_.1} parent=0
    _
  %s13 = ssub.s32 1, %s11
  %s14 = scalar_select 0, %s13, %s11
  $region1: #{_lambda_.1} parent=0
    #allocation7 [shape = 'u8[1024]{0}', space=vmem, size = 0x400, scoped, tag = 'output window, operand 0']
    #allocation8 [shape = 's32[2]{0}', space=sflag, size = 0x8, scoped, tag = 'scoped memory for _lambda_.1']
    %15 = vsyncpa [#allocation8], 0
    %s16 = scalar_lea.sflag [#allocation8], 1
    %17 = vsyncpa %s16, 0
    loop: start=0, step=1, limit=4
    $region2: #{_lambda_.1} parent=1 // loop_pre_header
      _
    $region3: #{_lambda_.1} parent=1 // loop_header
      %s19 = sphi 0, %s23
      %p20 = scmp.ge.s32.totalorder %s19, 4
      %s29 = sphi 0, %s31
      %s32 = sphi 0, %s29
      %s33 = sphi 0, %s32
      %s49 = sphi 0, %s33
      %s55 = sphi 0, %s57
      %s58 = sphi 0, %s55
      %s59 = sphi 0, %s58
      %s75 = sphi 0, %s59
      %s81 = sphi 0, %s83
      %s84 = sphi 0, %s81
      %s85 = sphi 0, %s84
      %s101 = sphi 0, %s85
      %s107 = sphi 0, %s109
      %s110 = sphi 0, %s107
      %s111 = sphi 0, %s110
      %s127 = sphi 0, %s111
      %s131 = sphi 0, %s131
      %s133 = sphi 0, %s131
      %s134 = sphi 0, %s133
      %s148 = sphi 0, %s134
      %s152 = sphi 0, %s152
      %s154 = sphi 0, %s152
      %s155 = sphi 0, %s154
      %s169 = sphi 0, %s155
      %s173 = sphi 0, %s173
      %s175 = sphi 0, %s173
      %s176 = sphi 0, %s175
      %s190 = sphi 0, %s176
      %s194 = sphi 0, %s194
      %s196 = sphi 0, %s194
      %s197 = sphi 0, %s196
      %s211 = sphi 0, %s197
      %s215 = sphi 0, %s215
      %s217 = sphi 0, %s215
      %s218 = sphi 0, %s217
      %s232 = sphi 0, %s218
      %s236 = sphi 0, %s236
      %s238 = sphi 0, %s236
      %s239 = sphi 0, %s238
      %s253 = sphi 0, %s239
      %s259 = sphi 0, %s261
      %s262 = sphi 0, %s259
      %s263 = sphi 0, %s262
      %s279 = sphi 0, %s263
    $region4: #{_lambda_.1} parent=1 // loop_header_branch
      %22 = sbr.rel (%p20) target = $region8
    $region5: #{_lambda_.1} parent=1 // loop_body
      %s24 = ssub.s32 %s19, 1
      %s25 = ssub.s32 %s19, 2
      %s26 = sadd.s32 %s19, 1
      %s27 = ssub.s32 %s19, %s26
      %p28 = scmp.eq.s32.totalorder %s27, 0
      %s30 = sadd.s32 %s29, 1
      %s31 = scalar_select %p28, %s29, %s30
      %p34 = pneg %p28
      %p35 = scmp.eq.s32.totalorder %s19, 1
      %p36 = por %p34, %p35
      %p37 = scmp.ne.s32.totalorder %s29, %s32
      %p38 = scmp.eq.s32.totalorder %s19, 0
      %p39 = por %p37, %p38
      %p40 = scmp.ne.s32.totalorder %s29, %s32
      %p41 = scmp.eq.s32.totalorder %s24, 1
      %p42 = por %p40, %p41
      %p43 = scmp.ne.s32.totalorder %s32, %s33
      %p44 = scmp.eq.s32.totalorder %s24, 0
      %p45 = por %p43, %p44
      %p46 = scmp.ne.s32.totalorder %s32, %s33
      %p47 = scmp.eq.s32.totalorder %s25, 1
      %p48 = por %p46, %p47
      %p50 = scmp.ne.s32.totalorder %s33, %s49
      %p51 = scmp.eq.s32.totalorder %s25, 0
      %p52 = por %p50, %p51
      %s53 = ssub.s32 %s19, %s26
      %p54 = scmp.eq.s32.totalorder %s53, 0
      %s56 = sadd.s32 %s55, 1
      %s57 = scalar_select %p54, %s55, %s56
      %p60 = pneg %p54
      %p61 = scmp.eq.s32.totalorder %s19, 1
      %p62 = por %p60, %p61
      %p63 = scmp.ne.s32.totalorder %s55, %s58
      %p64 = scmp.eq.s32.totalorder %s19, 0
      %p65 = por %p63, %p64
      %p66 = scmp.ne.s32.totalorder %s55, %s58
      %p67 = scmp.eq.s32.totalorder %s24, 1
      %p68 = por %p66, %p67
      %p69 = scmp.ne.s32.totalorder %s58, %s59
      %p70 = scmp.eq.s32.totalorder %s24, 0
      %p71 = por %p69, %p70
      %p72 = scmp.ne.s32.totalorder %s58, %s59
      %p73 = scmp.eq.s32.totalorder %s25, 1
      %p74 = por %p72, %p73
      %p76 = scmp.ne.s32.totalorder %s59, %s75
      %p77 = scmp.eq.s32.totalorder %s25, 0
      %p78 = por %p76, %p77
      %s79 = ssub.s32 %s19, %s26
      %p80 = scmp.eq.s32.totalorder %s79, 0
      %s82 = sadd.s32 %s81, 1
      %s83 = scalar_select %p80, %s81, %s82
      %p86 = pneg %p80
      %p87 = scmp.eq.s32.totalorder %s19, 1
      %p88 = por %p86, %p87
      %p89 = scmp.ne.s32.totalorder %s81, %s84
      %p90 = scmp.eq.s32.totalorder %s19, 0
      %p91 = por %p89, %p90
      %p92 = scmp.ne.s32.totalorder %s81, %s84
      %p93 = scmp.eq.s32.totalorder %s24, 1
      %p94 = por %p92, %p93
      %p95 = scmp.ne.s32.totalorder %s84, %s85
      %p96 = scmp.eq.s32.totalorder %s24, 0
      %p97 = por %p95, %p96
      %p98 = scmp.ne.s32.totalorder %s84, %s85
      %p99 = scmp.eq.s32.totalorder %s25, 1
      %p100 = por %p98, %p99
      %p102 = scmp.ne.s32.totalorder %s85, %s101
      %p103 = scmp.eq.s32.totalorder %s25, 0
      %p104 = por %p102, %p103
      %s105 = ssub.s32 %s19, %s26
      %p106 = scmp.eq.s32.totalorder %s105, 0
      %s108 = sadd.s32 %s107, 1
      %s109 = scalar_select %p106, %s107, %s108
      %p112 = pneg %p106
      %p113 = scmp.eq.s32.totalorder %s19, 1
      %p114 = por %p112, %p113
      %p115 = scmp.ne.s32.totalorder %s107, %s110
      %p116 = scmp.eq.s32.totalorder %s19, 0
      %p117 = por %p115, %p116
      %p118 = scmp.ne.s32.totalorder %s107, %s110
      %p119 = scmp.eq.s32.totalorder %s24, 1
      %p120 = por %p118, %p119
      %p121 = scmp.ne.s32.totalorder %s110, %s111
      %p122 = scmp.eq.s32.totalorder %s24, 0
      %p123 = por %p121, %p122
      %p124 = scmp.ne.s32.totalorder %s110, %s111
      %p125 = scmp.eq.s32.totalorder %s25, 1
      %p126 = por %p124, %p125
      %p128 = scmp.ne.s32.totalorder %s111, %s127
      %p129 = scmp.eq.s32.totalorder %s25, 0
      %p130 = por %p128, %p129
      %s132 = sadd.s32 %s131, 1
      %p135 = scmp.eq.s32.totalorder %s19, 1
      %p136 = scmp.ne.s32.totalorder %s131, %s133
      %p137 = scmp.eq.s32.totalorder %s19, 0
      %p138 = por %p136, %p137
      %p139 = scmp.ne.s32.totalorder %s131, %s133
      %p140 = scmp.eq.s32.totalorder %s24, 1
      %p141 = por %p139, %p140
      %p142 = scmp.ne.s32.totalorder %s133, %s134
      %p143 = scmp.eq.s32.totalorder %s24, 0
      %p144 = por %p142, %p143
      %p145 = scmp.ne.s32.totalorder %s133, %s134
      %p146 = scmp.eq.s32.totalorder %s25, 1
      %p147 = por %p145, %p146
      %p149 = scmp.ne.s32.totalorder %s134, %s148
      %p150 = scmp.eq.s32.totalorder %s25, 0
      %p151 = por %p149, %p150
      %s153 = sadd.s32 %s152, 1
      %p156 = scmp.eq.s32.totalorder %s19, 1
      %p157 = scmp.ne.s32.totalorder %s152, %s154
      %p158 = scmp.eq.s32.totalorder %s19, 0
      %p159 = por %p157, %p158
      %p160 = scmp.ne.s32.totalorder %s152, %s154
      %p161 = scmp.eq.s32.totalorder %s24, 1
      %p162 = por %p160, %p161
      %p163 = scmp.ne.s32.totalorder %s154, %s155
      %p164 = scmp.eq.s32.totalorder %s24, 0
      %p165 = por %p163, %p164
      %p166 = scmp.ne.s32.totalorder %s154, %s155
      %p167 = scmp.eq.s32.totalorder %s25, 1
      %p168 = por %p166, %p167
      %p170 = scmp.ne.s32.totalorder %s155, %s169
      %p171 = scmp.eq.s32.totalorder %s25, 0
      %p172 = por %p170, %p171
      %s174 = sadd.s32 %s173, 1
      %p177 = scmp.eq.s32.totalorder %s19, 1
      %p178 = scmp.ne.s32.totalorder %s173, %s175
      %p179 = scmp.eq.s32.totalorder %s19, 0
      %p180 = por %p178, %p179
      %p181 = scmp.ne.s32.totalorder %s173, %s175
      %p182 = scmp.eq.s32.totalorder %s24, 1
      %p183 = por %p181, %p182
      %p184 = scmp.ne.s32.totalorder %s175, %s176
      %p185 = scmp.eq.s32.totalorder %s24, 0
      %p186 = por %p184, %p185
      %p187 = scmp.ne.s32.totalorder %s175, %s176
      %p188 = scmp.eq.s32.totalorder %s25, 1
      %p189 = por %p187, %p188
      %p191 = scmp.ne.s32.totalorder %s176, %s190
      %p192 = scmp.eq.s32.totalorder %s25, 0
      %p193 = por %p191, %p192
      %s195 = sadd.s32 %s194, 1
      %p198 = scmp.eq.s32.totalorder %s19, 1
      %p199 = scmp.ne.s32.totalorder %s194, %s196
      %p200 = scmp.eq.s32.totalorder %s19, 0
      %p201 = por %p199, %p200
      %p202 = scmp.ne.s32.totalorder %s194, %s196
      %p203 = scmp.eq.s32.totalorder %s24, 1
      %p204 = por %p202, %p203
      %p205 = scmp.ne.s32.totalorder %s196, %s197
      %p206 = scmp.eq.s32.totalorder %s24, 0
      %p207 = por %p205, %p206
      %p208 = scmp.ne.s32.totalorder %s196, %s197
      %p209 = scmp.eq.s32.totalorder %s25, 1
      %p210 = por %p208, %p209
      %p212 = scmp.ne.s32.totalorder %s197, %s211
      %p213 = scmp.eq.s32.totalorder %s25, 0
      %p214 = por %p212, %p213
      %s216 = sadd.s32 %s215, 1
      %p219 = scmp.eq.s32.totalorder %s19, 1
      %p220 = scmp.ne.s32.totalorder %s215, %s217
      %p221 = scmp.eq.s32.totalorder %s19, 0
      %p222 = por %p220, %p221
      %p223 = scmp.ne.s32.totalorder %s215, %s217
      %p224 = scmp.eq.s32.totalorder %s24, 1
      %p225 = por %p223, %p224
      %p226 = scmp.ne.s32.totalorder %s217, %s218
      %p227 = scmp.eq.s32.totalorder %s24, 0
      %p228 = por %p226, %p227
      %p229 = scmp.ne.s32.totalorder %s217, %s218
      %p230 = scmp.eq.s32.totalorder %s25, 1
      %p231 = por %p229, %p230
      %p233 = scmp.ne.s32.totalorder %s218, %s232
      %p234 = scmp.eq.s32.totalorder %s25, 0
      %p235 = por %p233, %p234
      %s237 = sadd.s32 %s236, 1
      %p240 = scmp.eq.s32.totalorder %s19, 1
      %p241 = scmp.ne.s32.totalorder %s236, %s238
      %p242 = scmp.eq.s32.totalorder %s19, 0
      %p243 = por %p241, %p242
      %p244 = scmp.ne.s32.totalorder %s236, %s238
      %p245 = scmp.eq.s32.totalorder %s24, 1
      %p246 = por %p244, %p245
      %p247 = scmp.ne.s32.totalorder %s238, %s239
      %p248 = scmp.eq.s32.totalorder %s24, 0
      %p249 = por %p247, %p248
      %p250 = scmp.ne.s32.totalorder %s238, %s239
      %p251 = scmp.eq.s32.totalorder %s25, 1
      %p252 = por %p250, %p251
      %p254 = scmp.ne.s32.totalorder %s239, %s253
      %p255 = scmp.eq.s32.totalorder %s25, 0
      %p256 = por %p254, %p255
      %s257 = ssub.s32 %s19, %s26
      %p258 = scmp.eq.s32.totalorder %s257, 0
      %s260 = sadd.s32 %s259, 1
      %s261 = scalar_select %p258, %s259, %s260
      %p264 = pneg %p258
      %p265 = scmp.eq.s32.totalorder %s19, 1
      %p266 = por %p264, %p265
      %p267 = scmp.ne.s32.totalorder %s259, %s262
      %p268 = scmp.eq.s32.totalorder %s19, 0
      %p269 = por %p267, %p268
      %p270 = scmp.ne.s32.totalorder %s259, %s262
      %p271 = scmp.eq.s32.totalorder %s24, 1
      %p272 = por %p270, %p271
      %p273 = scmp.ne.s32.totalorder %s262, %s263
      %p274 = scmp.eq.s32.totalorder %s24, 0
      %p275 = por %p273, %p274
      %p276 = scmp.ne.s32.totalorder %s262, %s263
      %p277 = scmp.eq.s32.totalorder %s25, 1
      %p278 = por %p276, %p277
      %p280 = scmp.ne.s32.totalorder %s263, %s279
      %p281 = scmp.eq.s32.totalorder %s25, 0
      %p282 = por %p280, %p281
      %p283 = scmp.le.s32.totalorder 1, %s19
      %p284 = scmp.lt.s32.totalorder %s19, 3
      %p285 = pnand %p283, %p284
      %p286 = pneg %p285
      // Predicated region
      $region9: #{_lambda_.1} parent=5 // pred_check
        _
      $region10: #{_lambda_.1} parent=5 // pred_check_branch
        %288 = sbr.rel (%p285) target = $region12
      $region11: #{_lambda_.1} parent=5 // pred_region
        %s289 = ssub.s32 %s19, 1
        // Predicated region
        $region13: #{_lambda_.1} parent=11 // pred_check
          %p290 = pneg %p144
        $region14: #{_lambda_.1} parent=11 // pred_check_branch
          %292 = sbr.rel (%p290) target = $region16
        $region15: #{_lambda_.1} parent=11 // pred_region
          _
        $region16: #{_lambda_.1} parent=11 // pred_fallthru
          _
        // Predicated region
        $region17: #{_lambda_.1} parent=11 // pred_check
          %p293 = pneg %p165
        $region18: #{_lambda_.1} parent=11 // pred_check_branch
          %295 = sbr.rel (%p293) target = $region20
        $region19: #{_lambda_.1} parent=11 // pred_region
          _
        $region20: #{_lambda_.1} parent=11 // pred_fallthru
          _
        // Predicated region
        $region21: #{_lambda_.1} parent=11 // pred_check
          %p296 = pneg %p186
        $region22: #{_lambda_.1} parent=11 // pred_check_branch
          %298 = sbr.rel (%p296) target = $region24
        $region23: #{_lambda_.1} parent=11 // pred_region
          _
        $region24: #{_lambda_.1} parent=11 // pred_fallthru
          _
        // Predicated region
        $region25: #{_lambda_.1} parent=11 // pred_check
          %p299 = pneg %p207
        $region26: #{_lambda_.1} parent=11 // pred_check_branch
          %301 = sbr.rel (%p299) target = $region28
        $region27: #{_lambda_.1} parent=11 // pred_region
          _
        $region28: #{_lambda_.1} parent=11 // pred_fallthru
          _
        // Predicated region
        $region29: #{_lambda_.1} parent=11 // pred_check
          %p302 = pneg %p228
        $region30: #{_lambda_.1} parent=11 // pred_check_branch
          %304 = sbr.rel (%p302) target = $region32
        $region31: #{_lambda_.1} parent=11 // pred_region
          _
        $region32: #{_lambda_.1} parent=11 // pred_fallthru
          _
        // Predicated region
        $region33: #{_lambda_.1} parent=11 // pred_check
          %p305 = pneg %p249
        $region34: #{_lambda_.1} parent=11 // pred_check_branch
          %307 = sbr.rel (%p305) target = $region36
        $region35: #{_lambda_.1} parent=11 // pred_region
          _
        $region36: #{_lambda_.1} parent=11 // pred_fallthru
          _
      $region12: #{_lambda_.1} parent=5 // pred_fallthru
        _
      %p308 = scmp.lt.s32.totalorder %s19, 2
      // Predicated region
      $region37: #{_lambda_.1} parent=5 // pred_check
        %p309 = pneg %p308
      $region38: #{_lambda_.1} parent=5 // pred_check_branch
        %311 = sbr.rel (%p309) target = $region40
      $region39: #{_lambda_.1} parent=5 // pred_region
        // Predicated region
        $region41: #{_lambda_.1} parent=39 // pred_check
          %p312 = pneg %p39
        $region42: #{_lambda_.1} parent=39 // pred_check_branch
          %314 = sbr.rel (%p312) target = $region44
        $region43: #{_lambda_.1} parent=39 // pred_region
          %p315 = scmp.lt.s32.totalorder %s19, 1
          %s316 = scalar_select %p315, %s19, 1
          %s317 = smul.addr %s316, 18
          %s318 = smul.addr %s317, 8
          %s319 = scalar_lea.vmem %s0, %s318
        $region44: #{_lambda_.1} parent=39 // pred_fallthru
          _
        // Predicated region
        $region45: #{_lambda_.1} parent=39 // pred_check
          %p320 = pneg %p65
        $region46: #{_lambda_.1} parent=39 // pred_check_branch
          %322 = sbr.rel (%p320) target = $region48
        $region47: #{_lambda_.1} parent=39 // pred_region
          %p323 = scmp.lt.s32.totalorder %s19, 1
          %s324 = scalar_select %p323, %s19, 1
          %s325 = smul.addr %s324, 18
          %s326 = smul.addr %s325, 8
          %s327 = scalar_lea.vmem %s1, %s326
        $region48: #{_lambda_.1} parent=39 // pred_fallthru
          _
        // Predicated region
        $region49: #{_lambda_.1} parent=39 // pred_check
          %p328 = pneg %p91
        $region50: #{_lambda_.1} parent=39 // pred_check_branch
          %330 = sbr.rel (%p328) target = $region52
        $region51: #{_lambda_.1} parent=39 // pred_region
          %p331 = scmp.lt.s32.totalorder %s19, 1
          %s332 = scalar_select %p331, %s19, 1
          %s333 = smul.addr %s332, 18
          %s334 = smul.addr %s333, 8
          %s335 = scalar_lea.vmem %s2, %s334
        $region52: #{_lambda_.1} parent=39 // pred_fallthru
          _
        // Predicated region
        $region53: #{_lambda_.1} parent=39 // pred_check
          %p336 = pneg %p117
        $region54: #{_lambda_.1} parent=39 // pred_check_branch
          %338 = sbr.rel (%p336) target = $region56
        $region55: #{_lambda_.1} parent=39 // pred_region
          %p339 = scmp.lt.s32.totalorder %s19, 1
          %s340 = scalar_select %p339, %s19, 1
          %s341 = smul.addr %s340, 18
          %s342 = smul.addr %s341, 8
          %s343 = scalar_lea.vmem %s3, %s342
        $region56: #{_lambda_.1} parent=39 // pred_fallthru
          _
      $region40: #{_lambda_.1} parent=5 // pred_fallthru
        _
      %p344 = scmp.le.s32.totalorder 1, %s19
      %p345 = scmp.lt.s32.totalorder %s19, 3
      %p346 = pnand %p344, %p345
      %p347 = pneg %p346
      // Predicated region
      $region57: #{_lambda_.1} parent=5 // pred_check
        _
      $region58: #{_lambda_.1} parent=5 // pred_check_branch
        %349 = sbr.rel (%p346) target = $region60
      $region59: #{_lambda_.1} parent=5 // pred_region
        %s350 = ssub.s32 %s19, 1
        %p351 = scmp.lt.s32.totalorder %s24, 1
        %s352 = scalar_select %p351, %s24, 1
        %s353 = smul.addr %s352, 18
        %s354 = smul.addr %s353, 8
        %s355 = scalar_lea.vmem %s0, %s354
        %p356 = pneg %p45
        %p357 = pneg %p42
        %p358 = scmp.lt.s32.totalorder %s24, 1
        %s359 = scalar_select %p358, %s24, 1
        %s360 = smul.addr %s359, 18
        %s361 = smul.addr %s360, 8
        %s362 = scalar_lea.vmem %s1, %s361
        %p363 = pneg %p71
        %p364 = pneg %p68
        %p365 = scmp.lt.s32.totalorder %s24, 1
        %s366 = scalar_select %p365, %s24, 1
        %s367 = smul.addr %s366, 18
        %s368 = smul.addr %s367, 8
        %s369 = scalar_lea.vmem %s2, %s368
        %p370 = pneg %p97
        %p371 = pneg %p94
        %p372 = scmp.lt.s32.totalorder %s24, 1
        %s373 = scalar_select %p372, %s24, 1
        %s374 = smul.addr %s373, 18
        %s375 = smul.addr %s374, 8
        %s376 = scalar_lea.vmem %s3, %s375
        %p377 = pneg %p123
        %p378 = pneg %p120
        %p379 = pneg %p144
        %p380 = pneg %p141
        %p381 = pneg %p165
        %p382 = pneg %p162
        %p383 = pneg %p186
        %p384 = pneg %p183
        %p385 = pneg %p207
        %p386 = pneg %p204
        %p387 = pneg %p228
        %p388 = pneg %p225
        %p389 = pneg %p249
        %p390 = pneg %p246
        %p391 = pneg %p275
        %p392 = pneg %p272
        %s393 = sand.u32 %s262, 1
        %s394 = scalar_lea.sflag [#allocation8], %s393
        %s395 = sand.u32 %s262, 1
        %s396 = scalar_lea.vmem [#allocation7], %s395
        %p397 = scmp.lt.s32.totalorder %s24, 1
        %s398 = scalar_select %p397, %s24, 1
        %s399 = smul.addr %s398, 18
        %s400 = smul.addr %s399, 8
        %s401 = scalar_lea.vmem %s0, %s400
        %p402 = scmp.lt.s32.totalorder %s24, 1
        %s403 = scalar_select %p402, %s24, 1
        %s404 = smul.addr %s403, 18
        %s405 = smul.addr %s404, 8
        %s406 = scalar_lea.vmem %s1, %s405
        %p407 = scmp.lt.s32.totalorder %s24, 1
        %s408 = scalar_select %p407, %s24, 1
        %s409 = smul.addr %s408, 18
        %s410 = smul.addr %s409, 8
        %s411 = scalar_lea.vmem %s2, %s410
        %p412 = scmp.lt.s32.totalorder %s24, 1
        %s413 = scalar_select %p412, %s24, 1
        %s414 = smul.addr %s413, 18
        %s415 = smul.addr %s414, 8
        %s416 = scalar_lea.vmem %s3, %s415
        %418 = vst [vmem:[#allocation4] sm:$0xff] 0.0
        %419 = vst [vmem:[#allocation4 + $0x8] sm:$0x3] 0.0
        %420 = vst [vmem:[#allocation4 + $0x10] sm:$0xff] 0.0
        %421 = vst [vmem:[#allocation4 + $0x18] sm:$0x3] 0.0
        %422 = vst [vmem:[#allocation4 + $0x20] sm:$0xff] 0.0
        %423 = vst [vmem:[#allocation4 + $0x28] sm:$0x3] 0.0
        %424 = vst [vmem:[#allocation4 + $0x30] sm:$0xff] 0.0
        %425 = vst [vmem:[#allocation4 + $0x38] sm:$0x3] 0.0
        %426 = vst [vmem:[#allocation4 + $0x40] sm:$0xff] 0.0
        %427 = vst [vmem:[#allocation4 + $0x48] sm:$0x3] 0.0
        %428 = vst [vmem:[#allocation4 + $0x50] sm:$0xff] 0.0
        %429 = vst [vmem:[#allocation4 + $0x58] sm:$0x3] 0.0
        %430 = vst [vmem:[#allocation4 + $0x60] sm:$0xff] 0.0
        %431 = vst [vmem:[#allocation4 + $0x68] sm:$0x3] 0.0
        %432 = vst [vmem:[#allocation4 + $0x70] sm:$0xff] 0.0
        %433 = vst [vmem:[#allocation4 + $0x78] sm:$0x3] 0.0
        %434 = vst [vmem:[#allocation4 + $0x80] sm:$0xff] 0.0
        %435 = vst [vmem:[#allocation4 + $0x88] sm:$0x3] 0.0
        %436 = vst [vmem:[#allocation4 + $0x90] sm:$0xff] 0.0
        %437 = vst [vmem:[#allocation4 + $0x98] sm:$0x3] 0.0
        %438 = vst [vmem:[#allocation5] sm:$0x3f] 0.0
        %439 = vst [vmem:[#allocation5 + $0x8] sm:$0x3f] 0.0
        %440 = vst [vmem:[#allocation5 + $0x10] sm:$0x3f] 0.0
        %441 = vst [vmem:[#allocation5 + $0x18] sm:$0x3f] 0.0
        %442 = vst [vmem:[#allocation5 + $0x20] sm:$0x3f] 0.0
        %443 = vst [vmem:[#allocation5 + $0x28] sm:$0x3f] 0.0
        %444 = vst [vmem:[#allocation6] sm:$0xf] 0.0
        %445 = vst [vmem:[#allocation6 + $0x4] sm:$0xf] 0.0
        %446 = vst [vmem:[#allocation6 + $0x8] sm:$0xf] 0.0
        %447 = vst [vmem:[#allocation6 + $0xc] sm:$0xf] 0.0
        %v448 = vld [vmem:[%s401] sm:$0xff]
        %449 = vst [vmem:[#allocation2] sm:$0xff] %v448
        %s450 = scalar_lea.vmem %s401, 16
        %v451 = vld [vmem:[%s450] sm:$0xff]
        %452 = vst [vmem:[#allocation2 + $0x48] sm:$0xff] %v451
        %s453 = scalar_lea.vmem %s401, 32
        %v454 = vld [vmem:[%s453] sm:$0xff]
        %455 = vst [vmem:[#allocation2 + $0x90] sm:$0xff] %v454
        %s456 = scalar_lea.vmem %s401, 48
        %v457 = vld [vmem:[%s456] sm:$0xff]
        %458 = vst [vmem:[#allocation2 + $0xd8] sm:$0xff] %v457
        %s459 = scalar_lea.vmem %s401, 64
        %v460 = vld [vmem:[%s459] sm:$0xff]
        %461 = vst [vmem:[#allocation2 + $0x120] sm:$0xff] %v460
        %s462 = scalar_lea.vmem %s401, 80
        %v463 = vld [vmem:[%s462] sm:$0xff]
        %464 = vst [vmem:[#allocation2 + $0x168] sm:$0xff] %v463
        %s465 = scalar_lea.vmem %s401, 96
        %v466 = vld [vmem:[%s465] sm:$0xff]
        %467 = vst [vmem:[#allocation2 + $0x1b0] sm:$0xff] %v466
        %s468 = scalar_lea.vmem %s401, 112
        %v469 = vld [vmem:[%s468] sm:$0xff]
        %470 = vst [vmem:[#allocation2 + $0x1f8] sm:$0xff] %v469
        %v471 = vld [vmem:[%s406] sm:$0xff]
        %472 = vst [vmem:[#allocation2 + $0x8] sm:$0xff] %v471
        %s473 = scalar_lea.vmem %s406, 16
        %v474 = vld [vmem:[%s473] sm:$0xff]
        %475 = vst [vmem:[#allocation2 + $0x50] sm:$0xff] %v474
        %s476 = scalar_lea.vmem %s406, 32
        %v477 = vld [vmem:[%s476] sm:$0xff]
        %478 = vst [vmem:[#allocation2 + $0x98] sm:$0xff] %v477
        %s479 = scalar_lea.vmem %s406, 48
        %v480 = vld [vmem:[%s479] sm:$0xff]
        %481 = vst [vmem:[#allocation2 + $0xe0] sm:$0xff] %v480
        %s482 = scalar_lea.vmem %s406, 64
        %v483 = vld [vmem:[%s482] sm:$0xff]
        %484 = vst [vmem:[#allocation2 + $0x128] sm:$0xff] %v483
        %s485 = scalar_lea.vmem %s406, 80
        %v486 = vld [vmem:[%s485] sm:$0xff]
        %487 = vst [vmem:[#allocation2 + $0x170] sm:$0xff] %v486
        %s488 = scalar_lea.vmem %s406, 96
        %v489 = vld [vmem:[%s488] sm:$0xff]
        %490 = vst [vmem:[#allocation2 + $0x1b8] sm:$0xff] %v489
        %s491 = scalar_lea.vmem %s406, 112
        %v492 = vld [vmem:[%s491] sm:$0xff]
        %493 = vst [vmem:[#allocation2 + $0x200] sm:$0xff] %v492
        %v494 = vld [vmem:[%s401 + $0x1] sm:$0xff]
        %495 = vst [vmem:[#allocation2 + $0x10] sm:$0xff] %v494
        %v496 = vld [vmem:[%s450 + $0x1] sm:$0xff]
        %497 = vst [vmem:[#allocation2 + $0x58] sm:$0xff] %v496
        %v498 = vld [vmem:[%s453 + $0x1] sm:$0xff]
        %499 = vst [vmem:[#allocation2 + $0xa0] sm:$0xff] %v498
        %v500 = vld [vmem:[%s456 + $0x1] sm:$0xff]
        %501 = vst [vmem:[#allocation2 + $0xe8] sm:$0xff] %v500
        %v502 = vld [vmem:[%s459 + $0x1] sm:$0xff]
        %503 = vst [vmem:[#allocation2 + $0x130] sm:$0xff] %v502
        %v504 = vld [vmem:[%s462 + $0x1] sm:$0xff]
        %505 = vst [vmem:[#allocation2 + $0x178] sm:$0xff] %v504
        %v506 = vld [vmem:[%s465 + $0x1] sm:$0xff]
        %507 = vst [vmem:[#allocation2 + $0x1c0] sm:$0xff] %v506
        %v508 = vld [vmem:[%s468 + $0x1] sm:$0xff]
        %509 = vst [vmem:[#allocation2 + $0x208] sm:$0xff] %v508
        %v510 = vld [vmem:[%s411] sm:$0xff]
        %511 = vst [vmem:[#allocation2 + $0x18] sm:$0xff] %v510
        %s512 = scalar_lea.vmem %s411, 16
        %v513 = vld [vmem:[%s512] sm:$0xff]
        %514 = vst [vmem:[#allocation2 + $0x60] sm:$0xff] %v513
        %s515 = scalar_lea.vmem %s411, 32
        %v516 = vld [vmem:[%s515] sm:$0xff]
        %517 = vst [vmem:[#allocation2 + $0xa8] sm:$0xff] %v516
        %s518 = scalar_lea.vmem %s411, 48
        %v519 = vld [vmem:[%s518] sm:$0xff]
        %520 = vst [vmem:[#allocation2 + $0xf0] sm:$0xff] %v519
        %s521 = scalar_lea.vmem %s411, 64
        %v522 = vld [vmem:[%s521] sm:$0xff]
        %523 = vst [vmem:[#allocation2 + $0x138] sm:$0xff] %v522
        %s524 = scalar_lea.vmem %s411, 80
        %v525 = vld [vmem:[%s524] sm:$0xff]
        %526 = vst [vmem:[#allocation2 + $0x180] sm:$0xff] %v525
        %s527 = scalar_lea.vmem %s411, 96
        %v528 = vld [vmem:[%s527] sm:$0xff]
        %529 = vst [vmem:[#allocation2 + $0x1c8] sm:$0xff] %v528
        %s530 = scalar_lea.vmem %s411, 112
        %v531 = vld [vmem:[%s530] sm:$0xff]
        %532 = vst [vmem:[#allocation2 + $0x210] sm:$0xff] %v531
        %v533 = vld [vmem:[%s416] sm:$0xff]
        %534 = vst [vmem:[#allocation2 + $0x20] sm:$0xff] %v533
        %s535 = scalar_lea.vmem %s416, 16
        %v536 = vld [vmem:[%s535] sm:$0xff]
        %537 = vst [vmem:[#allocation2 + $0x68] sm:$0xff] %v536
        %s538 = scalar_lea.vmem %s416, 32
        %v539 = vld [vmem:[%s538] sm:$0xff]
        %540 = vst [vmem:[#allocation2 + $0xb0] sm:$0xff] %v539
        %s541 = scalar_lea.vmem %s416, 48
        %v542 = vld [vmem:[%s541] sm:$0xff]
        %543 = vst [vmem:[#allocation2 + $0xf8] sm:$0xff] %v542
        %s544 = scalar_lea.vmem %s416, 64
        %v545 = vld [vmem:[%s544] sm:$0xff]
        %546 = vst [vmem:[#allocation2 + $0x140] sm:$0xff] %v545
        %s547 = scalar_lea.vmem %s416, 80
        %v548 = vld [vmem:[%s547] sm:$0xff]
        %549 = vst [vmem:[#allocation2 + $0x188] sm:$0xff] %v548
        %s550 = scalar_lea.vmem %s416, 96
        %v551 = vld [vmem:[%s550] sm:$0xff]
        %552 = vst [vmem:[#allocation2 + $0x1d0] sm:$0xff] %v551
        %s553 = scalar_lea.vmem %s416, 112
        %v554 = vld [vmem:[%s553] sm:$0xff]
        %555 = vst [vmem:[#allocation2 + $0x218] sm:$0xff] %v554
        %v556 = vld [vmem:[%s411 + $0x1] sm:$0xff]
        %557 = vst [vmem:[#allocation2 + $0x28] sm:$0xff] %v556
        %v558 = vld [vmem:[%s512 + $0x1] sm:$0xff]
        %559 = vst [vmem:[#allocation2 + $0x70] sm:$0xff] %v558
        %v560 = vld [vmem:[%s515 + $0x1] sm:$0xff]
        %561 = vst [vmem:[#allocation2 + $0xb8] sm:$0xff] %v560
        %v562 = vld [vmem:[%s518 + $0x1] sm:$0xff]
        %563 = vst [vmem:[#allocation2 + $0x100] sm:$0xff] %v562
        %v564 = vld [vmem:[%s521 + $0x1] sm:$0xff]
        %565 = vst [vmem:[#allocation2 + $0x148] sm:$0xff] %v564
        %v566 = vld [vmem:[%s524 + $0x1] sm:$0xff]
        %567 = vst [vmem:[#allocation2 + $0x190] sm:$0xff] %v566
        %v568 = vld [vmem:[%s527 + $0x1] sm:$0xff]
        %569 = vst [vmem:[#allocation2 + $0x1d8] sm:$0xff] %v568
        %v570 = vld [vmem:[%s530 + $0x1] sm:$0xff]
        %571 = vst [vmem:[#allocation2 + $0x220] sm:$0xff] %v570
        %v572 = vld [vmem:[%s450] sm:$0xff]
        %573 = vst [vmem:[#allocation2 + $0x30] sm:$0xff] %v572
        %v574 = vld [vmem:[%s453] sm:$0xff]
        %575 = vst [vmem:[#allocation2 + $0x78] sm:$0xff] %v574
        %v576 = vld [vmem:[%s456] sm:$0xff]
        %577 = vst [vmem:[#allocation2 + $0xc0] sm:$0xff] %v576
        %v578 = vld [vmem:[%s459] sm:$0xff]
        %579 = vst [vmem:[#allocation2 + $0x108] sm:$0xff] %v578
        %v580 = vld [vmem:[%s462] sm:$0xff]
        %581 = vst [vmem:[#allocation2 + $0x150] sm:$0xff] %v580
        %v582 = vld [vmem:[%s465] sm:$0xff]
        %583 = vst [vmem:[#allocation2 + $0x198] sm:$0xff] %v582
        %v584 = vld [vmem:[%s468] sm:$0xff]
        %585 = vst [vmem:[#allocation2 + $0x1e0] sm:$0xff] %v584
        %s586 = scalar_lea.vmem %s401, 128
        %v587 = vld [vmem:[%s586] sm:$0xff]
        %588 = vst [vmem:[#allocation2 + $0x228] sm:$0xff] %v587
        %v589 = vld [vmem:[%s473] sm:$0xff]
        %590 = vst [vmem:[#allocation2 + $0x38] sm:$0xff] %v589
        %v591 = vld [vmem:[%s476] sm:$0xff]
        %592 = vst [vmem:[#allocation2 + $0x80] sm:$0xff] %v591
        %v593 = vld [vmem:[%s479] sm:$0xff]
        %594 = vst [vmem:[#allocation2 + $0xc8] sm:$0xff] %v593
        %v595 = vld [vmem:[%s482] sm:$0xff]
        %596 = vst [vmem:[#allocation2 + $0x110] sm:$0xff] %v595
        %v597 = vld [vmem:[%s485] sm:$0xff]
        %598 = vst [vmem:[#allocation2 + $0x158] sm:$0xff] %v597
        %v599 = vld [vmem:[%s488] sm:$0xff]
        %600 = vst [vmem:[#allocation2 + $0x1a0] sm:$0xff] %v599
        %v601 = vld [vmem:[%s491] sm:$0xff]
        %602 = vst [vmem:[#allocation2 + $0x1e8] sm:$0xff] %v601
        %s603 = scalar_lea.vmem %s406, 128
        %v604 = vld [vmem:[%s603] sm:$0xff]
        %605 = vst [vmem:[#allocation2 + $0x230] sm:$0xff] %v604
        %v606 = vld [vmem:[%s450 + $0x1] sm:$0xff]
        %607 = vst [vmem:[#allocation2 + $0x40] sm:$0xff] %v606
        %v608 = vld [vmem:[%s453 + $0x1] sm:$0xff]
        %609 = vst [vmem:[#allocation2 + $0x88] sm:$0xff] %v608
        %v610 = vld [vmem:[%s456 + $0x1] sm:$0xff]
        %611 = vst [vmem:[#allocation2 + $0xd0] sm:$0xff] %v610
        %v612 = vld [vmem:[%s459 + $0x1] sm:$0xff]
        %613 = vst [vmem:[#allocation2 + $0x118] sm:$0xff] %v612
        %v614 = vld [vmem:[%s462 + $0x1] sm:$0xff]
        %615 = vst [vmem:[#allocation2 + $0x160] sm:$0xff] %v614
        %v616 = vld [vmem:[%s465 + $0x1] sm:$0xff]
        %617 = vst [vmem:[#allocation2 + $0x1a8] sm:$0xff] %v616
        %v618 = vld [vmem:[%s468 + $0x1] sm:$0xff]
        %619 = vst [vmem:[#allocation2 + $0x1f0] sm:$0xff] %v618
        %v620 = vld [vmem:[%s586 + $0x1] sm:$0xff]
        %621 = vst [vmem:[#allocation2 + $0x238] sm:$0xff] %v620
        %v622 = vld [vmem:[#allocation2] sm:$0xff]
        %v623 = vld [vmem:[#allocation2 + $0x8] sm:$0xff]
        %v624 = vld [vmem:[#allocation2 + $0x10] sm:$0xff]
        %v625 = vld [vmem:[#allocation2 + $0x18] sm:$0xff]
        %v626 = vld [vmem:[#allocation2 + $0x20] sm:$0xff]
        %v627 = vld [vmem:[#allocation2 + $0x28] sm:$0xff]
        %v628 = vld [vmem:[#allocation2 + $0x30] sm:$0xff]
        %v629 = vld [vmem:[#allocation2 + $0x38] sm:$0xff]
        %v630 = vld [vmem:[#allocation2 + $0x40] sm:$0xff]
        %v631 = vld [vmem:[#allocation2 + $0x48] sm:$0xff]
        %v632 = vld [vmem:[#allocation2 + $0x50] sm:$0xff]
        %v633 = vld [vmem:[#allocation2 + $0x58] sm:$0xff]
        %v634 = vld [vmem:[#allocation2 + $0x60] sm:$0xff]
        %v635 = vld [vmem:[#allocation2 + $0x68] sm:$0xff]
        %v636 = vld [vmem:[#allocation2 + $0x70] sm:$0xff]
        %v637 = vld [vmem:[#allocation2 + $0x78] sm:$0xff]
        %v638 = vld [vmem:[#allocation2 + $0x80] sm:$0xff]
        %v639 = vld [vmem:[#allocation2 + $0x88] sm:$0xff]
        %v640 = vld [vmem:[#allocation2 + $0x90] sm:$0xff]
        %v641 = vld [vmem:[#allocation2 + $0x98] sm:$0xff]
        %v642 = vld [vmem:[#allocation2 + $0xa0] sm:$0xff]
        %v643 = vld [vmem:[#allocation2 + $0xa8] sm:$0xff]
        %v644 = vld [vmem:[#allocation2 + $0xb0] sm:$0xff]
        %v645 = vld [vmem:[#allocation2 + $0xb8] sm:$0xff]
        %v646 = vld [vmem:[#allocation2 + $0xc0] sm:$0xff]
        %v647 = vld [vmem:[#allocation2 + $0xc8] sm:$0xff]
        %v648 = vld [vmem:[#allocation2 + $0xd0] sm:$0xff]
        %v649 = vld [vmem:[#allocation2 + $0xd8] sm:$0xff]
        %v650 = vld [vmem:[#allocation2 + $0xe0] sm:$0xff]
        %v651 = vld [vmem:[#allocation2 + $0xe8] sm:$0xff]
        %v652 = vld [vmem:[#allocation2 + $0xf0] sm:$0xff]
        %v653 = vld [vmem:[#allocation2 + $0xf8] sm:$0xff]
        %v654 = vld [vmem:[#allocation2 + $0x100] sm:$0xff]
        %v655 = vld [vmem:[#allocation2 + $0x108] sm:$0xff]
        %v656 = vld [vmem:[#allocation2 + $0x110] sm:$0xff]
        %v657 = vld [vmem:[#allocation2 + $0x118] sm:$0xff]
        %v658 = vld [vmem:[#allocation2 + $0x120] sm:$0xff]
        %v659 = vld [vmem:[#allocation2 + $0x128] sm:$0xff]
        %v660 = vld [vmem:[#allocation2 + $0x130] sm:$0xff]
        %v661 = vld [vmem:[#allocation2 + $0x138] sm:$0xff]
        %v662 = vld [vmem:[#allocation2 + $0x140] sm:$0xff]
        %v663 = vld [vmem:[#allocation2 + $0x148] sm:$0xff]
        %v664 = vld [vmem:[#allocation2 + $0x150] sm:$0xff]
        %v665 = vld [vmem:[#allocation2 + $0x158] sm:$0xff]
        %v666 = vld [vmem:[#allocation2 + $0x160] sm:$0xff]
        %v667 = vld [vmem:[#allocation2 + $0x168] sm:$0xff]
        %v668 = vld [vmem:[#allocation2 + $0x170] sm:$0xff]
        %v669 = vld [vmem:[#allocation2 + $0x178] sm:$0xff]
        %v670 = vld [vmem:[#allocation2 + $0x180] sm:$0xff]
        %v671 = vld [vmem:[#allocation2 + $0x188] sm:$0xff]
        %v672 = vld [vmem:[#allocation2 + $0x190] sm:$0xff]
        %v673 = vld [vmem:[#allocation2 + $0x198] sm:$0xff]
        %v674 = vld [vmem:[#allocation2 + $0x1a0] sm:$0xff]
        %v675 = vld [vmem:[#allocation2 + $0x1a8] sm:$0xff]
        %v676 = vld [vmem:[#allocation2 + $0x1b0] sm:$0xff]
        %v677 = vld [vmem:[#allocation2 + $0x1b8] sm:$0xff]
        %v678 = vld [vmem:[#allocation2 + $0x1c0] sm:$0xff]
        %v679 = vld [vmem:[#allocation2 + $0x1c8] sm:$0xff]
        %v680 = vld [vmem:[#allocation2 + $0x1d0] sm:$0xff]
        %v681 = vld [vmem:[#allocation2 + $0x1d8] sm:$0xff]
        %v682 = vld [vmem:[#allocation2 + $0x1e0] sm:$0xff]
        %v683 = vld [vmem:[#allocation2 + $0x1e8] sm:$0xff]
        %v684 = vld [vmem:[#allocation2 + $0x1f0] sm:$0xff]
        %v685 = vld [vmem:[#allocation2 + $0x1f8] sm:$0xff]
        %v686 = vld [vmem:[#allocation2 + $0x200] sm:$0xff]
        %v687 = vld [vmem:[#allocation2 + $0x208] sm:$0xff]
        %v688 = vld [vmem:[#allocation2 + $0x210] sm:$0xff]
        %v689 = vld [vmem:[#allocation2 + $0x218] sm:$0xff]
        %v690 = vld [vmem:[#allocation2 + $0x220] sm:$0xff]
        %v691 = vld [vmem:[#allocation2 + $0x228] sm:$0xff]
        %v692 = vld [vmem:[#allocation2 + $0x230] sm:$0xff]
        %v693 = vld [vmem:[#allocation2 + $0x238] sm:$0xff]
        %v694 = vpack.c.bf16 %v631, %v622
        %v695 = vpack.c.bf16 %v632, %v623
        %v696 = vpack.c.bf16 %v633, %v624
        %v697 = vpack.c.bf16 %v634, %v625
        %v698 = vpack.c.bf16 %v635, %v626
        %v699 = vpack.c.bf16 %v636, %v627
        %v700 = vpack.c.bf16 %v637, %v628
        %v701 = vpack.c.bf16 %v638, %v629
        %v702 = vpack.c.bf16 %v639, %v630
        %v703 = vpack.c.bf16 %v649, %v640
        %v704 = vpack.c.bf16 %v650, %v641
        %v705 = vpack.c.bf16 %v651, %v642
        %v706 = vpack.c.bf16 %v652, %v643
        %v707 = vpack.c.bf16 %v653, %v644
        %v708 = vpack.c.bf16 %v654, %v645
        %v709 = vpack.c.bf16 %v655, %v646
        %v710 = vpack.c.bf16 %v656, %v647
        %v711 = vpack.c.bf16 %v657, %v648
        %v712 = vpack.c.bf16 %v667, %v658
        %v713 = vpack.c.bf16 %v668, %v659
        %v714 = vpack.c.bf16 %v669, %v660
        %v715 = vpack.c.bf16 %v670, %v661
        %v716 = vpack.c.bf16 %v671, %v662
        %v717 = vpack.c.bf16 %v672, %v663
        %v718 = vpack.c.bf16 %v673, %v664
        %v719 = vpack.c.bf16 %v674, %v665
        %v720 = vpack.c.bf16 %v675, %v666
        %v721 = vpack.c.bf16 %v685, %v676
        %v722 = vpack.c.bf16 %v686, %v677
        %v723 = vpack.c.bf16 %v687, %v678
        %v724 = vpack.c.bf16 %v688, %v679
        %v725 = vpack.c.bf16 %v689, %v680
        %v726 = vpack.c.bf16 %v690, %v681
        %v727 = vpack.c.bf16 %v691, %v682
        %v728 = vpack.c.bf16 %v692, %v683
        %v729 = vpack.c.bf16 %v693, %v684
        %v730 = vld [vmem:[%s4] sm:$0xf]
        %v731 = vld [vmem:[%s4 + $0x4] sm:$0xf]
        %v732 = vld [vmem:[%s4 + $0x8] sm:$0xf]
        %v733 = vld [vmem:[%s4 + $0xc] sm:$0xf]
        %v734 = vld [vmem:[%s4 + $0x10] sm:$0xf]
        %v735 = vld [vmem:[%s4 + $0x14] sm:$0xf]
        %v736 = vld [vmem:[%s4 + $0x18] sm:$0xf]
        %v737 = vld [vmem:[%s4 + $0x1c] sm:$0xf]
        %v738 = vld [vmem:[%s4 + $0x20] sm:$0xf]
        %v739 = vld [vmem:[%s4 + $0x24] sm:$0xf]
        %v740 = vld [vmem:[%s4 + $0x28] sm:$0xf]
        %v741 = vld [vmem:[%s4 + $0x2c] sm:$0xf]
        %v742 = vld [vmem:[%s4 + $0x30] sm:$0xf]
        %v743 = vld [vmem:[%s4 + $0x34] sm:$0xf]
        %v744 = vld [vmem:[%s4 + $0x38] sm:$0xf]
        %v745 = vld [vmem:[%s4 + $0x3c] sm:$0xf]
        %v746 = vld [vmem:[%s4 + $0x40] sm:$0xf]
        %v747 = vld [vmem:[%s4 + $0x44] sm:$0xf]
        %v748 = vld [vmem:[%s4 + $0x48] sm:$0xf]
        %v749 = vld [vmem:[%s4 + $0x4c] sm:$0xf]
        %v750 = vld [vmem:[%s4 + $0x50] sm:$0xf]
        %v751 = vld [vmem:[%s4 + $0x54] sm:$0xf]
        %v752 = vld [vmem:[%s4 + $0x58] sm:$0xf]
        %v753 = vld [vmem:[%s4 + $0x5c] sm:$0xf]
        %v754 = vld [vmem:[%s4 + $0x60] sm:$0xf]
        %v755 = vld [vmem:[%s4 + $0x64] sm:$0xf]
        %v756 = vld [vmem:[%s4 + $0x68] sm:$0xf]
        %v757 = vld [vmem:[%s4 + $0x6c] sm:$0xf]
        %v758 = vld [vmem:[%s4 + $0x70] sm:$0xf]
        %v759 = vld [vmem:[%s4 + $0x74] sm:$0xf]
        %v760 = vld [vmem:[%s4 + $0x78] sm:$0xf]
        %v761 = vld [vmem:[%s4 + $0x7c] sm:$0xf]
        %v762 = vld [vmem:[%s4 + $0x80] sm:$0xf]
        %v763 = vld [vmem:[%s4 + $0x84] sm:$0xf]
        %v764 = vld [vmem:[%s4 + $0x88] sm:$0xf]
        %v765 = vld [vmem:[%s4 + $0x8c] sm:$0xf]
        %v766 = vld [vmem:[%s4 + $0x90] sm:$0xf]
        %v767 = vld [vmem:[%s4 + $0x94] sm:$0xf]
        %v768 = vld [vmem:[%s4 + $0x98] sm:$0xf]
        %v769 = vld [vmem:[%s4 + $0x9c] sm:$0xf]
        %v770 = vld [vmem:[%s4 + $0xa0] sm:$0xf]
        %v771 = vld [vmem:[%s4 + $0xa4] sm:$0xf]
        %v772 = vld [vmem:[%s4 + $0xa8] sm:$0xf]
        %v773 = vld [vmem:[%s4 + $0xac] sm:$0xf]
        %v774 = vld [vmem:[%s4 + $0xb0] sm:$0xf]
        %v775 = vld [vmem:[%s4 + $0xb4] sm:$0xf]
        %v776 = vld [vmem:[%s4 + $0xb8] sm:$0xf]
        %v777 = vld [vmem:[%s4 + $0xbc] sm:$0xf]
        %v778 = vld [vmem:[%s4 + $0xc0] sm:$0xf]
        %v779 = vld [vmem:[%s4 + $0xc4] sm:$0xf]
        %v780 = vld [vmem:[%s4 + $0xc8] sm:$0xf]
        %v781 = vld [vmem:[%s4 + $0xcc] sm:$0xf]
        %v782 = vld [vmem:[%s4 + $0xd0] sm:$0xf]
        %v783 = vld [vmem:[%s4 + $0xd4] sm:$0xf]
        %v784 = vld [vmem:[%s4 + $0xd8] sm:$0xf]
        %v785 = vld [vmem:[%s4 + $0xdc] sm:$0xf]
        %v786 = vld [vmem:[%s4 + $0xe0] sm:$0xf]
        %v787 = vld [vmem:[%s4 + $0xe4] sm:$0xf]
        %v788 = vld [vmem:[%s4 + $0xe8] sm:$0xf]
        %v789 = vld [vmem:[%s4 + $0xec] sm:$0xf]
        %v790 = vld [vmem:[%s4 + $0xf0] sm:$0xf]
        %v791 = vld [vmem:[%s4 + $0xf4] sm:$0xf]
        %v792 = vld [vmem:[%s4 + $0xf8] sm:$0xf]
        %v793 = vld [vmem:[%s4 + $0xfc] sm:$0xf]
        %v794 = vld [vmem:[%s4 + $0x100] sm:$0xf]
        %v795 = vld [vmem:[%s4 + $0x104] sm:$0xf]
        %v796 = vld [vmem:[%s4 + $0x108] sm:$0xf]
        %v797 = vld [vmem:[%s4 + $0x10c] sm:$0xf]
        %v798 = vld [vmem:[%s4 + $0x110] sm:$0xf]
        %v799 = vld [vmem:[%s4 + $0x114] sm:$0xf]
        %v800 = vld [vmem:[%s4 + $0x118] sm:$0xf]
        %v801 = vld [vmem:[%s4 + $0x11c] sm:$0xf]
        %v802 = vld [vmem:[%s4 + $0x120] sm:$0xf]
        %v803 = vld [vmem:[%s4 + $0x124] sm:$0xf]
        %v804 = vld [vmem:[%s4 + $0x128] sm:$0xf]
        %v805 = vld [vmem:[%s4 + $0x12c] sm:$0xf]
        %v806 = vld [vmem:[%s4 + $0x130] sm:$0xf]
        %v807 = vld [vmem:[%s4 + $0x134] sm:$0xf]
        %v808 = vld [vmem:[%s4 + $0x138] sm:$0xf]
        %v809 = vld [vmem:[%s4 + $0x13c] sm:$0xf]
        %v810 = vld [vmem:[%s4 + $0x140] sm:$0xf]
        %v811 = vld [vmem:[%s4 + $0x144] sm:$0xf]
        %v812 = vld [vmem:[%s4 + $0x148] sm:$0xf]
        %v813 = vld [vmem:[%s4 + $0x14c] sm:$0xf]
        %v814 = vld [vmem:[%s4 + $0x150] sm:$0xf]
        %v815 = vld [vmem:[%s4 + $0x154] sm:$0xf]
        %v816 = vld [vmem:[%s4 + $0x158] sm:$0xf]
        %v817 = vld [vmem:[%s4 + $0x15c] sm:$0xf]
        %v818 = vld [vmem:[%s4 + $0x160] sm:$0xf]
        %v819 = vld [vmem:[%s4 + $0x164] sm:$0xf]
        %v820 = vld [vmem:[%s4 + $0x168] sm:$0xf]
        %v821 = vld [vmem:[%s4 + $0x16c] sm:$0xf]
        %v822 = vld [vmem:[%s4 + $0x170] sm:$0xf]
        %v823 = vld [vmem:[%s4 + $0x174] sm:$0xf]
        %v824 = vld [vmem:[%s4 + $0x178] sm:$0xf]
        %v825 = vld [vmem:[%s4 + $0x17c] sm:$0xf]
        %v826 = vld [vmem:[%s4 + $0x180] sm:$0xf]
        %v827 = vld [vmem:[%s4 + $0x184] sm:$0xf]
        %v828 = vld [vmem:[%s4 + $0x188] sm:$0xf]
        %v829 = vld [vmem:[%s4 + $0x18c] sm:$0xf]
        %v830 = vld [vmem:[%s4 + $0x190] sm:$0xf]
        %v831 = vld [vmem:[%s4 + $0x194] sm:$0xf]
        %v832 = vld [vmem:[%s4 + $0x198] sm:$0xf]
        %v833 = vld [vmem:[%s4 + $0x19c] sm:$0xf]
        %v834 = vld [vmem:[%s4 + $0x1a0] sm:$0xf]
        %v835 = vld [vmem:[%s4 + $0x1a4] sm:$0xf]
        %v836 = vld [vmem:[%s4 + $0x1a8] sm:$0xf]
        %v837 = vld [vmem:[%s4 + $0x1ac] sm:$0xf]
        %v838 = vld [vmem:[%s4 + $0x1b0] sm:$0xf]
        %v839 = vld [vmem:[%s4 + $0x1b4] sm:$0xf]
        %v840 = vld [vmem:[%s4 + $0x1b8] sm:$0xf]
        %v841 = vld [vmem:[%s4 + $0x1bc] sm:$0xf]
        %v842 = vld [vmem:[%s4 + $0x1c0] sm:$0xf]
        %v843 = vld [vmem:[%s4 + $0x1c4] sm:$0xf]
        %v844 = vld [vmem:[%s4 + $0x1c8] sm:$0xf]
        %v845 = vld [vmem:[%s4 + $0x1cc] sm:$0xf]
        %v846 = vld [vmem:[%s4 + $0x1d0] sm:$0xf]
        %v847 = vld [vmem:[%s4 + $0x1d4] sm:$0xf]
        %v848 = vld [vmem:[%s4 + $0x1d8] sm:$0xf]
        %v849 = vld [vmem:[%s4 + $0x1dc] sm:$0xf]
        %v850 = vld [vmem:[%s4 + $0x1e0] sm:$0xf]
        %v851 = vld [vmem:[%s4 + $0x1e4] sm:$0xf]
        %v852 = vld [vmem:[%s4 + $0x1e8] sm:$0xf]
        %v853 = vld [vmem:[%s4 + $0x1ec] sm:$0xf]
        %v854 = vld [vmem:[%s4 + $0x1f0] sm:$0xf]
        %v855 = vld [vmem:[%s4 + $0x1f4] sm:$0xf]
        %v856 = vld [vmem:[%s4 + $0x1f8] sm:$0xf]
        %v857 = vld [vmem:[%s4 + $0x1fc] sm:$0xf]
        %v858 = vld [vmem:[%s4 + $0x200] sm:$0xf]
        %v859 = vld [vmem:[%s4 + $0x204] sm:$0xf]
        %v860 = vld [vmem:[%s4 + $0x208] sm:$0xf]
        %v861 = vld [vmem:[%s4 + $0x20c] sm:$0xf]
        %v862 = vld [vmem:[%s4 + $0x210] sm:$0xf]
        %v863 = vld [vmem:[%s4 + $0x214] sm:$0xf]
        %v864 = vld [vmem:[%s4 + $0x218] sm:$0xf]
        %v865 = vld [vmem:[%s4 + $0x21c] sm:$0xf]
        %v866 = vld [vmem:[%s4 + $0x220] sm:$0xf]
        %v867 = vld [vmem:[%s4 + $0x224] sm:$0xf]
        %v868 = vld [vmem:[%s4 + $0x228] sm:$0xf]
        %v869 = vld [vmem:[%s4 + $0x22c] sm:$0xf]
        %v870 = vld [vmem:[%s4 + $0x230] sm:$0xf]
        %v871 = vld [vmem:[%s4 + $0x234] sm:$0xf]
        %v872 = vld [vmem:[%s4 + $0x238] sm:$0xf]
        %v873 = vld [vmem:[%s4 + $0x23c] sm:$0xf]
        %v874 = vld [vmem:[%s5] sm:$0x1]
        %v876 = vlaneseq
        %v877 = vshrl.u32 %v876, 7
        %v878 = vsub.s32 0, %v877
        %v879 = vrot.slane %v874, %v878
        %v1025 = vunpack.c.l.b16 %v730
        %v1026 = vunpack.c.l.b16 %v731
        %v1027 = vunpack.c.l.b16 %v732
        %v1028 = vunpack.c.l.b16 %v733
        %v1029 = vunpack.c.l.b16 %v734
        %v1030 = vunpack.c.l.b16 %v735
        %v1031 = vunpack.c.l.b16 %v736
        %v1032 = vunpack.c.l.b16 %v737
        %v1033 = vunpack.c.l.b16 %v738
        %v1034 = vunpack.c.l.b16 %v739
        %v1035 = vunpack.c.l.b16 %v740
        %v1036 = vunpack.c.l.b16 %v741
        %v1037 = vunpack.c.l.b16 %v742
        %v1038 = vunpack.c.l.b16 %v743
        %v1039 = vunpack.c.l.b16 %v744
        %v1040 = vunpack.c.l.b16 %v745
        %v1041 = vunpack.c.l.b16 %v746
        %v1042 = vunpack.c.l.b16 %v747
        %v1043 = vunpack.c.l.b16 %v748
        %v1044 = vunpack.c.l.b16 %v749
        %v1045 = vunpack.c.l.b16 %v750
        %v1046 = vunpack.c.l.b16 %v751
        %v1047 = vunpack.c.l.b16 %v752
        %v1048 = vunpack.c.l.b16 %v753
        %v1049 = vunpack.c.l.b16 %v754
        %v1050 = vunpack.c.l.b16 %v755
        %v1051 = vunpack.c.l.b16 %v756
        %v1052 = vunpack.c.l.b16 %v757
        %v1053 = vunpack.c.l.b16 %v758
        %v1054 = vunpack.c.l.b16 %v759
        %v1055 = vunpack.c.l.b16 %v760
        %v1056 = vunpack.c.l.b16 %v761
        %v1057 = vunpack.c.l.b16 %v762
        %v1058 = vunpack.c.l.b16 %v763
        %v1059 = vunpack.c.l.b16 %v764
        %v1060 = vunpack.c.l.b16 %v765
        %v1061 = vunpack.c.l.b16 %v766
        %v1062 = vunpack.c.l.b16 %v767
        %v1063 = vunpack.c.l.b16 %v768
        %v1064 = vunpack.c.l.b16 %v769
        %v1065 = vunpack.c.l.b16 %v770
        %v1066 = vunpack.c.l.b16 %v771
        %v1067 = vunpack.c.l.b16 %v772
        %v1068 = vunpack.c.l.b16 %v773
        %v1069 = vunpack.c.l.b16 %v774
        %v1070 = vunpack.c.l.b16 %v775
        %v1071 = vunpack.c.l.b16 %v776
        %v1072 = vunpack.c.l.b16 %v777
        %v1073 = vunpack.c.l.b16 %v778
        %v1074 = vunpack.c.l.b16 %v779
        %v1075 = vunpack.c.l.b16 %v780
        %v1076 = vunpack.c.l.b16 %v781
        %v1077 = vunpack.c.l.b16 %v782
        %v1078 = vunpack.c.l.b16 %v783
        %v1079 = vunpack.c.l.b16 %v784
        %v1080 = vunpack.c.l.b16 %v785
        %v1081 = vunpack.c.l.b16 %v786
        %v1082 = vunpack.c.l.b16 %v787
        %v1083 = vunpack.c.l.b16 %v788
        %v1084 = vunpack.c.l.b16 %v789
        %v1085 = vunpack.c.l.b16 %v790
        %v1086 = vunpack.c.l.b16 %v791
        %v1087 = vunpack.c.l.b16 %v792
        %v1088 = vunpack.c.l.b16 %v793
        %v1089 = vunpack.c.l.b16 %v794
        %v1090 = vunpack.c.l.b16 %v795
        %v1091 = vunpack.c.l.b16 %v796
        %v1092 = vunpack.c.l.b16 %v797
        %v1093 = vunpack.c.l.b16 %v798
        %v1094 = vunpack.c.l.b16 %v799
        %v1095 = vunpack.c.l.b16 %v800
        %v1096 = vunpack.c.l.b16 %v801
        %v1097 = vunpack.c.l.b16 %v802
        %v1098 = vunpack.c.l.b16 %v803
        %v1099 = vunpack.c.l.b16 %v804
        %v1100 = vunpack.c.l.b16 %v805
        %v1101 = vunpack.c.l.b16 %v806
        %v1102 = vunpack.c.l.b16 %v807
        %v1103 = vunpack.c.l.b16 %v808
        %v1104 = vunpack.c.l.b16 %v809
        %v1105 = vunpack.c.l.b16 %v810
        %v1106 = vunpack.c.l.b16 %v811
        %v1107 = vunpack.c.l.b16 %v812
        %v1108 = vunpack.c.l.b16 %v813
        %v1109 = vunpack.c.l.b16 %v814
        %v1110 = vunpack.c.l.b16 %v815
        %v1111 = vunpack.c.l.b16 %v816
        %v1112 = vunpack.c.l.b16 %v817
        %v1113 = vunpack.c.l.b16 %v818
        %v1114 = vunpack.c.l.b16 %v819
        %v1115 = vunpack.c.l.b16 %v820
        %v1116 = vunpack.c.l.b16 %v821
        %v1117 = vunpack.c.l.b16 %v822
        %v1118 = vunpack.c.l.b16 %v823
        %v1119 = vunpack.c.l.b16 %v824
        %v1120 = vunpack.c.l.b16 %v825
        %v1121 = vunpack.c.l.b16 %v826
        %v1122 = vunpack.c.l.b16 %v827
        %v1123 = vunpack.c.l.b16 %v828
        %v1124 = vunpack.c.l.b16 %v829
        %v1125 = vunpack.c.l.b16 %v830
        %v1126 = vunpack.c.l.b16 %v831
        %v1127 = vunpack.c.l.b16 %v832
        %v1128 = vunpack.c.l.b16 %v833
        %v1129 = vunpack.c.l.b16 %v834
        %v1130 = vunpack.c.l.b16 %v835
        %v1131 = vunpack.c.l.b16 %v836
        %v1132 = vunpack.c.l.b16 %v837
        %v1133 = vunpack.c.l.b16 %v838
        %v1134 = vunpack.c.l.b16 %v839
        %v1135 = vunpack.c.l.b16 %v840
        %v1136 = vunpack.c.l.b16 %v841
        %v1137 = vunpack.c.l.b16 %v842
        %v1138 = vunpack.c.l.b16 %v843
        %v1139 = vunpack.c.l.b16 %v844
        %v1140 = vunpack.c.l.b16 %v845
        %v1141 = vunpack.c.l.b16 %v846
        %v1142 = vunpack.c.l.b16 %v847
        %v1143 = vunpack.c.l.b16 %v848
        %v1144 = vunpack.c.l.b16 %v849
        %v1145 = vunpack.c.l.b16 %v850
        %v1146 = vunpack.c.l.b16 %v851
        %v1147 = vunpack.c.l.b16 %v852
        %v1148 = vunpack.c.l.b16 %v853
        %v1149 = vunpack.c.l.b16 %v854
        %v1150 = vunpack.c.l.b16 %v855
        %v1151 = vunpack.c.l.b16 %v856
        %v1152 = vunpack.c.l.b16 %v857
        %v1153 = vunpack.c.l.b16 %v858
        %v1154 = vunpack.c.l.b16 %v859
        %v1155 = vunpack.c.l.b16 %v860
        %v1156 = vunpack.c.l.b16 %v861
        %v1157 = vunpack.c.l.b16 %v862
        %v1158 = vunpack.c.l.b16 %v863
        %v1159 = vunpack.c.l.b16 %v864
        %v1160 = vunpack.c.l.b16 %v865
        %v1161 = vunpack.c.l.b16 %v866
        %v1162 = vunpack.c.l.b16 %v867
        %v1163 = vunpack.c.l.b16 %v868
        %v1164 = vunpack.c.l.b16 %v869
        %v1165 = vunpack.c.l.b16 %v870
        %v1166 = vunpack.c.l.b16 %v871
        %v1167 = vunpack.c.l.b16 %v872
        %v1168 = vunpack.c.l.b16 %v873
        %v1169 = vpack.c.b16 %v1026, %v1025
        %v1170 = vpack.c.b16 %v1028, %v1027
        %v1171 = vpack.c.b16 %v1030, %v1029
        %v1172 = vpack.c.b16 %v1032, %v1031
        %v1173 = vpack.c.b16 %v1034, %v1033
        %v1174 = vpack.c.b16 %v1036, %v1035
        %v1175 = vpack.c.b16 %v1038, %v1037
        %v1176 = vpack.c.b16 %v1040, %v1039
        %v1177 = vpack.c.b16 %v1042, %v1041
        %v1178 = vpack.c.b16 %v1044, %v1043
        %v1179 = vpack.c.b16 %v1046, %v1045
        %v1180 = vpack.c.b16 %v1048, %v1047
        %v1181 = vpack.c.b16 %v1050, %v1049
        %v1182 = vpack.c.b16 %v1052, %v1051
        %v1183 = vpack.c.b16 %v1054, %v1053
        %v1184 = vpack.c.b16 %v1056, %v1055
        %v1185 = vpack.c.b16 %v1058, %v1057
        %v1186 = vpack.c.b16 %v1060, %v1059
        %v1187 = vpack.c.b16 %v1062, %v1061
        %v1188 = vpack.c.b16 %v1064, %v1063
        %v1189 = vpack.c.b16 %v1066, %v1065
        %v1190 = vpack.c.b16 %v1068, %v1067
        %v1191 = vpack.c.b16 %v1070, %v1069
        %v1192 = vpack.c.b16 %v1072, %v1071
        %v1193 = vpack.c.b16 %v1074, %v1073
        %v1194 = vpack.c.b16 %v1076, %v1075
        %v1195 = vpack.c.b16 %v1078, %v1077
        %v1196 = vpack.c.b16 %v1080, %v1079
        %v1197 = vpack.c.b16 %v1082, %v1081
        %v1198 = vpack.c.b16 %v1084, %v1083
        %v1199 = vpack.c.b16 %v1086, %v1085
        %v1200 = vpack.c.b16 %v1088, %v1087
        %v1201 = vpack.c.b16 %v1090, %v1089
        %v1202 = vpack.c.b16 %v1092, %v1091
        %v1203 = vpack.c.b16 %v1094, %v1093
        %v1204 = vpack.c.b16 %v1096, %v1095
        %v1205 = vpack.c.b16 %v1098, %v1097
        %v1206 = vpack.c.b16 %v1100, %v1099
        %v1207 = vpack.c.b16 %v1102, %v1101
        %v1208 = vpack.c.b16 %v1104, %v1103
        %v1209 = vpack.c.b16 %v1106, %v1105
        %v1210 = vpack.c.b16 %v1108, %v1107
        %v1211 = vpack.c.b16 %v1110, %v1109
        %v1212 = vpack.c.b16 %v1112, %v1111
        %v1213 = vpack.c.b16 %v1114, %v1113
        %v1214 = vpack.c.b16 %v1116, %v1115
        %v1215 = vpack.c.b16 %v1118, %v1117
        %v1216 = vpack.c.b16 %v1120, %v1119
        %v1217 = vpack.c.b16 %v1122, %v1121
        %v1218 = vpack.c.b16 %v1124, %v1123
        %v1219 = vpack.c.b16 %v1126, %v1125
        %v1220 = vpack.c.b16 %v1128, %v1127
        %v1221 = vpack.c.b16 %v1130, %v1129
        %v1222 = vpack.c.b16 %v1132, %v1131
        %v1223 = vpack.c.b16 %v1134, %v1133
        %v1224 = vpack.c.b16 %v1136, %v1135
        %v1225 = vpack.c.b16 %v1138, %v1137
        %v1226 = vpack.c.b16 %v1140, %v1139
        %v1227 = vpack.c.b16 %v1142, %v1141
        %v1228 = vpack.c.b16 %v1144, %v1143
        %v1229 = vpack.c.b16 %v1146, %v1145
        %v1230 = vpack.c.b16 %v1148, %v1147
        %v1231 = vpack.c.b16 %v1150, %v1149
        %v1232 = vpack.c.b16 %v1152, %v1151
        %v1233 = vpack.c.b16 %v1154, %v1153
        %v1234 = vpack.c.b16 %v1156, %v1155
        %v1235 = vpack.c.b16 %v1158, %v1157
        %v1236 = vpack.c.b16 %v1160, %v1159
        %v1237 = vpack.c.b16 %v1162, %v1161
        %v1238 = vpack.c.b16 %v1164, %v1163
        %v1239 = vpack.c.b16 %v1166, %v1165
        %v1240 = vpack.c.b16 %v1168, %v1167
        %1313 = vmatprep.subr.bf16.mxu0 0
        %1314 = vmatpush1.bf16.msra.mxu0 %v1169
        %1315 = vmatprep.subr.bf16.mxu0 0
        %1316 = vmatpush1.bf16.msra.mxu0 %v1170
        %1317 = vmatprep.subr.bf16.mxu0 0
        %1318 = vmatpush1.bf16.msra.mxu0 %v1171
        %1319 = vmatprep.subr.bf16.mxu0 0
        %1320 = vmatpush1.bf16.msra.mxu0 %v1172
        %1321 = vmatprep.subr.bf16.mxu0 0
        %1322 = vmatpush1.bf16.msra.mxu0 %v1173
        %1323 = vmatprep.subr.bf16.mxu0 0
        %1324 = vmatpush1.bf16.msra.mxu0 %v1174
        %1325 = vmatprep.subr.bf16.mxu0 0
        %1326 = vmatpush1.bf16.msra.mxu0 %v1175
        %1327 = vmatprep.subr.bf16.mxu0 0
        %1328 = vmatpush1.bf16.msra.mxu0 %v1176
        %1329 = vmatprep.subr.bf16.mxu0 0
        %1330 = vmatpush1.bf16.msra.mxu0 %v1177
        %1331 = vmatprep.subr.bf16.mxu0 0
        %1332 = vmatpush1.bf16.msra.mxu0 %v1178
        %1333 = vmatprep.subr.bf16.mxu0 0
        %1334 = vmatpush1.bf16.msra.mxu0 %v1179
        %1335 = vmatprep.subr.bf16.mxu0 0
        %1336 = vmatpush1.bf16.msra.mxu0 %v1180
        %1337 = vmatprep.subr.bf16.mxu0 0
        %1338 = vmatpush1.bf16.msra.mxu0 %v1181
        %1339 = vmatprep.subr.bf16.mxu0 0
        %1340 = vmatpush1.bf16.msra.mxu0 %v1182
        %1341 = vmatprep.subr.bf16.mxu0 0
        %1342 = vmatpush1.bf16.msra.mxu0 %v1183
        %1343 = vmatprep.subr.bf16.mxu0 0
        %1344 = vmatpush1.bf16.msra.mxu0 %v1184
        %1345 = vmatprep.mubr.bf16.mxu0 %v695
        %1346 = vmatmul.mubr.bf16.gmra.mrb[0].mxu0 %v694
        %v1347 = vpop.f32.mrb[0].mxu0
        %v1348 = vadd.f32 %v879, %v1347
        %v1349 = vpop.f32.mrb[0].mxu0
        %v1350 = vpop.f32.mrb[0].mxu0
        %v1351 = vadd.f32 %v879, %v1350
        %v1352 = vpop.f32.mrb[0].mxu0
        %1353 = vmatprep.mubr.bf16.mxu0 %v704
        %1354 = vmatmul.mubr.bf16.gmra.mrb[0].mxu0 %v703
        %v1355 = vpop.f32.mrb[0].mxu0
        %v1356 = vadd.f32 %v879, %v1355
        %v1357 = vpop.f32.mrb[0].mxu0
        %v1358 = vpop.f32.mrb[0].mxu0
        %v1359 = vadd.f32 %v879, %v1358
        %v1360 = vpop.f32.mrb[0].mxu0
        %1361 = vmatprep.mubr.bf16.mxu0 %v713
        %1362 = vmatmul.mubr.bf16.gmra.mrb[0].mxu0 %v712
        %v1363 = vpop.f32.mrb[0].mxu0
        %v1364 = vadd.f32 %v879, %v1363
        %v1365 = vpop.f32.mrb[0].mxu0
        %v1366 = vpop.f32.mrb[0].mxu0
        %v1367 = vadd.f32 %v879, %v1366
        %v1368 = vpop.f32.mrb[0].mxu0
        %1369 = vmatprep.mubr.bf16.mxu0 %v722
        %1370 = vmatmul.mubr.bf16.gmra.mrb[0].mxu0 %v721
        %v1371 = vpop.f32.mrb[0].mxu0
        %v1372 = vadd.f32 %v879, %v1371
        %v1373 = vpop.f32.mrb[0].mxu0
        %v1374 = vpop.f32.mrb[0].mxu0
        %v1375 = vadd.f32 %v879, %v1374
        %v1376 = vpop.f32.mrb[0].mxu0
        %1377 = vdwg.mxu0
        %1378 = vmatprep.subr.bf16.mxu0 0
        %1379 = vmatpush1.bf16.msra.mxu0 %v1185
        %1380 = vmatprep.subr.bf16.mxu0 0
        %1381 = vmatpush1.bf16.msra.mxu0 %v1186
        %1382 = vmatprep.subr.bf16.mxu0 0
        %1383 = vmatpush1.bf16.msra.mxu0 %v1187
        %1384 = vmatprep.subr.bf16.mxu0 0
        %1385 = vmatpush1.bf16.msra.mxu0 %v1188
        %1386 = vmatprep.subr.bf16.mxu0 0
        %1387 = vmatpush1.bf16.msra.mxu0 %v1189
        %1388 = vmatprep.subr.bf16.mxu0 0
        %1389 = vmatpush1.bf16.msra.mxu0 %v1190
        %1390 = vmatprep.subr.bf16.mxu0 0
        %1391 = vmatpush1.bf16.msra.mxu0 %v1191
        %1392 = vmatprep.subr.bf16.mxu0 0
        %1393 = vmatpush1.bf16.msra.mxu0 %v1192
        %1394 = vmatprep.subr.bf16.mxu0 0
        %1395 = vmatpush1.bf16.msra.mxu0 %v1193
        %1396 = vmatprep.subr.bf16.mxu0 0
        %1397 = vmatpush1.bf16.msra.mxu0 %v1194
        %1398 = vmatprep.subr.bf16.mxu0 0
        %1399 = vmatpush1.bf16.msra.mxu0 %v1195
        %1400 = vmatprep.subr.bf16.mxu0 0
        %1401 = vmatpush1.bf16.msra.mxu0 %v1196
        %1402 = vmatprep.subr.bf16.mxu0 0
        %1403 = vmatpush1.bf16.msra.mxu0 %v1197
        %1404 = vmatprep.subr.bf16.mxu0 0
        %1405 = vmatpush1.bf16.msra.mxu0 %v1198
        %1406 = vmatprep.subr.bf16.mxu0 0
        %1407 = vmatpush1.bf16.msra.mxu0 %v1199
        %1408 = vmatprep.subr.bf16.mxu0 0
        %1409 = vmatpush1.bf16.msra.mxu0 %v1200
        %1410 = vmatprep.mubr.bf16.mxu0 %v697
        %1411 = vmatmul.mubr.bf16.gmra.mrb[0].mxu0 %v696
        %v1412 = vpop.f32.mrb[0].mxu0
        %v1413 = vadd.f32 %v1348, %v1412
        %v1414 = vpop.f32.mrb[0].mxu0
        %v1415 = vpop.f32.mrb[0].mxu0
        %v1416 = vadd.f32 %v1351, %v1415
        %v1417 = vpop.f32.mrb[0].mxu0
        %1418 = vmatprep.mubr.bf16.mxu0 %v706
        %1419 = vmatmul.mubr.bf16.gmra.mrb[0].mxu0 %v705
        %v1420 = vpop.f32.mrb[0].mxu0
        %v1421 = vadd.f32 %v1356, %v1420
        %v1422 = vpop.f32.mrb[0].mxu0
        %v1423 = vpop.f32.mrb[0].mxu0
        %v1424 = vadd.f32 %v1359, %v1423
        %v1425 = vpop.f32.mrb[0].mxu0
        %1426 = vmatprep.mubr.bf16.mxu0 %v715
        %1427 = vmatmul.mubr.bf16.gmra.mrb[0].mxu0 %v714
        %v1428 = vpop.f32.mrb[0].mxu0
        %v1429 = vadd.f32 %v1364, %v1428
        %v1430 = vpop.f32.mrb[0].mxu0
        %v1431 = vpop.f32.mrb[0].mxu0
        %v1432 = vadd.f32 %v1367, %v1431
        %v1433 = vpop.f32.mrb[0].mxu0
        %1434 = vmatprep.mubr.bf16.mxu0 %v724
        %1435 = vmatmul.mubr.bf16.gmra.mrb[0].mxu0 %v723
        %v1436 = vpop.f32.mrb[0].mxu0
        %v1437 = vadd.f32 %v1372, %v1436
        %v1438 = vpop.f32.mrb[0].mxu0
        %v1439 = vpop.f32.mrb[0].mxu0
        %v1440 = vadd.f32 %v1375, %v1439
        %v1441 = vpop.f32.mrb[0].mxu0
        %1442 = vdwg.mxu0
        %1443 = vmatprep.subr.bf16.mxu0 0
        %1444 = vmatpush1.bf16.msra.mxu0 %v1201
        %1445 = vmatprep.subr.bf16.mxu0 0
        %1446 = vmatpush1.bf16.msra.mxu0 %v1202
        %1447 = vmatprep.subr.bf16.mxu0 0
        %1448 = vmatpush1.bf16.msra.mxu0 %v1203
        %1449 = vmatprep.subr.bf16.mxu0 0
        %1450 = vmatpush1.bf16.msra.mxu0 %v1204
        %1451 = vmatprep.subr.bf16.mxu0 0
        %1452 = vmatpush1.bf16.msra.mxu0 %v1205
        %1453 = vmatprep.subr.bf16.mxu0 0
        %1454 = vmatpush1.bf16.msra.mxu0 %v1206
        %1455 = vmatprep.subr.bf16.mxu0 0
        %1456 = vmatpush1.bf16.msra.mxu0 %v1207
        %1457 = vmatprep.subr.bf16.mxu0 0
        %1458 = vmatpush1.bf16.msra.mxu0 %v1208
        %1459 = vmatprep.subr.bf16.mxu0 0
        %1460 = vmatpush1.bf16.msra.mxu0 %v1209
        %1461 = vmatprep.subr.bf16.mxu0 0
        %1462 = vmatpush1.bf16.msra.mxu0 %v1210
        %1463 = vmatprep.subr.bf16.mxu0 0
        %1464 = vmatpush1.bf16.msra.mxu0 %v1211
        %1465 = vmatprep.subr.bf16.mxu0 0
        %1466 = vmatpush1.bf16.msra.mxu0 %v1212
        %1467 = vmatprep.subr.bf16.mxu0 0
        %1468 = vmatpush1.bf16.msra.mxu0 %v1213
        %1469 = vmatprep.subr.bf16.mxu0 0
        %1470 = vmatpush1.bf16.msra.mxu0 %v1214
        %1471 = vmatprep.subr.bf16.mxu0 0
        %1472 = vmatpush1.bf16.msra.mxu0 %v1215
        %1473 = vmatprep.subr.bf16.mxu0 0
        %1474 = vmatpush1.bf16.msra.mxu0 %v1216
        %1475 = vmatprep.mubr.bf16.mxu0 %v699
        %1476 = vmatmul.mubr.bf16.gmra.mrb[0].mxu0 %v698
        %v1477 = vpop.f32.mrb[0].mxu0
        %v1478 = vadd.f32 %v1413, %v1477
        %v1479 = vpop.f32.mrb[0].mxu0
        %v1480 = vpop.f32.mrb[0].mxu0
        %v1481 = vadd.f32 %v1416, %v1480
        %v1482 = vpop.f32.mrb[0].mxu0
        %1483 = vmatprep.mubr.bf16.mxu0 %v708
        %1484 = vmatmul.mubr.bf16.gmra.mrb[0].mxu0 %v707
        %v1485 = vpop.f32.mrb[0].mxu0
        %v1486 = vadd.f32 %v1421, %v1485
        %v1487 = vpop.f32.mrb[0].mxu0
        %v1488 = vpop.f32.mrb[0].mxu0
        %v1489 = vadd.f32 %v1424, %v1488
        %v1490 = vpop.f32.mrb[0].mxu0
        %1491 = vmatprep.mubr.bf16.mxu0 %v717
        %1492 = vmatmul.mubr.bf16.gmra.mrb[0].mxu0 %v716
        %v1493 = vpop.f32.mrb[0].mxu0
        %v1494 = vadd.f32 %v1429, %v1493
        %v1495 = vpop.f32.mrb[0].mxu0
        %v1496 = vpop.f32.mrb[0].mxu0
        %v1497 = vadd.f32 %v1432, %v1496
        %v1498 = vpop.f32.mrb[0].mxu0
        %1499 = vmatprep.mubr.bf16.mxu0 %v726
        %1500 = vmatmul.mubr.bf16.gmra.mrb[0].mxu0 %v725
        %v1501 = vpop.f32.mrb[0].mxu0
        %v1502 = vadd.f32 %v1437, %v1501
        %v1503 = vpop.f32.mrb[0].mxu0
        %v1504 = vpop.f32.mrb[0].mxu0
        %v1505 = vadd.f32 %v1440, %v1504
        %v1506 = vpop.f32.mrb[0].mxu0
        %1507 = vdwg.mxu0
        %1508 = vmatprep.subr.bf16.mxu0 0
        %1509 = vmatpush1.bf16.msra.mxu0 %v1217
        %1510 = vmatprep.subr.bf16.mxu0 0
        %1511 = vmatpush1.bf16.msra.mxu0 %v1218
        %1512 = vmatprep.subr.bf16.mxu0 0
        %1513 = vmatpush1.bf16.msra.mxu0 %v1219
        %1514 = vmatprep.subr.bf16.mxu0 0
        %1515 = vmatpush1.bf16.msra.mxu0 %v1220
        %1516 = vmatprep.subr.bf16.mxu0 0
        %1517 = vmatpush1.bf16.msra.mxu0 %v1221
        %1518 = vmatprep.subr.bf16.mxu0 0
        %1519 = vmatpush1.bf16.msra.mxu0 %v1222
        %1520 = vmatprep.subr.bf16.mxu0 0
        %1521 = vmatpush1.bf16.msra.mxu0 %v1223
        %1522 = vmatprep.subr.bf16.mxu0 0
        %1523 = vmatpush1.bf16.msra.mxu0 %v1224
        %1524 = vmatprep.subr.bf16.mxu0 0
        %1525 = vmatpush1.bf16.msra.mxu0 %v1225
        %1526 = vmatprep.subr.bf16.mxu0 0
        %1527 = vmatpush1.bf16.msra.mxu0 %v1226
        %1528 = vmatprep.subr.bf16.mxu0 0
        %1529 = vmatpush1.bf16.msra.mxu0 %v1227
        %1530 = vmatprep.subr.bf16.mxu0 0
        %1531 = vmatpush1.bf16.msra.mxu0 %v1228
        %1532 = vmatprep.subr.bf16.mxu0 0
        %1533 = vmatpush1.bf16.msra.mxu0 %v1229
        %1534 = vmatprep.subr.bf16.mxu0 0
        %1535 = vmatpush1.bf16.msra.mxu0 %v1230
        %1536 = vmatprep.subr.bf16.mxu0 0
        %1537 = vmatpush1.bf16.msra.mxu0 %v1231
        %1538 = vmatprep.subr.bf16.mxu0 0
        %1539 = vmatpush1.bf16.msra.mxu0 %v1232
        %1540 = vmatprep.mubr.bf16.mxu0 %v701
        %1541 = vmatmul.mubr.bf16.gmra.mrb[0].mxu0 %v700
        %v1542 = vpop.f32.mrb[0].mxu0
        %v1543 = vadd.f32 %v1478, %v1542
        %v1544 = vpop.f32.mrb[0].mxu0
        %v1545 = vpop.f32.mrb[0].mxu0
        %v1546 = vadd.f32 %v1481, %v1545
        %v1547 = vpop.f32.mrb[0].mxu0
        %1548 = vmatprep.mubr.bf16.mxu0 %v710
        %1549 = vmatmul.mubr.bf16.gmra.mrb[0].mxu0 %v709
        %v1550 = vpop.f32.mrb[0].mxu0
        %v1551 = vadd.f32 %v1486, %v1550
        %v1552 = vpop.f32.mrb[0].mxu0
        %v1553 = vpop.f32.mrb[0].mxu0
        %v1554 = vadd.f32 %v1489, %v1553
        %v1555 = vpop.f32.mrb[0].mxu0
        %1556 = vmatprep.mubr.bf16.mxu0 %v719
        %1557 = vmatmul.mubr.bf16.gmra.mrb[0].mxu0 %v718
        %v1558 = vpop.f32.mrb[0].mxu0
        %v1559 = vadd.f32 %v1494, %v1558
        %v1560 = vpop.f32.mrb[0].mxu0
        %v1561 = vpop.f32.mrb[0].mxu0
        %v1562 = vadd.f32 %v1497, %v1561
        %v1563 = vpop.f32.mrb[0].mxu0
        %1564 = vmatprep.mubr.bf16.mxu0 %v728
        %1565 = vmatmul.mubr.bf16.gmra.mrb[0].mxu0 %v727
        %v1566 = vpop.f32.mrb[0].mxu0
        %v1567 = vadd.f32 %v1502, %v1566
        %v1568 = vpop.f32.mrb[0].mxu0
        %v1569 = vpop.f32.mrb[0].mxu0
        %v1570 = vadd.f32 %v1505, %v1569
        %v1571 = vpop.f32.mrb[0].mxu0
        %1572 = vdwg.mxu0
        %1573 = vmatprep.subr.bf16.mxu0 0
        %1574 = vmatpush1.bf16.msra.mxu0 %v1233
        %1575 = vmatprep.subr.bf16.mxu0 0
        %1576 = vmatpush1.bf16.msra.mxu0 %v1234
        %1577 = vmatprep.subr.bf16.mxu0 0
        %1578 = vmatpush1.bf16.msra.mxu0 %v1235
        %1579 = vmatprep.subr.bf16.mxu0 0
        %1580 = vmatpush1.bf16.msra.mxu0 %v1236
        %1581 = vmatprep.subr.bf16.mxu0 0
        %1582 = vmatpush1.bf16.msra.mxu0 %v1237
        %1583 = vmatprep.subr.bf16.mxu0 0
        %1584 = vmatpush1.bf16.msra.mxu0 %v1238
        %1585 = vmatprep.subr.bf16.mxu0 0
        %1586 = vmatpush1.bf16.msra.mxu0 %v1239
        %1587 = vmatprep.subr.bf16.mxu0 0
        %1588 = vmatpush1.bf16.msra.mxu0 %v1240
        %1589 = vmatprep.subr.bf16.mxu0 0
        %1590 = vmatpush1.bf16.msra.mxu0 0
        %1591 = vmatprep.subr.bf16.mxu0 0
        %1592 = vmatpush1.bf16.msra.mxu0 0
        %1593 = vmatprep.subr.bf16.mxu0 0
        %1594 = vmatpush1.bf16.msra.mxu0 0
        %1595 = vmatprep.subr.bf16.mxu0 0
        %1596 = vmatpush1.bf16.msra.mxu0 0
        %1597 = vmatprep.subr.bf16.mxu0 0
        %1598 = vmatpush1.bf16.msra.mxu0 0
        %1599 = vmatprep.subr.bf16.mxu0 0
        %1600 = vmatpush1.bf16.msra.mxu0 0
        %1601 = vmatprep.subr.bf16.mxu0 0
        %1602 = vmatpush1.bf16.msra.mxu0 0
        %1603 = vmatprep.subr.bf16.mxu0 0
        %1604 = vmatpush1.bf16.msra.mxu0 0
        %1605 = vmatprep.mubr.bf16.mxu0 0
        %1606 = vmatmul.mubr.bf16.gmra.mrb[0].mxu0 %v702
        %v1607 = vpop.f32.mrb[0].mxu0
        %v1608 = vadd.f32 %v1543, %v1607
        %v1609 = vpop.f32.mrb[0].mxu0
        %v1610 = vpop.f32.mrb[0].mxu0
        %v1611 = vadd.f32 %v1546, %v1610
        %v1612 = vpop.f32.mrb[0].mxu0
        %1613 = vmatprep.mubr.bf16.mxu0 0
        %1614 = vmatmul.mubr.bf16.gmra.mrb[0].mxu0 %v711
        %v1615 = vpop.f32.mrb[0].mxu0
        %v1616 = vadd.f32 %v1551, %v1615
        %v1617 = vpop.f32.mrb[0].mxu0
        %v1618 = vpop.f32.mrb[0].mxu0
        %v1619 = vadd.f32 %v1554, %v1618
        %v1620 = vpop.f32.mrb[0].mxu0
        %1621 = vmatprep.mubr.bf16.mxu0 0
        %1622 = vmatmul.mubr.bf16.gmra.mrb[0].mxu0 %v720
        %v1623 = vpop.f32.mrb[0].mxu0
        %v1624 = vadd.f32 %v1559, %v1623
        %v1625 = vpop.f32.mrb[0].mxu0
        %v1626 = vpop.f32.mrb[0].mxu0
        %v1627 = vadd.f32 %v1562, %v1626
        %v1628 = vpop.f32.mrb[0].mxu0
        %1629 = vmatprep.mubr.bf16.mxu0 0
        %1630 = vmatmul.mubr.bf16.gmra.mrb[0].mxu0 %v729
        %v1631 = vpop.f32.mrb[0].mxu0
        %v1632 = vadd.f32 %v1567, %v1631
        %v1633 = vpop.f32.mrb[0].mxu0
        %v1634 = vpop.f32.mrb[0].mxu0
        %v1635 = vadd.f32 %v1570, %v1634
        %v1636 = vpop.f32.mrb[0].mxu0
        %1637 = vdwg.mxu0
        %v1638 = vmax.f32 %v1608, 0.0
        %v1639 = vmax.f32 %v1611, 0.0
        %v1640 = vmax.f32 %v1616, 0.0
        %v1641 = vmax.f32 %v1619, 0.0
        %v1642 = vmax.f32 %v1624, 0.0
        %v1643 = vmax.f32 %v1627, 0.0
        %v1644 = vmax.f32 %v1632, 0.0
        %v1645 = vmax.f32 %v1635, 0.0
        %v1646 = vld [vmem:[%s7] sm:$0x1]
        %v1647 = vld [vmem:[%s9] sm:$0x1]
        %s1648 = scalar_lea.vmem [#allocation4], 16
        %1649 = vst [vmem:[%s1648 + $0x1] sm:$0xff] %v1638
        %s1650 = scalar_lea.vmem [#allocation4], 32
        %1651 = vst [vmem:[%s1650 + $0x1] sm:$0xff] %v1639
        %s1652 = scalar_lea.vmem [#allocation4], 48
        %1653 = vst [vmem:[%s1652 + $0x1] sm:$0xff] %v1640
        %s1654 = scalar_lea.vmem [#allocation4], 64
        %1655 = vst [vmem:[%s1654 + $0x1] sm:$0xff] %v1641
        %s1656 = scalar_lea.vmem [#allocation4], 80
        %1657 = vst [vmem:[%s1656 + $0x1] sm:$0xff] %v1642
        %s1658 = scalar_lea.vmem [#allocation4], 96
        %1659 = vst [vmem:[%s1658 + $0x1] sm:$0xff] %v1643
        %s1660 = scalar_lea.vmem [#allocation4], 112
        %1661 = vst [vmem:[%s1660 + $0x1] sm:$0xff] %v1644
        %s1662 = scalar_lea.vmem [#allocation4], 128
        %1663 = vst [vmem:[%s1662 + $0x1] sm:$0xff] %v1645
        %v1664 = vld [vmem:[#allocation4] sm:$0xff]
        %v1665 = vld [vmem:[#allocation4 + $0x10] sm:$0xff]
        %v1666 = vld [vmem:[#allocation4 + $0x20] sm:$0xff]
        %v1667 = vld [vmem:[#allocation4 + $0x30] sm:$0xff]
        %v1668 = vld [vmem:[#allocation4 + $0x40] sm:$0xff]
        %v1669 = vld [vmem:[#allocation4 + $0x50] sm:$0xff]
        %v1670 = vld [vmem:[#allocation4 + $0x60] sm:$0xff]
        %v1671 = vld [vmem:[#allocation4 + $0x70] sm:$0xff]
        %v1672 = vld [vmem:[%s6] sm:$0x1]
        %v1673 = vlaneseq
        %v1674 = vshrl.u32 %v1673, 7
        %v1675 = vsub.s32 0, %v1674
        %v1676 = vrot.slane %v1672, %v1675
        %v1677 = vmul.f32 %v1664, %v1676
        %v1678 = vmul.f32 %v1665, %v1676
        %v1679 = vmul.f32 %v1666, %v1676
        %v1680 = vmul.f32 %v1667, %v1676
        %v1681 = vmul.f32 %v1668, %v1676
        %v1682 = vmul.f32 %v1669, %v1676
        %v1683 = vmul.f32 %v1670, %v1676
        %v1684 = vmul.f32 %v1671, %v1676
        %v1685 = vadd.f32 %v1677, 0.0
        %v1686 = vadd.f32 %v1678, 0.0
        %v1687 = vadd.f32 %v1679, 0.0
        %v1688 = vadd.f32 %v1680, 0.0
        %v1689 = vadd.f32 %v1681, 0.0
        %v1690 = vadd.f32 %v1682, 0.0
        %v1691 = vadd.f32 %v1683, 0.0
        %v1692 = vadd.f32 %v1684, 0.0
        %v1693 = vld [vmem:[#allocation4 + $0x1] sm:$0xff]
        %v1694 = vld [vmem:[#allocation4 + $0x11] sm:$0xff]
        %v1695 = vld [vmem:[#allocation4 + $0x21] sm:$0xff]
        %v1696 = vld [vmem:[#allocation4 + $0x31] sm:$0xff]
        %v1697 = vld [vmem:[#allocation4 + $0x41] sm:$0xff]
        %v1698 = vld [vmem:[#allocation4 + $0x51] sm:$0xff]
        %v1699 = vld [vmem:[#allocation4 + $0x61] sm:$0xff]
        %v1700 = vld [vmem:[#allocation4 + $0x71] sm:$0xff]
        %v1701 = vld [vmem:[%s6 + $0x1] sm:$0x1]
        %v1702 = vlaneseq
        %v1703 = vshrl.u32 %v1702, 7
        %v1704 = vsub.s32 0, %v1703
        %v1705 = vrot.slane %v1701, %v1704
        %v1706 = vmul.f32 %v1693, %v1705
        %v1707 = vmul.f32 %v1694, %v1705
        %v1708 = vmul.f32 %v1695, %v1705
        %v1709 = vmul.f32 %v1696, %v1705
        %v1710 = vmul.f32 %v1697, %v1705
        %v1711 = vmul.f32 %v1698, %v1705
        %v1712 = vmul.f32 %v1699, %v1705
        %v1713 = vmul.f32 %v1700, %v1705
        %v1714 = vadd.f32 %v1685, %v1706
        %v1715 = vadd.f32 %v1686, %v1707
        %v1716 = vadd.f32 %v1687, %v1708
        %v1717 = vadd.f32 %v1688, %v1709
        %v1718 = vadd.f32 %v1689, %v1710
        %v1719 = vadd.f32 %v1690, %v1711
        %v1720 = vadd.f32 %v1691, %v1712
        %v1721 = vadd.f32 %v1692, %v1713
        %v1722 = vld [vmem:[#allocation4 + $0x2] sm:$0xff]
        %v1723 = vld [vmem:[#allocation4 + $0x12] sm:$0xff]
        %v1724 = vld [vmem:[#allocation4 + $0x22] sm:$0xff]
        %v1725 = vld [vmem:[#allocation4 + $0x32] sm:$0xff]
        %v1726 = vld [vmem:[#allocation4 + $0x42] sm:$0xff]
        %v1727 = vld [vmem:[#allocation4 + $0x52] sm:$0xff]
        %v1728 = vld [vmem:[#allocation4 + $0x62] sm:$0xff]
        %v1729 = vld [vmem:[#allocation4 + $0x72] sm:$0xff]
        %v1730 = vld [vmem:[%s6 + $0x2] sm:$0x1]
        %v1731 = vlaneseq
        %v1732 = vshrl.u32 %v1731, 7
        %v1733 = vsub.s32 0, %v1732
        %v1734 = vrot.slane %v1730, %v1733
        %v1735 = vmul.f32 %v1722, %v1734
        %v1736 = vmul.f32 %v1723, %v1734
        %v1737 = vmul.f32 %v1724, %v1734
        %v1738 = vmul.f32 %v1725, %v1734
        %v1739 = vmul.f32 %v1726, %v1734
        %v1740 = vmul.f32 %v1727, %v1734
        %v1741 = vmul.f32 %v1728, %v1734
        %v1742 = vmul.f32 %v1729, %v1734
        %v1743 = vadd.f32 %v1714, %v1735
        %v1744 = vadd.f32 %v1715, %v1736
        %v1745 = vadd.f32 %v1716, %v1737
        %v1746 = vadd.f32 %v1717, %v1738
        %v1747 = vadd.f32 %v1718, %v1739
        %v1748 = vadd.f32 %v1719, %v1740
        %v1749 = vadd.f32 %v1720, %v1741
        %v1750 = vadd.f32 %v1721, %v1742
        %v1751 = vld [vmem:[%s1648] sm:$0xff]
        %v1752 = vld [vmem:[%s1648 + $0x10] sm:$0xff]
        %v1753 = vld [vmem:[%s1648 + $0x20] sm:$0xff]
        %v1754 = vld [vmem:[%s1648 + $0x30] sm:$0xff]
        %v1755 = vld [vmem:[%s1648 + $0x40] sm:$0xff]
        %v1756 = vld [vmem:[%s1648 + $0x50] sm:$0xff]
        %v1757 = vld [vmem:[%s1648 + $0x60] sm:$0xff]
        %v1758 = vld [vmem:[%s1648 + $0x70] sm:$0xff]
        %v1759 = vld [vmem:[%s6 + $0x3] sm:$0x1]
        %v1760 = vlaneseq
        %v1761 = vshrl.u32 %v1760, 7
        %v1762 = vsub.s32 0, %v1761
        %v1763 = vrot.slane %v1759, %v1762
        %v1764 = vmul.f32 %v1751, %v1763
        %v1765 = vmul.f32 %v1752, %v1763
        %v1766 = vmul.f32 %v1753, %v1763
        %v1767 = vmul.f32 %v1754, %v1763
        %v1768 = vmul.f32 %v1755, %v1763
        %v1769 = vmul.f32 %v1756, %v1763
        %v1770 = vmul.f32 %v1757, %v1763
        %v1771 = vmul.f32 %v1758, %v1763
        %v1772 = vadd.f32 %v1743, %v1764
        %v1773 = vadd.f32 %v1744, %v1765
        %v1774 = vadd.f32 %v1745, %v1766
        %v1775 = vadd.f32 %v1746, %v1767
        %v1776 = vadd.f32 %v1747, %v1768
        %v1777 = vadd.f32 %v1748, %v1769
        %v1778 = vadd.f32 %v1749, %v1770
        %v1779 = vadd.f32 %v1750, %v1771
        %v1780 = vld [vmem:[%s1648 + $0x1] sm:$0xff]
        %v1781 = vld [vmem:[%s1648 + $0x11] sm:$0xff]
        %v1782 = vld [vmem:[%s1648 + $0x21] sm:$0xff]
        %v1783 = vld [vmem:[%s1648 + $0x31] sm:$0xff]
        %v1784 = vld [vmem:[%s1648 + $0x41] sm:$0xff]
        %v1785 = vld [vmem:[%s1648 + $0x51] sm:$0xff]
        %v1786 = vld [vmem:[%s1648 + $0x61] sm:$0xff]
        %v1787 = vld [vmem:[%s1648 + $0x71] sm:$0xff]
        %v1788 = vld [vmem:[%s6 + $0x4] sm:$0x1]
        %v1789 = vlaneseq
        %v1790 = vshrl.u32 %v1789, 7
        %v1791 = vsub.s32 0, %v1790
        %v1792 = vrot.slane %v1788, %v1791
        %v1793 = vmul.f32 %v1780, %v1792
        %v1794 = vmul.f32 %v1781, %v1792
        %v1795 = vmul.f32 %v1782, %v1792
        %v1796 = vmul.f32 %v1783, %v1792
        %v1797 = vmul.f32 %v1784, %v1792
        %v1798 = vmul.f32 %v1785, %v1792
        %v1799 = vmul.f32 %v1786, %v1792
        %v1800 = vmul.f32 %v1787, %v1792
        %v1801 = vadd.f32 %v1772, %v1793
        %v1802 = vadd.f32 %v1773, %v1794
        %v1803 = vadd.f32 %v1774, %v1795
        %v1804 = vadd.f32 %v1775, %v1796
        %v1805 = vadd.f32 %v1776, %v1797
        %v1806 = vadd.f32 %v1777, %v1798
        %v1807 = vadd.f32 %v1778, %v1799
        %v1808 = vadd.f32 %v1779, %v1800
        %v1809 = vld [vmem:[%s1648 + $0x2] sm:$0xff]
        %v1810 = vld [vmem:[%s1648 + $0x12] sm:$0xff]
        %v1811 = vld [vmem:[%s1648 + $0x22] sm:$0xff]
        %v1812 = vld [vmem:[%s1648 + $0x32] sm:$0xff]
        %v1813 = vld [vmem:[%s1648 + $0x42] sm:$0xff]
        %v1814 = vld [vmem:[%s1648 + $0x52] sm:$0xff]
        %v1815 = vld [vmem:[%s1648 + $0x62] sm:$0xff]
        %v1816 = vld [vmem:[%s1648 + $0x72] sm:$0xff]
        %v1817 = vld [vmem:[%s6 + $0x5] sm:$0x1]
        %v1818 = vlaneseq
        %v1819 = vshrl.u32 %v1818, 7
        %v1820 = vsub.s32 0, %v1819
        %v1821 = vrot.slane %v1817, %v1820
        %v1822 = vmul.f32 %v1809, %v1821
        %v1823 = vmul.f32 %v1810, %v1821
        %v1824 = vmul.f32 %v1811, %v1821
        %v1825 = vmul.f32 %v1812, %v1821
        %v1826 = vmul.f32 %v1813, %v1821
        %v1827 = vmul.f32 %v1814, %v1821
        %v1828 = vmul.f32 %v1815, %v1821
        %v1829 = vmul.f32 %v1816, %v1821
        %v1830 = vadd.f32 %v1801, %v1822
        %v1831 = vadd.f32 %v1802, %v1823
        %v1832 = vadd.f32 %v1803, %v1824
        %v1833 = vadd.f32 %v1804, %v1825
        %v1834 = vadd.f32 %v1805, %v1826
        %v1835 = vadd.f32 %v1806, %v1827
        %v1836 = vadd.f32 %v1807, %v1828
        %v1837 = vadd.f32 %v1808, %v1829
        %v1838 = vld [vmem:[%s1650] sm:$0xff]
        %v1839 = vld [vmem:[%s1650 + $0x10] sm:$0xff]
        %v1840 = vld [vmem:[%s1650 + $0x20] sm:$0xff]
        %v1841 = vld [vmem:[%s1650 + $0x30] sm:$0xff]
        %v1842 = vld [vmem:[%s1650 + $0x40] sm:$0xff]
        %v1843 = vld [vmem:[%s1650 + $0x50] sm:$0xff]
        %v1844 = vld [vmem:[%s1650 + $0x60] sm:$0xff]
        %v1845 = vld [vmem:[%s1650 + $0x70] sm:$0xff]
        %v1846 = vld [vmem:[%s6 + $0x6] sm:$0x1]
        %v1847 = vlaneseq
        %v1848 = vshrl.u32 %v1847, 7
        %v1849 = vsub.s32 0, %v1848
        %v1850 = vrot.slane %v1846, %v1849
        %v1851 = vmul.f32 %v1838, %v1850
        %v1852 = vmul.f32 %v1839, %v1850
        %v1853 = vmul.f32 %v1840, %v1850
        %v1854 = vmul.f32 %v1841, %v1850
        %v1855 = vmul.f32 %v1842, %v1850
        %v1856 = vmul.f32 %v1843, %v1850
        %v1857 = vmul.f32 %v1844, %v1850
        %v1858 = vmul.f32 %v1845, %v1850
        %v1859 = vadd.f32 %v1830, %v1851
        %v1860 = vadd.f32 %v1831, %v1852
        %v1861 = vadd.f32 %v1832, %v1853
        %v1862 = vadd.f32 %v1833, %v1854
        %v1863 = vadd.f32 %v1834, %v1855
        %v1864 = vadd.f32 %v1835, %v1856
        %v1865 = vadd.f32 %v1836, %v1857
        %v1866 = vadd.f32 %v1837, %v1858
        %v1867 = vld [vmem:[%s1650 + $0x1] sm:$0xff]
        %v1868 = vld [vmem:[%s1650 + $0x11] sm:$0xff]
        %v1869 = vld [vmem:[%s1650 + $0x21] sm:$0xff]
        %v1870 = vld [vmem:[%s1650 + $0x31] sm:$0xff]
        %v1871 = vld [vmem:[%s1650 + $0x41] sm:$0xff]
        %v1872 = vld [vmem:[%s1650 + $0x51] sm:$0xff]
        %v1873 = vld [vmem:[%s1650 + $0x61] sm:$0xff]
        %v1874 = vld [vmem:[%s1650 + $0x71] sm:$0xff]
        %v1875 = vld [vmem:[%s6 + $0x7] sm:$0x1]
        %v1876 = vlaneseq
        %v1877 = vshrl.u32 %v1876, 7
        %v1878 = vsub.s32 0, %v1877
        %v1879 = vrot.slane %v1875, %v1878
        %v1880 = vmul.f32 %v1867, %v1879
        %v1881 = vmul.f32 %v1868, %v1879
        %v1882 = vmul.f32 %v1869, %v1879
        %v1883 = vmul.f32 %v1870, %v1879
        %v1884 = vmul.f32 %v1871, %v1879
        %v1885 = vmul.f32 %v1872, %v1879
        %v1886 = vmul.f32 %v1873, %v1879
        %v1887 = vmul.f32 %v1874, %v1879
        %v1888 = vadd.f32 %v1859, %v1880
        %v1889 = vadd.f32 %v1860, %v1881
        %v1890 = vadd.f32 %v1861, %v1882
        %v1891 = vadd.f32 %v1862, %v1883
        %v1892 = vadd.f32 %v1863, %v1884
        %v1893 = vadd.f32 %v1864, %v1885
        %v1894 = vadd.f32 %v1865, %v1886
        %v1895 = vadd.f32 %v1866, %v1887
        %v1896 = vld [vmem:[%s1650 + $0x2] sm:$0xff]
        %v1897 = vld [vmem:[%s1650 + $0x12] sm:$0xff]
        %v1898 = vld [vmem:[%s1650 + $0x22] sm:$0xff]
        %v1899 = vld [vmem:[%s1650 + $0x32] sm:$0xff]
        %v1900 = vld [vmem:[%s1650 + $0x42] sm:$0xff]
        %v1901 = vld [vmem:[%s1650 + $0x52] sm:$0xff]
        %v1902 = vld [vmem:[%s1650 + $0x62] sm:$0xff]
        %v1903 = vld [vmem:[%s1650 + $0x72] sm:$0xff]
        %v1904 = vld [vmem:[%s6 + $0x8] sm:$0x1]
        %v1905 = vlaneseq
        %v1906 = vshrl.u32 %v1905, 7
        %v1907 = vsub.s32 0, %v1906
        %v1908 = vrot.slane %v1904, %v1907
        %v1909 = vmul.f32 %v1896, %v1908
        %v1910 = vmul.f32 %v1897, %v1908
        %v1911 = vmul.f32 %v1898, %v1908
        %v1912 = vmul.f32 %v1899, %v1908
        %v1913 = vmul.f32 %v1900, %v1908
        %v1914 = vmul.f32 %v1901, %v1908
        %v1915 = vmul.f32 %v1902, %v1908
        %v1916 = vmul.f32 %v1903, %v1908
        %v1917 = vadd.f32 %v1888, %v1909
        %v1918 = vadd.f32 %v1889, %v1910
        %v1919 = vadd.f32 %v1890, %v1911
        %v1920 = vadd.f32 %v1891, %v1912
        %v1921 = vadd.f32 %v1892, %v1913
        %v1922 = vadd.f32 %v1893, %v1914
        %v1923 = vadd.f32 %v1894, %v1915
        %v1924 = vadd.f32 %v1895, %v1916
        %v1925 = vlaneseq
        %v1926 = vshrl.u32 %v1925, 7
        %v1927 = vsub.s32 0, %v1926
        %v1928 = vrot.slane %v1646, %v1927
        %v1929 = vadd.f32 %v1917, %v1928
        %v1930 = vadd.f32 %v1918, %v1928
        %v1931 = vadd.f32 %v1919, %v1928
        %v1932 = vadd.f32 %v1920, %v1928
        %v1933 = vadd.f32 %v1921, %v1928
        %v1934 = vadd.f32 %v1922, %v1928
        %v1935 = vadd.f32 %v1923, %v1928
        %v1936 = vadd.f32 %v1924, %v1928
        %v1937 = vmax.f32 %v1929, 0.0
        %v1938 = vmax.f32 %v1930, 0.0
        %v1939 = vmax.f32 %v1931, 0.0
        %v1940 = vmax.f32 %v1932, 0.0
        %v1941 = vmax.f32 %v1933, 0.0
        %v1942 = vmax.f32 %v1934, 0.0
        %v1943 = vmax.f32 %v1935, 0.0
        %v1944 = vmax.f32 %v1936, 0.0
        %1945 = vst [vmem:[#allocation3] sm:$0xff] %v1937
        %1946 = vst [vmem:[#allocation3 + $0x8] sm:$0xff] %v1938
        %1947 = vst [vmem:[#allocation3 + $0x10] sm:$0xff] %v1939
        %1948 = vst [vmem:[#allocation3 + $0x18] sm:$0xff] %v1940
        %1949 = vst [vmem:[#allocation3 + $0x20] sm:$0xff] %v1941
        %1950 = vst [vmem:[#allocation3 + $0x28] sm:$0xff] %v1942
        %1951 = vst [vmem:[#allocation3 + $0x30] sm:$0xff] %v1943
        %1952 = vst [vmem:[#allocation3 + $0x38] sm:$0xff] %v1944
        %v1953 = vld [vmem:[#allocation3] sm:$0xff]
        %v1954 = vld [vmem:[#allocation3 + $0x8] sm:$0xff]
        %v1955 = vld [vmem:[#allocation3 + $0x10] sm:$0xff]
        %v1956 = vld [vmem:[#allocation3 + $0x18] sm:$0xff]
        %v1957 = vld [vmem:[#allocation3 + $0x20] sm:$0xff]
        %v1958 = vld [vmem:[#allocation3 + $0x28] sm:$0xff]
        %v1959 = vld [vmem:[#allocation3 + $0x30] sm:$0xff]
        %v1960 = vld [vmem:[#allocation3 + $0x38] sm:$0xff]
        %v1961 = vpack.c.bf16 %v1954, %v1953
        %v1962 = vpack.c.bf16 %v1956, %v1955
        %v1963 = vpack.c.bf16 %v1958, %v1957
        %v1964 = vpack.c.bf16 %v1960, %v1959
        %v1965 = vld [vmem:[%s8] sm:$0xf]
        %v1966 = vld [vmem:[%s8 + $0x4] sm:$0xf]
        %v1967 = vld [vmem:[%s8 + $0x8] sm:$0xf]
        %v1968 = vld [vmem:[%s8 + $0xc] sm:$0xf]
        %v1969 = vld [vmem:[%s8 + $0x10] sm:$0xf]
        %v1970 = vld [vmem:[%s8 + $0x14] sm:$0xf]
        %v1971 = vld [vmem:[%s8 + $0x18] sm:$0xf]
        %v1972 = vld [vmem:[%s8 + $0x1c] sm:$0xf]
        %v1973 = vld [vmem:[%s8 + $0x20] sm:$0xf]
        %v1974 = vld [vmem:[%s8 + $0x24] sm:$0xf]
        %v1975 = vld [vmem:[%s8 + $0x28] sm:$0xf]
        %v1976 = vld [vmem:[%s8 + $0x2c] sm:$0xf]
        %v1977 = vld [vmem:[%s8 + $0x30] sm:$0xf]
        %v1978 = vld [vmem:[%s8 + $0x34] sm:$0xf]
        %v1979 = vld [vmem:[%s8 + $0x38] sm:$0xf]
        %v1980 = vld [vmem:[%s8 + $0x3c] sm:$0xf]
        %v1981 = vlaneseq
        %v1982 = vshrl.u32 %v1981, 7
        %v1983 = vsub.s32 0, %v1982
        %v1984 = vrot.slane %v1647, %v1983
        %v2001 = vunpack.c.l.b16 %v1965
        %v2002 = vunpack.c.l.b16 %v1966
        %v2003 = vunpack.c.l.b16 %v1967
        %v2004 = vunpack.c.l.b16 %v1968
        %v2005 = vunpack.c.l.b16 %v1969
        %v2006 = vunpack.c.l.b16 %v1970
        %v2007 = vunpack.c.l.b16 %v1971
        %v2008 = vunpack.c.l.b16 %v1972
        %v2009 = vunpack.c.l.b16 %v1973
        %v2010 = vunpack.c.l.b16 %v1974
        %v2011 = vunpack.c.l.b16 %v1975
        %v2012 = vunpack.c.l.b16 %v1976
        %v2013 = vunpack.c.l.b16 %v1977
        %v2014 = vunpack.c.l.b16 %v1978
        %v2015 = vunpack.c.l.b16 %v1979
        %v2016 = vunpack.c.l.b16 %v1980
        %v2017 = vpack.c.b16 %v2002, %v2001
        %v2018 = vpack.c.b16 %v2004, %v2003
        %v2019 = vpack.c.b16 %v2006, %v2005
        %v2020 = vpack.c.b16 %v2008, %v2007
        %v2021 = vpack.c.b16 %v2010, %v2009
        %v2022 = vpack.c.b16 %v2012, %v2011
        %v2023 = vpack.c.b16 %v2014, %v2013
        %v2024 = vpack.c.b16 %v2016, %v2015
        %2033 = vmatprep.subr.bf16.mxu0 0
        %2034 = vmatpush1.bf16.msra.mxu0 %v2017
        %2035 = vmatprep.subr.bf16.mxu0 0
        %2036 = vmatpush1.bf16.msra.mxu0 %v2018
        %2037 = vmatprep.subr.bf16.mxu0 0
        %2038 = vmatpush1.bf16.msra.mxu0 %v2019
        %2039 = vmatprep.subr.bf16.mxu0 0
        %2040 = vmatpush1.bf16.msra.mxu0 %v2020
        %2041 = vmatprep.subr.bf16.mxu0 0
        %2042 = vmatpush1.bf16.msra.mxu0 %v2021
        %2043 = vmatprep.subr.bf16.mxu0 0
        %2044 = vmatpush1.bf16.msra.mxu0 %v2022
        %2045 = vmatprep.subr.bf16.mxu0 0
        %2046 = vmatpush1.bf16.msra.mxu0 %v2023
        %2047 = vmatprep.subr.bf16.mxu0 0
        %2048 = vmatpush1.bf16.msra.mxu0 %v2024
        %2049 = vmatprep.subr.bf16.mxu0 0
        %2050 = vmatpush1.bf16.msra.mxu0 0
        %2051 = vmatprep.subr.bf16.mxu0 0
        %2052 = vmatpush1.bf16.msra.mxu0 0
        %2053 = vmatprep.subr.bf16.mxu0 0
        %2054 = vmatpush1.bf16.msra.mxu0 0
        %2055 = vmatprep.subr.bf16.mxu0 0
        %2056 = vmatpush1.bf16.msra.mxu0 0
        %2057 = vmatprep.subr.bf16.mxu0 0
        %2058 = vmatpush1.bf16.msra.mxu0 0
        %2059 = vmatprep.subr.bf16.mxu0 0
        %2060 = vmatpush1.bf16.msra.mxu0 0
        %2061 = vmatprep.subr.bf16.mxu0 0
        %2062 = vmatpush1.bf16.msra.mxu0 0
        %2063 = vmatprep.subr.bf16.mxu0 0
        %2064 = vmatpush1.bf16.msra.mxu0 0
        %2065 = vmatprep.mubr.bf16.mxu0 0
        %2066 = vmatmul.mubr.bf16.gmra.mrb[0].mxu0 %v1961
        %v2067 = vpop.f32.mrb[0].mxu0
        %v2068 = vadd.f32 %v1984, %v2067
        %v2069 = vpop.f32.mrb[0].mxu0
        %v2070 = vpop.f32.mrb[0].mxu0
        %v2071 = vadd.f32 %v1984, %v2070
        %v2072 = vpop.f32.mrb[0].mxu0
        %2073 = vmatprep.mubr.bf16.mxu0 0
        %2074 = vmatmul.mubr.bf16.gmra.mrb[0].mxu0 %v1962
        %v2075 = vpop.f32.mrb[0].mxu0
        %v2076 = vadd.f32 %v1984, %v2075
        %v2077 = vpop.f32.mrb[0].mxu0
        %v2078 = vpop.f32.mrb[0].mxu0
        %v2079 = vadd.f32 %v1984, %v2078
        %v2080 = vpop.f32.mrb[0].mxu0
        %2081 = vmatprep.mubr.bf16.mxu0 0
        %2082 = vmatmul.mubr.bf16.gmra.mrb[0].mxu0 %v1963
        %v2083 = vpop.f32.mrb[0].mxu0
        %v2084 = vadd.f32 %v1984, %v2083
        %v2085 = vpop.f32.mrb[0].mxu0
        %v2086 = vpop.f32.mrb[0].mxu0
        %v2087 = vadd.f32 %v1984, %v2086
        %v2088 = vpop.f32.mrb[0].mxu0
        %2089 = vmatprep.mubr.bf16.mxu0 0
        %2090 = vmatmul.mubr.bf16.gmra.mrb[0].mxu0 %v1964
        %v2091 = vpop.f32.mrb[0].mxu0
        %v2092 = vadd.f32 %v1984, %v2091
        %v2093 = vpop.f32.mrb[0].mxu0
        %v2094 = vpop.f32.mrb[0].mxu0
        %v2095 = vadd.f32 %v1984, %v2094
        %v2096 = vpop.f32.mrb[0].mxu0
        %2097 = vdwg.mxu0
        %v2098 = vmax.f32 %v2068, 0.0
        %v2099 = vmax.f32 %v2071, 0.0
        %v2100 = vmax.f32 %v2076, 0.0
        %v2101 = vmax.f32 %v2079, 0.0
        %v2102 = vmax.f32 %v2084, 0.0
        %v2103 = vmax.f32 %v2087, 0.0
        %v2104 = vmax.f32 %v2092, 0.0
        %v2105 = vmax.f32 %v2095, 0.0
        %v2106 = vld [vmem:[%s7 + $0x1] sm:$0x1]
        %v2107 = vld [vmem:[%s9 + $0x1] sm:$0x1]
        %2108 = vst [vmem:[%s1648 + $0x1] sm:$0xff] %v2098
        %2109 = vst [vmem:[%s1650 + $0x1] sm:$0xff] %v2099
        %2110 = vst [vmem:[%s1652 + $0x1] sm:$0xff] %v2100
        %2111 = vst [vmem:[%s1654 + $0x1] sm:$0xff] %v2101
        %2112 = vst [vmem:[%s1656 + $0x1] sm:$0xff] %v2102
        %2113 = vst [vmem:[%s1658 + $0x1] sm:$0xff] %v2103
        %2114 = vst [vmem:[%s1660 + $0x1] sm:$0xff] %v2104
        %2115 = vst [vmem:[%s1662 + $0x1] sm:$0xff] %v2105
        %v2116 = vld [vmem:[#allocation4] sm:$0x1]
        %v2117 = vld [vmem:[%s6 + $0x9] sm:$0x1]
        %v2118 = vmul.f32 %v2116, %v2117
        %v2119 = vadd.f32 %v2118, 0.0
        %v2120 = vld [vmem:[#allocation4 + $0x1] sm:$0x1]
        %v2121 = vld [vmem:[%s6 + $0xa] sm:$0x1]
        %v2122 = vmul.f32 %v2120, %v2121
        %v2123 = vadd.f32 %v2119, %v2122
        %v2124 = vld [vmem:[#allocation4 + $0x2] sm:$0x1]
        %v2125 = vld [vmem:[%s6 + $0xb] sm:$0x1]
        %v2126 = vmul.f32 %v2124, %v2125
        %v2127 = vadd.f32 %v2123, %v2126
        %v2128 = vld [vmem:[%s1648] sm:$0x1]
        %v2129 = vld [vmem:[%s6 + $0xc] sm:$0x1]
        %v2130 = vmul.f32 %v2128, %v2129
        %v2131 = vadd.f32 %v2127, %v2130
        %v2132 = vld [vmem:[%s1648 + $0x1] sm:$0x1]
        %v2133 = vld [vmem:[%s6 + $0xd] sm:$0x1]
        %v2134 = vmul.f32 %v2132, %v2133
        %v2135 = vadd.f32 %v2131, %v2134
        %v2136 = vld [vmem:[%s1648 + $0x2] sm:$0x1]
        %v2137 = vld [vmem:[%s6 + $0xe] sm:$0x1]
        %v2138 = vmul.f32 %v2136, %v2137
        %v2139 = vadd.f32 %v2135, %v2138
        %v2140 = vld [vmem:[%s1650] sm:$0x1]
        %v2141 = vld [vmem:[%s6 + $0xf] sm:$0x1]
        %v2142 = vmul.f32 %v2140, %v2141
        %v2143 = vadd.f32 %v2139, %v2142
        %v2144 = vld [vmem:[%s1650 + $0x1] sm:$0x1]
        %v2145 = vld [vmem:[%s6 + $0x10] sm:$0x1]
        %v2146 = vmul.f32 %v2144, %v2145
        %v2147 = vadd.f32 %v2143, %v2146
        %v2148 = vld [vmem:[%s1650 + $0x2] sm:$0x1]
        %v2149 = vld [vmem:[%s6 + $0x11] sm:$0x1]
        %v2150 = vmul.f32 %v2148, %v2149
        %v2151 = vadd.f32 %v2147, %v2150
        %v2152 = vadd.f32 %v2151, %v2106
        %v2153 = vmax.f32 %v2152, 0.0
        %2154 = vst [vmem:[#allocation3] sm:$0x1] %v2153
        %v2155 = vld [vmem:[#allocation4 + $0x2] sm:$0x1]
        %v2156 = vld [vmem:[%s6 + $0x9] sm:$0x1]
        %v2157 = vmul.f32 %v2155, %v2156
        %v2158 = vadd.f32 %v2157, 0.0
        %v2159 = vld [vmem:[#allocation4 + $0x3] sm:$0x1]
        %v2160 = vld [vmem:[%s6 + $0xa] sm:$0x1]
        %v2161 = vmul.f32 %v2159, %v2160
        %v2162 = vadd.f32 %v2158, %v2161
        %v2163 = vld [vmem:[#allocation4 + $0x4] sm:$0x1]
        %v2164 = vld [vmem:[%s6 + $0xb] sm:$0x1]
        %v2165 = vmul.f32 %v2163, %v2164
        %v2166 = vadd.f32 %v2162, %v2165
        %v2167 = vld [vmem:[%s1648 + $0x2] sm:$0x1]
        %v2168 = vld [vmem:[%s6 + $0xc] sm:$0x1]
        %v2169 = vmul.f32 %v2167, %v2168
        %v2170 = vadd.f32 %v2166, %v2169
        %v2171 = vld [vmem:[%s1648 + $0x3] sm:$0x1]
        %v2172 = vld [vmem:[%s6 + $0xd] sm:$0x1]
        %v2173 = vmul.f32 %v2171, %v2172
        %v2174 = vadd.f32 %v2170, %v2173
        %v2175 = vld [vmem:[%s1648 + $0x4] sm:$0x1]
        %v2176 = vld [vmem:[%s6 + $0xe] sm:$0x1]
        %v2177 = vmul.f32 %v2175, %v2176
        %v2178 = vadd.f32 %v2174, %v2177
        %v2179 = vld [vmem:[%s1650 + $0x2] sm:$0x1]
        %v2180 = vld [vmem:[%s6 + $0xf] sm:$0x1]
        %v2181 = vmul.f32 %v2179, %v2180
        %v2182 = vadd.f32 %v2178, %v2181
        %v2183 = vld [vmem:[%s1650 + $0x3] sm:$0x1]
        %v2184 = vld [vmem:[%s6 + $0x10] sm:$0x1]
        %v2185 = vmul.f32 %v2183, %v2184
        %v2186 = vadd.f32 %v2182, %v2185
        %v2187 = vld [vmem:[%s1650 + $0x4] sm:$0x1]
        %v2188 = vld [vmem:[%s6 + $0x11] sm:$0x1]
        %v2189 = vmul.f32 %v2187, %v2188
        %v2190 = vadd.f32 %v2186, %v2189
        %v2191 = vadd.f32 %v2190, %v2106
        %v2192 = vmax.f32 %v2191, 0.0
        %2193 = vst [vmem:[#allocation3 + $0x1] sm:$0x1] %v2192
        %v2194 = vld [vmem:[#allocation4 + $0x4] sm:$0x1]
        %v2195 = vld [vmem:[%s6 + $0x9] sm:$0x1]
        %v2196 = vmul.f32 %v2194, %v2195
        %v2197 = vadd.f32 %v2196, 0.0
        %v2198 = vld [vmem:[#allocation4 + $0x5] sm:$0x1]
        %v2199 = vld [vmem:[%s6 + $0xa] sm:$0x1]
        %v2200 = vmul.f32 %v2198, %v2199
        %v2201 = vadd.f32 %v2197, %v2200
        %v2202 = vld [vmem:[#allocation4 + $0x6] sm:$0x1]
        %v2203 = vld [vmem:[%s6 + $0xb] sm:$0x1]
        %v2204 = vmul.f32 %v2202, %v2203
        %v2205 = vadd.f32 %v2201, %v2204
        %v2206 = vld [vmem:[%s1648 + $0x4] sm:$0x1]
        %v2207 = vld [vmem:[%s6 + $0xc] sm:$0x1]
        %v2208 = vmul.f32 %v2206, %v2207
        %v2209 = vadd.f32 %v2205, %v2208
        %v2210 = vld [vmem:[%s1648 + $0x5] sm:$0x1]
        %v2211 = vld [vmem:[%s6 + $0xd] sm:$0x1]
        %v2212 = vmul.f32 %v2210, %v2211
        %v2213 = vadd.f32 %v2209, %v2212
        %v2214 = vld [vmem:[%s1648 + $0x6] sm:$0x1]
        %v2215 = vld [vmem:[%s6 + $0xe] sm:$0x1]
        %v2216 = vmul.f32 %v2214, %v2215
        %v2217 = vadd.f32 %v2213, %v2216
        %v2218 = vld [vmem:[%s1650 + $0x4] sm:$0x1]
        %v2219 = vld [vmem:[%s6 + $0xf] sm:$0x1]
        %v2220 = vmul.f32 %v2218, %v2219
        %v2221 = vadd.f32 %v2217, %v2220
        %v2222 = vld [vmem:[%s1650 + $0x5] sm:$0x1]
        %v2223 = vld [vmem:[%s6 + $0x10] sm:$0x1]
        %v2224 = vmul.f32 %v2222, %v2223
        %v2225 = vadd.f32 %v2221, %v2224
        %v2226 = vld [vmem:[%s1650 + $0x6] sm:$0x1]
        %v2227 = vld [vmem:[%s6 + $0x11] sm:$0x1]
        %v2228 = vmul.f32 %v2226, %v2227
        %v2229 = vadd.f32 %v2225, %v2228
        %v2230 = vadd.f32 %v2229, %v2106
        %v2231 = vmax.f32 %v2230, 0.0
        %2232 = vst [vmem:[#allocation3 + $0x2] sm:$0x1] %v2231
        %v2233 = vld [vmem:[#allocation4 + $0x6] sm:$0x1]
        %v2234 = vld [vmem:[%s6 + $0x9] sm:$0x1]
        %v2235 = vmul.f32 %v2233, %v2234
        %v2236 = vadd.f32 %v2235, 0.0
        %v2237 = vld [vmem:[#allocation4 + $0x7] sm:$0x1]
        %v2238 = vld [vmem:[%s6 + $0xa] sm:$0x1]
        %v2239 = vmul.f32 %v2237, %v2238
        %v2240 = vadd.f32 %v2236, %v2239
        %v2241 = vld [vmem:[#allocation4 + $0x8] sm:$0x1]
        %v2242 = vld [vmem:[%s6 + $0xb] sm:$0x1]
        %v2243 = vmul.f32 %v2241, %v2242
        %v2244 = vadd.f32 %v2240, %v2243
        %v2245 = vld [vmem:[%s1648 + $0x6] sm:$0x1]
        %v2246 = vld [vmem:[%s6 + $0xc] sm:$0x1]
        %v2247 = vmul.f32 %v2245, %v2246
        %v2248 = vadd.f32 %v2244, %v2247
        %v2249 = vld [vmem:[%s1648 + $0x7] sm:$0x1]
        %v2250 = vld [vmem:[%s6 + $0xd] sm:$0x1]
        %v2251 = vmul.f32 %v2249, %v2250
        %v2252 = vadd.f32 %v2248, %v2251
        %v2253 = vld [vmem:[%s1648 + $0x8] sm:$0x1]
        %v2254 = vld [vmem:[%s6 + $0xe] sm:$0x1]
        %v2255 = vmul.f32 %v2253, %v2254
        %v2256 = vadd.f32 %v2252, %v2255
        %v2257 = vld [vmem:[%s1650 + $0x6] sm:$0x1]
        %v2258 = vld [vmem:[%s6 + $0xf] sm:$0x1]
        %v2259 = vmul.f32 %v2257, %v2258
        %v2260 = vadd.f32 %v2256, %v2259
        %v2261 = vld [vmem:[%s1650 + $0x7] sm:$0x1]
        %v2262 = vld [vmem:[%s6 + $0x10] sm:$0x1]
        %v2263 = vmul.f32 %v2261, %v2262
        %v2264 = vadd.f32 %v2260, %v2263
        %v2265 = vld [vmem:[%s1650 + $0x8] sm:$0x1]
        %v2266 = vld [vmem:[%s6 + $0x11] sm:$0x1]
        %v2267 = vmul.f32 %v2265, %v2266
        %v2268 = vadd.f32 %v2264, %v2267
        %v2269 = vadd.f32 %v2268, %v2106
        %v2270 = vmax.f32 %v2269, 0.0
        %2271 = vst [vmem:[#allocation3 + $0x3] sm:$0x1] %v2270
        %v2272 = vld [vmem:[%s1650] sm:$0x1]
        %v2273 = vld [vmem:[%s6 + $0x9] sm:$0x1]
        %v2274 = vmul.f32 %v2272, %v2273
        %v2275 = vadd.f32 %v2274, 0.0
        %v2276 = vld [vmem:[%s1650 + $0x1] sm:$0x1]
        %v2277 = vld [vmem:[%s6 + $0xa] sm:$0x1]
        %v2278 = vmul.f32 %v2276, %v2277
        %v2279 = vadd.f32 %v2275, %v2278
        %v2280 = vld [vmem:[%s1650 + $0x2] sm:$0x1]
        %v2281 = vld [vmem:[%s6 + $0xb] sm:$0x1]
        %v2282 = vmul.f32 %v2280, %v2281
        %v2283 = vadd.f32 %v2279, %v2282
        %v2284 = vld [vmem:[%s1652] sm:$0x1]
        %v2285 = vld [vmem:[%s6 + $0xc] sm:$0x1]
        %v2286 = vmul.f32 %v2284, %v2285
        %v2287 = vadd.f32 %v2283, %v2286
        %v2288 = vld [vmem:[%s1652 + $0x1] sm:$0x1]
        %v2289 = vld [vmem:[%s6 + $0xd] sm:$0x1]
        %v2290 = vmul.f32 %v2288, %v2289
        %v2291 = vadd.f32 %v2287, %v2290
        %v2292 = vld [vmem:[%s1652 + $0x2] sm:$0x1]
        %v2293 = vld [vmem:[%s6 + $0xe] sm:$0x1]
        %v2294 = vmul.f32 %v2292, %v2293
        %v2295 = vadd.f32 %v2291, %v2294
        %v2296 = vld [vmem:[%s1654] sm:$0x1]
        %v2297 = vld [vmem:[%s6 + $0xf] sm:$0x1]
        %v2298 = vmul.f32 %v2296, %v2297
        %v2299 = vadd.f32 %v2295, %v2298
        %v2300 = vld [vmem:[%s1654 + $0x1] sm:$0x1]
        %v2301 = vld [vmem:[%s6 + $0x10] sm:$0x1]
        %v2302 = vmul.f32 %v2300, %v2301
        %v2303 = vadd.f32 %v2299, %v2302
        %v2304 = vld [vmem:[%s1654 + $0x2] sm:$0x1]
        %v2305 = vld [vmem:[%s6 + $0x11] sm:$0x1]
        %v2306 = vmul.f32 %v2304, %v2305
        %v2307 = vadd.f32 %v2303, %v2306
        %v2308 = vadd.f32 %v2307, %v2106
        %v2309 = vmax.f32 %v2308, 0.0
        %2310 = vst [vmem:[#allocation3 + $0x4] sm:$0x1] %v2309
        %v2311 = vld [vmem:[%s1650 + $0x2] sm:$0x1]
        %v2312 = vld [vmem:[%s6 + $0x9] sm:$0x1]
        %v2313 = vmul.f32 %v2311, %v2312
        %v2314 = vadd.f32 %v2313, 0.0
        %v2315 = vld [vmem:[%s1650 + $0x3] sm:$0x1]
        %v2316 = vld [vmem:[%s6 + $0xa] sm:$0x1]
        %v2317 = vmul.f32 %v2315, %v2316
        %v2318 = vadd.f32 %v2314, %v2317
        %v2319 = vld [vmem:[%s1650 + $0x4] sm:$0x1]
        %v2320 = vld [vmem:[%s6 + $0xb] sm:$0x1]
        %v2321 = vmul.f32 %v2319, %v2320
        %v2322 = vadd.f32 %v2318, %v2321
        %v2323 = vld [vmem:[%s1652 + $0x2] sm:$0x1]
        %v2324 = vld [vmem:[%s6 + $0xc] sm:$0x1]
        %v2325 = vmul.f32 %v2323, %v2324
        %v2326 = vadd.f32 %v2322, %v2325
        %v2327 = vld [vmem:[%s1652 + $0x3] sm:$0x1]
        %v2328 = vld [vmem:[%s6 + $0xd] sm:$0x1]
        %v2329 = vmul.f32 %v2327, %v2328
        %v2330 = vadd.f32 %v2326, %v2329
        %v2331 = vld [vmem:[%s1652 + $0x4] sm:$0x1]
        %v2332 = vld [vmem:[%s6 + $0xe] sm:$0x1]
        %v2333 = vmul.f32 %v2331, %v2332
        %v2334 = vadd.f32 %v2330, %v2333
        %v2335 = vld [vmem:[%s1654 + $0x2] sm:$0x1]
        %v2336 = vld [vmem:[%s6 + $0xf] sm:$0x1]
        %v2337 = vmul.f32 %v2335, %v2336
        %v2338 = vadd.f32 %v2334, %v2337
        %v2339 = vld [vmem:[%s1654 + $0x3] sm:$0x1]
        %v2340 = vld [vmem:[%s6 + $0x10] sm:$0x1]
        %v2341 = vmul.f32 %v2339, %v2340
        %v2342 = vadd.f32 %v2338, %v2341
        %v2343 = vld [vmem:[%s1654 + $0x4] sm:$0x1]
        %v2344 = vld [vmem:[%s6 + $0x11] sm:$0x1]
        %v2345 = vmul.f32 %v2343, %v2344
        %v2346 = vadd.f32 %v2342, %v2345
        %v2347 = vadd.f32 %v2346, %v2106
        %v2348 = vmax.f32 %v2347, 0.0
        %2349 = vst [vmem:[#allocation3 + $0x5] sm:$0x1] %v2348
        %v2350 = vld [vmem:[%s1650 + $0x4] sm:$0x1]
        %v2351 = vld [vmem:[%s6 + $0x9] sm:$0x1]
        %v2352 = vmul.f32 %v2350, %v2351
        %v2353 = vadd.f32 %v2352, 0.0
        %v2354 = vld [vmem:[%s1650 + $0x5] sm:$0x1]
        %v2355 = vld [vmem:[%s6 + $0xa] sm:$0x1]
        %v2356 = vmul.f32 %v2354, %v2355
        %v2357 = vadd.f32 %v2353, %v2356
        %v2358 = vld [vmem:[%s1650 + $0x6] sm:$0x1]
        %v2359 = vld [vmem:[%s6 + $0xb] sm:$0x1]
        %v2360 = vmul.f32 %v2358, %v2359
        %v2361 = vadd.f32 %v2357, %v2360
        %v2362 = vld [vmem:[%s1652 + $0x4] sm:$0x1]
        %v2363 = vld [vmem:[%s6 + $0xc] sm:$0x1]
        %v2364 = vmul.f32 %v2362, %v2363
        %v2365 = vadd.f32 %v2361, %v2364
        %v2366 = vld [vmem:[%s1652 + $0x5] sm:$0x1]
        %v2367 = vld [vmem:[%s6 + $0xd] sm:$0x1]
        %v2368 = vmul.f32 %v2366, %v2367
        %v2369 = vadd.f32 %v2365, %v2368
        %v2370 = vld [vmem:[%s1652 + $0x6] sm:$0x1]
        %v2371 = vld [vmem:[%s6 + $0xe] sm:$0x1]
        %v2372 = vmul.f32 %v2370, %v2371
        %v2373 = vadd.f32 %v2369, %v2372
        %v2374 = vld [vmem:[%s1654 + $0x4] sm:$0x1]
        %v2375 = vld [vmem:[%s6 + $0xf] sm:$0x1]
        %v2376 = vmul.f32 %v2374, %v2375
        %v2377 = vadd.f32 %v2373, %v2376
        %v2378 = vld [vmem:[%s1654 + $0x5] sm:$0x1]
        %v2379 = vld [vmem:[%s6 + $0x10] sm:$0x1]
        %v2380 = vmul.f32 %v2378, %v2379
        %v2381 = vadd.f32 %v2377, %v2380
        %v2382 = vld [vmem:[%s1654 + $0x6] sm:$0x1]
        %v2383 = vld [vmem:[%s6 + $0x11] sm:$0x1]
        %v2384 = vmul.f32 %v2382, %v2383
        %v2385 = vadd.f32 %v2381, %v2384
        %v2386 = vadd.f32 %v2385, %v2106
        %v2387 = vmax.f32 %v2386, 0.0
        %2388 = vst [vmem:[#allocation3 + $0x6] sm:$0x1] %v2387
        %v2389 = vld [vmem:[%s1650 + $0x6] sm:$0x1]
        %v2390 = vld [vmem:[%s6 + $0x9] sm:$0x1]
        %v2391 = vmul.f32 %v2389, %v2390
        %v2392 = vadd.f32 %v2391, 0.0
        %v2393 = vld [vmem:[%s1650 + $0x7] sm:$0x1]
        %v2394 = vld [vmem:[%s6 + $0xa] sm:$0x1]
        %v2395 = vmul.f32 %v2393, %v2394
        %v2396 = vadd.f32 %v2392, %v2395
        %v2397 = vld [vmem:[%s1650 + $0x8] sm:$0x1]
        %v2398 = vld [vmem:[%s6 + $0xb] sm:$0x1]
        %v2399 = vmul.f32 %v2397, %v2398
        %v2400 = vadd.f32 %v2396, %v2399
        %v2401 = vld [vmem:[%s1652 + $0x6] sm:$0x1]
        %v2402 = vld [vmem:[%s6 + $0xc] sm:$0x1]
        %v2403 = vmul.f32 %v2401, %v2402
        %v2404 = vadd.f32 %v2400, %v2403
        %v2405 = vld [vmem:[%s1652 + $0x7] sm:$0x1]
        %v2406 = vld [vmem:[%s6 + $0xd] sm:$0x1]
        %v2407 = vmul.f32 %v2405, %v2406
        %v2408 = vadd.f32 %v2404, %v2407
        %v2409 = vld [vmem:[%s1652 + $0x8] sm:$0x1]
        %v2410 = vld [vmem:[%s6 + $0xe] sm:$0x1]
        %v2411 = vmul.f32 %v2409, %v2410
        %v2412 = vadd.f32 %v2408, %v2411
        %v2413 = vld [vmem:[%s1654 + $0x6] sm:$0x1]
        %v2414 = vld [vmem:[%s6 + $0xf] sm:$0x1]
        %v2415 = vmul.f32 %v2413, %v2414
        %v2416 = vadd.f32 %v2412, %v2415
        %v2417 = vld [vmem:[%s1654 + $0x7] sm:$0x1]
        %v2418 = vld [vmem:[%s6 + $0x10] sm:$0x1]
        %v2419 = vmul.f32 %v2417, %v2418
        %v2420 = vadd.f32 %v2416, %v2419
        %v2421 = vld [vmem:[%s1654 + $0x8] sm:$0x1]
        %v2422 = vld [vmem:[%s6 + $0x11] sm:$0x1]
        %v2423 = vmul.f32 %v2421, %v2422
        %v2424 = vadd.f32 %v2420, %v2423
        %v2425 = vadd.f32 %v2424, %v2106
        %v2426 = vmax.f32 %v2425, 0.0
        %2427 = vst [vmem:[#allocation3 + $0x7] sm:$0x1] %v2426
        %v2428 = vld [vmem:[%s1654] sm:$0x1]
        %v2429 = vld [vmem:[%s6 + $0x9] sm:$0x1]
        %v2430 = vmul.f32 %v2428, %v2429
        %v2431 = vadd.f32 %v2430, 0.0
        %v2432 = vld [vmem:[%s1654 + $0x1] sm:$0x1]
        %v2433 = vld [vmem:[%s6 + $0xa] sm:$0x1]
        %v2434 = vmul.f32 %v2432, %v2433
        %v2435 = vadd.f32 %v2431, %v2434
        %v2436 = vld [vmem:[%s1654 + $0x2] sm:$0x1]
        %v2437 = vld [vmem:[%s6 + $0xb] sm:$0x1]
        %v2438 = vmul.f32 %v2436, %v2437
        %v2439 = vadd.f32 %v2435, %v2438
        %v2440 = vld [vmem:[%s1656] sm:$0x1]
        %v2441 = vld [vmem:[%s6 + $0xc] sm:$0x1]
        %v2442 = vmul.f32 %v2440, %v2441
        %v2443 = vadd.f32 %v2439, %v2442
        %v2444 = vld [vmem:[%s1656 + $0x1] sm:$0x1]
        %v2445 = vld [vmem:[%s6 + $0xd] sm:$0x1]
        %v2446 = vmul.f32 %v2444, %v2445
        %v2447 = vadd.f32 %v2443, %v2446
        %v2448 = vld [vmem:[%s1656 + $0x2] sm:$0x1]
        %v2449 = vld [vmem:[%s6 + $0xe] sm:$0x1]
        %v2450 = vmul.f32 %v2448, %v2449
        %v2451 = vadd.f32 %v2447, %v2450
        %v2452 = vld [vmem:[%s1658] sm:$0x1]
        %v2453 = vld [vmem:[%s6 + $0xf] sm:$0x1]
        %v2454 = vmul.f32 %v2452, %v2453
        %v2455 = vadd.f32 %v2451, %v2454
        %v2456 = vld [vmem:[%s1658 + $0x1] sm:$0x1]
        %v2457 = vld [vmem:[%s6 + $0x10] sm:$0x1]
        %v2458 = vmul.f32 %v2456, %v2457
        %v2459 = vadd.f32 %v2455, %v2458
        %v2460 = vld [vmem:[%s1658 + $0x2] sm:$0x1]
        %v2461 = vld [vmem:[%s6 + $0x11] sm:$0x1]
        %v2462 = vmul.f32 %v2460, %v2461
        %v2463 = vadd.f32 %v2459, %v2462
        %v2464 = vadd.f32 %v2463, %v2106
        %v2465 = vmax.f32 %v2464, 0.0
        %2466 = vst [vmem:[#allocation3 + $0x8] sm:$0x1] %v2465
        %v2467 = vld [vmem:[%s1654 + $0x2] sm:$0x1]
        %v2468 = vld [vmem:[%s6 + $0x9] sm:$0x1]
        %v2469 = vmul.f32 %v2467, %v2468
        %v2470 = vadd.f32 %v2469, 0.0
        %v2471 = vld [vmem:[%s1654 + $0x3] sm:$0x1]
        %v2472 = vld [vmem:[%s6 + $0xa] sm:$0x1]
        %v2473 = vmul.f32 %v2471, %v2472
        %v2474 = vadd.f32 %v2470, %v2473
        %v2475 = vld [vmem:[%s1654 + $0x4] sm:$0x1]
        %v2476 = vld [vmem:[%s6 + $0xb] sm:$0x1]
        %v2477 = vmul.f32 %v2475, %v2476
        %v2478 = vadd.f32 %v2474, %v2477
        %v2479 = vld [vmem:[%s1656 + $0x2] sm:$0x1]
        %v2480 = vld [vmem:[%s6 + $0xc] sm:$0x1]
        %v2481 = vmul.f32 %v2479, %v2480
        %v2482 = vadd.f32 %v2478, %v2481
        %v2483 = vld [vmem:[%s1656 + $0x3] sm:$0x1]
        %v2484 = vld [vmem:[%s6 + $0xd] sm:$0x1]
        %v2485 = vmul.f32 %v2483, %v2484
        %v2486 = vadd.f32 %v2482, %v2485
        %v2487 = vld [vmem:[%s1656 + $0x4] sm:$0x1]
        %v2488 = vld [vmem:[%s6 + $0xe] sm:$0x1]
        %v2489 = vmul.f32 %v2487, %v2488
        %v2490 = vadd.f32 %v2486, %v2489
        %v2491 = vld [vmem:[%s1658 + $0x2] sm:$0x1]
        %v2492 = vld [vmem:[%s6 + $0xf] sm:$0x1]
        %v2493 = vmul.f32 %v2491, %v2492
        %v2494 = vadd.f32 %v2490, %v2493
        %v2495 = vld [vmem:[%s1658 + $0x3] sm:$0x1]
        %v2496 = vld [vmem:[%s6 + $0x10] sm:$0x1]
        %v2497 = vmul.f32 %v2495, %v2496
        %v2498 = vadd.f32 %v2494, %v2497
        %v2499 = vld [vmem:[%s1658 + $0x4] sm:$0x1]
        %v2500 = vld [vmem:[%s6 + $0x11] sm:$0x1]
        %v2501 = vmul.f32 %v2499, %v2500
        %v2502 = vadd.f32 %v2498, %v2501
        %v2503 = vadd.f32 %v2502, %v2106
        %v2504 = vmax.f32 %v2503, 0.0
        %2505 = vst [vmem:[#allocation3 + $0x9] sm:$0x1] %v2504
        %v2506 = vld [vmem:[%s1654 + $0x4] sm:$0x1]
        %v2507 = vld [vmem:[%s6 + $0x9] sm:$0x1]
        %v2508 = vmul.f32 %v2506, %v2507
        %v2509 = vadd.f32 %v2508, 0.0
        %v2510 = vld [vmem:[%s1654 + $0x5] sm:$0x1]
        %v2511 = vld [vmem:[%s6 + $0xa] sm:$0x1]
        %v2512 = vmul.f32 %v2510, %v2511
        %v2513 = vadd.f32 %v2509, %v2512
        %v2514 = vld [vmem:[%s1654 + $0x6] sm:$0x1]
        %v2515 = vld [vmem:[%s6 + $0xb] sm:$0x1]
        %v2516 = vmul.f32 %v2514, %v2515
        %v2517 = vadd.f32 %v2513, %v2516
        %v2518 = vld [vmem:[%s1656 + $0x4] sm:$0x1]
        %v2519 = vld [vmem:[%s6 + $0xc] sm:$0x1]
        %v2520 = vmul.f32 %v2518, %v2519
        %v2521 = vadd.f32 %v2517, %v2520
        %v2522 = vld [vmem:[%s1656 + $0x5] sm:$0x1]
        %v2523 = vld [vmem:[%s6 + $0xd] sm:$0x1]
        %v2524 = vmul.f32 %v2522, %v2523
        %v2525 = vadd.f32 %v2521, %v2524
        %v2526 = vld [vmem:[%s1656 + $0x6] sm:$0x1]
        %v2527 = vld [vmem:[%s6 + $0xe] sm:$0x1]
        %v2528 = vmul.f32 %v2526, %v2527
        %v2529 = vadd.f32 %v2525, %v2528
        %v2530 = vld [vmem:[%s1658 + $0x4] sm:$0x1]
        %v2531 = vld [vmem:[%s6 + $0xf] sm:$0x1]
        %v2532 = vmul.f32 %v2530, %v2531
        %v2533 = vadd.f32 %v2529, %v2532
        %v2534 = vld [vmem:[%s1658 + $0x5] sm:$0x1]
        %v2535 = vld [vmem:[%s6 + $0x10] sm:$0x1]
        %v2536 = vmul.f32 %v2534, %v2535
        %v2537 = vadd.f32 %v2533, %v2536
        %v2538 = vld [vmem:[%s1658 + $0x6] sm:$0x1]
        %v2539 = vld [vmem:[%s6 + $0x11] sm:$0x1]
        %v2540 = vmul.f32 %v2538, %v2539
        %v2541 = vadd.f32 %v2537, %v2540
        %v2542 = vadd.f32 %v2541, %v2106
        %v2543 = vmax.f32 %v2542, 0.0
        %2544 = vst [vmem:[#allocation3 + $0xa] sm:$0x1] %v2543
        %v2545 = vld [vmem:[%s1654 + $0x6] sm:$0x1]
        %v2546 = vld [vmem:[%s6 + $0x9] sm:$0x1]
        %v2547 = vmul.f32 %v2545, %v2546
        %v2548 = vadd.f32 %v2547, 0.0
        %v2549 = vld [vmem:[%s1654 + $0x7] sm:$0x1]
        %v2550 = vld [vmem:[%s6 + $0xa] sm:$0x1]
        %v2551 = vmul.f32 %v2549, %v2550
        %v2552 = vadd.f32 %v2548, %v2551
        %v2553 = vld [vmem:[%s1654 + $0x8] sm:$0x1]
        %v2554 = vld [vmem:[%s6 + $0xb] sm:$0x1]
        %v2555 = vmul.f32 %v2553, %v2554
        %v2556 = vadd.f32 %v2552, %v2555
        %v2557 = vld [vmem:[%s1656 + $0x6] sm:$0x1]
        %v2558 = vld [vmem:[%s6 + $0xc] sm:$0x1]
        %v2559 = vmul.f32 %v2557, %v2558
        %v2560 = vadd.f32 %v2556, %v2559
        %v2561 = vld [vmem:[%s1656 + $0x7] sm:$0x1]
        %v2562 = vld [vmem:[%s6 + $0xd] sm:$0x1]
        %v2563 = vmul.f32 %v2561, %v2562
        %v2564 = vadd.f32 %v2560, %v2563
        %v2565 = vld [vmem:[%s1656 + $0x8] sm:$0x1]
        %v2566 = vld [vmem:[%s6 + $0xe] sm:$0x1]
        %v2567 = vmul.f32 %v2565, %v2566
        %v2568 = vadd.f32 %v2564, %v2567
        %v2569 = vld [vmem:[%s1658 + $0x6] sm:$0x1]
        %v2570 = vld [vmem:[%s6 + $0xf] sm:$0x1]
        %v2571 = vmul.f32 %v2569, %v2570
        %v2572 = vadd.f32 %v2568, %v2571
        %v2573 = vld [vmem:[%s1658 + $0x7] sm:$0x1]
        %v2574 = vld [vmem:[%s6 + $0x10] sm:$0x1]
        %v2575 = vmul.f32 %v2573, %v2574
        %v2576 = vadd.f32 %v2572, %v2575
        %v2577 = vld [vmem:[%s1658 + $0x8] sm:$0x1]
        %v2578 = vld [vmem:[%s6 + $0x11] sm:$0x1]
        %v2579 = vmul.f32 %v2577, %v2578
        %v2580 = vadd.f32 %v2576, %v2579
        %v2581 = vadd.f32 %v2580, %v2106
        %v2582 = vmax.f32 %v2581, 0.0
        %2583 = vst [vmem:[#allocation3 + $0xb] sm:$0x1] %v2582
        %v2584 = vld [vmem:[%s1658] sm:$0x1]
        %v2585 = vld [vmem:[%s6 + $0x9] sm:$0x1]
        %v2586 = vmul.f32 %v2584, %v2585
        %v2587 = vadd.f32 %v2586, 0.0
        %v2588 = vld [vmem:[%s1658 + $0x1] sm:$0x1]
        %v2589 = vld [vmem:[%s6 + $0xa] sm:$0x1]
        %v2590 = vmul.f32 %v2588, %v2589
        %v2591 = vadd.f32 %v2587, %v2590
        %v2592 = vld [vmem:[%s1658 + $0x2] sm:$0x1]
        %v2593 = vld [vmem:[%s6 + $0xb] sm:$0x1]
        %v2594 = vmul.f32 %v2592, %v2593
        %v2595 = vadd.f32 %v2591, %v2594
        %v2596 = vld [vmem:[%s1660] sm:$0x1]
        %v2597 = vld [vmem:[%s6 + $0xc] sm:$0x1]
        %v2598 = vmul.f32 %v2596, %v2597
        %v2599 = vadd.f32 %v2595, %v2598
        %v2600 = vld [vmem:[%s1660 + $0x1] sm:$0x1]
        %v2601 = vld [vmem:[%s6 + $0xd] sm:$0x1]
        %v2602 = vmul.f32 %v2600, %v2601
        %v2603 = vadd.f32 %v2599, %v2602
        %v2604 = vld [vmem:[%s1660 + $0x2] sm:$0x1]
        %v2605 = vld [vmem:[%s6 + $0xe] sm:$0x1]
        %v2606 = vmul.f32 %v2604, %v2605
        %v2607 = vadd.f32 %v2603, %v2606
        %v2608 = vld [vmem:[%s1662] sm:$0x1]
        %v2609 = vld [vmem:[%s6 + $0xf] sm:$0x1]
        %v2610 = vmul.f32 %v2608, %v2609
        %v2611 = vadd.f32 %v2607, %v2610
        %v2612 = vld [vmem:[%s1662 + $0x1] sm:$0x1]
        %v2613 = vld [vmem:[%s6 + $0x10] sm:$0x1]
        %v2614 = vmul.f32 %v2612, %v2613
        %v2615 = vadd.f32 %v2611, %v2614
        %v2616 = vld [vmem:[%s1662 + $0x2] sm:$0x1]
        %v2617 = vld [vmem:[%s6 + $0x11] sm:$0x1]
        %v2618 = vmul.f32 %v2616, %v2617
        %v2619 = vadd.f32 %v2615, %v2618
        %v2620 = vadd.f32 %v2619, %v2106
        %v2621 = vmax.f32 %v2620, 0.0
        %2622 = vst [vmem:[#allocation3 + $0xc] sm:$0x1] %v2621
        %v2623 = vld [vmem:[%s1658 + $0x2] sm:$0x1]
        %v2624 = vld [vmem:[%s6 + $0x9] sm:$0x1]
        %v2625 = vmul.f32 %v2623, %v2624
        %v2626 = vadd.f32 %v2625, 0.0
        %v2627 = vld [vmem:[%s1658 + $0x3] sm:$0x1]
        %v2628 = vld [vmem:[%s6 + $0xa] sm:$0x1]
        %v2629 = vmul.f32 %v2627, %v2628
        %v2630 = vadd.f32 %v2626, %v2629
        %v2631 = vld [vmem:[%s1658 + $0x4] sm:$0x1]
        %v2632 = vld [vmem:[%s6 + $0xb] sm:$0x1]
        %v2633 = vmul.f32 %v2631, %v2632
        %v2634 = vadd.f32 %v2630, %v2633
        %v2635 = vld [vmem:[%s1660 + $0x2] sm:$0x1]
        %v2636 = vld [vmem:[%s6 + $0xc] sm:$0x1]
        %v2637 = vmul.f32 %v2635, %v2636
        %v2638 = vadd.f32 %v2634, %v2637
        %v2639 = vld [vmem:[%s1660 + $0x3] sm:$0x1]
        %v2640 = vld [vmem:[%s6 + $0xd] sm:$0x1]
        %v2641 = vmul.f32 %v2639, %v2640
        %v2642 = vadd.f32 %v2638, %v2641
        %v2643 = vld [vmem:[%s1660 + $0x4] sm:$0x1]
        %v2644 = vld [vmem:[%s6 + $0xe] sm:$0x1]
        %v2645 = vmul.f32 %v2643, %v2644
        %v2646 = vadd.f32 %v2642, %v2645
        %v2647 = vld [vmem:[%s1662 + $0x2] sm:$0x1]
        %v2648 = vld [vmem:[%s6 + $0xf] sm:$0x1]
        %v2649 = vmul.f32 %v2647, %v2648
        %v2650 = vadd.f32 %v2646, %v2649
        %v2651 = vld [vmem:[%s1662 + $0x3] sm:$0x1]
        %v2652 = vld [vmem:[%s6 + $0x10] sm:$0x1]
        %v2653 = vmul.f32 %v2651, %v2652
        %v2654 = vadd.f32 %v2650, %v2653
        %v2655 = vld [vmem:[%s1662 + $0x4] sm:$0x1]
        %v2656 = vld [vmem:[%s6 + $0x11] sm:$0x1]
        %v2657 = vmul.f32 %v2655, %v2656
        %v2658 = vadd.f32 %v2654, %v2657
        %v2659 = vadd.f32 %v2658, %v2106
        %v2660 = vmax.f32 %v2659, 0.0
        %2661 = vst [vmem:[#allocation3 + $0xd] sm:$0x1] %v2660
        %v2662 = vld [vmem:[%s1658 + $0x4] sm:$0x1]
        %v2663 = vld [vmem:[%s6 + $0x9] sm:$0x1]
        %v2664 = vmul.f32 %v2662, %v2663
        %v2665 = vadd.f32 %v2664, 0.0
        %v2666 = vld [vmem:[%s1658 + $0x5] sm:$0x1]
        %v2667 = vld [vmem:[%s6 + $0xa] sm:$0x1]
        %v2668 = vmul.f32 %v2666, %v2667
        %v2669 = vadd.f32 %v2665, %v2668
        %v2670 = vld [vmem:[%s1658 + $0x6] sm:$0x1]
        %v2671 = vld [vmem:[%s6 + $0xb] sm:$0x1]
        %v2672 = vmul.f32 %v2670, %v2671
        %v2673 = vadd.f32 %v2669, %v2672
        %v2674 = vld [vmem:[%s1660 + $0x4] sm:$0x1]
        %v2675 = vld [vmem:[%s6 + $0xc] sm:$0x1]
        %v2676 = vmul.f32 %v2674, %v2675
        %v2677 = vadd.f32 %v2673, %v2676
        %v2678 = vld [vmem:[%s1660 + $0x5] sm:$0x1]
        %v2679 = vld [vmem:[%s6 + $0xd] sm:$0x1]
        %v2680 = vmul.f32 %v2678, %v2679
        %v2681 = vadd.f32 %v2677, %v2680
        %v2682 = vld [vmem:[%s1660 + $0x6] sm:$0x1]
        %v2683 = vld [vmem:[%s6 + $0xe] sm:$0x1]
        %v2684 = vmul.f32 %v2682, %v2683
        %v2685 = vadd.f32 %v2681, %v2684
        %v2686 = vld [vmem:[%s1662 + $0x4] sm:$0x1]
        %v2687 = vld [vmem:[%s6 + $0xf] sm:$0x1]
        %v2688 = vmul.f32 %v2686, %v2687
        %v2689 = vadd.f32 %v2685, %v2688
        %v2690 = vld [vmem:[%s1662 + $0x5] sm:$0x1]
        %v2691 = vld [vmem:[%s6 + $0x10] sm:$0x1]
        %v2692 = vmul.f32 %v2690, %v2691
        %v2693 = vadd.f32 %v2689, %v2692
        %v2694 = vld [vmem:[%s1662 + $0x6] sm:$0x1]
        %v2695 = vld [vmem:[%s6 + $0x11] sm:$0x1]
        %v2696 = vmul.f32 %v2694, %v2695
        %v2697 = vadd.f32 %v2693, %v2696
        %v2698 = vadd.f32 %v2697, %v2106
        %v2699 = vmax.f32 %v2698, 0.0
        %2700 = vst [vmem:[#allocation3 + $0xe] sm:$0x1] %v2699
        %v2701 = vld [vmem:[%s1658 + $0x6] sm:$0x1]
        %v2702 = vld [vmem:[%s6 + $0x9] sm:$0x1]
        %v2703 = vmul.f32 %v2701, %v2702
        %v2704 = vadd.f32 %v2703, 0.0
        %v2705 = vld [vmem:[%s1658 + $0x7] sm:$0x1]
        %v2706 = vld [vmem:[%s6 + $0xa] sm:$0x1]
        %v2707 = vmul.f32 %v2705, %v2706
        %v2708 = vadd.f32 %v2704, %v2707
        %v2709 = vld [vmem:[%s1658 + $0x8] sm:$0x1]
        %v2710 = vld [vmem:[%s6 + $0xb] sm:$0x1]
        %v2711 = vmul.f32 %v2709, %v2710
        %v2712 = vadd.f32 %v2708, %v2711
        %v2713 = vld [vmem:[%s1660 + $0x6] sm:$0x1]
        %v2714 = vld [vmem:[%s6 + $0xc] sm:$0x1]
        %v2715 = vmul.f32 %v2713, %v2714
        %v2716 = vadd.f32 %v2712, %v2715
        %v2717 = vld [vmem:[%s1660 + $0x7] sm:$0x1]
        %v2718 = vld [vmem:[%s6 + $0xd] sm:$0x1]
        %v2719 = vmul.f32 %v2717, %v2718
        %v2720 = vadd.f32 %v2716, %v2719
        %v2721 = vld [vmem:[%s1660 + $0x8] sm:$0x1]
        %v2722 = vld [vmem:[%s6 + $0xe] sm:$0x1]
        %v2723 = vmul.f32 %v2721, %v2722
        %v2724 = vadd.f32 %v2720, %v2723
        %v2725 = vld [vmem:[%s1662 + $0x6] sm:$0x1]
        %v2726 = vld [vmem:[%s6 + $0xf] sm:$0x1]
        %v2727 = vmul.f32 %v2725, %v2726
        %v2728 = vadd.f32 %v2724, %v2727
        %v2729 = vld [vmem:[%s1662 + $0x7] sm:$0x1]
        %v2730 = vld [vmem:[%s6 + $0x10] sm:$0x1]
        %v2731 = vmul.f32 %v2729, %v2730
        %v2732 = vadd.f32 %v2728, %v2731
        %v2733 = vld [vmem:[%s1662 + $0x8] sm:$0x1]
        %v2734 = vld [vmem:[%s6 + $0x11] sm:$0x1]
        %v2735 = vmul.f32 %v2733, %v2734
        %v2736 = vadd.f32 %v2732, %v2735
        %v2737 = vadd.f32 %v2736, %v2106
        %v2738 = vmax.f32 %v2737, 0.0
        %2739 = vst [vmem:[#allocation3 + $0xf] sm:$0x1] %v2738
        %v2740 = vld [vmem:[#allocation3] sm:$0xff]
        %v2741 = vld [vmem:[#allocation3 + $0x8] sm:$0xff]
        %v2742 = vpack.c.bf16 %v2741, %v2740
        %s2743 = scalar_lea.vmem %s8, 64
        %v2744 = vld [vmem:[%s2743] sm:$0xf]
        %v2745 = vld [vmem:[%s2743 + $0x4] sm:$0xf]
        %v2746 = vld [vmem:[%s2743 + $0x8] sm:$0xf]
        %v2747 = vld [vmem:[%s2743 + $0xc] sm:$0xf]
        %v2748 = vld [vmem:[%s2743 + $0x10] sm:$0xf]
        %v2749 = vld [vmem:[%s2743 + $0x14] sm:$0xf]
        %v2750 = vld [vmem:[%s2743 + $0x18] sm:$0xf]
        %v2751 = vld [vmem:[%s2743 + $0x1c] sm:$0xf]
        %v2752 = vld [vmem:[%s2743 + $0x20] sm:$0xf]
        %v2753 = vld [vmem:[%s2743 + $0x24] sm:$0xf]
        %v2754 = vld [vmem:[%s2743 + $0x28] sm:$0xf]
        %v2755 = vld [vmem:[%s2743 + $0x2c] sm:$0xf]
        %v2756 = vld [vmem:[%s2743 + $0x30] sm:$0xf]
        %v2757 = vld [vmem:[%s2743 + $0x34] sm:$0xf]
        %v2758 = vld [vmem:[%s2743 + $0x38] sm:$0xf]
        %v2759 = vld [vmem:[%s2743 + $0x3c] sm:$0xf]
        %v2760 = vlaneseq
        %v2761 = vshrl.u32 %v2760, 7
        %v2762 = vsub.s32 0, %v2761
        %v2763 = vrot.slane %v2107, %v2762
        %v2780 = vunpack.c.l.b16 %v2744
        %v2781 = vunpack.c.l.b16 %v2745
        %v2782 = vunpack.c.l.b16 %v2746
        %v2783 = vunpack.c.l.b16 %v2747
        %v2784 = vunpack.c.l.b16 %v2748
        %v2785 = vunpack.c.l.b16 %v2749
        %v2786 = vunpack.c.l.b16 %v2750
        %v2787 = vunpack.c.l.b16 %v2751
        %v2788 = vunpack.c.l.b16 %v2752
        %v2789 = vunpack.c.l.b16 %v2753
        %v2790 = vunpack.c.l.b16 %v2754
        %v2791 = vunpack.c.l.b16 %v2755
        %v2792 = vunpack.c.l.b16 %v2756
        %v2793 = vunpack.c.l.b16 %v2757
        %v2794 = vunpack.c.l.b16 %v2758
        %v2795 = vunpack.c.l.b16 %v2759
        %v2796 = vpack.c.b16 %v2781, %v2780
        %v2797 = vpack.c.b16 %v2783, %v2782
        %v2798 = vpack.c.b16 %v2785, %v2784
        %v2799 = vpack.c.b16 %v2787, %v2786
        %v2800 = vpack.c.b16 %v2789, %v2788
        %v2801 = vpack.c.b16 %v2791, %v2790
        %v2802 = vpack.c.b16 %v2793, %v2792
        %v2803 = vpack.c.b16 %v2795, %v2794
        %2812 = vmatprep.subr.bf16.mxu0 0
        %2813 = vmatpush1.bf16.msra.mxu0 %v2796
        %2814 = vmatprep.subr.bf16.mxu0 0
        %2815 = vmatpush1.bf16.msra.mxu0 %v2797
        %2816 = vmatprep.subr.bf16.mxu0 0
        %2817 = vmatpush1.bf16.msra.mxu0 %v2798
        %2818 = vmatprep.subr.bf16.mxu0 0
        %2819 = vmatpush1.bf16.msra.mxu0 %v2799
        %2820 = vmatprep.subr.bf16.mxu0 0
        %2821 = vmatpush1.bf16.msra.mxu0 %v2800
        %2822 = vmatprep.subr.bf16.mxu0 0
        %2823 = vmatpush1.bf16.msra.mxu0 %v2801
        %2824 = vmatprep.subr.bf16.mxu0 0
        %2825 = vmatpush1.bf16.msra.mxu0 %v2802
        %2826 = vmatprep.subr.bf16.mxu0 0
        %2827 = vmatpush1.bf16.msra.mxu0 %v2803
        %2828 = vmatprep.subr.bf16.mxu0 0
        %2829 = vmatpush1.bf16.msra.mxu0 0
        %2830 = vmatprep.subr.bf16.mxu0 0
        %2831 = vmatpush1.bf16.msra.mxu0 0
        %2832 = vmatprep.subr.bf16.mxu0 0
        %2833 = vmatpush1.bf16.msra.mxu0 0
        %2834 = vmatprep.subr.bf16.mxu0 0
        %2835 = vmatpush1.bf16.msra.mxu0 0
        %2836 = vmatprep.subr.bf16.mxu0 0
        %2837 = vmatpush1.bf16.msra.mxu0 0
        %2838 = vmatprep.subr.bf16.mxu0 0
        %2839 = vmatpush1.bf16.msra.mxu0 0
        %2840 = vmatprep.subr.bf16.mxu0 0
        %2841 = vmatpush1.bf16.msra.mxu0 0
        %2842 = vmatprep.subr.bf16.mxu0 0
        %2843 = vmatpush1.bf16.msra.mxu0 0
        %2844 = vmatprep.mubr.bf16.mxu0 0
        %2845 = vmatmul.mubr.bf16.gmra.mrb[0].mxu0 %v2742
        %v2846 = vpop.f32.mrb[0].mxu0
        %v2847 = vadd.f32 %v2763, %v2846
        %v2848 = vpop.f32.mrb[0].mxu0
        %v2849 = vpop.f32.mrb[0].mxu0
        %v2850 = vadd.f32 %v2763, %v2849
        %v2851 = vpop.f32.mrb[0].mxu0
        %2852 = vdwg.mxu0
        %v2853 = vmax.f32 %v2847, 0.0
        %v2854 = vmax.f32 %v2850, 0.0
        %v2855 = vld [vmem:[%s7 + $0x2] sm:$0x1]
        %v2856 = vld [vmem:[%s9 + $0x2] sm:$0x1]
        %s2857 = scalar_lea.vmem [#allocation5], 8
        %2858 = vst [vmem:[%s2857 + $0x1] sm:$0xf] %v2853
        %s2859 = scalar_lea.vmem [#allocation5], 16
        %2860 = vst [vmem:[%s2859 - $0x3] sm:$0xf0] %v2853
        %s2861 = scalar_lea.vmem [#allocation5], 24
        %2862 = vst [vmem:[%s2861 + $0x1] sm:$0xf] %v2854
        %s2863 = scalar_lea.vmem [#allocation5], 32
        %2864 = vst [vmem:[%s2863 - $0x3] sm:$0xf0] %v2854
        %v2865 = vld [vmem:[#allocation5] sm:$0xf]
        %v2866 = vld [vmem:[#allocation5 + $0x8] sm:$0xf]
        %v2867 = vld [vmem:[#allocation5 + $0x10] sm:$0xf]
        %v2868 = vld [vmem:[#allocation5 + $0x18] sm:$0xf]
        %v2869 = vld [vmem:[%s6 + $0x12] sm:$0x1]
        %v2870 = vlaneseq
        %v2871 = vshrl.u32 %v2870, 7
        %v2872 = vsub.s32 0, %v2871
        %v2873 = vrot.slane %v2869, %v2872
        %v2874 = vmul.f32 %v2865, %v2873
        %v2875 = vmul.f32 %v2866, %v2873
        %v2876 = vmul.f32 %v2867, %v2873
        %v2877 = vmul.f32 %v2868, %v2873
        %v2878 = vadd.f32 %v2874, 0.0
        %v2879 = vadd.f32 %v2875, 0.0
        %v2880 = vadd.f32 %v2876, 0.0
        %v2881 = vadd.f32 %v2877, 0.0
        %v2882 = vld [vmem:[#allocation5 + $0x1] sm:$0xf]
        %v2883 = vld [vmem:[#allocation5 + $0x9] sm:$0xf]
        %v2884 = vld [vmem:[#allocation5 + $0x11] sm:$0xf]
        %v2885 = vld [vmem:[#allocation5 + $0x19] sm:$0xf]
        %v2886 = vld [vmem:[%s6 + $0x13] sm:$0x1]
        %v2887 = vlaneseq
        %v2888 = vshrl.u32 %v2887, 7
        %v2889 = vsub.s32 0, %v2888
        %v2890 = vrot.slane %v2886, %v2889
        %v2891 = vmul.f32 %v2882, %v2890
        %v2892 = vmul.f32 %v2883, %v2890
        %v2893 = vmul.f32 %v2884, %v2890
        %v2894 = vmul.f32 %v2885, %v2890
        %v2895 = vadd.f32 %v2878, %v2891
        %v2896 = vadd.f32 %v2879, %v2892
        %v2897 = vadd.f32 %v2880, %v2893
        %v2898 = vadd.f32 %v2881, %v2894
        %v2899 = vld [vmem:[#allocation5 + $0x2] sm:$0xf]
        %v2900 = vld [vmem:[#allocation5 + $0xa] sm:$0xf]
        %v2901 = vld [vmem:[#allocation5 + $0x12] sm:$0xf]
        %v2902 = vld [vmem:[#allocation5 + $0x1a] sm:$0xf]
        %v2903 = vld [vmem:[%s6 + $0x14] sm:$0x1]
        %v2904 = vlaneseq
        %v2905 = vshrl.u32 %v2904, 7
        %v2906 = vsub.s32 0, %v2905
        %v2907 = vrot.slane %v2903, %v2906
        %v2908 = vmul.f32 %v2899, %v2907
        %v2909 = vmul.f32 %v2900, %v2907
        %v2910 = vmul.f32 %v2901, %v2907
        %v2911 = vmul.f32 %v2902, %v2907
        %v2912 = vadd.f32 %v2895, %v2908
        %v2913 = vadd.f32 %v2896, %v2909
        %v2914 = vadd.f32 %v2897, %v2910
        %v2915 = vadd.f32 %v2898, %v2911
        %v2916 = vld [vmem:[%s2857] sm:$0xf]
        %v2917 = vld [vmem:[%s2857 + $0x8] sm:$0xf]
        %v2918 = vld [vmem:[%s2857 + $0x10] sm:$0xf]
        %v2919 = vld [vmem:[%s2857 + $0x18] sm:$0xf]
        %v2920 = vld [vmem:[%s6 + $0x15] sm:$0x1]
        %v2921 = vlaneseq
        %v2922 = vshrl.u32 %v2921, 7
        %v2923 = vsub.s32 0, %v2922
        %v2924 = vrot.slane %v2920, %v2923
        %v2925 = vmul.f32 %v2916, %v2924
        %v2926 = vmul.f32 %v2917, %v2924
        %v2927 = vmul.f32 %v2918, %v2924
        %v2928 = vmul.f32 %v2919, %v2924
        %v2929 = vadd.f32 %v2912, %v2925
        %v2930 = vadd.f32 %v2913, %v2926
        %v2931 = vadd.f32 %v2914, %v2927
        %v2932 = vadd.f32 %v2915, %v2928
        %v2933 = vld [vmem:[%s2857 + $0x1] sm:$0xf]
        %v2934 = vld [vmem:[%s2857 + $0x9] sm:$0xf]
        %v2935 = vld [vmem:[%s2857 + $0x11] sm:$0xf]
        %v2936 = vld [vmem:[%s2857 + $0x19] sm:$0xf]
        %v2937 = vld [vmem:[%s6 + $0x16] sm:$0x1]
        %v2938 = vlaneseq
        %v2939 = vshrl.u32 %v2938, 7
        %v2940 = vsub.s32 0, %v2939
        %v2941 = vrot.slane %v2937, %v2940
        %v2942 = vmul.f32 %v2933, %v2941
        %v2943 = vmul.f32 %v2934, %v2941
        %v2944 = vmul.f32 %v2935, %v2941
        %v2945 = vmul.f32 %v2936, %v2941
        %v2946 = vadd.f32 %v2929, %v2942
        %v2947 = vadd.f32 %v2930, %v2943
        %v2948 = vadd.f32 %v2931, %v2944
        %v2949 = vadd.f32 %v2932, %v2945
        %v2950 = vld [vmem:[%s2857 + $0x2] sm:$0xf]
        %v2951 = vld [vmem:[%s2857 + $0xa] sm:$0xf]
        %v2952 = vld [vmem:[%s2857 + $0x12] sm:$0xf]
        %v2953 = vld [vmem:[%s2857 + $0x1a] sm:$0xf]
        %v2954 = vld [vmem:[%s6 + $0x17] sm:$0x1]
        %v2955 = vlaneseq
        %v2956 = vshrl.u32 %v2955, 7
        %v2957 = vsub.s32 0, %v2956
        %v2958 = vrot.slane %v2954, %v2957
        %v2959 = vmul.f32 %v2950, %v2958
        %v2960 = vmul.f32 %v2951, %v2958
        %v2961 = vmul.f32 %v2952, %v2958
        %v2962 = vmul.f32 %v2953, %v2958
        %v2963 = vadd.f32 %v2946, %v2959
        %v2964 = vadd.f32 %v2947, %v2960
        %v2965 = vadd.f32 %v2948, %v2961
        %v2966 = vadd.f32 %v2949, %v2962
        %v2967 = vld [vmem:[%s2859] sm:$0xf]
        %v2968 = vld [vmem:[%s2859 + $0x8] sm:$0xf]
        %v2969 = vld [vmem:[%s2859 + $0x10] sm:$0xf]
        %v2970 = vld [vmem:[%s2859 + $0x18] sm:$0xf]
        %v2971 = vld [vmem:[%s6 + $0x18] sm:$0x1]
        %v2972 = vlaneseq
        %v2973 = vshrl.u32 %v2972, 7
        %v2974 = vsub.s32 0, %v2973
        %v2975 = vrot.slane %v2971, %v2974
        %v2976 = vmul.f32 %v2967, %v2975
        %v2977 = vmul.f32 %v2968, %v2975
        %v2978 = vmul.f32 %v2969, %v2975
        %v2979 = vmul.f32 %v2970, %v2975
        %v2980 = vadd.f32 %v2963, %v2976
        %v2981 = vadd.f32 %v2964, %v2977
        %v2982 = vadd.f32 %v2965, %v2978
        %v2983 = vadd.f32 %v2966, %v2979
        %v2984 = vld [vmem:[%s2859 + $0x1] sm:$0xf]
        %v2985 = vld [vmem:[%s2859 + $0x9] sm:$0xf]
        %v2986 = vld [vmem:[%s2859 + $0x11] sm:$0xf]
        %v2987 = vld [vmem:[%s2859 + $0x19] sm:$0xf]
        %v2988 = vld [vmem:[%s6 + $0x19] sm:$0x1]
        %v2989 = vlaneseq
        %v2990 = vshrl.u32 %v2989, 7
        %v2991 = vsub.s32 0, %v2990
        %v2992 = vrot.slane %v2988, %v2991
        %v2993 = vmul.f32 %v2984, %v2992
        %v2994 = vmul.f32 %v2985, %v2992
        %v2995 = vmul.f32 %v2986, %v2992
        %v2996 = vmul.f32 %v2987, %v2992
        %v2997 = vadd.f32 %v2980, %v2993
        %v2998 = vadd.f32 %v2981, %v2994
        %v2999 = vadd.f32 %v2982, %v2995
        %v3000 = vadd.f32 %v2983, %v2996
        %v3001 = vld [vmem:[%s2859 + $0x2] sm:$0xf]
        %v3002 = vld [vmem:[%s2859 + $0xa] sm:$0xf]
        %v3003 = vld [vmem:[%s2859 + $0x12] sm:$0xf]
        %v3004 = vld [vmem:[%s2859 + $0x1a] sm:$0xf]
        %v3005 = vld [vmem:[%s6 + $0x1a] sm:$0x1]
        %v3006 = vlaneseq
        %v3007 = vshrl.u32 %v3006, 7
        %v3008 = vsub.s32 0, %v3007
        %v3009 = vrot.slane %v3005, %v3008
        %v3010 = vmul.f32 %v3001, %v3009
        %v3011 = vmul.f32 %v3002, %v3009
        %v3012 = vmul.f32 %v3003, %v3009
        %v3013 = vmul.f32 %v3004, %v3009
        %v3014 = vadd.f32 %v2997, %v3010
        %v3015 = vadd.f32 %v2998, %v3011
        %v3016 = vadd.f32 %v2999, %v3012
        %v3017 = vadd.f32 %v3000, %v3013
        %v3018 = vlaneseq
        %v3019 = vshrl.u32 %v3018, 7
        %v3020 = vsub.s32 0, %v3019
        %v3021 = vrot.slane %v2855, %v3020
        %v3022 = vadd.f32 %v3014, %v3021
        %v3023 = vadd.f32 %v3015, %v3021
        %v3024 = vadd.f32 %v3016, %v3021
        %v3025 = vadd.f32 %v3017, %v3021
        %v3026 = vmax.f32 %v3022, 0.0
        %v3027 = vmax.f32 %v3023, 0.0
        %v3028 = vmax.f32 %v3024, 0.0
        %v3029 = vmax.f32 %v3025, 0.0
        %3030 = vst [vmem:[#allocation3] sm:$0xf] %v3026
        %3031 = vst [vmem:[#allocation3 + $0x4] sm:$0xf] %v3027
        %3032 = vst [vmem:[#allocation3 + $0x8] sm:$0xf] %v3028
        %3033 = vst [vmem:[#allocation3 + $0xc] sm:$0xf] %v3029
        %v3034 = vld [vmem:[#allocation3] sm:$0xff]
        %v3035 = vld [vmem:[#allocation3 + $0x8] sm:$0xff]
        %v3036 = vpack.c.bf16 %v3035, %v3034
        %s3037 = scalar_lea.vmem %s8, 128
        %v3038 = vld [vmem:[%s3037] sm:$0xf]
        %v3039 = vld [vmem:[%s3037 + $0x4] sm:$0xf]
        %v3040 = vld [vmem:[%s3037 + $0x8] sm:$0xf]
        %v3041 = vld [vmem:[%s3037 + $0xc] sm:$0xf]
        %v3042 = vld [vmem:[%s3037 + $0x10] sm:$0xf]
        %v3043 = vld [vmem:[%s3037 + $0x14] sm:$0xf]
        %v3044 = vld [vmem:[%s3037 + $0x18] sm:$0xf]
        %v3045 = vld [vmem:[%s3037 + $0x1c] sm:$0xf]
        %v3046 = vld [vmem:[%s3037 + $0x20] sm:$0xf]
        %v3047 = vld [vmem:[%s3037 + $0x24] sm:$0xf]
        %v3048 = vld [vmem:[%s3037 + $0x28] sm:$0xf]
        %v3049 = vld [vmem:[%s3037 + $0x2c] sm:$0xf]
        %v3050 = vld [vmem:[%s3037 + $0x30] sm:$0xf]
        %v3051 = vld [vmem:[%s3037 + $0x34] sm:$0xf]
        %v3052 = vld [vmem:[%s3037 + $0x38] sm:$0xf]
        %v3053 = vld [vmem:[%s3037 + $0x3c] sm:$0xf]
        %v3054 = vlaneseq
        %v3055 = vshrl.u32 %v3054, 7
        %v3056 = vsub.s32 0, %v3055
        %v3057 = vrot.slane %v2856, %v3056
        %v3074 = vunpack.c.l.b16 %v3038
        %v3075 = vunpack.c.l.b16 %v3039
        %v3076 = vunpack.c.l.b16 %v3040
        %v3077 = vunpack.c.l.b16 %v3041
        %v3078 = vunpack.c.l.b16 %v3042
        %v3079 = vunpack.c.l.b16 %v3043
        %v3080 = vunpack.c.l.b16 %v3044
        %v3081 = vunpack.c.l.b16 %v3045
        %v3082 = vunpack.c.l.b16 %v3046
        %v3083 = vunpack.c.l.b16 %v3047
        %v3084 = vunpack.c.l.b16 %v3048
        %v3085 = vunpack.c.l.b16 %v3049
        %v3086 = vunpack.c.l.b16 %v3050
        %v3087 = vunpack.c.l.b16 %v3051
        %v3088 = vunpack.c.l.b16 %v3052
        %v3089 = vunpack.c.l.b16 %v3053
        %v3090 = vpack.c.b16 %v3075, %v3074
        %v3091 = vpack.c.b16 %v3077, %v3076
        %v3092 = vpack.c.b16 %v3079, %v3078
        %v3093 = vpack.c.b16 %v3081, %v3080
        %v3094 = vpack.c.b16 %v3083, %v3082
        %v3095 = vpack.c.b16 %v3085, %v3084
        %v3096 = vpack.c.b16 %v3087, %v3086
        %v3097 = vpack.c.b16 %v3089, %v3088
        %3106 = vmatprep.subr.bf16.mxu0 0
        %3107 = vmatpush1.bf16.msra.mxu0 %v3090
        %3108 = vmatprep.subr.bf16.mxu0 0
        %3109 = vmatpush1.bf16.msra.mxu0 %v3091
        %3110 = vmatprep.subr.bf16.mxu0 0
        %3111 = vmatpush1.bf16.msra.mxu0 %v3092
        %3112 = vmatprep.subr.bf16.mxu0 0
        %3113 = vmatpush1.bf16.msra.mxu0 %v3093
        %3114 = vmatprep.subr.bf16.mxu0 0
        %3115 = vmatpush1.bf16.msra.mxu0 %v3094
        %3116 = vmatprep.subr.bf16.mxu0 0
        %3117 = vmatpush1.bf16.msra.mxu0 %v3095
        %3118 = vmatprep.subr.bf16.mxu0 0
        %3119 = vmatpush1.bf16.msra.mxu0 %v3096
        %3120 = vmatprep.subr.bf16.mxu0 0
        %3121 = vmatpush1.bf16.msra.mxu0 %v3097
        %3122 = vmatprep.subr.bf16.mxu0 0
        %3123 = vmatpush1.bf16.msra.mxu0 0
        %3124 = vmatprep.subr.bf16.mxu0 0
        %3125 = vmatpush1.bf16.msra.mxu0 0
        %3126 = vmatprep.subr.bf16.mxu0 0
        %3127 = vmatpush1.bf16.msra.mxu0 0
        %3128 = vmatprep.subr.bf16.mxu0 0
        %3129 = vmatpush1.bf16.msra.mxu0 0
        %3130 = vmatprep.subr.bf16.mxu0 0
        %3131 = vmatpush1.bf16.msra.mxu0 0
        %3132 = vmatprep.subr.bf16.mxu0 0
        %3133 = vmatpush1.bf16.msra.mxu0 0
        %3134 = vmatprep.subr.bf16.mxu0 0
        %3135 = vmatpush1.bf16.msra.mxu0 0
        %3136 = vmatprep.subr.bf16.mxu0 0
        %3137 = vmatpush1.bf16.msra.mxu0 0
        %3138 = vmatprep.mubr.bf16.mxu0 0
        %3139 = vmatmul.mubr.bf16.gmra.mrb[0].mxu0 %v3036
        %v3140 = vpop.f32.mrb[0].mxu0
        %v3141 = vadd.f32 %v3057, %v3140
        %v3142 = vpop.f32.mrb[0].mxu0
        %v3143 = vpop.f32.mrb[0].mxu0
        %v3144 = vadd.f32 %v3057, %v3143
        %v3145 = vpop.f32.mrb[0].mxu0
        %3146 = vdwg.mxu0
        %v3147 = vmax.f32 %v3141, 0.0
        %v3148 = vmax.f32 %v3144, 0.0
        %v3149 = vld [vmem:[%s7 + $0x3] sm:$0x1]
        %v3150 = vld [vmem:[%s9 + $0x3] sm:$0x1]
        %3151 = vst [vmem:[%s2857 + $0x1] sm:$0xf] %v3147
        %3152 = vst [vmem:[%s2859 - $0x3] sm:$0xf0] %v3147
        %3153 = vst [vmem:[%s2861 + $0x1] sm:$0xf] %v3148
        %3154 = vst [vmem:[%s2863 - $0x3] sm:$0xf0] %v3148
        %v3155 = vld [vmem:[#allocation5] sm:$0x1]
        %v3156 = vld [vmem:[%s6 + $0x1b] sm:$0x1]
        %v3157 = vmul.f32 %v3155, %v3156
        %v3158 = vadd.f32 %v3157, 0.0
        %v3159 = vld [vmem:[#allocation5 + $0x1] sm:$0x1]
        %v3160 = vld [vmem:[%s6 + $0x1c] sm:$0x1]
        %v3161 = vmul.f32 %v3159, %v3160
        %v3162 = vadd.f32 %v3158, %v3161
        %v3163 = vld [vmem:[#allocation5 + $0x2] sm:$0x1]
        %v3164 = vld [vmem:[%s6 + $0x1d] sm:$0x1]
        %v3165 = vmul.f32 %v3163, %v3164
        %v3166 = vadd.f32 %v3162, %v3165
        %v3167 = vld [vmem:[%s2857] sm:$0x1]
        %v3168 = vld [vmem:[%s6 + $0x1e] sm:$0x1]
        %v3169 = vmul.f32 %v3167, %v3168
        %v3170 = vadd.f32 %v3166, %v3169
        %v3171 = vld [vmem:[%s2857 + $0x1] sm:$0x1]
        %v3172 = vld [vmem:[%s6 + $0x1f] sm:$0x1]
        %v3173 = vmul.f32 %v3171, %v3172
        %v3174 = vadd.f32 %v3170, %v3173
        %v3175 = vld [vmem:[%s2857 + $0x2] sm:$0x1]
        %v3176 = vld [vmem:[%s6 + $0x20] sm:$0x1]
        %v3177 = vmul.f32 %v3175, %v3176
        %v3178 = vadd.f32 %v3174, %v3177
        %v3179 = vld [vmem:[%s2859] sm:$0x1]
        %v3180 = vld [vmem:[%s6 + $0x21] sm:$0x1]
        %v3181 = vmul.f32 %v3179, %v3180
        %v3182 = vadd.f32 %v3178, %v3181
        %v3183 = vld [vmem:[%s2859 + $0x1] sm:$0x1]
        %v3184 = vld [vmem:[%s6 + $0x22] sm:$0x1]
        %v3185 = vmul.f32 %v3183, %v3184
        %v3186 = vadd.f32 %v3182, %v3185
        %v3187 = vld [vmem:[%s2859 + $0x2] sm:$0x1]
        %v3188 = vld [vmem:[%s6 + $0x23] sm:$0x1]
        %v3189 = vmul.f32 %v3187, %v3188
        %v3190 = vadd.f32 %v3186, %v3189
        %v3191 = vadd.f32 %v3190, %v3149
        %v3192 = vmax.f32 %v3191, 0.0
        %3193 = vst [vmem:[#allocation3] sm:$0x1] %v3192
        %v3194 = vld [vmem:[#allocation5 + $0x2] sm:$0x1]
        %v3195 = vld [vmem:[%s6 + $0x1b] sm:$0x1]
        %v3196 = vmul.f32 %v3194, %v3195
        %v3197 = vadd.f32 %v3196, 0.0
        %v3198 = vld [vmem:[#allocation5 + $0x3] sm:$0x1]
        %v3199 = vld [vmem:[%s6 + $0x1c] sm:$0x1]
        %v3200 = vmul.f32 %v3198, %v3199
        %v3201 = vadd.f32 %v3197, %v3200
        %v3202 = vld [vmem:[#allocation5 + $0x4] sm:$0x1]
        %v3203 = vld [vmem:[%s6 + $0x1d] sm:$0x1]
        %v3204 = vmul.f32 %v3202, %v3203
        %v3205 = vadd.f32 %v3201, %v3204
        %v3206 = vld [vmem:[%s2857 + $0x2] sm:$0x1]
        %v3207 = vld [vmem:[%s6 + $0x1e] sm:$0x1]
        %v3208 = vmul.f32 %v3206, %v3207
        %v3209 = vadd.f32 %v3205, %v3208
        %v3210 = vld [vmem:[%s2857 + $0x3] sm:$0x1]
        %v3211 = vld [vmem:[%s6 + $0x1f] sm:$0x1]
        %v3212 = vmul.f32 %v3210, %v3211
        %v3213 = vadd.f32 %v3209, %v3212
        %v3214 = vld [vmem:[%s2857 + $0x4] sm:$0x1]
        %v3215 = vld [vmem:[%s6 + $0x20] sm:$0x1]
        %v3216 = vmul.f32 %v3214, %v3215
        %v3217 = vadd.f32 %v3213, %v3216
        %v3218 = vld [vmem:[%s2859 + $0x2] sm:$0x1]
        %v3219 = vld [vmem:[%s6 + $0x21] sm:$0x1]
        %v3220 = vmul.f32 %v3218, %v3219
        %v3221 = vadd.f32 %v3217, %v3220
        %v3222 = vld [vmem:[%s2859 + $0x3] sm:$0x1]
        %v3223 = vld [vmem:[%s6 + $0x22] sm:$0x1]
        %v3224 = vmul.f32 %v3222, %v3223
        %v3225 = vadd.f32 %v3221, %v3224
        %v3226 = vld [vmem:[%s2859 + $0x4] sm:$0x1]
        %v3227 = vld [vmem:[%s6 + $0x23] sm:$0x1]
        %v3228 = vmul.f32 %v3226, %v3227
        %v3229 = vadd.f32 %v3225, %v3228
        %v3230 = vadd.f32 %v3229, %v3149
        %v3231 = vmax.f32 %v3230, 0.0
        %3232 = vst [vmem:[#allocation3 + $0x1] sm:$0x1] %v3231
        %v3233 = vld [vmem:[%s2859] sm:$0x1]
        %v3234 = vld [vmem:[%s6 + $0x1b] sm:$0x1]
        %v3235 = vmul.f32 %v3233, %v3234
        %v3236 = vadd.f32 %v3235, 0.0
        %v3237 = vld [vmem:[%s2859 + $0x1] sm:$0x1]
        %v3238 = vld [vmem:[%s6 + $0x1c] sm:$0x1]
        %v3239 = vmul.f32 %v3237, %v3238
        %v3240 = vadd.f32 %v3236, %v3239
        %v3241 = vld [vmem:[%s2859 + $0x2] sm:$0x1]
        %v3242 = vld [vmem:[%s6 + $0x1d] sm:$0x1]
        %v3243 = vmul.f32 %v3241, %v3242
        %v3244 = vadd.f32 %v3240, %v3243
        %v3245 = vld [vmem:[%s2861] sm:$0x1]
        %v3246 = vld [vmem:[%s6 + $0x1e] sm:$0x1]
        %v3247 = vmul.f32 %v3245, %v3246
        %v3248 = vadd.f32 %v3244, %v3247
        %v3249 = vld [vmem:[%s2861 + $0x1] sm:$0x1]
        %v3250 = vld [vmem:[%s6 + $0x1f] sm:$0x1]
        %v3251 = vmul.f32 %v3249, %v3250
        %v3252 = vadd.f32 %v3248, %v3251
        %v3253 = vld [vmem:[%s2861 + $0x2] sm:$0x1]
        %v3254 = vld [vmem:[%s6 + $0x20] sm:$0x1]
        %v3255 = vmul.f32 %v3253, %v3254
        %v3256 = vadd.f32 %v3252, %v3255
        %v3257 = vld [vmem:[%s2863] sm:$0x1]
        %v3258 = vld [vmem:[%s6 + $0x21] sm:$0x1]
        %v3259 = vmul.f32 %v3257, %v3258
        %v3260 = vadd.f32 %v3256, %v3259
        %v3261 = vld [vmem:[%s2863 + $0x1] sm:$0x1]
        %v3262 = vld [vmem:[%s6 + $0x22] sm:$0x1]
        %v3263 = vmul.f32 %v3261, %v3262
        %v3264 = vadd.f32 %v3260, %v3263
        %v3265 = vld [vmem:[%s2863 + $0x2] sm:$0x1]
        %v3266 = vld [vmem:[%s6 + $0x23] sm:$0x1]
        %v3267 = vmul.f32 %v3265, %v3266
        %v3268 = vadd.f32 %v3264, %v3267
        %v3269 = vadd.f32 %v3268, %v3149
        %v3270 = vmax.f32 %v3269, 0.0
        %3271 = vst [vmem:[#allocation3 + $0x2] sm:$0x1] %v3270
        %v3272 = vld [vmem:[%s2859 + $0x2] sm:$0x1]
        %v3273 = vld [vmem:[%s6 + $0x1b] sm:$0x1]
        %v3274 = vmul.f32 %v3272, %v3273
        %v3275 = vadd.f32 %v3274, 0.0
        %v3276 = vld [vmem:[%s2859 + $0x3] sm:$0x1]
        %v3277 = vld [vmem:[%s6 + $0x1c] sm:$0x1]
        %v3278 = vmul.f32 %v3276, %v3277
        %v3279 = vadd.f32 %v3275, %v3278
        %v3280 = vld [vmem:[%s2859 + $0x4] sm:$0x1]
        %v3281 = vld [vmem:[%s6 + $0x1d] sm:$0x1]
        %v3282 = vmul.f32 %v3280, %v3281
        %v3283 = vadd.f32 %v3279, %v3282
        %v3284 = vld [vmem:[%s2861 + $0x2] sm:$0x1]
        %v3285 = vld [vmem:[%s6 + $0x1e] sm:$0x1]
        %v3286 = vmul.f32 %v3284, %v3285
        %v3287 = vadd.f32 %v3283, %v3286
        %v3288 = vld [vmem:[%s2861 + $0x3] sm:$0x1]
        %v3289 = vld [vmem:[%s6 + $0x1f] sm:$0x1]
        %v3290 = vmul.f32 %v3288, %v3289
        %v3291 = vadd.f32 %v3287, %v3290
        %v3292 = vld [vmem:[%s2861 + $0x4] sm:$0x1]
        %v3293 = vld [vmem:[%s6 + $0x20] sm:$0x1]
        %v3294 = vmul.f32 %v3292, %v3293
        %v3295 = vadd.f32 %v3291, %v3294
        %v3296 = vld [vmem:[%s2863 + $0x2] sm:$0x1]
        %v3297 = vld [vmem:[%s6 + $0x21] sm:$0x1]
        %v3298 = vmul.f32 %v3296, %v3297
        %v3299 = vadd.f32 %v3295, %v3298
        %v3300 = vld [vmem:[%s2863 + $0x3] sm:$0x1]
        %v3301 = vld [vmem:[%s6 + $0x22] sm:$0x1]
        %v3302 = vmul.f32 %v3300, %v3301
        %v3303 = vadd.f32 %v3299, %v3302
        %v3304 = vld [vmem:[%s2863 + $0x4] sm:$0x1]
        %v3305 = vld [vmem:[%s6 + $0x23] sm:$0x1]
        %v3306 = vmul.f32 %v3304, %v3305
        %v3307 = vadd.f32 %v3303, %v3306
        %v3308 = vadd.f32 %v3307, %v3149
        %v3309 = vmax.f32 %v3308, 0.0
        %3310 = vst [vmem:[#allocation3 + $0x3] sm:$0x1] %v3309
        %v3311 = vld [vmem:[#allocation3] sm:$0xf]
        %v3312 = vpack.c.bf16 %v3311, %v3311
        %s3313 = scalar_lea.vmem %s8, 192
        %v3314 = vld [vmem:[%s3313] sm:$0xf]
        %v3315 = vld [vmem:[%s3313 + $0x4] sm:$0xf]
        %v3316 = vld [vmem:[%s3313 + $0x8] sm:$0xf]
        %v3317 = vld [vmem:[%s3313 + $0xc] sm:$0xf]
        %v3318 = vld [vmem:[%s3313 + $0x10] sm:$0xf]
        %v3319 = vld [vmem:[%s3313 + $0x14] sm:$0xf]
        %v3320 = vld [vmem:[%s3313 + $0x18] sm:$0xf]
        %v3321 = vld [vmem:[%s3313 + $0x1c] sm:$0xf]
        %v3322 = vld [vmem:[%s3313 + $0x20] sm:$0xf]
        %v3323 = vld [vmem:[%s3313 + $0x24] sm:$0xf]
        %v3324 = vld [vmem:[%s3313 + $0x28] sm:$0xf]
        %v3325 = vld [vmem:[%s3313 + $0x2c] sm:$0xf]
        %v3326 = vld [vmem:[%s3313 + $0x30] sm:$0xf]
        %v3327 = vld [vmem:[%s3313 + $0x34] sm:$0xf]
        %v3328 = vld [vmem:[%s3313 + $0x38] sm:$0xf]
        %v3329 = vld [vmem:[%s3313 + $0x3c] sm:$0xf]
        %v3330 = vlaneseq
        %v3331 = vshrl.u32 %v3330, 7
        %v3332 = vsub.s32 0, %v3331
        %v3333 = vrot.slane %v3150, %v3332
        %v3350 = vunpack.c.l.b16 %v3314
        %v3351 = vunpack.c.l.b16 %v3315
        %v3352 = vunpack.c.l.b16 %v3316
        %v3353 = vunpack.c.l.b16 %v3317
        %v3354 = vunpack.c.l.b16 %v3318
        %v3355 = vunpack.c.l.b16 %v3319
        %v3356 = vunpack.c.l.b16 %v3320
        %v3357 = vunpack.c.l.b16 %v3321
        %v3358 = vunpack.c.l.b16 %v3322
        %v3359 = vunpack.c.l.b16 %v3323
        %v3360 = vunpack.c.l.b16 %v3324
        %v3361 = vunpack.c.l.b16 %v3325
        %v3362 = vunpack.c.l.b16 %v3326
        %v3363 = vunpack.c.l.b16 %v3327
        %v3364 = vunpack.c.l.b16 %v3328
        %v3365 = vunpack.c.l.b16 %v3329
        %v3366 = vpack.c.b16 %v3351, %v3350
        %v3367 = vpack.c.b16 %v3353, %v3352
        %v3368 = vpack.c.b16 %v3355, %v3354
        %v3369 = vpack.c.b16 %v3357, %v3356
        %v3370 = vpack.c.b16 %v3359, %v3358
        %v3371 = vpack.c.b16 %v3361, %v3360
        %v3372 = vpack.c.b16 %v3363, %v3362
        %v3373 = vpack.c.b16 %v3365, %v3364
        %3382 = vmatprep.subr.bf16.mxu0 0
        %3383 = vmatpush1.bf16.msra.mxu0 %v3366
        %3384 = vmatprep.subr.bf16.mxu0 0
        %3385 = vmatpush1.bf16.msra.mxu0 %v3367
        %3386 = vmatprep.subr.bf16.mxu0 0
        %3387 = vmatpush1.bf16.msra.mxu0 %v3368
        %3388 = vmatprep.subr.bf16.mxu0 0
        %3389 = vmatpush1.bf16.msra.mxu0 %v3369
        %3390 = vmatprep.subr.bf16.mxu0 0
        %3391 = vmatpush1.bf16.msra.mxu0 %v3370
        %3392 = vmatprep.subr.bf16.mxu0 0
        %3393 = vmatpush1.bf16.msra.mxu0 %v3371
        %3394 = vmatprep.subr.bf16.mxu0 0
        %3395 = vmatpush1.bf16.msra.mxu0 %v3372
        %3396 = vmatprep.subr.bf16.mxu0 0
        %3397 = vmatpush1.bf16.msra.mxu0 %v3373
        %3398 = vmatprep.subr.bf16.mxu0 0
        %3399 = vmatpush1.bf16.msra.mxu0 0
        %3400 = vmatprep.subr.bf16.mxu0 0
        %3401 = vmatpush1.bf16.msra.mxu0 0
        %3402 = vmatprep.subr.bf16.mxu0 0
        %3403 = vmatpush1.bf16.msra.mxu0 0
        %3404 = vmatprep.subr.bf16.mxu0 0
        %3405 = vmatpush1.bf16.msra.mxu0 0
        %3406 = vmatprep.subr.bf16.mxu0 0
        %3407 = vmatpush1.bf16.msra.mxu0 0
        %3408 = vmatprep.subr.bf16.mxu0 0
        %3409 = vmatpush1.bf16.msra.mxu0 0
        %3410 = vmatprep.subr.bf16.mxu0 0
        %3411 = vmatpush1.bf16.msra.mxu0 0
        %3412 = vmatprep.subr.bf16.mxu0 0
        %3413 = vmatpush1.bf16.msra.mxu0 0
        %3414 = vmatprep.mubr.bf16.mxu0 0
        %3415 = vmatmul.mubr.bf16.gmra.mrb[0].mxu0 %v3312
        %v3416 = vpop.f32.mrb[0].mxu0
        %v3417 = vadd.f32 %v3333, %v3416
        %v3418 = vpop.f32.mrb[0].mxu0
        %v3419 = vpop.f32.mrb[0].mxu0
        %v3420 = vpop.f32.mrb[0].mxu0
        %3421 = vdwg.mxu0
        %v3422 = vmax.f32 %v3417, 0.0
        %v3423 = vld [vmem:[%s7 + $0x4] sm:$0x1]
        %v3424 = vld [vmem:[%s9 + $0x4] sm:$0x1]
        %s3425 = scalar_lea.vmem [#allocation6], 4
        %3426 = vst [vmem:[%s3425 + $0x1] sm:$0x3] %v3422
        %s3427 = scalar_lea.vmem [#allocation6], 8
        %3428 = vst [vmem:[%s3427 - $0x1] sm:$0xc] %v3422
        %v3429 = vld [vmem:[#allocation6] sm:$0x3]
        %v3430 = vld [vmem:[#allocation6 + $0x4] sm:$0x3]
        %v3431 = vld [vmem:[%s6 + $0x24] sm:$0x1]
        %v3432 = vlaneseq
        %v3433 = vshrl.u32 %v3432, 7
        %v3434 = vsub.s32 0, %v3433
        %v3435 = vrot.slane %v3431, %v3434
        %v3436 = vmul.f32 %v3429, %v3435
        %v3437 = vmul.f32 %v3430, %v3435
        %v3438 = vadd.f32 %v3436, 0.0
        %v3439 = vadd.f32 %v3437, 0.0
        %v3440 = vld [vmem:[#allocation6 + $0x1] sm:$0x3]
        %v3441 = vld [vmem:[#allocation6 + $0x5] sm:$0x3]
        %v3442 = vld [vmem:[%s6 + $0x25] sm:$0x1]
        %v3443 = vlaneseq
        %v3444 = vshrl.u32 %v3443, 7
        %v3445 = vsub.s32 0, %v3444
        %v3446 = vrot.slane %v3442, %v3445
        %v3447 = vmul.f32 %v3440, %v3446
        %v3448 = vmul.f32 %v3441, %v3446
        %v3449 = vadd.f32 %v3438, %v3447
        %v3450 = vadd.f32 %v3439, %v3448
        %v3451 = vld [vmem:[#allocation6 + $0x2] sm:$0x3]
        %v3452 = vld [vmem:[#allocation6 + $0x6] sm:$0x3]
        %v3453 = vld [vmem:[%s6 + $0x26] sm:$0x1]
        %v3454 = vlaneseq
        %v3455 = vshrl.u32 %v3454, 7
        %v3456 = vsub.s32 0, %v3455
        %v3457 = vrot.slane %v3453, %v3456
        %v3458 = vmul.f32 %v3451, %v3457
        %v3459 = vmul.f32 %v3452, %v3457
        %v3460 = vadd.f32 %v3449, %v3458
        %v3461 = vadd.f32 %v3450, %v3459
        %v3462 = vld [vmem:[%s3425] sm:$0x3]
        %v3463 = vld [vmem:[%s3425 + $0x4] sm:$0x3]
        %v3464 = vld [vmem:[%s6 + $0x27] sm:$0x1]
        %v3465 = vlaneseq
        %v3466 = vshrl.u32 %v3465, 7
        %v3467 = vsub.s32 0, %v3466
        %v3468 = vrot.slane %v3464, %v3467
        %v3469 = vmul.f32 %v3462, %v3468
        %v3470 = vmul.f32 %v3463, %v3468
        %v3471 = vadd.f32 %v3460, %v3469
        %v3472 = vadd.f32 %v3461, %v3470
        %v3473 = vld [vmem:[%s3425 + $0x1] sm:$0x3]
        %v3474 = vld [vmem:[%s3425 + $0x5] sm:$0x3]
        %v3475 = vld [vmem:[%s6 + $0x28] sm:$0x1]
        %v3476 = vlaneseq
        %v3477 = vshrl.u32 %v3476, 7
        %v3478 = vsub.s32 0, %v3477
        %v3479 = vrot.slane %v3475, %v3478
        %v3480 = vmul.f32 %v3473, %v3479
        %v3481 = vmul.f32 %v3474, %v3479
        %v3482 = vadd.f32 %v3471, %v3480
        %v3483 = vadd.f32 %v3472, %v3481
        %v3484 = vld [vmem:[%s3425 + $0x2] sm:$0x3]
        %v3485 = vld [vmem:[%s3425 + $0x6] sm:$0x3]
        %v3486 = vld [vmem:[%s6 + $0x29] sm:$0x1]
        %v3487 = vlaneseq
        %v3488 = vshrl.u32 %v3487, 7
        %v3489 = vsub.s32 0, %v3488
        %v3490 = vrot.slane %v3486, %v3489
        %v3491 = vmul.f32 %v3484, %v3490
        %v3492 = vmul.f32 %v3485, %v3490
        %v3493 = vadd.f32 %v3482, %v3491
        %v3494 = vadd.f32 %v3483, %v3492
        %v3495 = vld [vmem:[%s3427] sm:$0x3]
        %v3496 = vld [vmem:[%s3427 + $0x4] sm:$0x3]
        %v3497 = vld [vmem:[%s6 + $0x2a] sm:$0x1]
        %v3498 = vlaneseq
        %v3499 = vshrl.u32 %v3498, 7
        %v3500 = vsub.s32 0, %v3499
        %v3501 = vrot.slane %v3497, %v3500
        %v3502 = vmul.f32 %v3495, %v3501
        %v3503 = vmul.f32 %v3496, %v3501
        %v3504 = vadd.f32 %v3493, %v3502
        %v3505 = vadd.f32 %v3494, %v3503
        %v3506 = vld [vmem:[%s3427 + $0x1] sm:$0x3]
        %v3507 = vld [vmem:[%s3427 + $0x5] sm:$0x3]
        %v3508 = vld [vmem:[%s6 + $0x2b] sm:$0x1]
        %v3509 = vlaneseq
        %v3510 = vshrl.u32 %v3509, 7
        %v3511 = vsub.s32 0, %v3510
        %v3512 = vrot.slane %v3508, %v3511
        %v3513 = vmul.f32 %v3506, %v3512
        %v3514 = vmul.f32 %v3507, %v3512
        %v3515 = vadd.f32 %v3504, %v3513
        %v3516 = vadd.f32 %v3505, %v3514
        %v3517 = vld [vmem:[%s3427 + $0x2] sm:$0x3]
        %v3518 = vld [vmem:[%s3427 + $0x6] sm:$0x3]
        %v3519 = vld [vmem:[%s6 + $0x2c] sm:$0x1]
        %v3520 = vlaneseq
        %v3521 = vshrl.u32 %v3520, 7
        %v3522 = vsub.s32 0, %v3521
        %v3523 = vrot.slane %v3519, %v3522
        %v3524 = vmul.f32 %v3517, %v3523
        %v3525 = vmul.f32 %v3518, %v3523
        %v3526 = vadd.f32 %v3515, %v3524
        %v3527 = vadd.f32 %v3516, %v3525
        %v3528 = vlaneseq
        %v3529 = vshrl.u32 %v3528, 7
        %v3530 = vsub.s32 0, %v3529
        %v3531 = vrot.slane %v3423, %v3530
        %v3532 = vadd.f32 %v3526, %v3531
        %v3533 = vadd.f32 %v3527, %v3531
        %v3534 = vmax.f32 %v3532, 0.0
        %v3535 = vmax.f32 %v3533, 0.0
        %3536 = vst [vmem:[#allocation3] sm:$0x3] %v3534
        %3537 = vst [vmem:[#allocation3 + $0x2] sm:$0x3] %v3535
        %v3538 = vld [vmem:[#allocation3] sm:$0xf]
        %v3539 = vpack.c.bf16 %v3538, %v3538
        %s3540 = scalar_lea.vmem %s8, 256
        %v3541 = vld [vmem:[%s3540] sm:$0xf]
        %v3542 = vld [vmem:[%s3540 + $0x4] sm:$0xf]
        %v3543 = vld [vmem:[%s3540 + $0x8] sm:$0xf]
        %v3544 = vld [vmem:[%s3540 + $0xc] sm:$0xf]
        %v3545 = vld [vmem:[%s3540 + $0x10] sm:$0xf]
        %v3546 = vld [vmem:[%s3540 + $0x14] sm:$0xf]
        %v3547 = vld [vmem:[%s3540 + $0x18] sm:$0xf]
        %v3548 = vld [vmem:[%s3540 + $0x1c] sm:$0xf]
        %v3549 = vld [vmem:[%s3540 + $0x20] sm:$0xf]
        %v3550 = vld [vmem:[%s3540 + $0x24] sm:$0xf]
        %v3551 = vld [vmem:[%s3540 + $0x28] sm:$0xf]
        %v3552 = vld [vmem:[%s3540 + $0x2c] sm:$0xf]
        %v3553 = vld [vmem:[%s3540 + $0x30] sm:$0xf]
        %v3554 = vld [vmem:[%s3540 + $0x34] sm:$0xf]
        %v3555 = vld [vmem:[%s3540 + $0x38] sm:$0xf]
        %v3556 = vld [vmem:[%s3540 + $0x3c] sm:$0xf]
        %v3557 = vlaneseq
        %v3558 = vshrl.u32 %v3557, 7
        %v3559 = vsub.s32 0, %v3558
        %v3560 = vrot.slane %v3424, %v3559
        %v3577 = vunpack.c.l.b16 %v3541
        %v3578 = vunpack.c.l.b16 %v3542
        %v3579 = vunpack.c.l.b16 %v3543
        %v3580 = vunpack.c.l.b16 %v3544
        %v3581 = vunpack.c.l.b16 %v3545
        %v3582 = vunpack.c.l.b16 %v3546
        %v3583 = vunpack.c.l.b16 %v3547
        %v3584 = vunpack.c.l.b16 %v3548
        %v3585 = vunpack.c.l.b16 %v3549
        %v3586 = vunpack.c.l.b16 %v3550
        %v3587 = vunpack.c.l.b16 %v3551
        %v3588 = vunpack.c.l.b16 %v3552
        %v3589 = vunpack.c.l.b16 %v3553
        %v3590 = vunpack.c.l.b16 %v3554
        %v3591 = vunpack.c.l.b16 %v3555
        %v3592 = vunpack.c.l.b16 %v3556
        %v3593 = vpack.c.b16 %v3578, %v3577
        %v3594 = vpack.c.b16 %v3580, %v3579
        %v3595 = vpack.c.b16 %v3582, %v3581
        %v3596 = vpack.c.b16 %v3584, %v3583
        %v3597 = vpack.c.b16 %v3586, %v3585
        %v3598 = vpack.c.b16 %v3588, %v3587
        %v3599 = vpack.c.b16 %v3590, %v3589
        %v3600 = vpack.c.b16 %v3592, %v3591
        %3609 = vmatprep.subr.bf16.mxu0 0
        %3610 = vmatpush1.bf16.msra.mxu0 %v3593
        %3611 = vmatprep.subr.bf16.mxu0 0
        %3612 = vmatpush1.bf16.msra.mxu0 %v3594
        %3613 = vmatprep.subr.bf16.mxu0 0
        %3614 = vmatpush1.bf16.msra.mxu0 %v3595
        %3615 = vmatprep.subr.bf16.mxu0 0
        %3616 = vmatpush1.bf16.msra.mxu0 %v3596
        %3617 = vmatprep.subr.bf16.mxu0 0
        %3618 = vmatpush1.bf16.msra.mxu0 %v3597
        %3619 = vmatprep.subr.bf16.mxu0 0
        %3620 = vmatpush1.bf16.msra.mxu0 %v3598
        %3621 = vmatprep.subr.bf16.mxu0 0
        %3622 = vmatpush1.bf16.msra.mxu0 %v3599
        %3623 = vmatprep.subr.bf16.mxu0 0
        %3624 = vmatpush1.bf16.msra.mxu0 %v3600
        %3625 = vmatprep.subr.bf16.mxu0 0
        %3626 = vmatpush1.bf16.msra.mxu0 0
        %3627 = vmatprep.subr.bf16.mxu0 0
        %3628 = vmatpush1.bf16.msra.mxu0 0
        %3629 = vmatprep.subr.bf16.mxu0 0
        %3630 = vmatpush1.bf16.msra.mxu0 0
        %3631 = vmatprep.subr.bf16.mxu0 0
        %3632 = vmatpush1.bf16.msra.mxu0 0
        %3633 = vmatprep.subr.bf16.mxu0 0
        %3634 = vmatpush1.bf16.msra.mxu0 0
        %3635 = vmatprep.subr.bf16.mxu0 0
        %3636 = vmatpush1.bf16.msra.mxu0 0
        %3637 = vmatprep.subr.bf16.mxu0 0
        %3638 = vmatpush1.bf16.msra.mxu0 0
        %3639 = vmatprep.subr.bf16.mxu0 0
        %3640 = vmatpush1.bf16.msra.mxu0 0
        %3641 = vmatprep.mubr.bf16.mxu0 0
        %3642 = vmatmul.mubr.bf16.gmra.mrb[0].mxu0 %v3539
        %v3643 = vpop.f32.mrb[0].mxu0
        %v3644 = vadd.f32 %v3560, %v3643
        %v3645 = vpop.f32.mrb[0].mxu0
        %v3646 = vpop.f32.mrb[0].mxu0
        %v3647 = vpop.f32.mrb[0].mxu0
        %3648 = vdwg.mxu0
        %v3649 = vmax.f32 %v3644, 0.0
        %v3650 = vld [vmem:[%s7 + $0x5] sm:$0x1]
        %v3651 = vld [vmem:[%s9 + $0x5] sm:$0x1]
        %3652 = vst [vmem:[%s3425 + $0x1] sm:$0x3] %v3649
        %3653 = vst [vmem:[%s3427 - $0x1] sm:$0xc] %v3649
        %v3654 = vld [vmem:[#allocation6] sm:$0x1]
        %v3655 = vld [vmem:[%s6 + $0x2d] sm:$0x1]
        %v3656 = vmul.f32 %v3654, %v3655
        %v3657 = vadd.f32 %v3656, 0.0
        %v3658 = vld [vmem:[#allocation6 + $0x1] sm:$0x1]
        %v3659 = vld [vmem:[%s6 + $0x2e] sm:$0x1]
        %v3660 = vmul.f32 %v3658, %v3659
        %v3661 = vadd.f32 %v3657, %v3660
        %v3662 = vld [vmem:[#allocation6 + $0x2] sm:$0x1]
        %v3663 = vld [vmem:[%s6 + $0x2f] sm:$0x1]
        %v3664 = vmul.f32 %v3662, %v3663
        %v3665 = vadd.f32 %v3661, %v3664
        %v3666 = vld [vmem:[%s3425] sm:$0x1]
        %v3667 = vld [vmem:[%s6 + $0x30] sm:$0x1]
        %v3668 = vmul.f32 %v3666, %v3667
        %v3669 = vadd.f32 %v3665, %v3668
        %v3670 = vld [vmem:[%s3425 + $0x1] sm:$0x1]
        %v3671 = vld [vmem:[%s6 + $0x31] sm:$0x1]
        %v3672 = vmul.f32 %v3670, %v3671
        %v3673 = vadd.f32 %v3669, %v3672
        %v3674 = vld [vmem:[%s3425 + $0x2] sm:$0x1]
        %v3675 = vld [vmem:[%s6 + $0x32] sm:$0x1]
        %v3676 = vmul.f32 %v3674, %v3675
        %v3677 = vadd.f32 %v3673, %v3676
        %v3678 = vld [vmem:[%s3427] sm:$0x1]
        %v3679 = vld [vmem:[%s6 + $0x33] sm:$0x1]
        %v3680 = vmul.f32 %v3678, %v3679
        %v3681 = vadd.f32 %v3677, %v3680
        %v3682 = vld [vmem:[%s3427 + $0x1] sm:$0x1]
        %v3683 = vld [vmem:[%s6 + $0x34] sm:$0x1]
        %v3684 = vmul.f32 %v3682, %v3683
        %v3685 = vadd.f32 %v3681, %v3684
        %v3686 = vld [vmem:[%s3427 + $0x2] sm:$0x1]
        %v3687 = vld [vmem:[%s6 + $0x35] sm:$0x1]
        %v3688 = vmul.f32 %v3686, %v3687
        %v3689 = vadd.f32 %v3685, %v3688
        %v3690 = vadd.f32 %v3689, %v3650
        %v3691 = vmax.f32 %v3690, 0.0
        %3692 = vst [vmem:[#allocation3] sm:$0x1] %v3691
        %v3693 = vld [vmem:[#allocation3] sm:$0x1]
        %v3694 = vpack.c.bf16 %v3693, %v3693
        %s3695 = scalar_lea.vmem %s8, 320
        %v3696 = vld [vmem:[%s3695] sm:$0xf]
        %v3697 = vld [vmem:[%s3695 + $0x4] sm:$0xf]
        %v3698 = vld [vmem:[%s3695 + $0x8] sm:$0xf]
        %v3699 = vld [vmem:[%s3695 + $0xc] sm:$0xf]
        %v3700 = vld [vmem:[%s3695 + $0x10] sm:$0xf]
        %v3701 = vld [vmem:[%s3695 + $0x14] sm:$0xf]
        %v3702 = vld [vmem:[%s3695 + $0x18] sm:$0xf]
        %v3703 = vld [vmem:[%s3695 + $0x1c] sm:$0xf]
        %v3704 = vld [vmem:[%s3695 + $0x20] sm:$0xf]
        %v3705 = vld [vmem:[%s3695 + $0x24] sm:$0xf]
        %v3706 = vld [vmem:[%s3695 + $0x28] sm:$0xf]
        %v3707 = vld [vmem:[%s3695 + $0x2c] sm:$0xf]
        %v3708 = vld [vmem:[%s3695 + $0x30] sm:$0xf]
        %v3709 = vld [vmem:[%s3695 + $0x34] sm:$0xf]
        %v3710 = vld [vmem:[%s3695 + $0x38] sm:$0xf]
        %v3711 = vld [vmem:[%s3695 + $0x3c] sm:$0xf]
        %v3728 = vunpack.c.l.b16 %v3696
        %v3729 = vunpack.c.l.b16 %v3697
        %v3730 = vunpack.c.l.b16 %v3698
        %v3731 = vunpack.c.l.b16 %v3699
        %v3732 = vunpack.c.l.b16 %v3700
        %v3733 = vunpack.c.l.b16 %v3701
        %v3734 = vunpack.c.l.b16 %v3702
        %v3735 = vunpack.c.l.b16 %v3703
        %v3736 = vunpack.c.l.b16 %v3704
        %v3737 = vunpack.c.l.b16 %v3705
        %v3738 = vunpack.c.l.b16 %v3706
        %v3739 = vunpack.c.l.b16 %v3707
        %v3740 = vunpack.c.l.b16 %v3708
        %v3741 = vunpack.c.l.b16 %v3709
        %v3742 = vunpack.c.l.b16 %v3710
        %v3743 = vunpack.c.l.b16 %v3711
        %v3744 = vpack.c.b16 %v3729, %v3728
        %v3745 = vpack.c.b16 %v3731, %v3730
        %v3746 = vpack.c.b16 %v3733, %v3732
        %v3747 = vpack.c.b16 %v3735, %v3734
        %v3748 = vpack.c.b16 %v3737, %v3736
        %v3749 = vpack.c.b16 %v3739, %v3738
        %v3750 = vpack.c.b16 %v3741, %v3740
        %v3751 = vpack.c.b16 %v3743, %v3742
        %3760 = vmatprep.subr.bf16.mxu0 0
        %3761 = vmatpush1.bf16.msra.mxu0 %v3744
        %3762 = vmatprep.subr.bf16.mxu0 0
        %3763 = vmatpush1.bf16.msra.mxu0 %v3745
        %3764 = vmatprep.subr.bf16.mxu0 0
        %3765 = vmatpush1.bf16.msra.mxu0 %v3746
        %3766 = vmatprep.subr.bf16.mxu0 0
        %3767 = vmatpush1.bf16.msra.mxu0 %v3747
        %3768 = vmatprep.subr.bf16.mxu0 0
        %3769 = vmatpush1.bf16.msra.mxu0 %v3748
        %3770 = vmatprep.subr.bf16.mxu0 0
        %3771 = vmatpush1.bf16.msra.mxu0 %v3749
        %3772 = vmatprep.subr.bf16.mxu0 0
        %3773 = vmatpush1.bf16.msra.mxu0 %v3750
        %3774 = vmatprep.subr.bf16.mxu0 0
        %3775 = vmatpush1.bf16.msra.mxu0 %v3751
        %3776 = vmatprep.subr.bf16.mxu0 0
        %3777 = vmatpush1.bf16.msra.mxu0 0
        %3778 = vmatprep.subr.bf16.mxu0 0
        %3779 = vmatpush1.bf16.msra.mxu0 0
        %3780 = vmatprep.subr.bf16.mxu0 0
        %3781 = vmatpush1.bf16.msra.mxu0 0
        %3782 = vmatprep.subr.bf16.mxu0 0
        %3783 = vmatpush1.bf16.msra.mxu0 0
        %3784 = vmatprep.subr.bf16.mxu0 0
        %3785 = vmatpush1.bf16.msra.mxu0 0
        %3786 = vmatprep.subr.bf16.mxu0 0
        %3787 = vmatpush1.bf16.msra.mxu0 0
        %3788 = vmatprep.subr.bf16.mxu0 0
        %3789 = vmatpush1.bf16.msra.mxu0 0
        %3790 = vmatprep.subr.bf16.mxu0 0
        %3791 = vmatpush1.bf16.msra.mxu0 0
        %3792 = vmatprep.mubr.bf16.mxu0 0
        %3793 = vmatmul.mubr.bf16.gmra.mrb[0].mxu0 %v3694
        %v3794 = vpop.f32.mrb[0].mxu0
        %v3795 = vadd.f32 %v3651, %v3794
        %v3796 = vpop.f32.mrb[0].mxu0
        %v3797 = vpop.f32.mrb[0].mxu0
        %v3798 = vpop.f32.mrb[0].mxu0
        %3799 = vdwg.mxu0
        %v3800 = vmax.f32 %v3795, 0.0
        %v3801 = vld [vmem:[%s7 + $0x6] sm:$0x1]
        %v3802 = vld [vmem:[%s9 + $0x6] sm:$0x1]
        %v3803 = vld [vmem:[%s6 + $0x3a] sm:$0x1]
        %v3804 = vmul.f32 %v3800, %v3803
        %v3805 = vadd.f32 %v3804, %v3801
        %v3806 = vmax.f32 %v3805, 0.0
        %v3807 = vpack.c.bf16 %v3806, %v3806
        %s3808 = scalar_lea.vmem %s8, 384
        %v3809 = vld [vmem:[%s3808] sm:$0xf]
        %v3810 = vld [vmem:[%s3808 + $0x4] sm:$0xf]
        %v3811 = vld [vmem:[%s3808 + $0x8] sm:$0xf]
        %v3812 = vld [vmem:[%s3808 + $0xc] sm:$0xf]
        %v3813 = vld [vmem:[%s3808 + $0x10] sm:$0xf]
        %v3814 = vld [vmem:[%s3808 + $0x14] sm:$0xf]
        %v3815 = vld [vmem:[%s3808 + $0x18] sm:$0xf]
        %v3816 = vld [vmem:[%s3808 + $0x1c] sm:$0xf]
        %v3817 = vld [vmem:[%s3808 + $0x20] sm:$0xf]
        %v3818 = vld [vmem:[%s3808 + $0x24] sm:$0xf]
        %v3819 = vld [vmem:[%s3808 + $0x28] sm:$0xf]
        %v3820 = vld [vmem:[%s3808 + $0x2c] sm:$0xf]
        %v3821 = vld [vmem:[%s3808 + $0x30] sm:$0xf]
        %v3822 = vld [vmem:[%s3808 + $0x34] sm:$0xf]
        %v3823 = vld [vmem:[%s3808 + $0x38] sm:$0xf]
        %v3824 = vld [vmem:[%s3808 + $0x3c] sm:$0xf]
        %v3841 = vunpack.c.l.b16 %v3809
        %v3842 = vunpack.c.l.b16 %v3810
        %v3843 = vunpack.c.l.b16 %v3811
        %v3844 = vunpack.c.l.b16 %v3812
        %v3845 = vunpack.c.l.b16 %v3813
        %v3846 = vunpack.c.l.b16 %v3814
        %v3847 = vunpack.c.l.b16 %v3815
        %v3848 = vunpack.c.l.b16 %v3816
        %v3849 = vunpack.c.l.b16 %v3817
        %v3850 = vunpack.c.l.b16 %v3818
        %v3851 = vunpack.c.l.b16 %v3819
        %v3852 = vunpack.c.l.b16 %v3820
        %v3853 = vunpack.c.l.b16 %v3821
        %v3854 = vunpack.c.l.b16 %v3822
        %v3855 = vunpack.c.l.b16 %v3823
        %v3856 = vunpack.c.l.b16 %v3824
        %v3857 = vpack.c.b16 %v3842, %v3841
        %v3858 = vpack.c.b16 %v3844, %v3843
        %v3859 = vpack.c.b16 %v3846, %v3845
        %v3860 = vpack.c.b16 %v3848, %v3847
        %v3861 = vpack.c.b16 %v3850, %v3849
        %v3862 = vpack.c.b16 %v3852, %v3851
        %v3863 = vpack.c.b16 %v3854, %v3853
        %v3864 = vpack.c.b16 %v3856, %v3855
        %3873 = vmatprep.subr.bf16.mxu0 0
        %3874 = vmatpush1.bf16.msra.mxu0 %v3857
        %3875 = vmatprep.subr.bf16.mxu0 0
        %3876 = vmatpush1.bf16.msra.mxu0 %v3858
        %3877 = vmatprep.subr.bf16.mxu0 0
        %3878 = vmatpush1.bf16.msra.mxu0 %v3859
        %3879 = vmatprep.subr.bf16.mxu0 0
        %3880 = vmatpush1.bf16.msra.mxu0 %v3860
        %3881 = vmatprep.subr.bf16.mxu0 0
        %3882 = vmatpush1.bf16.msra.mxu0 %v3861
        %3883 = vmatprep.subr.bf16.mxu0 0
        %3884 = vmatpush1.bf16.msra.mxu0 %v3862
        %3885 = vmatprep.subr.bf16.mxu0 0
        %3886 = vmatpush1.bf16.msra.mxu0 %v3863
        %3887 = vmatprep.subr.bf16.mxu0 0
        %3888 = vmatpush1.bf16.msra.mxu0 %v3864
        %3889 = vmatprep.subr.bf16.mxu0 0
        %3890 = vmatpush1.bf16.msra.mxu0 0
        %3891 = vmatprep.subr.bf16.mxu0 0
        %3892 = vmatpush1.bf16.msra.mxu0 0
        %3893 = vmatprep.subr.bf16.mxu0 0
        %3894 = vmatpush1.bf16.msra.mxu0 0
        %3895 = vmatprep.subr.bf16.mxu0 0
        %3896 = vmatpush1.bf16.msra.mxu0 0
        %3897 = vmatprep.subr.bf16.mxu0 0
        %3898 = vmatpush1.bf16.msra.mxu0 0
        %3899 = vmatprep.subr.bf16.mxu0 0
        %3900 = vmatpush1.bf16.msra.mxu0 0
        %3901 = vmatprep.subr.bf16.mxu0 0
        %3902 = vmatpush1.bf16.msra.mxu0 0
        %3903 = vmatprep.subr.bf16.mxu0 0
        %3904 = vmatpush1.bf16.msra.mxu0 0
        %3905 = vmatprep.mubr.bf16.mxu0 0
        %3906 = vmatmul.mubr.bf16.gmra.mrb[0].mxu0 %v3807
        %v3907 = vpop.f32.mrb[0].mxu0
        %v3908 = vadd.f32 %v3802, %v3907
        %v3909 = vpop.f32.mrb[0].mxu0
        %v3910 = vpop.f32.mrb[0].mxu0
        %v3911 = vpop.f32.mrb[0].mxu0
        %3912 = vdwg.mxu0
        %v3913 = vmax.f32 %v3908, 0.0
        %v3914 = vld [vmem:[%s7 + $0x7] sm:$0x1]
        %v3915 = vld [vmem:[%s9 + $0x7] sm:$0x1]
        %v3916 = vld [vmem:[%s6 + $0x43] sm:$0x1]
        %v3917 = vmul.f32 %v3913, %v3916
        %v3918 = vadd.f32 %v3917, %v3914
        %v3919 = vmax.f32 %v3918, 0.0
        %v3920 = vpack.c.bf16 %v3919, %v3919
        %s3921 = scalar_lea.vmem %s8, 448
        %v3922 = vld [vmem:[%s3921] sm:$0xf]
        %v3923 = vld [vmem:[%s3921 + $0x4] sm:$0xf]
        %v3924 = vld [vmem:[%s3921 + $0x8] sm:$0xf]
        %v3925 = vld [vmem:[%s3921 + $0xc] sm:$0xf]
        %v3926 = vld [vmem:[%s3921 + $0x10] sm:$0xf]
        %v3927 = vld [vmem:[%s3921 + $0x14] sm:$0xf]
        %v3928 = vld [vmem:[%s3921 + $0x18] sm:$0xf]
        %v3929 = vld [vmem:[%s3921 + $0x1c] sm:$0xf]
        %v3930 = vld [vmem:[%s3921 + $0x20] sm:$0xf]
        %v3931 = vld [vmem:[%s3921 + $0x24] sm:$0xf]
        %v3932 = vld [vmem:[%s3921 + $0x28] sm:$0xf]
        %v3933 = vld [vmem:[%s3921 + $0x2c] sm:$0xf]
        %v3934 = vld [vmem:[%s3921 + $0x30] sm:$0xf]
        %v3935 = vld [vmem:[%s3921 + $0x34] sm:$0xf]
        %v3936 = vld [vmem:[%s3921 + $0x38] sm:$0xf]
        %v3937 = vld [vmem:[%s3921 + $0x3c] sm:$0xf]
        %v3954 = vunpack.c.l.b16 %v3922
        %v3955 = vunpack.c.l.b16 %v3923
        %v3956 = vunpack.c.l.b16 %v3924
        %v3957 = vunpack.c.l.b16 %v3925
        %v3958 = vunpack.c.l.b16 %v3926
        %v3959 = vunpack.c.l.b16 %v3927
        %v3960 = vunpack.c.l.b16 %v3928
        %v3961 = vunpack.c.l.b16 %v3929
        %v3962 = vunpack.c.l.b16 %v3930
        %v3963 = vunpack.c.l.b16 %v3931
        %v3964 = vunpack.c.l.b16 %v3932
        %v3965 = vunpack.c.l.b16 %v3933
        %v3966 = vunpack.c.l.b16 %v3934
        %v3967 = vunpack.c.l.b16 %v3935
        %v3968 = vunpack.c.l.b16 %v3936
        %v3969 = vunpack.c.l.b16 %v3937
        %v3970 = vpack.c.b16 %v3955, %v3954
        %v3971 = vpack.c.b16 %v3957, %v3956
        %v3972 = vpack.c.b16 %v3959, %v3958
        %v3973 = vpack.c.b16 %v3961, %v3960
        %v3974 = vpack.c.b16 %v3963, %v3962
        %v3975 = vpack.c.b16 %v3965, %v3964
        %v3976 = vpack.c.b16 %v3967, %v3966
        %v3977 = vpack.c.b16 %v3969, %v3968
        %3986 = vmatprep.subr.bf16.mxu0 0
        %3987 = vmatpush1.bf16.msra.mxu0 %v3970
        %3988 = vmatprep.subr.bf16.mxu0 0
        %3989 = vmatpush1.bf16.msra.mxu0 %v3971
        %3990 = vmatprep.subr.bf16.mxu0 0
        %3991 = vmatpush1.bf16.msra.mxu0 %v3972
        %3992 = vmatprep.subr.bf16.mxu0 0
        %3993 = vmatpush1.bf16.msra.mxu0 %v3973
        %3994 = vmatprep.subr.bf16.mxu0 0
        %3995 = vmatpush1.bf16.msra.mxu0 %v3974
        %3996 = vmatprep.subr.bf16.mxu0 0
        %3997 = vmatpush1.bf16.msra.mxu0 %v3975
        %3998 = vmatprep.subr.bf16.mxu0 0
        %3999 = vmatpush1.bf16.msra.mxu0 %v3976
        %4000 = vmatprep.subr.bf16.mxu0 0
        %4001 = vmatpush1.bf16.msra.mxu0 %v3977
        %4002 = vmatprep.subr.bf16.mxu0 0
        %4003 = vmatpush1.bf16.msra.mxu0 0
        %4004 = vmatprep.subr.bf16.mxu0 0
        %4005 = vmatpush1.bf16.msra.mxu0 0
        %4006 = vmatprep.subr.bf16.mxu0 0
        %4007 = vmatpush1.bf16.msra.mxu0 0
        %4008 = vmatprep.subr.bf16.mxu0 0
        %4009 = vmatpush1.bf16.msra.mxu0 0
        %4010 = vmatprep.subr.bf16.mxu0 0
        %4011 = vmatpush1.bf16.msra.mxu0 0
        %4012 = vmatprep.subr.bf16.mxu0 0
        %4013 = vmatpush1.bf16.msra.mxu0 0
        %4014 = vmatprep.subr.bf16.mxu0 0
        %4015 = vmatpush1.bf16.msra.mxu0 0
        %4016 = vmatprep.subr.bf16.mxu0 0
        %4017 = vmatpush1.bf16.msra.mxu0 0
        %4018 = vmatprep.mubr.bf16.mxu0 0
        %4019 = vmatmul.mubr.bf16.gmra.mrb[0].mxu0 %v3920
        %v4020 = vpop.f32.mrb[0].mxu0
        %v4021 = vadd.f32 %v3915, %v4020
        %v4022 = vpop.f32.mrb[0].mxu0
        %v4023 = vpop.f32.mrb[0].mxu0
        %v4024 = vpop.f32.mrb[0].mxu0
        %4025 = vdwg.mxu0
        %v4026 = vmax.f32 %v4021, 0.0
        %v4027 = vld [vmem:[%s7 + $0x8] sm:$0x1]
        %v4028 = vld [vmem:[%s9 + $0x8] sm:$0x1]
        %v4029 = vld [vmem:[%s6 + $0x4c] sm:$0x1]
        %v4030 = vmul.f32 %v4026, %v4029
        %v4031 = vadd.f32 %v4030, %v4027
        %v4032 = vmax.f32 %v4031, 0.0
        %v4033 = vpack.c.bf16 %v4032, %v4032
        %s4034 = scalar_lea.vmem %s8, 512
        %v4035 = vld [vmem:[%s4034] sm:$0xf]
        %v4036 = vld [vmem:[%s4034 + $0x4] sm:$0xf]
        %v4037 = vld [vmem:[%s4034 + $0x8] sm:$0xf]
        %v4038 = vld [vmem:[%s4034 + $0xc] sm:$0xf]
        %v4039 = vld [vmem:[%s4034 + $0x10] sm:$0xf]
        %v4040 = vld [vmem:[%s4034 + $0x14] sm:$0xf]
        %v4041 = vld [vmem:[%s4034 + $0x18] sm:$0xf]
        %v4042 = vld [vmem:[%s4034 + $0x1c] sm:$0xf]
        %v4043 = vld [vmem:[%s4034 + $0x20] sm:$0xf]
        %v4044 = vld [vmem:[%s4034 + $0x24] sm:$0xf]
        %v4045 = vld [vmem:[%s4034 + $0x28] sm:$0xf]
        %v4046 = vld [vmem:[%s4034 + $0x2c] sm:$0xf]
        %v4047 = vld [vmem:[%s4034 + $0x30] sm:$0xf]
        %v4048 = vld [vmem:[%s4034 + $0x34] sm:$0xf]
        %v4049 = vld [vmem:[%s4034 + $0x38] sm:$0xf]
        %v4050 = vld [vmem:[%s4034 + $0x3c] sm:$0xf]
        %v4067 = vunpack.c.l.b16 %v4035
        %v4068 = vunpack.c.l.b16 %v4036
        %v4069 = vunpack.c.l.b16 %v4037
        %v4070 = vunpack.c.l.b16 %v4038
        %v4071 = vunpack.c.l.b16 %v4039
        %v4072 = vunpack.c.l.b16 %v4040
        %v4073 = vunpack.c.l.b16 %v4041
        %v4074 = vunpack.c.l.b16 %v4042
        %v4075 = vunpack.c.l.b16 %v4043
        %v4076 = vunpack.c.l.b16 %v4044
        %v4077 = vunpack.c.l.b16 %v4045
        %v4078 = vunpack.c.l.b16 %v4046
        %v4079 = vunpack.c.l.b16 %v4047
        %v4080 = vunpack.c.l.b16 %v4048
        %v4081 = vunpack.c.l.b16 %v4049
        %v4082 = vunpack.c.l.b16 %v4050
        %v4083 = vpack.c.b16 %v4068, %v4067
        %v4084 = vpack.c.b16 %v4070, %v4069
        %v4085 = vpack.c.b16 %v4072, %v4071
        %v4086 = vpack.c.b16 %v4074, %v4073
        %v4087 = vpack.c.b16 %v4076, %v4075
        %v4088 = vpack.c.b16 %v4078, %v4077
        %v4089 = vpack.c.b16 %v4080, %v4079
        %v4090 = vpack.c.b16 %v4082, %v4081
        %4099 = vmatprep.subr.bf16.mxu0 0
        %4100 = vmatpush1.bf16.msra.mxu0 %v4083
        %4101 = vmatprep.subr.bf16.mxu0 0
        %4102 = vmatpush1.bf16.msra.mxu0 %v4084
        %4103 = vmatprep.subr.bf16.mxu0 0
        %4104 = vmatpush1.bf16.msra.mxu0 %v4085
        %4105 = vmatprep.subr.bf16.mxu0 0
        %4106 = vmatpush1.bf16.msra.mxu0 %v4086
        %4107 = vmatprep.subr.bf16.mxu0 0
        %4108 = vmatpush1.bf16.msra.mxu0 %v4087
        %4109 = vmatprep.subr.bf16.mxu0 0
        %4110 = vmatpush1.bf16.msra.mxu0 %v4088
        %4111 = vmatprep.subr.bf16.mxu0 0
        %4112 = vmatpush1.bf16.msra.mxu0 %v4089
        %4113 = vmatprep.subr.bf16.mxu0 0
        %4114 = vmatpush1.bf16.msra.mxu0 %v4090
        %4115 = vmatprep.subr.bf16.mxu0 0
        %4116 = vmatpush1.bf16.msra.mxu0 0
        %4117 = vmatprep.subr.bf16.mxu0 0
        %4118 = vmatpush1.bf16.msra.mxu0 0
        %4119 = vmatprep.subr.bf16.mxu0 0
        %4120 = vmatpush1.bf16.msra.mxu0 0
        %4121 = vmatprep.subr.bf16.mxu0 0
        %4122 = vmatpush1.bf16.msra.mxu0 0
        %4123 = vmatprep.subr.bf16.mxu0 0
        %4124 = vmatpush1.bf16.msra.mxu0 0
        %4125 = vmatprep.subr.bf16.mxu0 0
        %4126 = vmatpush1.bf16.msra.mxu0 0
        %4127 = vmatprep.subr.bf16.mxu0 0
        %4128 = vmatpush1.bf16.msra.mxu0 0
        %4129 = vmatprep.subr.bf16.mxu0 0
        %4130 = vmatpush1.bf16.msra.mxu0 0
        %4131 = vmatprep.mubr.bf16.mxu0 0
        %4132 = vmatmul.mubr.bf16.gmra.mrb[0].mxu0 %v4033
        %v4133 = vpop.f32.mrb[0].mxu0
        %v4134 = vadd.f32 %v4028, %v4133
        %v4135 = vpop.f32.mrb[0].mxu0
        %v4136 = vpop.f32.mrb[0].mxu0
        %v4137 = vpop.f32.mrb[0].mxu0
        %4138 = vdwg.mxu0
        %v4139 = vmax.f32 %v4134, 0.0
        %v4140 = vld [vmem:[%s7 + $0x9] sm:$0x1]
        %v4141 = vld [vmem:[%s9 + $0x9] sm:$0x1]
        %v4142 = vld [vmem:[%s6 + $0x55] sm:$0x1]
        %v4143 = vmul.f32 %v4139, %v4142
        %v4144 = vadd.f32 %v4143, %v4140
        %v4145 = vmax.f32 %v4144, 0.0
        %v4146 = vpack.c.bf16 %v4145, %v4145
        %s4147 = scalar_lea.vmem %s8, 576
        %v4148 = vld [vmem:[%s4147] sm:$0xf]
        %v4149 = vld [vmem:[%s4147 + $0x4] sm:$0xf]
        %v4150 = vld [vmem:[%s4147 + $0x8] sm:$0xf]
        %v4151 = vld [vmem:[%s4147 + $0xc] sm:$0xf]
        %v4152 = vld [vmem:[%s4147 + $0x10] sm:$0xf]
        %v4153 = vld [vmem:[%s4147 + $0x14] sm:$0xf]
        %v4154 = vld [vmem:[%s4147 + $0x18] sm:$0xf]
        %v4155 = vld [vmem:[%s4147 + $0x1c] sm:$0xf]
        %v4156 = vld [vmem:[%s4147 + $0x20] sm:$0xf]
        %v4157 = vld [vmem:[%s4147 + $0x24] sm:$0xf]
        %v4158 = vld [vmem:[%s4147 + $0x28] sm:$0xf]
        %v4159 = vld [vmem:[%s4147 + $0x2c] sm:$0xf]
        %v4160 = vld [vmem:[%s4147 + $0x30] sm:$0xf]
        %v4161 = vld [vmem:[%s4147 + $0x34] sm:$0xf]
        %v4162 = vld [vmem:[%s4147 + $0x38] sm:$0xf]
        %v4163 = vld [vmem:[%s4147 + $0x3c] sm:$0xf]
        %v4180 = vunpack.c.l.b16 %v4148
        %v4181 = vunpack.c.l.b16 %v4149
        %v4182 = vunpack.c.l.b16 %v4150
        %v4183 = vunpack.c.l.b16 %v4151
        %v4184 = vunpack.c.l.b16 %v4152
        %v4185 = vunpack.c.l.b16 %v4153
        %v4186 = vunpack.c.l.b16 %v4154
        %v4187 = vunpack.c.l.b16 %v4155
        %v4188 = vunpack.c.l.b16 %v4156
        %v4189 = vunpack.c.l.b16 %v4157
        %v4190 = vunpack.c.l.b16 %v4158
        %v4191 = vunpack.c.l.b16 %v4159
        %v4192 = vunpack.c.l.b16 %v4160
        %v4193 = vunpack.c.l.b16 %v4161
        %v4194 = vunpack.c.l.b16 %v4162
        %v4195 = vunpack.c.l.b16 %v4163
        %v4196 = vpack.c.b16 %v4181, %v4180
        %v4197 = vpack.c.b16 %v4183, %v4182
        %v4198 = vpack.c.b16 %v4185, %v4184
        %v4199 = vpack.c.b16 %v4187, %v4186
        %v4200 = vpack.c.b16 %v4189, %v4188
        %v4201 = vpack.c.b16 %v4191, %v4190
        %v4202 = vpack.c.b16 %v4193, %v4192
        %v4203 = vpack.c.b16 %v4195, %v4194
        %4212 = vmatprep.subr.bf16.mxu0 0
        %4213 = vmatpush1.bf16.msra.mxu0 %v4196
        %4214 = vmatprep.subr.bf16.mxu0 0
        %4215 = vmatpush1.bf16.msra.mxu0 %v4197
        %4216 = vmatprep.subr.bf16.mxu0 0
        %4217 = vmatpush1.bf16.msra.mxu0 %v4198
        %4218 = vmatprep.subr.bf16.mxu0 0
        %4219 = vmatpush1.bf16.msra.mxu0 %v4199
        %4220 = vmatprep.subr.bf16.mxu0 0
        %4221 = vmatpush1.bf16.msra.mxu0 %v4200
        %4222 = vmatprep.subr.bf16.mxu0 0
        %4223 = vmatpush1.bf16.msra.mxu0 %v4201
        %4224 = vmatprep.subr.bf16.mxu0 0
        %4225 = vmatpush1.bf16.msra.mxu0 %v4202
        %4226 = vmatprep.subr.bf16.mxu0 0
        %4227 = vmatpush1.bf16.msra.mxu0 %v4203
        %4228 = vmatprep.subr.bf16.mxu0 0
        %4229 = vmatpush1.bf16.msra.mxu0 0
        %4230 = vmatprep.subr.bf16.mxu0 0
        %4231 = vmatpush1.bf16.msra.mxu0 0
        %4232 = vmatprep.subr.bf16.mxu0 0
        %4233 = vmatpush1.bf16.msra.mxu0 0
        %4234 = vmatprep.subr.bf16.mxu0 0
        %4235 = vmatpush1.bf16.msra.mxu0 0
        %4236 = vmatprep.subr.bf16.mxu0 0
        %4237 = vmatpush1.bf16.msra.mxu0 0
        %4238 = vmatprep.subr.bf16.mxu0 0
        %4239 = vmatpush1.bf16.msra.mxu0 0
        %4240 = vmatprep.subr.bf16.mxu0 0
        %4241 = vmatpush1.bf16.msra.mxu0 0
        %4242 = vmatprep.subr.bf16.mxu0 0
        %4243 = vmatpush1.bf16.msra.mxu0 0
        %4244 = vmatprep.mubr.bf16.mxu0 0
        %4245 = vmatmul.mubr.bf16.gmra.mrb[0].mxu0 %v4146
        %v4246 = vpop.f32.mrb[0].mxu0
        %v4247 = vadd.f32 %v4141, %v4246
        %v4248 = vpop.f32.mrb[0].mxu0
        %v4249 = vpop.f32.mrb[0].mxu0
        %v4250 = vpop.f32.mrb[0].mxu0
        %4251 = vdwg.mxu0
        %v4252 = vmax.f32 %v4247, 0.0
        %v4253 = vld [vmem:[%s7 + $0xa] sm:$0x1]
        %v4254 = vld [vmem:[%s9 + $0xa] sm:$0x1]
        %v4255 = vld [vmem:[%s6 + $0x5e] sm:$0x1]
        %v4256 = vmul.f32 %v4252, %v4255
        %v4257 = vadd.f32 %v4256, %v4253
        %v4258 = vmax.f32 %v4257, 0.0
        %v4259 = vpack.c.bf16 %v4258, %v4258
        %s4260 = scalar_lea.vmem %s8, 640
        %v4261 = vld [vmem:[%s4260] sm:$0xf]
        %v4262 = vld [vmem:[%s4260 + $0x4] sm:$0xf]
        %v4263 = vld [vmem:[%s4260 + $0x8] sm:$0xf]
        %v4264 = vld [vmem:[%s4260 + $0xc] sm:$0xf]
        %v4265 = vld [vmem:[%s4260 + $0x10] sm:$0xf]
        %v4266 = vld [vmem:[%s4260 + $0x14] sm:$0xf]
        %v4267 = vld [vmem:[%s4260 + $0x18] sm:$0xf]
        %v4268 = vld [vmem:[%s4260 + $0x1c] sm:$0xf]
        %v4269 = vld [vmem:[%s4260 + $0x20] sm:$0xf]
        %v4270 = vld [vmem:[%s4260 + $0x24] sm:$0xf]
        %v4271 = vld [vmem:[%s4260 + $0x28] sm:$0xf]
        %v4272 = vld [vmem:[%s4260 + $0x2c] sm:$0xf]
        %v4273 = vld [vmem:[%s4260 + $0x30] sm:$0xf]
        %v4274 = vld [vmem:[%s4260 + $0x34] sm:$0xf]
        %v4275 = vld [vmem:[%s4260 + $0x38] sm:$0xf]
        %v4276 = vld [vmem:[%s4260 + $0x3c] sm:$0xf]
        %v4293 = vunpack.c.l.b16 %v4261
        %v4294 = vunpack.c.l.b16 %v4262
        %v4295 = vunpack.c.l.b16 %v4263
        %v4296 = vunpack.c.l.b16 %v4264
        %v4297 = vunpack.c.l.b16 %v4265
        %v4298 = vunpack.c.l.b16 %v4266
        %v4299 = vunpack.c.l.b16 %v4267
        %v4300 = vunpack.c.l.b16 %v4268
        %v4301 = vunpack.c.l.b16 %v4269
        %v4302 = vunpack.c.l.b16 %v4270
        %v4303 = vunpack.c.l.b16 %v4271
        %v4304 = vunpack.c.l.b16 %v4272
        %v4305 = vunpack.c.l.b16 %v4273
        %v4306 = vunpack.c.l.b16 %v4274
        %v4307 = vunpack.c.l.b16 %v4275
        %v4308 = vunpack.c.l.b16 %v4276
        %v4309 = vpack.c.b16 %v4294, %v4293
        %v4310 = vpack.c.b16 %v4296, %v4295
        %v4311 = vpack.c.b16 %v4298, %v4297
        %v4312 = vpack.c.b16 %v4300, %v4299
        %v4313 = vpack.c.b16 %v4302, %v4301
        %v4314 = vpack.c.b16 %v4304, %v4303
        %v4315 = vpack.c.b16 %v4306, %v4305
        %v4316 = vpack.c.b16 %v4308, %v4307
        %4325 = vmatprep.subr.bf16.mxu0 0
        %4326 = vmatpush1.bf16.msra.mxu0 %v4309
        %4327 = vmatprep.subr.bf16.mxu0 0
        %4328 = vmatpush1.bf16.msra.mxu0 %v4310
        %4329 = vmatprep.subr.bf16.mxu0 0
        %4330 = vmatpush1.bf16.msra.mxu0 %v4311
        %4331 = vmatprep.subr.bf16.mxu0 0
        %4332 = vmatpush1.bf16.msra.mxu0 %v4312
        %4333 = vmatprep.subr.bf16.mxu0 0
        %4334 = vmatpush1.bf16.msra.mxu0 %v4313
        %4335 = vmatprep.subr.bf16.mxu0 0
        %4336 = vmatpush1.bf16.msra.mxu0 %v4314
        %4337 = vmatprep.subr.bf16.mxu0 0
        %4338 = vmatpush1.bf16.msra.mxu0 %v4315
        %4339 = vmatprep.subr.bf16.mxu0 0
        %4340 = vmatpush1.bf16.msra.mxu0 %v4316
        %4341 = vmatprep.subr.bf16.mxu0 0
        %4342 = vmatpush1.bf16.msra.mxu0 0
        %4343 = vmatprep.subr.bf16.mxu0 0
        %4344 = vmatpush1.bf16.msra.mxu0 0
        %4345 = vmatprep.subr.bf16.mxu0 0
        %4346 = vmatpush1.bf16.msra.mxu0 0
        %4347 = vmatprep.subr.bf16.mxu0 0
        %4348 = vmatpush1.bf16.msra.mxu0 0
        %4349 = vmatprep.subr.bf16.mxu0 0
        %4350 = vmatpush1.bf16.msra.mxu0 0
        %4351 = vmatprep.subr.bf16.mxu0 0
        %4352 = vmatpush1.bf16.msra.mxu0 0
        %4353 = vmatprep.subr.bf16.mxu0 0
        %4354 = vmatpush1.bf16.msra.mxu0 0
        %4355 = vmatprep.subr.bf16.mxu0 0
        %4356 = vmatpush1.bf16.msra.mxu0 0
        %4357 = vmatprep.mubr.bf16.mxu0 0
        %4358 = vmatmul.mubr.bf16.gmra.mrb[0].mxu0 %v4259
        %v4359 = vpop.f32.mrb[0].mxu0
        %v4360 = vadd.f32 %v4254, %v4359
        %v4361 = vpop.f32.mrb[0].mxu0
        %v4362 = vpop.f32.mrb[0].mxu0
        %v4363 = vpop.f32.mrb[0].mxu0
        %4364 = vdwg.mxu0
        %v4365 = vmax.f32 %v4360, 0.0
        %v4366 = vld [vmem:[%s7 + $0xb] sm:$0x1]
        %v4367 = vld [vmem:[%s9 + $0xb] sm:$0x1]
        %v4368 = vld [vmem:[%s6 + $0x67] sm:$0x1]
        %v4369 = vmul.f32 %v4365, %v4368
        %v4370 = vadd.f32 %v4369, %v4366
        %v4371 = vmax.f32 %v4370, 0.0
        %v4372 = vpack.c.bf16 %v4371, %v4371
        %s4373 = scalar_lea.vmem %s8, 704
        %v4374 = vld [vmem:[%s4373] sm:$0xf]
        %v4375 = vld [vmem:[%s4373 + $0x4] sm:$0xf]
        %v4376 = vld [vmem:[%s4373 + $0x8] sm:$0xf]
        %v4377 = vld [vmem:[%s4373 + $0xc] sm:$0xf]
        %v4378 = vld [vmem:[%s4373 + $0x10] sm:$0xf]
        %v4379 = vld [vmem:[%s4373 + $0x14] sm:$0xf]
        %v4380 = vld [vmem:[%s4373 + $0x18] sm:$0xf]
        %v4381 = vld [vmem:[%s4373 + $0x1c] sm:$0xf]
        %v4382 = vld [vmem:[%s4373 + $0x20] sm:$0xf]
        %v4383 = vld [vmem:[%s4373 + $0x24] sm:$0xf]
        %v4384 = vld [vmem:[%s4373 + $0x28] sm:$0xf]
        %v4385 = vld [vmem:[%s4373 + $0x2c] sm:$0xf]
        %v4386 = vld [vmem:[%s4373 + $0x30] sm:$0xf]
        %v4387 = vld [vmem:[%s4373 + $0x34] sm:$0xf]
        %v4388 = vld [vmem:[%s4373 + $0x38] sm:$0xf]
        %v4389 = vld [vmem:[%s4373 + $0x3c] sm:$0xf]
        %v4406 = vunpack.c.l.b16 %v4374
        %v4407 = vunpack.c.l.b16 %v4375
        %v4408 = vunpack.c.l.b16 %v4376
        %v4409 = vunpack.c.l.b16 %v4377
        %v4410 = vunpack.c.l.b16 %v4378
        %v4411 = vunpack.c.l.b16 %v4379
        %v4412 = vunpack.c.l.b16 %v4380
        %v4413 = vunpack.c.l.b16 %v4381
        %v4414 = vunpack.c.l.b16 %v4382
        %v4415 = vunpack.c.l.b16 %v4383
        %v4416 = vunpack.c.l.b16 %v4384
        %v4417 = vunpack.c.l.b16 %v4385
        %v4418 = vunpack.c.l.b16 %v4386
        %v4419 = vunpack.c.l.b16 %v4387
        %v4420 = vunpack.c.l.b16 %v4388
        %v4421 = vunpack.c.l.b16 %v4389
        %v4422 = vpack.c.b16 %v4407, %v4406
        %v4423 = vpack.c.b16 %v4409, %v4408
        %v4424 = vpack.c.b16 %v4411, %v4410
        %v4425 = vpack.c.b16 %v4413, %v4412
        %v4426 = vpack.c.b16 %v4415, %v4414
        %v4427 = vpack.c.b16 %v4417, %v4416
        %v4428 = vpack.c.b16 %v4419, %v4418
        %v4429 = vpack.c.b16 %v4421, %v4420
        %4438 = vmatprep.subr.bf16.mxu0 0
        %4439 = vmatpush1.bf16.msra.mxu0 %v4422
        %4440 = vmatprep.subr.bf16.mxu0 0
        %4441 = vmatpush1.bf16.msra.mxu0 %v4423
        %4442 = vmatprep.subr.bf16.mxu0 0
        %4443 = vmatpush1.bf16.msra.mxu0 %v4424
        %4444 = vmatprep.subr.bf16.mxu0 0
        %4445 = vmatpush1.bf16.msra.mxu0 %v4425
        %4446 = vmatprep.subr.bf16.mxu0 0
        %4447 = vmatpush1.bf16.msra.mxu0 %v4426
        %4448 = vmatprep.subr.bf16.mxu0 0
        %4449 = vmatpush1.bf16.msra.mxu0 %v4427
        %4450 = vmatprep.subr.bf16.mxu0 0
        %4451 = vmatpush1.bf16.msra.mxu0 %v4428
        %4452 = vmatprep.subr.bf16.mxu0 0
        %4453 = vmatpush1.bf16.msra.mxu0 %v4429
        %4454 = vmatprep.subr.bf16.mxu0 0
        %4455 = vmatpush1.bf16.msra.mxu0 0
        %4456 = vmatprep.subr.bf16.mxu0 0
        %4457 = vmatpush1.bf16.msra.mxu0 0
        %4458 = vmatprep.subr.bf16.mxu0 0
        %4459 = vmatpush1.bf16.msra.mxu0 0
        %4460 = vmatprep.subr.bf16.mxu0 0
        %4461 = vmatpush1.bf16.msra.mxu0 0
        %4462 = vmatprep.subr.bf16.mxu0 0
        %4463 = vmatpush1.bf16.msra.mxu0 0
        %4464 = vmatprep.subr.bf16.mxu0 0
        %4465 = vmatpush1.bf16.msra.mxu0 0
        %4466 = vmatprep.subr.bf16.mxu0 0
        %4467 = vmatpush1.bf16.msra.mxu0 0
        %4468 = vmatprep.subr.bf16.mxu0 0
        %4469 = vmatpush1.bf16.msra.mxu0 0
        %4470 = vmatprep.mubr.bf16.mxu0 0
        %4471 = vmatmul.mubr.bf16.gmra.mrb[0].mxu0 %v4372
        %v4472 = vpop.f32.mrb[0].mxu0
        %v4473 = vadd.f32 %v4367, %v4472
        %v4474 = vpop.f32.mrb[0].mxu0
        %v4475 = vpop.f32.mrb[0].mxu0
        %v4476 = vpop.f32.mrb[0].mxu0
        %4477 = vdwg.mxu0
        %v4478 = vmax.f32 %v4473, 0.0
        %v4479 = vld [vmem:[%s7 + $0xc] sm:$0x1]
        %v4480 = vld [vmem:[%s9 + $0xc] sm:$0x1]
        %v4481 = vld [vmem:[%s6 + $0x70] sm:$0x1]
        %v4482 = vmul.f32 %v4478, %v4481
        %v4483 = vadd.f32 %v4482, %v4479
        %v4484 = vmax.f32 %v4483, 0.0
        %v4485 = vpack.c.bf16 %v4484, %v4484
        %s4486 = scalar_lea.vmem %s8, 768
        %v4487 = vld [vmem:[%s4486] sm:$0xf]
        %v4488 = vld [vmem:[%s4486 + $0x4] sm:$0xf]
        %v4489 = vld [vmem:[%s4486 + $0x8] sm:$0xf]
        %v4490 = vld [vmem:[%s4486 + $0xc] sm:$0xf]
        %v4491 = vld [vmem:[%s4486 + $0x10] sm:$0xf]
        %v4492 = vld [vmem:[%s4486 + $0x14] sm:$0xf]
        %v4493 = vld [vmem:[%s4486 + $0x18] sm:$0xf]
        %v4494 = vld [vmem:[%s4486 + $0x1c] sm:$0xf]
        %v4495 = vld [vmem:[%s4486 + $0x20] sm:$0xf]
        %v4496 = vld [vmem:[%s4486 + $0x24] sm:$0xf]
        %v4497 = vld [vmem:[%s4486 + $0x28] sm:$0xf]
        %v4498 = vld [vmem:[%s4486 + $0x2c] sm:$0xf]
        %v4499 = vld [vmem:[%s4486 + $0x30] sm:$0xf]
        %v4500 = vld [vmem:[%s4486 + $0x34] sm:$0xf]
        %v4501 = vld [vmem:[%s4486 + $0x38] sm:$0xf]
        %v4502 = vld [vmem:[%s4486 + $0x3c] sm:$0xf]
        %v4519 = vunpack.c.l.b16 %v4487
        %v4520 = vunpack.c.l.b16 %v4488
        %v4521 = vunpack.c.l.b16 %v4489
        %v4522 = vunpack.c.l.b16 %v4490
        %v4523 = vunpack.c.l.b16 %v4491
        %v4524 = vunpack.c.l.b16 %v4492
        %v4525 = vunpack.c.l.b16 %v4493
        %v4526 = vunpack.c.l.b16 %v4494
        %v4527 = vunpack.c.l.b16 %v4495
        %v4528 = vunpack.c.l.b16 %v4496
        %v4529 = vunpack.c.l.b16 %v4497
        %v4530 = vunpack.c.l.b16 %v4498
        %v4531 = vunpack.c.l.b16 %v4499
        %v4532 = vunpack.c.l.b16 %v4500
        %v4533 = vunpack.c.l.b16 %v4501
        %v4534 = vunpack.c.l.b16 %v4502
        %v4535 = vpack.c.b16 %v4520, %v4519
        %v4536 = vpack.c.b16 %v4522, %v4521
        %v4537 = vpack.c.b16 %v4524, %v4523
        %v4538 = vpack.c.b16 %v4526, %v4525
        %v4539 = vpack.c.b16 %v4528, %v4527
        %v4540 = vpack.c.b16 %v4530, %v4529
        %v4541 = vpack.c.b16 %v4532, %v4531
        %v4542 = vpack.c.b16 %v4534, %v4533
        %4551 = vmatprep.subr.bf16.mxu0 0
        %4552 = vmatpush1.bf16.msra.mxu0 %v4535
        %4553 = vmatprep.subr.bf16.mxu0 0
        %4554 = vmatpush1.bf16.msra.mxu0 %v4536
        %4555 = vmatprep.subr.bf16.mxu0 0
        %4556 = vmatpush1.bf16.msra.mxu0 %v4537
        %4557 = vmatprep.subr.bf16.mxu0 0
        %4558 = vmatpush1.bf16.msra.mxu0 %v4538
        %4559 = vmatprep.subr.bf16.mxu0 0
        %4560 = vmatpush1.bf16.msra.mxu0 %v4539
        %4561 = vmatprep.subr.bf16.mxu0 0
        %4562 = vmatpush1.bf16.msra.mxu0 %v4540
        %4563 = vmatprep.subr.bf16.mxu0 0
        %4564 = vmatpush1.bf16.msra.mxu0 %v4541
        %4565 = vmatprep.subr.bf16.mxu0 0
        %4566 = vmatpush1.bf16.msra.mxu0 %v4542
        %4567 = vmatprep.subr.bf16.mxu0 0
        %4568 = vmatpush1.bf16.msra.mxu0 0
        %4569 = vmatprep.subr.bf16.mxu0 0
        %4570 = vmatpush1.bf16.msra.mxu0 0
        %4571 = vmatprep.subr.bf16.mxu0 0
        %4572 = vmatpush1.bf16.msra.mxu0 0
        %4573 = vmatprep.subr.bf16.mxu0 0
        %4574 = vmatpush1.bf16.msra.mxu0 0
        %4575 = vmatprep.subr.bf16.mxu0 0
        %4576 = vmatpush1.bf16.msra.mxu0 0
        %4577 = vmatprep.subr.bf16.mxu0 0
        %4578 = vmatpush1.bf16.msra.mxu0 0
        %4579 = vmatprep.subr.bf16.mxu0 0
        %4580 = vmatpush1.bf16.msra.mxu0 0
        %4581 = vmatprep.subr.bf16.mxu0 0
        %4582 = vmatpush1.bf16.msra.mxu0 0
        %4583 = vmatprep.mubr.bf16.mxu0 0
        %4584 = vmatmul.mubr.bf16.gmra.mrb[0].mxu0 %v4485
        %v4585 = vpop.f32.mrb[0].mxu0
        %v4586 = vadd.f32 %v4480, %v4585
        %v4587 = vpop.f32.mrb[0].mxu0
        %v4588 = vpop.f32.mrb[0].mxu0
        %v4589 = vpop.f32.mrb[0].mxu0
        %4590 = vdwg.mxu0
        %v4591 = vmax.f32 %v4586, 0.0
        %4592 = vst [vmem:[%s396] sm:$0x1] %v4591
        %s4593 = sand.u32 %s262, 1
        %s4594 = scalar_lea.sflag [#allocation8], %s4593
        %s4595 = sand.u32 %s262, 1
        %s4596 = scalar_lea.vmem [#allocation7], %s4595
        // Predicated region
        $region61: #{_lambda_.1} parent=59 // pred_check
          %p4597 = pneg %p272
        $region62: #{_lambda_.1} parent=59 // pred_check_branch
          %4599 = sbr.rel (%p4597) target = $region64
        $region63: #{_lambda_.1} parent=59 // pred_region
          %s4601 = ssub.s32 16, 16
          %4602 = vsyncadd %s4594, %s4601
          %s4603 = smul.addr %s24, 16
          %s4604 = scalar_lea.hbm %s10, %s4603
          %s4606 = sshll.u32 %s4596, 4
          %s4607 = int_to_ptr.vmem [resolvable:$true] %s4606
          %4609 = dma.vmem_to_hbm [thread:$0]  %s4607, 16, %s4604, %s4594
        $region64: #{_lambda_.1} parent=59 // pred_fallthru
          _
      $region60: #{_lambda_.1} parent=5 // pred_fallthru
        _
      %p4610 = scmp.le.s32.totalorder 2, %s19
      // Predicated region
      $region65: #{_lambda_.1} parent=5 // pred_check
        %p4611 = pneg %p4610
      $region66: #{_lambda_.1} parent=5 // pred_check_branch
        %4613 = sbr.rel (%p4611) target = $region68
      $region67: #{_lambda_.1} parent=5 // pred_region
        %s4614 = ssub.s32 %s19, 2
        // Predicated region
        $region69: #{_lambda_.1} parent=67 // pred_check
          %p4615 = pneg %p278
        $region70: #{_lambda_.1} parent=67 // pred_check_branch
          %4617 = sbr.rel (%p4615) target = $region72
        $region71: #{_lambda_.1} parent=67 // pred_region
          %s4618 = sand.u32 %s263, 1
          %s4619 = scalar_lea.sflag [#allocation8], %s4618
          %s4620 = sand.u32 %s263, 1
          %s4621 = scalar_lea.vmem [#allocation7], %s4620
          %4622 = dma.done %s4619, 16
        $region72: #{_lambda_.1} parent=67 // pred_fallthru
          _
      $region68: #{_lambda_.1} parent=5 // pred_fallthru
        _
    $region6: #{_lambda_.1} parent=1 // loop_footer
      %s23 = sadd.s32 1, %s19
    $region7: #{_lambda_.1} parent=1 // loop_footer_branch
      %18 = sbr.rel target = $region3
    $region8: #{_lambda_.1} parent=1 // loop_exit
      _
    %4623 = vsyncpa [#allocation8], 1
    %s4624 = scalar_lea.sflag [#allocation8], 1
    %4625 = vsyncpa %s4624, 1

</llo_original>
